<compile_context>
chip_gen: v6e
topology: v6e:2x2x1
jax: 0.10.0
libtpu: 0.0.40
codegen_flags: <defaults>
</compile_context>

<pallas_src>
import functools

import numpy as np
import jax
import jax.numpy as jnp
from jax.experimental import pallas as pl
from jax.experimental.pallas import tpu as pltpu

BN_EPS = 1e-5
# BatchNorm eval with gamma=1, beta=0, running_mean=0, running_var=1
BN_SCALE = float(1.0 / np.sqrt(1.0 + BN_EPS))


def _rup(x, m):
    return ((x + m - 1) // m) * m


@functools.lru_cache(maxsize=None)
def _num_tensorcores():
    """2 for megacore parts (v4/v5p) and v7x (2 TC/chip); 1 for v5e/v6e."""
    try:
        kind = jax.devices()[0].device_kind.lower()
    except Exception:
        return 1
    return 2 if any(t in kind for t in ("v4", "v5p", "v7", "tpu7")) else 1


# ---------------------------------------------------------------------------
# Fused matmul Pallas kernel:  y = relu?( (x @ w) * scale [+ add] )
# ---------------------------------------------------------------------------

def _mm_kernel(x_ref, w_ref, *rest, scale, relu, has_add, multi_k):
    if multi_k:
        if has_add:
            add_ref, o_ref, acc_ref = rest
        else:
            o_ref, acc_ref = rest
        k = pl.program_id(2)

        @pl.when(k == 0)
        def _():
            acc_ref[...] = jnp.zeros_like(acc_ref)

        acc_ref[...] += jnp.dot(x_ref[...], w_ref[...],
                                preferred_element_type=jnp.float32)

        @pl.when(k == pl.num_programs(2) - 1)
        def _():
            y = acc_ref[...]
            if scale != 1.0:
                y = y * scale
            if has_add:
                y = y + add_ref[...].astype(jnp.float32)
            if relu:
                y = jnp.maximum(y, 0.0)
            o_ref[...] = y.astype(o_ref.dtype)
    else:
        # Single-K fast path: one dot, one store (no zero-init, no +=).
        if has_add:
            add_ref, o_ref = rest
        else:
            (o_ref,) = rest
        y = jnp.dot(x_ref[...], w_ref[...], preferred_element_type=jnp.float32)
        if scale != 1.0:
            y = y * scale
        if has_add:
            y = y + add_ref[...].astype(jnp.float32)
        if relu:
            y = jnp.maximum(y, 0.0)
        o_ref[...] = y.astype(o_ref.dtype)


def fused_matmul(x, w, *, scale=1.0, relu=False, add=None,
                 out_dtype=jnp.bfloat16):
    """y = relu?((x @ w) * scale [+ add]).  bf16 MXU operands, f32 accumulate."""
    M, K = x.shape
    K2, N = w.shape
    assert K == K2, (K, K2)

    # ---- tile selection ---------------------------------------------------
    K_SINGLE = 2048
    if K <= K_SINGLE:
        Kp, tk = K, K                     # whole contraction in one block
    else:
        tk = 512
        Kp = _rup(K, tk)
    multi_k = (Kp // tk) > 1

    n_tc = _num_tensorcores()
    Mp = _rup(M, 16)
    n_split = n_tc if (n_tc > 1 and Mp >= 32) else 1
    if Mp <= 512 * n_split:
        tm = _rup(-(-Mp // n_split), 16)  # >=2 M tiles on 2-TC parts
    else:
        tm = 256
    Mp = _rup(Mp, tm)

    Np = _rup(N, 128)                     # lane-dense output stores
    tn = 256 if (Np % 256 == 0) else 128

    xp = x.astype(jnp.bfloat16)
    if (Mp, Kp) != (M, K):
        xp = jnp.pad(xp, ((0, Mp - M), (0, Kp - K)))
    wp = w.astype(jnp.bfloat16)
    if (Kp, Np) != (K, N):
        wp = jnp.pad(wp, ((0, Kp - K), (0, Np - N)))

    in_arrays = [xp, wp]
    in_specs = [
        pl.BlockSpec((tm, tk), lambda j, i, k: (i, k)),
        pl.BlockSpec((tk, tn), lambda j, i, k: (k, j)),
    ]
    has_add = add is not None
    if has_add:
        ap = add.astype(jnp.bfloat16)     # residual travels in bf16
        if ap.shape != (Mp, Np):
            ap = jnp.pad(ap, ((0, Mp - ap.shape[0]), (0, Np - ap.shape[1])))
        in_arrays.append(ap)
        in_specs.append(pl.BlockSpec((tm, tn), lambda j, i, k: (i, j)))

    scratch = [pltpu.VMEM((tm, tn), jnp.float32)] if multi_k else []

    out = pl.pallas_call(
        functools.partial(_mm_kernel, scale=float(scale), relu=relu,
                          has_add=has_add, multi_k=multi_k),
        out_shape=jax.ShapeDtypeStruct((Mp, Np), out_dtype),
        grid_spec=pltpu.PrefetchScalarGridSpec(
            num_scalar_prefetch=0,
            # N-tile outermost, M-tile inner: weight block stays VMEM-resident.
            grid=(Np // tn, Mp // tm, Kp // tk),
            in_specs=in_specs,
            out_specs=pl.BlockSpec((tm, tn), lambda j, i, k: (i, j)),
            scratch_shapes=scratch,
        ),
        compiler_params=pltpu.CompilerParams(
            dimension_semantics=("parallel", "parallel", "arbitrary")),
    )(*in_arrays)
    if (Mp, Np) != (M, N):
        out = out[:M, :N]
    return out


def conv2d_1x1(x, w, *, scale=BN_SCALE, relu=False, stride=1,
               out_dtype=jnp.bfloat16):
    if stride > 1:
        x = x[:, ::stride, ::stride, :]
    B, H, W, C = x.shape
    y = fused_matmul(x.reshape(B * H * W, C), w, scale=scale, relu=relu,
                     out_dtype=out_dtype)
    return y.reshape(B, H, W, -1)


# ---------------------------------------------------------------------------
# Fused SKConv branch kernel: both dilated grouped 3x3 convs + BN + ReLU.
# Tap gather happens in-kernel; the grouped (Cg=channels/groups) contraction
# runs on the VPU as Cg * 9 FMA passes per branch (no redundant MXU MACs).
# ---------------------------------------------------------------------------

def _skbranch_kernel(xg_ref, w_ref, o_ref, *, H, W, C, Cg, branches):
    """One batch image.

    xg_ref : (1, Cg, Hp, Wp, C) bf16, channel-expanded padded activation
             xg[j, h, w, c] = x_pad[h, w, (c // Cg) * Cg + j]
    w_ref  : (branches * 9 * Cg, C) f32 per-output-channel tap weights
    o_ref  : (1, H, W, branches * C) bf16 (stride-1 output, branch-major slabs)
    """
    outs = []
    for b in range(branches):
        dil = b + 1
        org = branches - dil          # origin inside the maxpad (= branches) ring
        acc = jnp.zeros((H, W, C), jnp.float32)
        for j in range(Cg):
            xj = xg_ref[0, j]         # (Hp, Wp, C)
            for kh in range(3):
                for kw in range(3):
                    row = ((b * 3 + kh) * 3 + kw) * Cg + j
                    wv = w_ref[row, :].reshape(1, 1, C)
                    win = xj[org + kh * dil: org + kh * dil + H,
                             org + kw * dil: org + kw * dil + W, :]
                    acc = acc + win.astype(jnp.float32) * wv
        outs.append(jnp.maximum(acc * BN_SCALE, 0.0).astype(o_ref.dtype))
    # Single lane-dense (branches*C wide) store.
    o_ref[0] = jnp.concatenate(outs, axis=-1)


def skconv_branches(x, w):
    """x: (B,H,W,C) bf16 ; w: (branches,3,3,Cg,C) -> (B,H,W,branches*C) bf16."""
    B, H, W, C = x.shape
    branches, _, _, Cg, _ = w.shape
    P = branches                      # max dilation == max padding over branches
    Hp, Wp = H + 2 * P, W + 2 * P

    xpad = jnp.pad(x.astype(jnp.bfloat16), ((0, 0), (P, P), (P, P), (0, 0)))
    base = (jnp.arange(C) // Cg) * Cg
    # Channel expansion (Cg views of the activation): Cg x HBM vs 18x for im2col.
    xg = jnp.stack([jnp.take(xpad, base + j, axis=-1) for j in range(Cg)],
                   axis=1)            # (B, Cg, Hp, Wp, C)
    wk = w.reshape(branches * 9 * Cg, C).astype(jnp.float32)

    return pl.pallas_call(
        functools.partial(_skbranch_kernel, H=H, W=W, C=C, Cg=Cg,
                          branches=branches),
        out_shape=jax.ShapeDtypeStruct((B, H, W, branches * C), jnp.bfloat16),
        grid_spec=pltpu.PrefetchScalarGridSpec(
            num_scalar_prefetch=0,
            grid=(B,),
            in_specs=[
                pl.BlockSpec((1, Cg, Hp, Wp, C), lambda b: (b, 0, 0, 0, 0)),
                pl.BlockSpec((branches * 9 * Cg, C), lambda b: (0, 0)),
            ],
            out_specs=pl.BlockSpec((1, H, W, branches * C),
                                   lambda b: (b, 0, 0, 0)),
        ),
        compiler_params=pltpu.CompilerParams(dimension_semantics=("parallel",)),
    )(xg, wk)


# ---------------------------------------------------------------------------
# SKConv / SKUnit forward
# ---------------------------------------------------------------------------

def skconv_forward(x, p, stride):
    """x: (B,H,W,C) bf16. Two dilated grouped 3x3 branches + select attention."""
    branches, _, _, _, C = p['branch_w'].shape

    xs = skconv_branches(x, p['branch_w'])            # (B,H,W,branches*C) bf16
    if stride > 1:
        xs = xs[:, ::stride, ::stride, :]             # TODO(synk): see header
    Bo, OH, OW, _ = xs.shape
    xs = xs.reshape(Bo, OH, OW, branches, C)

    # Attention path (tiny, M=batch): plain XLA, not worth a Pallas launch.
    gap = jnp.mean(jnp.sum(xs, axis=3, dtype=jnp.float32), axis=(1, 2))  # (B,C)
    att = jnp.maximum(jnp.dot(gap, p['fc_w']) * BN_SCALE, 0.0)           # (B,L)
    logits = jnp.dot(att, p['fcs_w']) + p['fcs_b']                       # (B,branches*C)
    a = jax.nn.softmax(logits.reshape(Bo, branches, C), axis=1)

    sel = jnp.sum(xs * a[:, None, None, :, :], axis=3)                   # f32
    return sel.astype(jnp.bfloat16)                                      # (B,OH,OW,C)


def skunit_forward(params, x, stride=1):
    """x: (B,H,W,in_c) NHWC float32 -> (B,OH,OW,out_c) float32."""
    B, H, W, in_c = x.shape
    mid_c = params['conv1_w'].shape[1]
    out_c = params['conv3_w'].shape[1]

    # conv1: 1x1 + BN + ReLU (bf16 activations downstream)
    h = conv2d_1x1(x, params['conv1_w'], relu=True)
    # conv2: SKConv (carries the stride)
    h = skconv_forward(h, params['skconv'], stride)
    Bo, OH, OW, _ = h.shape

    # shortcut
    if params['shortcut_w'] is not None:
        residual = conv2d_1x1(x, params['shortcut_w'], relu=False, stride=stride)
    else:
        if in_c != out_c or stride != 1:
            raise ValueError("identity shortcut needs in_c == out_c, stride == 1")
        residual = x.astype(jnp.bfloat16)

    # conv3 (1x1 + BN) fused with residual add and the final ReLU.
    out = fused_matmul(h.reshape(Bo * OH * OW, mid_c), params['conv3_w'],
                       scale=BN_SCALE, relu=True,
                       add=residual.reshape(Bo * OH * OW, out_c),
                       out_dtype=jnp.float32)
    return out.reshape(Bo, OH, OW, out_c)


# ---------------------------------------------------------------------------
# Parameter init (deterministic, kaiming-like fan_in; BN identity stats)
# ---------------------------------------------------------------------------

def _kaiming(key, fan_in, shape):
    return jax.random.normal(key, shape, jnp.float32) * np.sqrt(2.0 / fan_in)


def init_skunit_params(key, in_c, mid_c, out_c, branches=2, groups=32,
                       reduce=16, length=32):
    assert mid_c % groups == 0
    length = max(mid_c // reduce, length)
    Cg = mid_c // groups
    keys = iter(jax.random.split(key, 8))
    nk = lambda: next(keys)

    # branch_w[b, kh, kw, j, c]: weight for output channel c, tap (kh,kw),
    # input channel (c // Cg) * Cg + j  (grouped conv, bias=False).
    branch_w = _kaiming(nk(), 9 * Cg, (branches, 3, 3, Cg, mid_c))
    fcs_w = jnp.concatenate(
        [_kaiming(nk(), length, (length, mid_c)) for _ in range(branches)],
        axis=1)

    return {
        'conv1_w': _kaiming(nk(), in_c, (in_c, mid_c)),
        'conv3_w': _kaiming(nk(), mid_c, (mid_c, out_c)),
        'shortcut_w': (_kaiming(nk(), in_c, (in_c, out_c))
                       if in_c != out_c else None),
        'skconv': {
            'branch_w': branch_w,
            'fc_w': _kaiming(nk(), mid_c, (mid_c, length)),
            'fcs_w': fcs_w,                              # (length, branches*mid_c)
            'fcs_b': jnp.zeros((branches * mid_c,), jnp.float32),
        },
    }


# ---------------------------------------------------------------------------
# main
# ---------------------------------------------------------------------------

if __name__ == "__main__":
    key = jax.random.PRNGKey(0)
    kp, kx = jax.random.split(key)

    # Small SKUnit config: groups=32 requires mid_channels % 32 == 0.
    B, H, W = 2, 16, 16
    in_c, mid_c, out_c = 64, 64, 128
    stride = 1

    params = init_skunit_params(kp, in_c, mid_c, out_c)
    x = jax.random.normal(kx, (B, H, W, in_c), jnp.float32)  # torch: (B,in_c,H,W)

    fwd = jax.jit(functools.partial(skunit_forward, stride=stride))
    out = jax.block_until_ready(fwd(params, x))

    assert out.shape == (B, H, W, out_c), out.shape
    assert bool(jnp.all(jnp.isfinite(out)))
    assert bool(jnp.all(out >= 0.0))          # final ReLU
    print("KERNEL_OK")
</pallas_src>

<mosaic_0001>
module attributes {stable_mosaic.version = 11 : i64} {
  func.func @_mm_kernel(%arg0: i32, %arg1: i32, %arg2: i32, %arg3: memref<512x64xbf16, #tpu.memory_space<vmem>>, %arg4: memref<64x128xbf16, #tpu.memory_space<vmem>>, %arg5: memref<512x128xbf16, #tpu.memory_space<vmem>>) attributes {dimension_semantics = [#tpu.dimension_semantics<parallel>, #tpu.dimension_semantics<parallel>, #tpu.dimension_semantics<arbitrary>], iteration_bounds = array<i64: 1, 1, 1>, scalar_prefetch = 0 : i64, scratch_operands = 0 : i64, tpu.core_type = #tpu.core_type<tc>, window_params = [{transform_indices = @transform_0, window_bounds = array<i64: 512, 64>}, {transform_indices = @transform_1, window_bounds = array<i64: 64, 128>}, {transform_indices = @transform_2, window_bounds = array<i64: 512, 128>}]} {
    %c0 = arith.constant 0 : index
    %c0_0 = arith.constant 0 : index
    %0 = vector.load %arg3[%c0, %c0_0] : memref<512x64xbf16, #tpu.memory_space<vmem>>, vector<512x64xbf16>
    %c0_1 = arith.constant 0 : index
    %c0_2 = arith.constant 0 : index
    %1 = vector.load %arg4[%c0_1, %c0_2] : memref<64x128xbf16, #tpu.memory_space<vmem>>, vector<64x128xbf16>
    %cst = arith.constant dense<0.000000e+00> : vector<512x128xf32>
    %2 = tpu.matmul %0, %1, %cst {dimension_numbers = #tpu.dot_dimension_numbers<[1], [0], [0], [1], [0, 0, 1, 1], [], []>} : vector<512x64xbf16>, vector<64x128xbf16>, vector<512x128xf32> -> vector<512x128xf32>
    %cst_3 = arith.constant 0.999994993 : f32
    %3 = vector.broadcast %cst_3 : f32 to vector<512x128xf32>
    %4 = arith.mulf %2, %3 : vector<512x128xf32>
    %cst_4 = arith.constant 0.000000e+00 : f32
    %5 = vector.broadcast %cst_4 : f32 to vector<512x128xf32>
    %6 = arith.maximumf %4, %5 : vector<512x128xf32>
    %7 = arith.truncf %6 : vector<512x128xf32> to vector<512x128xbf16>
    %c0_5 = arith.constant 0 : index
    %c0_6 = arith.constant 0 : index
    %8 = vector.load %arg5[%c0_5, %c0_6] : memref<512x128xbf16, #tpu.memory_space<vmem>>, vector<512x128xbf16>
    tpu.vector_store %arg5[%c0_5, %c0_6], %7 {strides = array<i32>} : memref<512x128xbf16, #tpu.memory_space<vmem>>, vector<512x128xbf16>,
    return
  }
  func.func @transform_0(%arg0: i32, %arg1: i32, %arg2: i32) -> (i32, i32) {
    %c0_i32 = arith.constant 0 : i32
    return %arg1, %arg2 : i32, i32
  }
  func.func @transform_1(%arg0: i32, %arg1: i32, %arg2: i32) -> (i32, i32) {
    %c0_i32 = arith.constant 0 : i32
    return %arg2, %arg0 : i32, i32
  }
  func.func @transform_2(%arg0: i32, %arg1: i32, %arg2: i32) -> (i32, i32) {
    %c0_i32 = arith.constant 0 : i32
    return %arg1, %arg0 : i32, i32
  }
}

module attributes {stable_mosaic.version = 11 : i64} {
  func.func @_skbranch_kernel(%arg0: i32, %arg1: memref<1x2x20x20x64xbf16, #tpu.memory_space<vmem>>, %arg2: memref<36x64xf32, #tpu.memory_space<vmem>>, %arg3: memref<1x16x16x128xbf16, #tpu.memory_space<vmem>>) attributes {dimension_semantics = [#tpu.dimension_semantics<parallel>], iteration_bounds = array<i64: 2>, scalar_prefetch = 0 : i64, scratch_operands = 0 : i64, tpu.core_type = #tpu.core_type<tc>, window_params = [{transform_indices = @transform_0, window_bounds = array<i64: 1, 2, 20, 20, 64>}, {pipeline_mode = #tpu.pipeline_mode<synchronous>, transform_indices = @transform_1, window_bounds = array<i64: 36, 64>}, {transform_indices = @transform_2, window_bounds = array<i64: 1, 16, 16, 128>}]} {
    %cst = arith.constant 0.000000e+00 : f32
    %0 = vector.broadcast %cst : f32 to vector<16x16x64xf32>
    %c0 = arith.constant 0 : index
    %c0_0 = arith.constant 0 : index
    %c0_1 = arith.constant 0 : index
    %c0_2 = arith.constant 0 : index
    %c0_3 = arith.constant 0 : index
    %1 = vector.load %arg1[%c0, %c0_0, %c0_1, %c0_2, %c0_3] : memref<1x2x20x20x64xbf16, #tpu.memory_space<vmem>>, vector<1x1x20x20x64xbf16>
    %2 = vector.shape_cast %1 : vector<1x1x20x20x64xbf16> to vector<20x20x64xbf16>
    %c0_4 = arith.constant 0 : index
    %c0_5 = arith.constant 0 : index
    %3 = vector.load %arg2[%c0_4, %c0_5] : memref<36x64xf32, #tpu.memory_space<vmem>>, vector<1x64xf32>
    %4 = vector.shape_cast %3 : vector<1x64xf32> to vector<64xf32>
    %5 = vector.shape_cast %4 : vector<64xf32> to vector<1x1x64xf32>
    %6 = vector.extract_strided_slice %2 {offsets = [1, 1, 0], sizes = [16, 16, 64], strides = [1, 1, 1]} : vector<20x20x64xbf16> to vector<16x16x64xbf16>
    %7 = arith.extf %6 : vector<16x16x64xbf16> to vector<16x16x64xf32>
    %8 = vector.broadcast %5 : vector<1x1x64xf32> to vector<16x16x64xf32>
    %9 = arith.mulf %7, %8 : vector<16x16x64xf32>
    %10 = arith.addf %0, %9 : vector<16x16x64xf32>
    %c2 = arith.constant 2 : index
    %c0_6 = arith.constant 0 : index
    %11 = vector.load %arg2[%c2, %c0_6] : memref<36x64xf32, #tpu.memory_space<vmem>>, vector<1x64xf32>
    %12 = vector.shape_cast %11 : vector<1x64xf32> to vector<64xf32>
    %13 = vector.shape_cast %12 : vector<64xf32> to vector<1x1x64xf32>
    %14 = vector.extract_strided_slice %2 {offsets = [1, 2, 0], sizes = [16, 16, 64], strides = [1, 1, 1]} : vector<20x20x64xbf16> to vector<16x16x64xbf16>
    %15 = arith.extf %14 : vector<16x16x64xbf16> to vector<16x16x64xf32>
    %16 = vector.broadcast %13 : vector<1x1x64xf32> to vector<16x16x64xf32>
    %17 = arith.mulf %15, %16 : vector<16x16x64xf32>
    %18 = arith.addf %10, %17 : vector<16x16x64xf32>
    %c4 = arith.constant 4 : index
    %c0_7 = arith.constant 0 : index
    %19 = vector.load %arg2[%c4, %c0_7] : memref<36x64xf32, #tpu.memory_space<vmem>>, vector<1x64xf32>
    %20 = vector.shape_cast %19 : vector<1x64xf32> to vector<64xf32>
    %21 = vector.shape_cast %20 : vector<64xf32> to vector<1x1x64xf32>
    %22 = vector.extract_strided_slice %2 {offsets = [1, 3, 0], sizes = [16, 16, 64], strides = [1, 1, 1]} : vector<20x20x64xbf16> to vector<16x16x64xbf16>
    %23 = arith.extf %22 : vector<16x16x64xbf16> to vector<16x16x64xf32>
    %24 = vector.broadcast %21 : vector<1x1x64xf32> to vector<16x16x64xf32>
    %25 = arith.mulf %23, %24 : vector<16x16x64xf32>
    %26 = arith.addf %18, %25 : vector<16x16x64xf32>
    %c6 = arith.constant 6 : index
    %c0_8 = arith.constant 0 : index
    %27 = vector.load %arg2[%c6, %c0_8] : memref<36x64xf32, #tpu.memory_space<vmem>>, vector<1x64xf32>
    %28 = vector.shape_cast %27 : vector<1x64xf32> to vector<64xf32>
    %29 = vector.shape_cast %28 : vector<64xf32> to vector<1x1x64xf32>
    %30 = vector.extract_strided_slice %2 {offsets = [2, 1, 0], sizes = [16, 16, 64], strides = [1, 1, 1]} : vector<20x20x64xbf16> to vector<16x16x64xbf16>
    %31 = arith.extf %30 : vector<16x16x64xbf16> to vector<16x16x64xf32>
    %32 = vector.broadcast %29 : vector<1x1x64xf32> to vector<16x16x64xf32>
    %33 = arith.mulf %31, %32 : vector<16x16x64xf32>
    %34 = arith.addf %26, %33 : vector<16x16x64xf32>
    %c8 = arith.constant 8 : index
    %c0_9 = arith.constant 0 : index
    %35 = vector.load %arg2[%c8, %c0_9] : memref<36x64xf32, #tpu.memory_space<vmem>>, vector<1x64xf32>
    %36 = vector.shape_cast %35 : vector<1x64xf32> to vector<64xf32>
    %37 = vector.shape_cast %36 : vector<64xf32> to vector<1x1x64xf32>
    %38 = vector.extract_strided_slice %2 {offsets = [2, 2, 0], sizes = [16, 16, 64], strides = [1, 1, 1]} : vector<20x20x64xbf16> to vector<16x16x64xbf16>
    %39 = arith.extf %38 : vector<16x16x64xbf16> to vector<16x16x64xf32>
    %40 = vector.broadcast %37 : vector<1x1x64xf32> to vector<16x16x64xf32>
    %41 = arith.mulf %39, %40 : vector<16x16x64xf32>
    %42 = arith.addf %34, %41 : vector<16x16x64xf32>
    %c10 = arith.constant 10 : index
    %c0_10 = arith.constant 0 : index
    %43 = vector.load %arg2[%c10, %c0_10] : memref<36x64xf32, #tpu.memory_space<vmem>>, vector<1x64xf32>
    %44 = vector.shape_cast %43 : vector<1x64xf32> to vector<64xf32>
    %45 = vector.shape_cast %44 : vector<64xf32> to vector<1x1x64xf32>
    %46 = vector.extract_strided_slice %2 {offsets = [2, 3, 0], sizes = [16, 16, 64], strides = [1, 1, 1]} : vector<20x20x64xbf16> to vector<16x16x64xbf16>
    %47 = arith.extf %46 : vector<16x16x64xbf16> to vector<16x16x64xf32>
    %48 = vector.broadcast %45 : vector<1x1x64xf32> to vector<16x16x64xf32>
    %49 = arith.mulf %47, %48 : vector<16x16x64xf32>
    %50 = arith.addf %42, %49 : vector<16x16x64xf32>
    %c12 = arith.constant 12 : index
    %c0_11 = arith.constant 0 : index
    %51 = vector.load %arg2[%c12, %c0_11] : memref<36x64xf32, #tpu.memory_space<vmem>>, vector<1x64xf32>
    %52 = vector.shape_cast %51 : vector<1x64xf32> to vector<64xf32>
    %53 = vector.shape_cast %52 : vector<64xf32> to vector<1x1x64xf32>
    %54 = vector.extract_strided_slice %2 {offsets = [3, 1, 0], sizes = [16, 16, 64], strides = [1, 1, 1]} : vector<20x20x64xbf16> to vector<16x16x64xbf16>
    %55 = arith.extf %54 : vector<16x16x64xbf16> to vector<16x16x64xf32>
    %56 = vector.broadcast %53 : vector<1x1x64xf32> to vector<16x16x64xf32>
    %57 = arith.mulf %55, %56 : vector<16x16x64xf32>
    %58 = arith.addf %50, %57 : vector<16x16x64xf32>
    %c14 = arith.constant 14 : index
    %c0_12 = arith.constant 0 : index
    %59 = vector.load %arg2[%c14, %c0_12] : memref<36x64xf32, #tpu.memory_space<vmem>>, vector<1x64xf32>
    %60 = vector.shape_cast %59 : vector<1x64xf32> to vector<64xf32>
    %61 = vector.shape_cast %60 : vector<64xf32> to vector<1x1x64xf32>
    %62 = vector.extract_strided_slice %2 {offsets = [3, 2, 0], sizes = [16, 16, 64], strides = [1, 1, 1]} : vector<20x20x64xbf16> to vector<16x16x64xbf16>
    %63 = arith.extf %62 : vector<16x16x64xbf16> to vector<16x16x64xf32>
    %64 = vector.broadcast %61 : vector<1x1x64xf32> to vector<16x16x64xf32>
    %65 = arith.mulf %63, %64 : vector<16x16x64xf32>
    %66 = arith.addf %58, %65 : vector<16x16x64xf32>
    %c16 = arith.constant 16 : index
    %c0_13 = arith.constant 0 : index
    %67 = vector.load %arg2[%c16, %c0_13] : memref<36x64xf32, #tpu.memory_space<vmem>>, vector<1x64xf32>
    %68 = vector.shape_cast %67 : vector<1x64xf32> to vector<64xf32>
    %69 = vector.shape_cast %68 : vector<64xf32> to vector<1x1x64xf32>
    %70 = vector.extract_strided_slice %2 {offsets = [3, 3, 0], sizes = [16, 16, 64], strides = [1, 1, 1]} : vector<20x20x64xbf16> to vector<16x16x64xbf16>
    %71 = arith.extf %70 : vector<16x16x64xbf16> to vector<16x16x64xf32>
    %72 = vector.broadcast %69 : vector<1x1x64xf32> to vector<16x16x64xf32>
    %73 = arith.mulf %71, %72 : vector<16x16x64xf32>
    %74 = arith.addf %66, %73 : vector<16x16x64xf32>
    %c0_14 = arith.constant 0 : index
    %c1 = arith.constant 1 : index
    %c0_15 = arith.constant 0 : index
    %c0_16 = arith.constant 0 : index
    %c0_17 = arith.constant 0 : index
    %75 = vector.load %arg1[%c0_14, %c1, %c0_15, %c0_16, %c0_17] : memref<1x2x20x20x64xbf16, #tpu.memory_space<vmem>>, vector<1x1x20x20x64xbf16>
    %76 = vector.shape_cast %75 : vector<1x1x20x20x64xbf16> to vector<20x20x64xbf16>
    %c1_18 = arith.constant 1 : index
    %c0_19 = arith.constant 0 : index
    %77 = vector.load %arg2[%c1_18, %c0_19] : memref<36x64xf32, #tpu.memory_space<vmem>>, vector<1x64xf32>
    %78 = vector.shape_cast %77 : vector<1x64xf32> to vector<64xf32>
    %79 = vector.shape_cast %78 : vector<64xf32> to vector<1x1x64xf32>
    %80 = vector.extract_strided_slice %76 {offsets = [1, 1, 0], sizes = [16, 16, 64], strides = [1, 1, 1]} : vector<20x20x64xbf16> to vector<16x16x64xbf16>
    %81 = arith.extf %80 : vector<16x16x64xbf16> to vector<16x16x64xf32>
    %82 = vector.broadcast %79 : vector<1x1x64xf32> to vector<16x16x64xf32>
    %83 = arith.mulf %81, %82 : vector<16x16x64xf32>
    %84 = arith.addf %74, %83 : vector<16x16x64xf32>
    %c3 = arith.constant 3 : index
    %c0_20 = arith.constant 0 : index
    %85 = vector.load %arg2[%c3, %c0_20] : memref<36x64xf32, #tpu.memory_space<vmem>>, vector<1x64xf32>
    %86 = vector.shape_cast %85 : vector<1x64xf32> to vector<64xf32>
    %87 = vector.shape_cast %86 : vector<64xf32> to vector<1x1x64xf32>
    %88 = vector.extract_strided_slice %76 {offsets = [1, 2, 0], sizes = [16, 16, 64], strides = [1, 1, 1]} : vector<20x20x64xbf16> to vector<16x16x64xbf16>
    %89 = arith.extf %88 : vector<16x16x64xbf16> to vector<16x16x64xf32>
    %90 = vector.broadcast %87 : vector<1x1x64xf32> to vector<16x16x64xf32>
    %91 = arith.mulf %89, %90 : vector<16x16x64xf32>
    %92 = arith.addf %84, %91 : vector<16x16x64xf32>
    %c5 = arith.constant 5 : index
    %c0_21 = arith.constant 0 : index
    %93 = vector.load %arg2[%c5, %c0_21] : memref<36x64xf32, #tpu.memory_space<vmem>>, vector<1x64xf32>
    %94 = vector.shape_cast %93 : vector<1x64xf32> to vector<64xf32>
    %95 = vector.shape_cast %94 : vector<64xf32> to vector<1x1x64xf32>
    %96 = vector.extract_strided_slice %76 {offsets = [1, 3, 0], sizes = [16, 16, 64], strides = [1, 1, 1]} : vector<20x20x64xbf16> to vector<16x16x64xbf16>
    %97 = arith.extf %96 : vector<16x16x64xbf16> to vector<16x16x64xf32>
    %98 = vector.broadcast %95 : vector<1x1x64xf32> to vector<16x16x64xf32>
    %99 = arith.mulf %97, %98 : vector<16x16x64xf32>
    %100 = arith.addf %92, %99 : vector<16x16x64xf32>
    %c7 = arith.constant 7 : index
    %c0_22 = arith.constant 0 : index
    %101 = vector.load %arg2[%c7, %c0_22] : memref<36x64xf32, #tpu.memory_space<vmem>>, vector<1x64xf32>
    %102 = vector.shape_cast %101 : vector<1x64xf32> to vector<64xf32>
    %103 = vector.shape_cast %102 : vector<64xf32> to vector<1x1x64xf32>
    %104 = vector.extract_strided_slice %76 {offsets = [2, 1, 0], sizes = [16, 16, 64], strides = [1, 1, 1]} : vector<20x20x64xbf16> to vector<16x16x64xbf16>
    %105 = arith.extf %104 : vector<16x16x64xbf16> to vector<16x16x64xf32>
    %106 = vector.broadcast %103 : vector<1x1x64xf32> to vector<16x16x64xf32>
    %107 = arith.mulf %105, %106 : vector<16x16x64xf32>
    %108 = arith.addf %100, %107 : vector<16x16x64xf32>
    %c9 = arith.constant 9 : index
    %c0_23 = arith.constant 0 : index
    %109 = vector.load %arg2[%c9, %c0_23] : memref<36x64xf32, #tpu.memory_space<vmem>>, vector<1x64xf32>
    %110 = vector.shape_cast %109 : vector<1x64xf32> to vector<64xf32>
    %111 = vector.shape_cast %110 : vector<64xf32> to vector<1x1x64xf32>
    %112 = vector.extract_strided_slice %76 {offsets = [2, 2, 0], sizes = [16, 16, 64], strides = [1, 1, 1]} : vector<20x20x64xbf16> to vector<16x16x64xbf16>
    %113 = arith.extf %112 : vector<16x16x64xbf16> to vector<16x16x64xf32>
    %114 = vector.broadcast %111 : vector<1x1x64xf32> to vector<16x16x64xf32>
    %115 = arith.mulf %113, %114 : vector<16x16x64xf32>
    %116 = arith.addf %108, %115 : vector<16x16x64xf32>
    %c11 = arith.constant 11 : index
    %c0_24 = arith.constant 0 : index
    %117 = vector.load %arg2[%c11, %c0_24] : memref<36x64xf32, #tpu.memory_space<vmem>>, vector<1x64xf32>
    %118 = vector.shape_cast %117 : vector<1x64xf32> to vector<64xf32>
    %119 = vector.shape_cast %118 : vector<64xf32> to vector<1x1x64xf32>
    %120 = vector.extract_strided_slice %76 {offsets = [2, 3, 0], sizes = [16, 16, 64], strides = [1, 1, 1]} : vector<20x20x64xbf16> to vector<16x16x64xbf16>
    %121 = arith.extf %120 : vector<16x16x64xbf16> to vector<16x16x64xf32>
    %122 = vector.broadcast %119 : vector<1x1x64xf32> to vector<16x16x64xf32>
    %123 = arith.mulf %121, %122 : vector<16x16x64xf32>
    %124 = arith.addf %116, %123 : vector<16x16x64xf32>
    %c13 = arith.constant 13 : index
    %c0_25 = arith.constant 0 : index
    %125 = vector.load %arg2[%c13, %c0_25] : memref<36x64xf32, #tpu.memory_space<vmem>>, vector<1x64xf32>
    %126 = vector.shape_cast %125 : vector<1x64xf32> to vector<64xf32>
    %127 = vector.shape_cast %126 : vector<64xf32> to vector<1x1x64xf32>
    %128 = vector.extract_strided_slice %76 {offsets = [3, 1, 0], sizes = [16, 16, 64], strides = [1, 1, 1]} : vector<20x20x64xbf16> to vector<16x16x64xbf16>
    %129 = arith.extf %128 : vector<16x16x64xbf16> to vector<16x16x64xf32>
    %130 = vector.broadcast %127 : vector<1x1x64xf32> to vector<16x16x64xf32>
    %131 = arith.mulf %129, %130 : vector<16x16x64xf32>
    %132 = arith.addf %124, %131 : vector<16x16x64xf32>
    %c15 = arith.constant 15 : index
    %c0_26 = arith.constant 0 : index
    %133 = vector.load %arg2[%c15, %c0_26] : memref<36x64xf32, #tpu.memory_space<vmem>>, vector<1x64xf32>
    %134 = vector.shape_cast %133 : vector<1x64xf32> to vector<64xf32>
    %135 = vector.shape_cast %134 : vector<64xf32> to vector<1x1x64xf32>
    %136 = vector.extract_strided_slice %76 {offsets = [3, 2, 0], sizes = [16, 16, 64], strides = [1, 1, 1]} : vector<20x20x64xbf16> to vector<16x16x64xbf16>
    %137 = arith.extf %136 : vector<16x16x64xbf16> to vector<16x16x64xf32>
    %138 = vector.broadcast %135 : vector<1x1x64xf32> to vector<16x16x64xf32>
    %139 = arith.mulf %137, %138 : vector<16x16x64xf32>
    %140 = arith.addf %132, %139 : vector<16x16x64xf32>
    %c17 = arith.constant 17 : index
    %c0_27 = arith.constant 0 : index
    %141 = vector.load %arg2[%c17, %c0_27] : memref<36x64xf32, #tpu.memory_space<vmem>>, vector<1x64xf32>
    %142 = vector.shape_cast %141 : vector<1x64xf32> to vector<64xf32>
    %143 = vector.shape_cast %142 : vector<64xf32> to vector<1x1x64xf32>
    %144 = vector.extract_strided_slice %76 {offsets = [3, 3, 0], sizes = [16, 16, 64], strides = [1, 1, 1]} : vector<20x20x64xbf16> to vector<16x16x64xbf16>
    %145 = arith.extf %144 : vector<16x16x64xbf16> to vector<16x16x64xf32>
    %146 = vector.broadcast %143 : vector<1x1x64xf32> to vector<16x16x64xf32>
    %147 = arith.mulf %145, %146 : vector<16x16x64xf32>
    %148 = arith.addf %140, %147 : vector<16x16x64xf32>
    %cst_28 = arith.constant 0.999994993 : f32
    %149 = vector.broadcast %cst_28 : f32 to vector<16x16x64xf32>
    %150 = arith.mulf %148, %149 : vector<16x16x64xf32>
    %cst_29 = arith.constant 0.000000e+00 : f32
    %151 = vector.broadcast %cst_29 : f32 to vector<16x16x64xf32>
    %152 = arith.maximumf %150, %151 : vector<16x16x64xf32>
    %153 = arith.truncf %152 : vector<16x16x64xf32> to vector<16x16x64xbf16>
    %cst_30 = arith.constant 0.000000e+00 : f32
    %154 = vector.broadcast %cst_30 : f32 to vector<16x16x64xf32>
    %c0_31 = arith.constant 0 : index
    %c0_32 = arith.constant 0 : index
    %c0_33 = arith.constant 0 : index
    %c0_34 = arith.constant 0 : index
    %c0_35 = arith.constant 0 : index
    %155 = vector.load %arg1[%c0_31, %c0_32, %c0_33, %c0_34, %c0_35] : memref<1x2x20x20x64xbf16, #tpu.memory_space<vmem>>, vector<1x1x20x20x64xbf16>
    %156 = vector.shape_cast %155 : vector<1x1x20x20x64xbf16> to vector<20x20x64xbf16>
    %c18 = arith.constant 18 : index
    %c0_36 = arith.constant 0 : index
    %157 = vector.load %arg2[%c18, %c0_36] : memref<36x64xf32, #tpu.memory_space<vmem>>, vector<1x64xf32>
    %158 = vector.shape_cast %157 : vector<1x64xf32> to vector<64xf32>
    %159 = vector.shape_cast %158 : vector<64xf32> to vector<1x1x64xf32>
    %160 = vector.extract_strided_slice %156 {offsets = [0, 0, 0], sizes = [16, 16, 64], strides = [1, 1, 1]} : vector<20x20x64xbf16> to vector<16x16x64xbf16>
    %161 = arith.extf %160 : vector<16x16x64xbf16> to vector<16x16x64xf32>
    %162 = vector.broadcast %159 : vector<1x1x64xf32> to vector<16x16x64xf32>
    %163 = arith.mulf %161, %162 : vector<16x16x64xf32>
    %164 = arith.addf %154, %163 : vector<16x16x64xf32>
    %c20 = arith.constant 20 : index
    %c0_37 = arith.constant 0 : index
    %165 = vector.load %arg2[%c20, %c0_37] : memref<36x64xf32, #tpu.memory_space<vmem>>, vector<1x64xf32>
    %166 = vector.shape_cast %165 : vector<1x64xf32> to vector<64xf32>
    %167 = vector.shape_cast %166 : vector<64xf32> to vector<1x1x64xf32>
    %168 = vector.extract_strided_slice %156 {offsets = [0, 2, 0], sizes = [16, 16, 64], strides = [1, 1, 1]} : vector<20x20x64xbf16> to vector<16x16x64xbf16>
    %169 = arith.extf %168 : vector<16x16x64xbf16> to vector<16x16x64xf32>
    %170 = vector.broadcast %167 : vector<1x1x64xf32> to vector<16x16x64xf32>
    %171 = arith.mulf %169, %170 : vector<16x16x64xf32>
    %172 = arith.addf %164, %171 : vector<16x16x64xf32>
    %c22 = arith.constant 22 : index
    %c0_38 = arith.constant 0 : index
    %173 = vector.load %arg2[%c22, %c0_38] : memref<36x64xf32, #tpu.memory_space<vmem>>, vector<1x64xf32>
    %174 = vector.shape_cast %173 : vector<1x64xf32> to vector<64xf32>
    %175 = vector.shape_cast %174 : vector<64xf32> to vector<1x1x64xf32>
    %176 = vector.extract_strided_slice %156 {offsets = [0, 4, 0], sizes = [16, 16, 64], strides = [1, 1, 1]} : vector<20x20x64xbf16> to vector<16x16x64xbf16>
    %177 = arith.extf %176 : vector<16x16x64xbf16> to vector<16x16x64xf32>
    %178 = vector.broadcast %175 : vector<1x1x64xf32> to vector<16x16x64xf32>
    %179 = arith.mulf %177, %178 : vector<16x16x64xf32>
    %180 = arith.addf %172, %179 : vector<16x16x64xf32>
    %c24 = arith.constant 24 : index
    %c0_39 = arith.constant 0 : index
    %181 = vector.load %arg2[%c24, %c0_39] : memref<36x64xf32, #tpu.memory_space<vmem>>, vector<1x64xf32>
    %182 = vector.shape_cast %181 : vector<1x64xf32> to vector<64xf32>
    %183 = vector.shape_cast %182 : vector<64xf32> to vector<1x1x64xf32>
    %184 = vector.extract_strided_slice %156 {offsets = [2, 0, 0], sizes = [16, 16, 64], strides = [1, 1, 1]} : vector<20x20x64xbf16> to vector<16x16x64xbf16>
    %185 = arith.extf %184 : vector<16x16x64xbf16> to vector<16x16x64xf32>
    %186 = vector.broadcast %183 : vector<1x1x64xf32> to vector<16x16x64xf32>
    %187 = arith.mulf %185, %186 : vector<16x16x64xf32>
    %188 = arith.addf %180, %187 : vector<16x16x64xf32>
    %c26 = arith.constant 26 : index
    %c0_40 = arith.constant 0 : index
    %189 = vector.load %arg2[%c26, %c0_40] : memref<36x64xf32, #tpu.memory_space<vmem>>, vector<1x64xf32>
    %190 = vector.shape_cast %189 : vector<1x64xf32> to vector<64xf32>
    %191 = vector.shape_cast %190 : vector<64xf32> to vector<1x1x64xf32>
    %192 = vector.extract_strided_slice %156 {offsets = [2, 2, 0], sizes = [16, 16, 64], strides = [1, 1, 1]} : vector<20x20x64xbf16> to vector<16x16x64xbf16>
    %193 = arith.extf %192 : vector<16x16x64xbf16> to vector<16x16x64xf32>
    %194 = vector.broadcast %191 : vector<1x1x64xf32> to vector<16x16x64xf32>
    %195 = arith.mulf %193, %194 : vector<16x16x64xf32>
    %196 = arith.addf %188, %195 : vector<16x16x64xf32>
    %c28 = arith.constant 28 : index
    %c0_41 = arith.constant 0 : index
    %197 = vector.load %arg2[%c28, %c0_41] : memref<36x64xf32, #tpu.memory_space<vmem>>, vector<1x64xf32>
    %198 = vector.shape_cast %197 : vector<1x64xf32> to vector<64xf32>
    %199 = vector.shape_cast %198 : vector<64xf32> to vector<1x1x64xf32>
    %200 = vector.extract_strided_slice %156 {offsets = [2, 4, 0], sizes = [16, 16, 64], strides = [1, 1, 1]} : vector<20x20x64xbf16> to vector<16x16x64xbf16>
    %201 = arith.extf %200 : vector<16x16x64xbf16> to vector<16x16x64xf32>
    %202 = vector.broadcast %199 : vector<1x1x64xf32> to vector<16x16x64xf32>
    %203 = arith.mulf %201, %202 : vector<16x16x64xf32>
    %204 = arith.addf %196, %203 : vector<16x16x64xf32>
    %c30 = arith.constant 30 : index
    %c0_42 = arith.constant 0 : index
    %205 = vector.load %arg2[%c30, %c0_42] : memref<36x64xf32, #tpu.memory_space<vmem>>, vector<1x64xf32>
    %206 = vector.shape_cast %205 : vector<1x64xf32> to vector<64xf32>
    %207 = vector.shape_cast %206 : vector<64xf32> to vector<1x1x64xf32>
    %208 = vector.extract_strided_slice %156 {offsets = [4, 0, 0], sizes = [16, 16, 64], strides = [1, 1, 1]} : vector<20x20x64xbf16> to vector<16x16x64xbf16>
    %209 = arith.extf %208 : vector<16x16x64xbf16> to vector<16x16x64xf32>
    %210 = vector.broadcast %207 : vector<1x1x64xf32> to vector<16x16x64xf32>
    %211 = arith.mulf %209, %210 : vector<16x16x64xf32>
    %212 = arith.addf %204, %211 : vector<16x16x64xf32>
    %c32 = arith.constant 32 : index
    %c0_43 = arith.constant 0 : index
    %213 = vector.load %arg2[%c32, %c0_43] : memref<36x64xf32, #tpu.memory_space<vmem>>, vector<1x64xf32>
    %214 = vector.shape_cast %213 : vector<1x64xf32> to vector<64xf32>
    %215 = vector.shape_cast %214 : vector<64xf32> to vector<1x1x64xf32>
    %216 = vector.extract_strided_slice %156 {offsets = [4, 2, 0], sizes = [16, 16, 64], strides = [1, 1, 1]} : vector<20x20x64xbf16> to vector<16x16x64xbf16>
    %217 = arith.extf %216 : vector<16x16x64xbf16> to vector<16x16x64xf32>
    %218 = vector.broadcast %215 : vector<1x1x64xf32> to vector<16x16x64xf32>
    %219 = arith.mulf %217, %218 : vector<16x16x64xf32>
    %220 = arith.addf %212, %219 : vector<16x16x64xf32>
    %c34 = arith.constant 34 : index
    %c0_44 = arith.constant 0 : index
    %221 = vector.load %arg2[%c34, %c0_44] : memref<36x64xf32, #tpu.memory_space<vmem>>, vector<1x64xf32>
    %222 = vector.shape_cast %221 : vector<1x64xf32> to vector<64xf32>
    %223 = vector.shape_cast %222 : vector<64xf32> to vector<1x1x64xf32>
    %224 = vector.extract_strided_slice %156 {offsets = [4, 4, 0], sizes = [16, 16, 64], strides = [1, 1, 1]} : vector<20x20x64xbf16> to vector<16x16x64xbf16>
    %225 = arith.extf %224 : vector<16x16x64xbf16> to vector<16x16x64xf32>
    %226 = vector.broadcast %223 : vector<1x1x64xf32> to vector<16x16x64xf32>
    %227 = arith.mulf %225, %226 : vector<16x16x64xf32>
    %228 = arith.addf %220, %227 : vector<16x16x64xf32>
    %c0_45 = arith.constant 0 : index
    %c1_46 = arith.constant 1 : index
    %c0_47 = arith.constant 0 : index
    %c0_48 = arith.constant 0 : index
    %c0_49 = arith.constant 0 : index
    %229 = vector.load %arg1[%c0_45, %c1_46, %c0_47, %c0_48, %c0_49] : memref<1x2x20x20x64xbf16, #tpu.memory_space<vmem>>, vector<1x1x20x20x64xbf16>
    %230 = vector.shape_cast %229 : vector<1x1x20x20x64xbf16> to vector<20x20x64xbf16>
    %c19 = arith.constant 19 : index
    %c0_50 = arith.constant 0 : index
    %231 = vector.load %arg2[%c19, %c0_50] : memref<36x64xf32, #tpu.memory_space<vmem>>, vector<1x64xf32>
    %232 = vector.shape_cast %231 : vector<1x64xf32> to vector<64xf32>
    %233 = vector.shape_cast %232 : vector<64xf32> to vector<1x1x64xf32>
    %234 = vector.extract_strided_slice %230 {offsets = [0, 0, 0], sizes = [16, 16, 64], strides = [1, 1, 1]} : vector<20x20x64xbf16> to vector<16x16x64xbf16>
    %235 = arith.extf %234 : vector<16x16x64xbf16> to vector<16x16x64xf32>
    %236 = vector.broadcast %233 : vector<1x1x64xf32> to vector<16x16x64xf32>
    %237 = arith.mulf %235, %236 : vector<16x16x64xf32>
    %238 = arith.addf %228, %237 : vector<16x16x64xf32>
    %c21 = arith.constant 21 : index
    %c0_51 = arith.constant 0 : index
    %239 = vector.load %arg2[%c21, %c0_51] : memref<36x64xf32, #tpu.memory_space<vmem>>, vector<1x64xf32>
    %240 = vector.shape_cast %239 : vector<1x64xf32> to vector<64xf32>
    %241 = vector.shape_cast %240 : vector<64xf32> to vector<1x1x64xf32>
    %242 = vector.extract_strided_slice %230 {offsets = [0, 2, 0], sizes = [16, 16, 64], strides = [1, 1, 1]} : vector<20x20x64xbf16> to vector<16x16x64xbf16>
    %243 = arith.extf %242 : vector<16x16x64xbf16> to vector<16x16x64xf32>
    %244 = vector.broadcast %241 : vector<1x1x64xf32> to vector<16x16x64xf32>
    %245 = arith.mulf %243, %244 : vector<16x16x64xf32>
    %246 = arith.addf %238, %245 : vector<16x16x64xf32>
    %c23 = arith.constant 23 : index
    %c0_52 = arith.constant 0 : index
    %247 = vector.load %arg2[%c23, %c0_52] : memref<36x64xf32, #tpu.memory_space<vmem>>, vector<1x64xf32>
    %248 = vector.shape_cast %247 : vector<1x64xf32> to vector<64xf32>
    %249 = vector.shape_cast %248 : vector<64xf32> to vector<1x1x64xf32>
    %250 = vector.extract_strided_slice %230 {offsets = [0, 4, 0], sizes = [16, 16, 64], strides = [1, 1, 1]} : vector<20x20x64xbf16> to vector<16x16x64xbf16>
    %251 = arith.extf %250 : vector<16x16x64xbf16> to vector<16x16x64xf32>
    %252 = vector.broadcast %249 : vector<1x1x64xf32> to vector<16x16x64xf32>
    %253 = arith.mulf %251, %252 : vector<16x16x64xf32>
    %254 = arith.addf %246, %253 : vector<16x16x64xf32>
    %c25 = arith.constant 25 : index
    %c0_53 = arith.constant 0 : index
    %255 = vector.load %arg2[%c25, %c0_53] : memref<36x64xf32, #tpu.memory_space<vmem>>, vector<1x64xf32>
    %256 = vector.shape_cast %255 : vector<1x64xf32> to vector<64xf32>
    %257 = vector.shape_cast %256 : vector<64xf32> to vector<1x1x64xf32>
    %258 = vector.extract_strided_slice %230 {offsets = [2, 0, 0], sizes = [16, 16, 64], strides = [1, 1, 1]} : vector<20x20x64xbf16> to vector<16x16x64xbf16>
    %259 = arith.extf %258 : vector<16x16x64xbf16> to vector<16x16x64xf32>
    %260 = vector.broadcast %257 : vector<1x1x64xf32> to vector<16x16x64xf32>
    %261 = arith.mulf %259, %260 : vector<16x16x64xf32>
    %262 = arith.addf %254, %261 : vector<16x16x64xf32>
    %c27 = arith.constant 27 : index
    %c0_54 = arith.constant 0 : index
    %263 = vector.load %arg2[%c27, %c0_54] : memref<36x64xf32, #tpu.memory_space<vmem>>, vector<1x64xf32>
    %264 = vector.shape_cast %263 : vector<1x64xf32> to vector<64xf32>
    %265 = vector.shape_cast %264 : vector<64xf32> to vector<1x1x64xf32>
    %266 = vector.extract_strided_slice %230 {offsets = [2, 2, 0], sizes = [16, 16, 64], strides = [1, 1, 1]} : vector<20x20x64xbf16> to vector<16x16x64xbf16>
    %267 = arith.extf %266 : vector<16x16x64xbf16> to vector<16x16x64xf32>
    %268 = vector.broadcast %265 : vector<1x1x64xf32> to vector<16x16x64xf32>
    %269 = arith.mulf %267, %268 : vector<16x16x64xf32>
    %270 = arith.addf %262, %269 : vector<16x16x64xf32>
    %c29 = arith.constant 29 : index
    %c0_55 = arith.constant 0 : index
    %271 = vector.load %arg2[%c29, %c0_55] : memref<36x64xf32, #tpu.memory_space<vmem>>, vector<1x64xf32>
    %272 = vector.shape_cast %271 : vector<1x64xf32> to vector<64xf32>
    %273 = vector.shape_cast %272 : vector<64xf32> to vector<1x1x64xf32>
    %274 = vector.extract_strided_slice %230 {offsets = [2, 4, 0], sizes = [16, 16, 64], strides = [1, 1, 1]} : vector<20x20x64xbf16> to vector<16x16x64xbf16>
    %275 = arith.extf %274 : vector<16x16x64xbf16> to vector<16x16x64xf32>
    %276 = vector.broadcast %273 : vector<1x1x64xf32> to vector<16x16x64xf32>
    %277 = arith.mulf %275, %276 : vector<16x16x64xf32>
    %278 = arith.addf %270, %277 : vector<16x16x64xf32>
    %c31 = arith.constant 31 : index
    %c0_56 = arith.constant 0 : index
    %279 = vector.load %arg2[%c31, %c0_56] : memref<36x64xf32, #tpu.memory_space<vmem>>, vector<1x64xf32>
    %280 = vector.shape_cast %279 : vector<1x64xf32> to vector<64xf32>
    %281 = vector.shape_cast %280 : vector<64xf32> to vector<1x1x64xf32>
    %282 = vector.extract_strided_slice %230 {offsets = [4, 0, 0], sizes = [16, 16, 64], strides = [1, 1, 1]} : vector<20x20x64xbf16> to vector<16x16x64xbf16>
    %283 = arith.extf %282 : vector<16x16x64xbf16> to vector<16x16x64xf32>
    %284 = vector.broadcast %281 : vector<1x1x64xf32> to vector<16x16x64xf32>
    %285 = arith.mulf %283, %284 : vector<16x16x64xf32>
    %286 = arith.addf %278, %285 : vector<16x16x64xf32>
    %c33 = arith.constant 33 : index
    %c0_57 = arith.constant 0 : index
    %287 = vector.load %arg2[%c33, %c0_57] : memref<36x64xf32, #tpu.memory_space<vmem>>, vector<1x64xf32>
    %288 = vector.shape_cast %287 : vector<1x64xf32> to vector<64xf32>
    %289 = vector.shape_cast %288 : vector<64xf32> to vector<1x1x64xf32>
    %290 = vector.extract_strided_slice %230 {offsets = [4, 2, 0], sizes = [16, 16, 64], strides = [1, 1, 1]} : vector<20x20x64xbf16> to vector<16x16x64xbf16>
    %291 = arith.extf %290 : vector<16x16x64xbf16> to vector<16x16x64xf32>
    %292 = vector.broadcast %289 : vector<1x1x64xf32> to vector<16x16x64xf32>
    %293 = arith.mulf %291, %292 : vector<16x16x64xf32>
    %294 = arith.addf %286, %293 : vector<16x16x64xf32>
    %c35 = arith.constant 35 : index
    %c0_58 = arith.constant 0 : index
    %295 = vector.load %arg2[%c35, %c0_58] : memref<36x64xf32, #tpu.memory_space<vmem>>, vector<1x64xf32>
    %296 = vector.shape_cast %295 : vector<1x64xf32> to vector<64xf32>
    %297 = vector.shape_cast %296 : vector<64xf32> to vector<1x1x64xf32>
    %298 = vector.extract_strided_slice %230 {offsets = [4, 4, 0], sizes = [16, 16, 64], strides = [1, 1, 1]} : vector<20x20x64xbf16> to vector<16x16x64xbf16>
    %299 = arith.extf %298 : vector<16x16x64xbf16> to vector<16x16x64xf32>
    %300 = vector.broadcast %297 : vector<1x1x64xf32> to vector<16x16x64xf32>
    %301 = arith.mulf %299, %300 : vector<16x16x64xf32>
    %302 = arith.addf %294, %301 : vector<16x16x64xf32>
    %cst_59 = arith.constant 0.999994993 : f32
    %303 = vector.broadcast %cst_59 : f32 to vector<16x16x64xf32>
    %304 = arith.mulf %302, %303 : vector<16x16x64xf32>
    %cst_60 = arith.constant 0.000000e+00 : f32
    %305 = vector.broadcast %cst_60 : f32 to vector<16x16x64xf32>
    %306 = arith.maximumf %304, %305 : vector<16x16x64xf32>
    %307 = arith.truncf %306 : vector<16x16x64xf32> to vector<16x16x64xbf16>
    %308 = tpu.concatenate %153, %307 in 2 : vector<16x16x64xbf16>, vector<16x16x64xbf16> -> vector<16x16x128xbf16>
    %c0_61 = arith.constant 0 : index
    %c0_62 = arith.constant 0 : index
    %c0_63 = arith.constant 0 : index
    %c0_64 = arith.constant 0 : index
    %309 = vector.load %arg3[%c0_61, %c0_62, %c0_63, %c0_64] : memref<1x16x16x128xbf16, #tpu.memory_space<vmem>>, vector<1x16x16x128xbf16>
    %310 = vector.shape_cast %309 : vector<1x16x16x128xbf16> to vector<16x16x128xbf16>
    %311 = vector.shape_cast %308 : vector<16x16x128xbf16> to vector<1x16x16x128xbf16>
    tpu.vector_store %arg3[%c0_61, %c0_62, %c0_63, %c0_64], %311 {strides = array<i32>} : memref<1x16x16x128xbf16, #tpu.memory_space<vmem>>, vector<1x16x16x128xbf16>,
    return
  }
  func.func @transform_0(%arg0: i32) -> (i32, i32, i32, i32, i32) {
    %c0_i32 = arith.constant 0 : i32
    %c0_i32_0 = arith.constant 0 : i32
    %c0_i32_1 = arith.constant 0 : i32
    %c0_i32_2 = arith.constant 0 : i32
    %c0_i32_3 = arith.constant 0 : i32
    return %arg0, %c0_i32, %c0_i32_0, %c0_i32_1, %c0_i32_2 : i32, i32, i32, i32, i32
  }
  func.func @transform_1(%arg0: i32) -> (i32, i32) {
    %c0_i32 = arith.constant 0 : i32
    %c0_i32_0 = arith.constant 0 : i32
    %c0_i32_1 = arith.constant 0 : i32
    return %c0_i32, %c0_i32_0 : i32, i32
  }
  func.func @transform_2(%arg0: i32) -> (i32, i32, i32, i32) {
    %c0_i32 = arith.constant 0 : i32
    %c0_i32_0 = arith.constant 0 : i32
    %c0_i32_1 = arith.constant 0 : i32
    %c0_i32_2 = arith.constant 0 : i32
    return %arg0, %c0_i32, %c0_i32_0, %c0_i32_1 : i32, i32, i32, i32
  }
}

module attributes {stable_mosaic.version = 11 : i64} {
  func.func @_mm_kernel(%arg0: i32, %arg1: i32, %arg2: i32, %arg3: memref<512x64xbf16, #tpu.memory_space<vmem>>, %arg4: memref<64x128xbf16, #tpu.memory_space<vmem>>, %arg5: memref<512x128xbf16, #tpu.memory_space<vmem>>) attributes {dimension_semantics = [#tpu.dimension_semantics<parallel>, #tpu.dimension_semantics<parallel>, #tpu.dimension_semantics<arbitrary>], iteration_bounds = array<i64: 1, 1, 1>, scalar_prefetch = 0 : i64, scratch_operands = 0 : i64, tpu.core_type = #tpu.core_type<tc>, window_params = [{transform_indices = @transform_0, window_bounds = array<i64: 512, 64>}, {transform_indices = @transform_1, window_bounds = array<i64: 64, 128>}, {transform_indices = @transform_2, window_bounds = array<i64: 512, 128>}]} {
    %c0 = arith.constant 0 : index
    %c0_0 = arith.constant 0 : index
    %0 = vector.load %arg3[%c0, %c0_0] : memref<512x64xbf16, #tpu.memory_space<vmem>>, vector<512x64xbf16>
    %c0_1 = arith.constant 0 : index
    %c0_2 = arith.constant 0 : index
    %1 = vector.load %arg4[%c0_1, %c0_2] : memref<64x128xbf16, #tpu.memory_space<vmem>>, vector<64x128xbf16>
    %cst = arith.constant dense<0.000000e+00> : vector<512x128xf32>
    %2 = tpu.matmul %0, %1, %cst {dimension_numbers = #tpu.dot_dimension_numbers<[1], [0], [0], [1], [0, 0, 1, 1], [], []>} : vector<512x64xbf16>, vector<64x128xbf16>, vector<512x128xf32> -> vector<512x128xf32>
    %cst_3 = arith.constant 0.999994993 : f32
    %3 = vector.broadcast %cst_3 : f32 to vector<512x128xf32>
    %4 = arith.mulf %2, %3 : vector<512x128xf32>
    %5 = arith.truncf %4 : vector<512x128xf32> to vector<512x128xbf16>
    %c0_4 = arith.constant 0 : index
    %c0_5 = arith.constant 0 : index
    %6 = vector.load %arg5[%c0_4, %c0_5] : memref<512x128xbf16, #tpu.memory_space<vmem>>, vector<512x128xbf16>
    tpu.vector_store %arg5[%c0_4, %c0_5], %5 {strides = array<i32>} : memref<512x128xbf16, #tpu.memory_space<vmem>>, vector<512x128xbf16>,
    return
  }
  func.func @transform_0(%arg0: i32, %arg1: i32, %arg2: i32) -> (i32, i32) {
    %c0_i32 = arith.constant 0 : i32
    return %arg1, %arg2 : i32, i32
  }
  func.func @transform_1(%arg0: i32, %arg1: i32, %arg2: i32) -> (i32, i32) {
    %c0_i32 = arith.constant 0 : i32
    return %arg2, %arg0 : i32, i32
  }
  func.func @transform_2(%arg0: i32, %arg1: i32, %arg2: i32) -> (i32, i32) {
    %c0_i32 = arith.constant 0 : i32
    return %arg1, %arg0 : i32, i32
  }
}

module attributes {stable_mosaic.version = 11 : i64} {
  func.func @_mm_kernel(%arg0: i32, %arg1: i32, %arg2: i32, %arg3: memref<512x64xbf16, #tpu.memory_space<vmem>>, %arg4: memref<64x128xbf16, #tpu.memory_space<vmem>>, %arg5: memref<512x128xbf16, #tpu.memory_space<vmem>>, %arg6: memref<512x128xf32, #tpu.memory_space<vmem>>) attributes {dimension_semantics = [#tpu.dimension_semantics<parallel>, #tpu.dimension_semantics<parallel>, #tpu.dimension_semantics<arbitrary>], iteration_bounds = array<i64: 1, 1, 1>, scalar_prefetch = 0 : i64, scratch_operands = 0 : i64, tpu.core_type = #tpu.core_type<tc>, window_params = [{transform_indices = @transform_0, window_bounds = array<i64: 512, 64>}, {transform_indices = @transform_1, window_bounds = array<i64: 64, 128>}, {transform_indices = @transform_2, window_bounds = array<i64: 512, 128>}, {transform_indices = @transform_3, window_bounds = array<i64: 512, 128>}]} {
    %c0 = arith.constant 0 : index
    %c0_0 = arith.constant 0 : index
    %0 = vector.load %arg3[%c0, %c0_0] : memref<512x64xbf16, #tpu.memory_space<vmem>>, vector<512x64xbf16>
    %c0_1 = arith.constant 0 : index
    %c0_2 = arith.constant 0 : index
    %1 = vector.load %arg4[%c0_1, %c0_2] : memref<64x128xbf16, #tpu.memory_space<vmem>>, vector<64x128xbf16>
    %cst = arith.constant dense<0.000000e+00> : vector<512x128xf32>
    %2 = tpu.matmul %0, %1, %cst {dimension_numbers = #tpu.dot_dimension_numbers<[1], [0], [0], [1], [0, 0, 1, 1], [], []>} : vector<512x64xbf16>, vector<64x128xbf16>, vector<512x128xf32> -> vector<512x128xf32>
    %cst_3 = arith.constant 0.999994993 : f32
    %3 = vector.broadcast %cst_3 : f32 to vector<512x128xf32>
    %4 = arith.mulf %2, %3 : vector<512x128xf32>
    %c0_4 = arith.constant 0 : index
    %c0_5 = arith.constant 0 : index
    %5 = vector.load %arg5[%c0_4, %c0_5] : memref<512x128xbf16, #tpu.memory_space<vmem>>, vector<512x128xbf16>
    %6 = arith.extf %5 : vector<512x128xbf16> to vector<512x128xf32>
    %7 = arith.addf %4, %6 : vector<512x128xf32>
    %cst_6 = arith.constant 0.000000e+00 : f32
    %8 = vector.broadcast %cst_6 : f32 to vector<512x128xf32>
    %9 = arith.maximumf %7, %8 : vector<512x128xf32>
    %c0_7 = arith.constant 0 : index
    %c0_8 = arith.constant 0 : index
    %10 = vector.load %arg6[%c0_7, %c0_8] : memref<512x128xf32, #tpu.memory_space<vmem>>, vector<512x128xf32>
    tpu.vector_store %arg6[%c0_7, %c0_8], %9 {strides = array<i32>} : memref<512x128xf32, #tpu.memory_space<vmem>>, vector<512x128xf32>,
    return
  }
  func.func @transform_0(%arg0: i32, %arg1: i32, %arg2: i32) -> (i32, i32) {
    %c0_i32 = arith.constant 0 : i32
    return %arg1, %arg2 : i32, i32
  }
  func.func @transform_1(%arg0: i32, %arg1: i32, %arg2: i32) -> (i32, i32) {
    %c0_i32 = arith.constant 0 : i32
    return %arg2, %arg0 : i32, i32
  }
  func.func @transform_2(%arg0: i32, %arg1: i32, %arg2: i32) -> (i32, i32) {
    %c0_i32 = arith.constant 0 : i32
    return %arg1, %arg0 : i32, i32
  }
  func.func @transform_3(%arg0: i32, %arg1: i32, %arg2: i32) -> (i32, i32) {
    %c0_i32 = arith.constant 0 : i32
    return %arg1, %arg0 : i32, i32
  }
}

</mosaic_0001>

<llo_original>
// kernel: skunit_forward.4
$region0: #{skunit_forward.4}
  #allocation0 [shape = 'u32[]', space=smem, size = 0x4, offset = 0x4, fixed_abs, tag = 'smem constant byte address 0x4 - core index']
  #allocation1 [shape = 'u32[144,128]{1,0:T(1,128)}', space=vmem, size = 0x12000, scoped, tag = 'internal scratch']
  %s0 = inlined_call_operand.vmem [shape: bf16[512,64], index: 0, kind: input, shape index: {}]
  %s1 = inlined_call_operand.vmem [shape: bf16[64,128], index: 1, kind: input, shape index: {}]
  %s2 = inlined_call_operand.vmem [shape: bf16[512,128], index: 2, kind: output, shape index: {}]
  %s3 = sld [smem:[#allocation0]]
  $region18: #{skunit_forward.4} parent=0
    _
  %s5 = ssub.s32 1, %s3
  %s6 = scalar_select 0, %s5, %s3
  // Predicated region
  $region2: #{skunit_forward.4} parent=0 // pred_check
    _
  $region3: #{skunit_forward.4} parent=0 // pred_check_branch
    %8 = sbr.rel (0) target = $region5
  $region4: #{skunit_forward.4} parent=0 // pred_region
    _
  $region5: #{skunit_forward.4} parent=0 // pred_fallthru
    _
  // Predicated region
  $region6: #{skunit_forward.4} parent=0 // pred_check
    _
  $region7: #{skunit_forward.4} parent=0 // pred_check_branch
    %10 = sbr.rel (0) target = $region9
  $region8: #{skunit_forward.4} parent=0 // pred_region
    _
  $region9: #{skunit_forward.4} parent=0 // pred_fallthru
    _
  %v12 = vld [vmem:[%s0] sm:$0xf]
  %v13 = vld [vmem:[%s0 + $0x4] sm:$0xf]
  %v14 = vld [vmem:[%s0 + $0x8] sm:$0xf]
  %v15 = vld [vmem:[%s0 + $0xc] sm:$0xf]
  %v16 = vld [vmem:[%s0 + $0x10] sm:$0xf]
  %v17 = vld [vmem:[%s0 + $0x14] sm:$0xf]
  %v18 = vld [vmem:[%s0 + $0x18] sm:$0xf]
  %v19 = vld [vmem:[%s0 + $0x1c] sm:$0xf]
  %v20 = vld [vmem:[%s0 + $0x20] sm:$0xf]
  %v21 = vld [vmem:[%s0 + $0x24] sm:$0xf]
  %v22 = vld [vmem:[%s0 + $0x28] sm:$0xf]
  %v23 = vld [vmem:[%s0 + $0x2c] sm:$0xf]
  %v24 = vld [vmem:[%s0 + $0x30] sm:$0xf]
  %v25 = vld [vmem:[%s0 + $0x34] sm:$0xf]
  %v26 = vld [vmem:[%s0 + $0x38] sm:$0xf]
  %v27 = vld [vmem:[%s0 + $0x3c] sm:$0xf]
  %v28 = vld [vmem:[%s0 + $0x40] sm:$0xf]
  %v29 = vld [vmem:[%s0 + $0x44] sm:$0xf]
  %v30 = vld [vmem:[%s0 + $0x48] sm:$0xf]
  %v31 = vld [vmem:[%s0 + $0x4c] sm:$0xf]
  %v32 = vld [vmem:[%s0 + $0x50] sm:$0xf]
  %v33 = vld [vmem:[%s0 + $0x54] sm:$0xf]
  %v34 = vld [vmem:[%s0 + $0x58] sm:$0xf]
  %v35 = vld [vmem:[%s0 + $0x5c] sm:$0xf]
  %v36 = vld [vmem:[%s0 + $0x60] sm:$0xf]
  %v37 = vld [vmem:[%s0 + $0x64] sm:$0xf]
  %v38 = vld [vmem:[%s0 + $0x68] sm:$0xf]
  %v39 = vld [vmem:[%s0 + $0x6c] sm:$0xf]
  %v40 = vld [vmem:[%s0 + $0x70] sm:$0xf]
  %v41 = vld [vmem:[%s0 + $0x74] sm:$0xf]
  %v42 = vld [vmem:[%s0 + $0x78] sm:$0xf]
  %v43 = vld [vmem:[%s0 + $0x7c] sm:$0xf]
  %v44 = vld [vmem:[%s0 + $0x80] sm:$0xf]
  %v45 = vld [vmem:[%s0 + $0x84] sm:$0xf]
  %v46 = vld [vmem:[%s0 + $0x88] sm:$0xf]
  %v47 = vld [vmem:[%s0 + $0x8c] sm:$0xf]
  %v48 = vld [vmem:[%s0 + $0x90] sm:$0xf]
  %v49 = vld [vmem:[%s0 + $0x94] sm:$0xf]
  %v50 = vld [vmem:[%s0 + $0x98] sm:$0xf]
  %v51 = vld [vmem:[%s0 + $0x9c] sm:$0xf]
  %v52 = vld [vmem:[%s0 + $0xa0] sm:$0xf]
  %v53 = vld [vmem:[%s0 + $0xa4] sm:$0xf]
  %v54 = vld [vmem:[%s0 + $0xa8] sm:$0xf]
  %v55 = vld [vmem:[%s0 + $0xac] sm:$0xf]
  %v56 = vld [vmem:[%s0 + $0xb0] sm:$0xf]
  %v57 = vld [vmem:[%s0 + $0xb4] sm:$0xf]
  %v58 = vld [vmem:[%s0 + $0xb8] sm:$0xf]
  %v59 = vld [vmem:[%s0 + $0xbc] sm:$0xf]
  %v60 = vld [vmem:[%s0 + $0xc0] sm:$0xf]
  %v61 = vld [vmem:[%s0 + $0xc4] sm:$0xf]
  %v62 = vld [vmem:[%s0 + $0xc8] sm:$0xf]
  %v63 = vld [vmem:[%s0 + $0xcc] sm:$0xf]
  %v64 = vld [vmem:[%s0 + $0xd0] sm:$0xf]
  %v65 = vld [vmem:[%s0 + $0xd4] sm:$0xf]
  %v66 = vld [vmem:[%s0 + $0xd8] sm:$0xf]
  %v67 = vld [vmem:[%s0 + $0xdc] sm:$0xf]
  %v68 = vld [vmem:[%s0 + $0xe0] sm:$0xf]
  %v69 = vld [vmem:[%s0 + $0xe4] sm:$0xf]
  %v70 = vld [vmem:[%s0 + $0xe8] sm:$0xf]
  %v71 = vld [vmem:[%s0 + $0xec] sm:$0xf]
  %v72 = vld [vmem:[%s0 + $0xf0] sm:$0xf]
  %v73 = vld [vmem:[%s0 + $0xf4] sm:$0xf]
  %v74 = vld [vmem:[%s0 + $0xf8] sm:$0xf]
  %v75 = vld [vmem:[%s0 + $0xfc] sm:$0xf]
  %v76 = vld [vmem:[%s1] sm:$0xf]
  %v77 = vld [vmem:[%s1 + $0x4] sm:$0xf]
  %v78 = vld [vmem:[%s1 + $0x8] sm:$0xf]
  %v79 = vld [vmem:[%s1 + $0xc] sm:$0xf]
  %v80 = vld [vmem:[%s1 + $0x10] sm:$0xf]
  %v81 = vld [vmem:[%s1 + $0x14] sm:$0xf]
  %v82 = vld [vmem:[%s1 + $0x18] sm:$0xf]
  %v83 = vld [vmem:[%s1 + $0x1c] sm:$0xf]
  %v148 = vunpack.c.l.b16 %v12
  %v149 = vunpack.c.l.b16 %v13
  %v150 = vunpack.c.l.b16 %v14
  %v151 = vunpack.c.l.b16 %v15
  %v152 = vunpack.c.l.b16 %v16
  %v153 = vunpack.c.l.b16 %v17
  %v154 = vunpack.c.l.b16 %v18
  %v155 = vunpack.c.l.b16 %v19
  %v156 = vunpack.c.l.b16 %v20
  %v157 = vunpack.c.l.b16 %v21
  %v158 = vunpack.c.l.b16 %v22
  %v159 = vunpack.c.l.b16 %v23
  %v160 = vunpack.c.l.b16 %v24
  %v161 = vunpack.c.l.b16 %v25
  %v162 = vunpack.c.l.b16 %v26
  %v163 = vunpack.c.l.b16 %v27
  %v164 = vunpack.c.l.b16 %v28
  %v165 = vunpack.c.l.b16 %v29
  %v166 = vunpack.c.l.b16 %v30
  %v167 = vunpack.c.l.b16 %v31
  %v168 = vunpack.c.l.b16 %v32
  %v169 = vunpack.c.l.b16 %v33
  %v170 = vunpack.c.l.b16 %v34
  %v171 = vunpack.c.l.b16 %v35
  %v172 = vunpack.c.l.b16 %v36
  %v173 = vunpack.c.l.b16 %v37
  %v174 = vunpack.c.l.b16 %v38
  %v175 = vunpack.c.l.b16 %v39
  %v176 = vunpack.c.l.b16 %v40
  %v177 = vunpack.c.l.b16 %v41
  %v178 = vunpack.c.l.b16 %v42
  %v179 = vunpack.c.l.b16 %v43
  %v180 = vunpack.c.l.b16 %v44
  %v181 = vunpack.c.l.b16 %v45
  %v182 = vunpack.c.l.b16 %v46
  %v183 = vunpack.c.l.b16 %v47
  %v184 = vunpack.c.l.b16 %v48
  %v185 = vunpack.c.l.b16 %v49
  %v186 = vunpack.c.l.b16 %v50
  %v187 = vunpack.c.l.b16 %v51
  %v188 = vunpack.c.l.b16 %v52
  %v189 = vunpack.c.l.b16 %v53
  %v190 = vunpack.c.l.b16 %v54
  %v191 = vunpack.c.l.b16 %v55
  %v192 = vunpack.c.l.b16 %v56
  %v193 = vunpack.c.l.b16 %v57
  %v194 = vunpack.c.l.b16 %v58
  %v195 = vunpack.c.l.b16 %v59
  %v196 = vunpack.c.l.b16 %v60
  %v197 = vunpack.c.l.b16 %v61
  %v198 = vunpack.c.l.b16 %v62
  %v199 = vunpack.c.l.b16 %v63
  %v200 = vunpack.c.l.b16 %v64
  %v201 = vunpack.c.l.b16 %v65
  %v202 = vunpack.c.l.b16 %v66
  %v203 = vunpack.c.l.b16 %v67
  %v204 = vunpack.c.l.b16 %v68
  %v205 = vunpack.c.l.b16 %v69
  %v206 = vunpack.c.l.b16 %v70
  %v207 = vunpack.c.l.b16 %v71
  %v208 = vunpack.c.l.b16 %v72
  %v209 = vunpack.c.l.b16 %v73
  %v210 = vunpack.c.l.b16 %v74
  %v211 = vunpack.c.l.b16 %v75
  %v212 = vpack.c.b16 %v149, %v148
  %v213 = vpack.c.b16 %v151, %v150
  %v214 = vpack.c.b16 %v153, %v152
  %v215 = vpack.c.b16 %v155, %v154
  %v216 = vpack.c.b16 %v157, %v156
  %v217 = vpack.c.b16 %v159, %v158
  %v218 = vpack.c.b16 %v161, %v160
  %v219 = vpack.c.b16 %v163, %v162
  %v220 = vpack.c.b16 %v165, %v164
  %v221 = vpack.c.b16 %v167, %v166
  %v222 = vpack.c.b16 %v169, %v168
  %v223 = vpack.c.b16 %v171, %v170
  %v224 = vpack.c.b16 %v173, %v172
  %v225 = vpack.c.b16 %v175, %v174
  %v226 = vpack.c.b16 %v177, %v176
  %v227 = vpack.c.b16 %v179, %v178
  %v228 = vpack.c.b16 %v181, %v180
  %v229 = vpack.c.b16 %v183, %v182
  %v230 = vpack.c.b16 %v185, %v184
  %v231 = vpack.c.b16 %v187, %v186
  %v232 = vpack.c.b16 %v189, %v188
  %v233 = vpack.c.b16 %v191, %v190
  %v234 = vpack.c.b16 %v193, %v192
  %v235 = vpack.c.b16 %v195, %v194
  %v236 = vpack.c.b16 %v197, %v196
  %v237 = vpack.c.b16 %v199, %v198
  %v238 = vpack.c.b16 %v201, %v200
  %v239 = vpack.c.b16 %v203, %v202
  %v240 = vpack.c.b16 %v205, %v204
  %v241 = vpack.c.b16 %v207, %v206
  %v242 = vpack.c.b16 %v209, %v208
  %v243 = vpack.c.b16 %v211, %v210
  %v252 = vunpack.c.l.b16 %v76
  %v253 = vunpack.c.l.b16 %v77
  %v254 = vunpack.c.l.b16 %v78
  %v255 = vunpack.c.l.b16 %v79
  %v256 = vunpack.c.l.b16 %v80
  %v257 = vunpack.c.l.b16 %v81
  %v258 = vunpack.c.l.b16 %v82
  %v259 = vunpack.c.l.b16 %v83
  %v260 = vpack.c.b16 %v253, %v252
  %v261 = vpack.c.b16 %v255, %v254
  %v262 = vpack.c.b16 %v257, %v256
  %v263 = vpack.c.b16 %v259, %v258
  %vm268 = vcmask 523264
  %v270 = vsel %vm268, %v212, 0
  %v273 = vsel %vm268, %v213, 0
  %v276 = vsel %vm268, %v214, 0
  %v279 = vsel %vm268, %v215, 0
  %v282 = vsel %vm268, %v216, 0
  %v285 = vsel %vm268, %v217, 0
  %v288 = vsel %vm268, %v218, 0
  %v291 = vsel %vm268, %v219, 0
  %v294 = vsel %vm268, %v220, 0
  %v297 = vsel %vm268, %v221, 0
  %v300 = vsel %vm268, %v222, 0
  %v303 = vsel %vm268, %v223, 0
  %v306 = vsel %vm268, %v224, 0
  %v309 = vsel %vm268, %v225, 0
  %v312 = vsel %vm268, %v226, 0
  %v315 = vsel %vm268, %v227, 0
  %v318 = vsel %vm268, %v228, 0
  %v321 = vsel %vm268, %v229, 0
  %v324 = vsel %vm268, %v230, 0
  %v327 = vsel %vm268, %v231, 0
  %v330 = vsel %vm268, %v232, 0
  %v333 = vsel %vm268, %v233, 0
  %v336 = vsel %vm268, %v234, 0
  %v339 = vsel %vm268, %v235, 0
  %v342 = vsel %vm268, %v236, 0
  %v345 = vsel %vm268, %v237, 0
  %v348 = vsel %vm268, %v238, 0
  %v351 = vsel %vm268, %v239, 0
  %v354 = vsel %vm268, %v240, 0
  %v357 = vsel %vm268, %v241, 0
  %v360 = vsel %vm268, %v242, 0
  %v363 = vsel %vm268, %v243, 0
  %365 = vmatprep.subr.bf16.mxu0 0
  %366 = vmatpush1.bf16.msra.mxu0 0
  %367 = vmatprep.subr.bf16.mxu0 0
  %368 = vmatpush1.bf16.msra.mxu0 0
  %369 = vmatprep.subr.bf16.mxu0 0
  %370 = vmatpush1.bf16.msra.mxu0 0
  %371 = vmatprep.subr.bf16.mxu0 0
  %372 = vmatpush1.bf16.msra.mxu0 0
  %373 = vmatprep.subr.bf16.mxu0 0
  %374 = vmatpush1.bf16.msra.mxu0 %v263
  %375 = vmatprep.subr.bf16.mxu0 0
  %376 = vmatpush1.bf16.msra.mxu0 %v262
  %377 = vmatprep.subr.bf16.mxu0 0
  %378 = vmatpush1.bf16.msra.mxu0 %v261
  %379 = vmatprep.subr.bf16.mxu0 0
  %380 = vmatpush1.bf16.msra.mxu0 %v260
  %381 = vmatprep.subr.bf16.mxu0 0
  %382 = vmatpush2.bf16.msra.mxu0 0
  %383 = vmatprep.subr.bf16.mxu0 0
  %384 = vmatpush2.bf16.msra.mxu0 0
  %385 = vmatprep.subr.bf16.mxu0 0
  %386 = vmatpush2.bf16.msra.mxu0 0
  %387 = vmatprep.subr.bf16.mxu0 0
  %388 = vmatpush2.bf16.msra.mxu0 0
  %389 = vmatprep.subr.bf16.mxu0 0
  %390 = vmatpush2.bf16.msra.mxu0 0
  %391 = vmatprep.subr.bf16.mxu0 0
  %392 = vmatpush2.bf16.msra.mxu0 0
  %393 = vmatprep.subr.bf16.mxu0 0
  %394 = vmatpush2.bf16.msra.mxu0 0
  %395 = vmatprep.subr.bf16.mxu0 0
  %396 = vmatpush2.bf16.msra.mxu0 0
  %397 = vmatprep.mubr.bf16.mxu0 0
  %398 = vmatmul.mubr.bf16.gmra.mxu0 %v270
  %v399 = vpop.f32.mrf.mxu0
  %v400 = vadd.f32 0.0, %v399
  %v401 = vpop.f32.mrf.mxu0
  %v402 = vpop.f32.mrf.mxu0
  %v403 = vadd.f32 0.0, %v402
  %v404 = vpop.f32.mrf.mxu0
  %405 = vmatprep.mubr.bf16.mxu0 0
  %406 = vmatmul.mubr.bf16.gmra.mxu0 %v273
  %v407 = vpop.f32.mrf.mxu0
  %v408 = vadd.f32 0.0, %v407
  %v409 = vpop.f32.mrf.mxu0
  %v410 = vpop.f32.mrf.mxu0
  %v411 = vadd.f32 0.0, %v410
  %v412 = vpop.f32.mrf.mxu0
  %413 = vmatprep.mubr.bf16.mxu0 0
  %414 = vmatmul.mubr.bf16.gmra.mxu0 %v276
  %v415 = vpop.f32.mrf.mxu0
  %v416 = vadd.f32 0.0, %v415
  %v417 = vpop.f32.mrf.mxu0
  %v418 = vpop.f32.mrf.mxu0
  %v419 = vadd.f32 0.0, %v418
  %v420 = vpop.f32.mrf.mxu0
  %421 = vmatprep.mubr.bf16.mxu0 0
  %422 = vmatmul.mubr.bf16.gmra.mxu0 %v279
  %v423 = vpop.f32.mrf.mxu0
  %v424 = vadd.f32 0.0, %v423
  %v425 = vpop.f32.mrf.mxu0
  %v426 = vpop.f32.mrf.mxu0
  %v427 = vadd.f32 0.0, %v426
  %v428 = vpop.f32.mrf.mxu0
  %429 = vmatprep.mubr.bf16.mxu0 0
  %430 = vmatmul.mubr.bf16.gmra.mxu0 %v282
  %v431 = vpop.f32.mrf.mxu0
  %v432 = vadd.f32 0.0, %v431
  %v433 = vpop.f32.mrf.mxu0
  %v434 = vpop.f32.mrf.mxu0
  %v435 = vadd.f32 0.0, %v434
  %v436 = vpop.f32.mrf.mxu0
  %437 = vmatprep.mubr.bf16.mxu0 0
  %438 = vmatmul.mubr.bf16.gmra.mxu0 %v285
  %v439 = vpop.f32.mrf.mxu0
  %v440 = vadd.f32 0.0, %v439
  %v441 = vpop.f32.mrf.mxu0
  %v442 = vpop.f32.mrf.mxu0
  %v443 = vadd.f32 0.0, %v442
  %v444 = vpop.f32.mrf.mxu0
  %445 = vmatprep.mubr.bf16.mxu0 0
  %446 = vmatmul.mubr.bf16.gmra.mxu0 %v288
  %v447 = vpop.f32.mrf.mxu0
  %v448 = vadd.f32 0.0, %v447
  %v449 = vpop.f32.mrf.mxu0
  %v450 = vpop.f32.mrf.mxu0
  %v451 = vadd.f32 0.0, %v450
  %v452 = vpop.f32.mrf.mxu0
  %453 = vmatprep.mubr.bf16.mxu0 0
  %454 = vmatmul.mubr.bf16.gmra.mxu0 %v291
  %v455 = vpop.f32.mrf.mxu0
  %v456 = vadd.f32 0.0, %v455
  %v457 = vpop.f32.mrf.mxu0
  %v458 = vpop.f32.mrf.mxu0
  %v459 = vadd.f32 0.0, %v458
  %v460 = vpop.f32.mrf.mxu0
  %461 = vmatprep.mubr.bf16.mxu0 0
  %462 = vmatmul.mubr.bf16.gmra.mxu0 %v294
  %v463 = vpop.f32.mrf.mxu0
  %v464 = vadd.f32 0.0, %v463
  %v465 = vpop.f32.mrf.mxu0
  %v466 = vpop.f32.mrf.mxu0
  %v467 = vadd.f32 0.0, %v466
  %v468 = vpop.f32.mrf.mxu0
  %469 = vmatprep.mubr.bf16.mxu0 0
  %470 = vmatmul.mubr.bf16.gmra.mxu0 %v297
  %v471 = vpop.f32.mrf.mxu0
  %v472 = vadd.f32 0.0, %v471
  %v473 = vpop.f32.mrf.mxu0
  %v474 = vpop.f32.mrf.mxu0
  %v475 = vadd.f32 0.0, %v474
  %v476 = vpop.f32.mrf.mxu0
  %477 = vmatprep.mubr.bf16.mxu0 0
  %478 = vmatmul.mubr.bf16.gmra.mxu0 %v300
  %v479 = vpop.f32.mrf.mxu0
  %v480 = vadd.f32 0.0, %v479
  %v481 = vpop.f32.mrf.mxu0
  %v482 = vpop.f32.mrf.mxu0
  %v483 = vadd.f32 0.0, %v482
  %v484 = vpop.f32.mrf.mxu0
  %485 = vmatprep.mubr.bf16.mxu0 0
  %486 = vmatmul.mubr.bf16.gmra.mxu0 %v303
  %v487 = vpop.f32.mrf.mxu0
  %v488 = vadd.f32 0.0, %v487
  %v489 = vpop.f32.mrf.mxu0
  %v490 = vpop.f32.mrf.mxu0
  %v491 = vadd.f32 0.0, %v490
  %v492 = vpop.f32.mrf.mxu0
  %493 = vmatprep.mubr.bf16.mxu0 0
  %494 = vmatmul.mubr.bf16.gmra.mxu0 %v306
  %v495 = vpop.f32.mrf.mxu0
  %v496 = vadd.f32 0.0, %v495
  %v497 = vpop.f32.mrf.mxu0
  %v498 = vpop.f32.mrf.mxu0
  %v499 = vadd.f32 0.0, %v498
  %v500 = vpop.f32.mrf.mxu0
  %501 = vmatprep.mubr.bf16.mxu0 0
  %502 = vmatmul.mubr.bf16.gmra.mxu0 %v309
  %v503 = vpop.f32.mrf.mxu0
  %v504 = vadd.f32 0.0, %v503
  %v505 = vpop.f32.mrf.mxu0
  %v506 = vpop.f32.mrf.mxu0
  %v507 = vadd.f32 0.0, %v506
  %v508 = vpop.f32.mrf.mxu0
  %509 = vmatprep.mubr.bf16.mxu0 0
  %510 = vmatmul.mubr.bf16.gmra.mxu0 %v312
  %v511 = vpop.f32.mrf.mxu0
  %v512 = vadd.f32 0.0, %v511
  %v513 = vpop.f32.mrf.mxu0
  %v514 = vpop.f32.mrf.mxu0
  %v515 = vadd.f32 0.0, %v514
  %v516 = vpop.f32.mrf.mxu0
  %517 = vmatprep.mubr.bf16.mxu0 0
  %518 = vmatmul.mubr.bf16.gmra.mxu0 %v315
  %v519 = vpop.f32.mrf.mxu0
  %v520 = vadd.f32 0.0, %v519
  %v521 = vpop.f32.mrf.mxu0
  %v522 = vpop.f32.mrf.mxu0
  %v523 = vadd.f32 0.0, %v522
  %v524 = vpop.f32.mrf.mxu0
  %525 = vmatprep.mubr.bf16.mxu0 0
  %526 = vmatmul.mubr.bf16.gmra.mxu0 %v318
  %v527 = vpop.f32.mrf.mxu0
  %v528 = vadd.f32 0.0, %v527
  %v529 = vpop.f32.mrf.mxu0
  %v530 = vpop.f32.mrf.mxu0
  %v531 = vadd.f32 0.0, %v530
  %v532 = vpop.f32.mrf.mxu0
  %533 = vmatprep.mubr.bf16.mxu0 0
  %534 = vmatmul.mubr.bf16.gmra.mxu0 %v321
  %v535 = vpop.f32.mrf.mxu0
  %v536 = vadd.f32 0.0, %v535
  %v537 = vpop.f32.mrf.mxu0
  %v538 = vpop.f32.mrf.mxu0
  %v539 = vadd.f32 0.0, %v538
  %v540 = vpop.f32.mrf.mxu0
  %541 = vmatprep.mubr.bf16.mxu0 0
  %542 = vmatmul.mubr.bf16.gmra.mxu0 %v324
  %v543 = vpop.f32.mrf.mxu0
  %v544 = vadd.f32 0.0, %v543
  %v545 = vpop.f32.mrf.mxu0
  %v546 = vpop.f32.mrf.mxu0
  %v547 = vadd.f32 0.0, %v546
  %v548 = vpop.f32.mrf.mxu0
  %549 = vmatprep.mubr.bf16.mxu0 0
  %550 = vmatmul.mubr.bf16.gmra.mxu0 %v327
  %v551 = vpop.f32.mrf.mxu0
  %v552 = vadd.f32 0.0, %v551
  %v553 = vpop.f32.mrf.mxu0
  %v554 = vpop.f32.mrf.mxu0
  %v555 = vadd.f32 0.0, %v554
  %v556 = vpop.f32.mrf.mxu0
  %557 = vmatprep.mubr.bf16.mxu0 0
  %558 = vmatmul.mubr.bf16.gmra.mxu0 %v330
  %v559 = vpop.f32.mrf.mxu0
  %v560 = vadd.f32 0.0, %v559
  %v561 = vpop.f32.mrf.mxu0
  %v562 = vpop.f32.mrf.mxu0
  %v563 = vadd.f32 0.0, %v562
  %v564 = vpop.f32.mrf.mxu0
  %565 = vmatprep.mubr.bf16.mxu0 0
  %566 = vmatmul.mubr.bf16.gmra.mxu0 %v333
  %v567 = vpop.f32.mrf.mxu0
  %v568 = vadd.f32 0.0, %v567
  %v569 = vpop.f32.mrf.mxu0
  %v570 = vpop.f32.mrf.mxu0
  %v571 = vadd.f32 0.0, %v570
  %v572 = vpop.f32.mrf.mxu0
  %573 = vmatprep.mubr.bf16.mxu0 0
  %574 = vmatmul.mubr.bf16.gmra.mxu0 %v336
  %v575 = vpop.f32.mrf.mxu0
  %v576 = vadd.f32 0.0, %v575
  %v577 = vpop.f32.mrf.mxu0
  %v578 = vpop.f32.mrf.mxu0
  %v579 = vadd.f32 0.0, %v578
  %v580 = vpop.f32.mrf.mxu0
  %581 = vmatprep.mubr.bf16.mxu0 0
  %582 = vmatmul.mubr.bf16.gmra.mxu0 %v339
  %v583 = vpop.f32.mrf.mxu0
  %v584 = vadd.f32 0.0, %v583
  %v585 = vpop.f32.mrf.mxu0
  %v586 = vpop.f32.mrf.mxu0
  %v587 = vadd.f32 0.0, %v586
  %v588 = vpop.f32.mrf.mxu0
  %589 = vmatprep.mubr.bf16.mxu0 0
  %590 = vmatmul.mubr.bf16.gmra.mxu0 %v342
  %v591 = vpop.f32.mrf.mxu0
  %v592 = vadd.f32 0.0, %v591
  %v593 = vpop.f32.mrf.mxu0
  %v594 = vpop.f32.mrf.mxu0
  %v595 = vadd.f32 0.0, %v594
  %v596 = vpop.f32.mrf.mxu0
  %597 = vmatprep.mubr.bf16.mxu0 0
  %598 = vmatmul.mubr.bf16.gmra.mxu0 %v345
  %v599 = vpop.f32.mrf.mxu0
  %v600 = vadd.f32 0.0, %v599
  %v601 = vpop.f32.mrf.mxu0
  %v602 = vpop.f32.mrf.mxu0
  %v603 = vadd.f32 0.0, %v602
  %v604 = vpop.f32.mrf.mxu0
  %605 = vmatprep.mubr.bf16.mxu0 0
  %606 = vmatmul.mubr.bf16.gmra.mxu0 %v348
  %v607 = vpop.f32.mrf.mxu0
  %v608 = vadd.f32 0.0, %v607
  %v609 = vpop.f32.mrf.mxu0
  %v610 = vpop.f32.mrf.mxu0
  %v611 = vadd.f32 0.0, %v610
  %v612 = vpop.f32.mrf.mxu0
  %613 = vmatprep.mubr.bf16.mxu0 0
  %614 = vmatmul.mubr.bf16.gmra.mxu0 %v351
  %v615 = vpop.f32.mrf.mxu0
  %v616 = vadd.f32 0.0, %v615
  %v617 = vpop.f32.mrf.mxu0
  %v618 = vpop.f32.mrf.mxu0
  %v619 = vadd.f32 0.0, %v618
  %v620 = vpop.f32.mrf.mxu0
  %621 = vmatprep.mubr.bf16.mxu0 0
  %622 = vmatmul.mubr.bf16.gmra.mxu0 %v354
  %v623 = vpop.f32.mrf.mxu0
  %v624 = vadd.f32 0.0, %v623
  %v625 = vpop.f32.mrf.mxu0
  %v626 = vpop.f32.mrf.mxu0
  %v627 = vadd.f32 0.0, %v626
  %v628 = vpop.f32.mrf.mxu0
  %629 = vmatprep.mubr.bf16.mxu0 0
  %630 = vmatmul.mubr.bf16.gmra.mxu0 %v357
  %v631 = vpop.f32.mrf.mxu0
  %v632 = vadd.f32 0.0, %v631
  %v633 = vpop.f32.mrf.mxu0
  %v634 = vpop.f32.mrf.mxu0
  %v635 = vadd.f32 0.0, %v634
  %v636 = vpop.f32.mrf.mxu0
  %637 = vmatprep.mubr.bf16.mxu0 0
  %638 = vmatmul.mubr.bf16.gmra.mxu0 %v360
  %v639 = vpop.f32.mrf.mxu0
  %v640 = vadd.f32 0.0, %v639
  %v641 = vpop.f32.mrf.mxu0
  %v642 = vpop.f32.mrf.mxu0
  %v643 = vadd.f32 0.0, %v642
  %v644 = vpop.f32.mrf.mxu0
  %645 = vmatprep.mubr.bf16.mxu0 0
  %646 = vmatmul.mubr.bf16.gmra.mxu0 %v363
  %v647 = vpop.f32.mrf.mxu0
  %v648 = vadd.f32 0.0, %v647
  %v649 = vpop.f32.mrf.mxu0
  %v650 = vpop.f32.mrf.mxu0
  %v651 = vadd.f32 0.0, %v650
  %v652 = vpop.f32.mrf.mxu0
  %653 = vdwg.mxu0
  %v654 = vmul.f32 %v400, 0.999995
  %v655 = vmul.f32 %v403, 0.999995
  %v656 = vmul.f32 %v408, 0.999995
  %v657 = vmul.f32 %v411, 0.999995
  %v658 = vmul.f32 %v416, 0.999995
  %v659 = vmul.f32 %v419, 0.999995
  %v660 = vmul.f32 %v424, 0.999995
  %v661 = vmul.f32 %v427, 0.999995
  %v662 = vmul.f32 %v432, 0.999995
  %v663 = vmul.f32 %v435, 0.999995
  %v664 = vmul.f32 %v440, 0.999995
  %v665 = vmul.f32 %v443, 0.999995
  %v666 = vmul.f32 %v448, 0.999995
  %v667 = vmul.f32 %v451, 0.999995
  %v668 = vmul.f32 %v456, 0.999995
  %v669 = vmul.f32 %v459, 0.999995
  %v670 = vmul.f32 %v464, 0.999995
  %v671 = vmul.f32 %v467, 0.999995
  %v672 = vmul.f32 %v472, 0.999995
  %v673 = vmul.f32 %v475, 0.999995
  %v674 = vmul.f32 %v480, 0.999995
  %v675 = vmul.f32 %v483, 0.999995
  %v676 = vmul.f32 %v488, 0.999995
  %v677 = vmul.f32 %v491, 0.999995
  %v678 = vmul.f32 %v496, 0.999995
  %v679 = vmul.f32 %v499, 0.999995
  %v680 = vmul.f32 %v504, 0.999995
  %v681 = vmul.f32 %v507, 0.999995
  %v682 = vmul.f32 %v512, 0.999995
  %v683 = vmul.f32 %v515, 0.999995
  %v684 = vmul.f32 %v520, 0.999995
  %v685 = vmul.f32 %v523, 0.999995
  %v686 = vmul.f32 %v528, 0.999995
  %v687 = vmul.f32 %v531, 0.999995
  %v688 = vmul.f32 %v536, 0.999995
  %v689 = vmul.f32 %v539, 0.999995
  %v690 = vmul.f32 %v544, 0.999995
  %v691 = vmul.f32 %v547, 0.999995
  %v692 = vmul.f32 %v552, 0.999995
  %v693 = vmul.f32 %v555, 0.999995
  %v694 = vmul.f32 %v560, 0.999995
  %v695 = vmul.f32 %v563, 0.999995
  %v696 = vmul.f32 %v568, 0.999995
  %v697 = vmul.f32 %v571, 0.999995
  %v698 = vmul.f32 %v576, 0.999995
  %v699 = vmul.f32 %v579, 0.999995
  %v700 = vmul.f32 %v584, 0.999995
  %v701 = vmul.f32 %v587, 0.999995
  %v702 = vmul.f32 %v592, 0.999995
  %v703 = vmul.f32 %v595, 0.999995
  %v704 = vmul.f32 %v600, 0.999995
  %v705 = vmul.f32 %v603, 0.999995
  %v706 = vmul.f32 %v608, 0.999995
  %v707 = vmul.f32 %v611, 0.999995
  %v708 = vmul.f32 %v616, 0.999995
  %v709 = vmul.f32 %v619, 0.999995
  %v710 = vmul.f32 %v624, 0.999995
  %v711 = vmul.f32 %v627, 0.999995
  %v712 = vmul.f32 %v632, 0.999995
  %v713 = vmul.f32 %v635, 0.999995
  %v714 = vmul.f32 %v640, 0.999995
  %v715 = vmul.f32 %v643, 0.999995
  %v716 = vmul.f32 %v648, 0.999995
  %v717 = vmul.f32 %v651, 0.999995
  %v718 = vmax.f32 %v654, 0.0
  %v719 = vmax.f32 %v655, 0.0
  %v720 = vmax.f32 %v656, 0.0
  %v721 = vmax.f32 %v657, 0.0
  %v722 = vmax.f32 %v658, 0.0
  %v723 = vmax.f32 %v659, 0.0
  %v724 = vmax.f32 %v660, 0.0
  %v725 = vmax.f32 %v661, 0.0
  %v726 = vmax.f32 %v662, 0.0
  %v727 = vmax.f32 %v663, 0.0
  %v728 = vmax.f32 %v664, 0.0
  %v729 = vmax.f32 %v665, 0.0
  %v730 = vmax.f32 %v666, 0.0
  %v731 = vmax.f32 %v667, 0.0
  %v732 = vmax.f32 %v668, 0.0
  %v733 = vmax.f32 %v669, 0.0
  %v734 = vmax.f32 %v670, 0.0
  %v735 = vmax.f32 %v671, 0.0
  %v736 = vmax.f32 %v672, 0.0
  %v737 = vmax.f32 %v673, 0.0
  %v738 = vmax.f32 %v674, 0.0
  %v739 = vmax.f32 %v675, 0.0
  %v740 = vmax.f32 %v676, 0.0
  %v741 = vmax.f32 %v677, 0.0
  %v742 = vmax.f32 %v678, 0.0
  %v743 = vmax.f32 %v679, 0.0
  %v744 = vmax.f32 %v680, 0.0
  %v745 = vmax.f32 %v681, 0.0
  %v746 = vmax.f32 %v682, 0.0
  %v747 = vmax.f32 %v683, 0.0
  %v748 = vmax.f32 %v684, 0.0
  %v749 = vmax.f32 %v685, 0.0
  %v750 = vmax.f32 %v686, 0.0
  %v751 = vmax.f32 %v687, 0.0
  %v752 = vmax.f32 %v688, 0.0
  %v753 = vmax.f32 %v689, 0.0
  %v754 = vmax.f32 %v690, 0.0
  %v755 = vmax.f32 %v691, 0.0
  %v756 = vmax.f32 %v692, 0.0
  %v757 = vmax.f32 %v693, 0.0
  %v758 = vmax.f32 %v694, 0.0
  %v759 = vmax.f32 %v695, 0.0
  %v760 = vmax.f32 %v696, 0.0
  %v761 = vmax.f32 %v697, 0.0
  %v762 = vmax.f32 %v698, 0.0
  %v763 = vmax.f32 %v699, 0.0
  %v764 = vmax.f32 %v700, 0.0
  %v765 = vmax.f32 %v701, 0.0
  %v766 = vmax.f32 %v702, 0.0
  %v767 = vmax.f32 %v703, 0.0
  %v768 = vmax.f32 %v704, 0.0
  %v769 = vmax.f32 %v705, 0.0
  %v770 = vmax.f32 %v706, 0.0
  %v771 = vmax.f32 %v707, 0.0
  %v772 = vmax.f32 %v708, 0.0
  %v773 = vmax.f32 %v709, 0.0
  %v774 = vmax.f32 %v710, 0.0
  %v775 = vmax.f32 %v711, 0.0
  %v776 = vmax.f32 %v712, 0.0
  %v777 = vmax.f32 %v713, 0.0
  %v778 = vmax.f32 %v714, 0.0
  %v779 = vmax.f32 %v715, 0.0
  %v780 = vmax.f32 %v716, 0.0
  %v781 = vmax.f32 %v717, 0.0
  %v782 = vpack.c.bf16 %v719, %v718
  %v783 = vpack.c.bf16 %v721, %v720
  %v784 = vpack.c.bf16 %v723, %v722
  %v785 = vpack.c.bf16 %v725, %v724
  %v786 = vpack.c.bf16 %v727, %v726
  %v787 = vpack.c.bf16 %v729, %v728
  %v788 = vpack.c.bf16 %v731, %v730
  %v789 = vpack.c.bf16 %v733, %v732
  %v790 = vpack.c.bf16 %v735, %v734
  %v791 = vpack.c.bf16 %v737, %v736
  %v792 = vpack.c.bf16 %v739, %v738
  %v793 = vpack.c.bf16 %v741, %v740
  %v794 = vpack.c.bf16 %v743, %v742
  %v795 = vpack.c.bf16 %v745, %v744
  %v796 = vpack.c.bf16 %v747, %v746
  %v797 = vpack.c.bf16 %v749, %v748
  %v798 = vpack.c.bf16 %v751, %v750
  %v799 = vpack.c.bf16 %v753, %v752
  %v800 = vpack.c.bf16 %v755, %v754
  %v801 = vpack.c.bf16 %v757, %v756
  %v802 = vpack.c.bf16 %v759, %v758
  %v803 = vpack.c.bf16 %v761, %v760
  %v804 = vpack.c.bf16 %v763, %v762
  %v805 = vpack.c.bf16 %v765, %v764
  %v806 = vpack.c.bf16 %v767, %v766
  %v807 = vpack.c.bf16 %v769, %v768
  %v808 = vpack.c.bf16 %v771, %v770
  %v809 = vpack.c.bf16 %v773, %v772
  %v810 = vpack.c.bf16 %v775, %v774
  %v811 = vpack.c.bf16 %v777, %v776
  %v812 = vpack.c.bf16 %v779, %v778
  %v813 = vpack.c.bf16 %v781, %v780
  %v846 = vunpack.c.l.b16 %v782
  %v847 = vunpack.c.h.b16 %v782
  %v848 = vunpack.c.l.b16 %v783
  %v849 = vunpack.c.h.b16 %v783
  %v850 = vunpack.c.l.b16 %v784
  %v851 = vunpack.c.h.b16 %v784
  %v852 = vunpack.c.l.b16 %v785
  %v853 = vunpack.c.h.b16 %v785
  %v854 = vunpack.c.l.b16 %v786
  %v855 = vunpack.c.h.b16 %v786
  %v856 = vunpack.c.l.b16 %v787
  %v857 = vunpack.c.h.b16 %v787
  %v858 = vunpack.c.l.b16 %v788
  %v859 = vunpack.c.h.b16 %v788
  %v860 = vunpack.c.l.b16 %v789
  %v861 = vunpack.c.h.b16 %v789
  %v862 = vunpack.c.l.b16 %v790
  %v863 = vunpack.c.h.b16 %v790
  %v864 = vunpack.c.l.b16 %v791
  %v865 = vunpack.c.h.b16 %v791
  %v866 = vunpack.c.l.b16 %v792
  %v867 = vunpack.c.h.b16 %v792
  %v868 = vunpack.c.l.b16 %v793
  %v869 = vunpack.c.h.b16 %v793
  %v870 = vunpack.c.l.b16 %v794
  %v871 = vunpack.c.h.b16 %v794
  %v872 = vunpack.c.l.b16 %v795
  %v873 = vunpack.c.h.b16 %v795
  %v874 = vunpack.c.l.b16 %v796
  %v875 = vunpack.c.h.b16 %v796
  %v876 = vunpack.c.l.b16 %v797
  %v877 = vunpack.c.h.b16 %v797
  %v878 = vunpack.c.l.b16 %v798
  %v879 = vunpack.c.h.b16 %v798
  %v880 = vunpack.c.l.b16 %v799
  %v881 = vunpack.c.h.b16 %v799
  %v882 = vunpack.c.l.b16 %v800
  %v883 = vunpack.c.h.b16 %v800
  %v884 = vunpack.c.l.b16 %v801
  %v885 = vunpack.c.h.b16 %v801
  %v886 = vunpack.c.l.b16 %v802
  %v887 = vunpack.c.h.b16 %v802
  %v888 = vunpack.c.l.b16 %v803
  %v889 = vunpack.c.h.b16 %v803
  %v890 = vunpack.c.l.b16 %v804
  %v891 = vunpack.c.h.b16 %v804
  %v892 = vunpack.c.l.b16 %v805
  %v893 = vunpack.c.h.b16 %v805
  %v894 = vunpack.c.l.b16 %v806
  %v895 = vunpack.c.h.b16 %v806
  %v896 = vunpack.c.l.b16 %v807
  %v897 = vunpack.c.h.b16 %v807
  %v898 = vunpack.c.l.b16 %v808
  %v899 = vunpack.c.h.b16 %v808
  %v900 = vunpack.c.l.b16 %v809
  %v901 = vunpack.c.h.b16 %v809
  %v902 = vunpack.c.l.b16 %v810
  %v903 = vunpack.c.h.b16 %v810
  %v904 = vunpack.c.l.b16 %v811
  %v905 = vunpack.c.h.b16 %v811
  %v906 = vunpack.c.l.b16 %v812
  %v907 = vunpack.c.h.b16 %v812
  %v908 = vunpack.c.l.b16 %v813
  %v909 = vunpack.c.h.b16 %v813
  %v910 = vpack.c.b16 %v846, %v846
  %v911 = vpack.c.b16 %v847, %v847
  %v912 = vpack.c.b16 %v848, %v848
  %v913 = vpack.c.b16 %v849, %v849
  %v914 = vpack.c.b16 %v850, %v850
  %v915 = vpack.c.b16 %v851, %v851
  %v916 = vpack.c.b16 %v852, %v852
  %v917 = vpack.c.b16 %v853, %v853
  %v918 = vpack.c.b16 %v854, %v854
  %v919 = vpack.c.b16 %v855, %v855
  %v920 = vpack.c.b16 %v856, %v856
  %v921 = vpack.c.b16 %v857, %v857
  %v922 = vpack.c.b16 %v858, %v858
  %v923 = vpack.c.b16 %v859, %v859
  %v924 = vpack.c.b16 %v860, %v860
  %v925 = vpack.c.b16 %v861, %v861
  %v926 = vpack.c.b16 %v862, %v862
  %v927 = vpack.c.b16 %v863, %v863
  %v928 = vpack.c.b16 %v864, %v864
  %v929 = vpack.c.b16 %v865, %v865
  %v930 = vpack.c.b16 %v866, %v866
  %v931 = vpack.c.b16 %v867, %v867
  %v932 = vpack.c.b16 %v868, %v868
  %v933 = vpack.c.b16 %v869, %v869
  %v934 = vpack.c.b16 %v870, %v870
  %v935 = vpack.c.b16 %v871, %v871
  %v936 = vpack.c.b16 %v872, %v872
  %v937 = vpack.c.b16 %v873, %v873
  %v938 = vpack.c.b16 %v874, %v874
  %v939 = vpack.c.b16 %v875, %v875
  %v940 = vpack.c.b16 %v876, %v876
  %v941 = vpack.c.b16 %v877, %v877
  %v942 = vpack.c.b16 %v878, %v878
  %v943 = vpack.c.b16 %v879, %v879
  %v944 = vpack.c.b16 %v880, %v880
  %v945 = vpack.c.b16 %v881, %v881
  %v946 = vpack.c.b16 %v882, %v882
  %v947 = vpack.c.b16 %v883, %v883
  %v948 = vpack.c.b16 %v884, %v884
  %v949 = vpack.c.b16 %v885, %v885
  %v950 = vpack.c.b16 %v886, %v886
  %v951 = vpack.c.b16 %v887, %v887
  %v952 = vpack.c.b16 %v888, %v888
  %v953 = vpack.c.b16 %v889, %v889
  %v954 = vpack.c.b16 %v890, %v890
  %v955 = vpack.c.b16 %v891, %v891
  %v956 = vpack.c.b16 %v892, %v892
  %v957 = vpack.c.b16 %v893, %v893
  %v958 = vpack.c.b16 %v894, %v894
  %v959 = vpack.c.b16 %v895, %v895
  %v960 = vpack.c.b16 %v896, %v896
  %v961 = vpack.c.b16 %v897, %v897
  %v962 = vpack.c.b16 %v898, %v898
  %v963 = vpack.c.b16 %v899, %v899
  %v964 = vpack.c.b16 %v900, %v900
  %v965 = vpack.c.b16 %v901, %v901
  %v966 = vpack.c.b16 %v902, %v902
  %v967 = vpack.c.b16 %v903, %v903
  %v968 = vpack.c.b16 %v904, %v904
  %v969 = vpack.c.b16 %v905, %v905
  %v970 = vpack.c.b16 %v906, %v906
  %v971 = vpack.c.b16 %v907, %v907
  %v972 = vpack.c.b16 %v908, %v908
  %v973 = vpack.c.b16 %v909, %v909
  %1038 = vst [vmem:[%s2] sm:$0xf] %v910
  %1039 = vst [vmem:[%s2 + $0x4] sm:$0xf] %v911
  %1040 = vst [vmem:[%s2 + $0x8] sm:$0xf] %v912
  %1041 = vst [vmem:[%s2 + $0xc] sm:$0xf] %v913
  %1042 = vst [vmem:[%s2 + $0x10] sm:$0xf] %v914
  %1043 = vst [vmem:[%s2 + $0x14] sm:$0xf] %v915
  %1044 = vst [vmem:[%s2 + $0x18] sm:$0xf] %v916
  %1045 = vst [vmem:[%s2 + $0x1c] sm:$0xf] %v917
  %1046 = vst [vmem:[%s2 + $0x20] sm:$0xf] %v918
  %1047 = vst [vmem:[%s2 + $0x24] sm:$0xf] %v919
  %1048 = vst [vmem:[%s2 + $0x28] sm:$0xf] %v920
  %1049 = vst [vmem:[%s2 + $0x2c] sm:$0xf] %v921
  %1050 = vst [vmem:[%s2 + $0x30] sm:$0xf] %v922
  %1051 = vst [vmem:[%s2 + $0x34] sm:$0xf] %v923
  %1052 = vst [vmem:[%s2 + $0x38] sm:$0xf] %v924
  %1053 = vst [vmem:[%s2 + $0x3c] sm:$0xf] %v925
  %1054 = vst [vmem:[%s2 + $0x40] sm:$0xf] %v926
  %1055 = vst [vmem:[%s2 + $0x44] sm:$0xf] %v927
  %1056 = vst [vmem:[%s2 + $0x48] sm:$0xf] %v928
  %1057 = vst [vmem:[%s2 + $0x4c] sm:$0xf] %v929
  %1058 = vst [vmem:[%s2 + $0x50] sm:$0xf] %v930
  %1059 = vst [vmem:[%s2 + $0x54] sm:$0xf] %v931
  %1060 = vst [vmem:[%s2 + $0x58] sm:$0xf] %v932
  %1061 = vst [vmem:[%s2 + $0x5c] sm:$0xf] %v933
  %1062 = vst [vmem:[%s2 + $0x60] sm:$0xf] %v934
  %1063 = vst [vmem:[%s2 + $0x64] sm:$0xf] %v935
  %1064 = vst [vmem:[%s2 + $0x68] sm:$0xf] %v936
  %1065 = vst [vmem:[%s2 + $0x6c] sm:$0xf] %v937
  %1066 = vst [vmem:[%s2 + $0x70] sm:$0xf] %v938
  %1067 = vst [vmem:[%s2 + $0x74] sm:$0xf] %v939
  %1068 = vst [vmem:[%s2 + $0x78] sm:$0xf] %v940
  %1069 = vst [vmem:[%s2 + $0x7c] sm:$0xf] %v941
  %1070 = vst [vmem:[%s2 + $0x80] sm:$0xf] %v942
  %1071 = vst [vmem:[%s2 + $0x84] sm:$0xf] %v943
  %1072 = vst [vmem:[%s2 + $0x88] sm:$0xf] %v944
  %1073 = vst [vmem:[%s2 + $0x8c] sm:$0xf] %v945
  %1074 = vst [vmem:[%s2 + $0x90] sm:$0xf] %v946
  %1075 = vst [vmem:[%s2 + $0x94] sm:$0xf] %v947
  %1076 = vst [vmem:[%s2 + $0x98] sm:$0xf] %v948
  %1077 = vst [vmem:[%s2 + $0x9c] sm:$0xf] %v949
  %1078 = vst [vmem:[%s2 + $0xa0] sm:$0xf] %v950
  %1079 = vst [vmem:[%s2 + $0xa4] sm:$0xf] %v951
  %1080 = vst [vmem:[%s2 + $0xa8] sm:$0xf] %v952
  %1081 = vst [vmem:[%s2 + $0xac] sm:$0xf] %v953
  %1082 = vst [vmem:[%s2 + $0xb0] sm:$0xf] %v954
  %1083 = vst [vmem:[%s2 + $0xb4] sm:$0xf] %v955
  %1084 = vst [vmem:[%s2 + $0xb8] sm:$0xf] %v956
  %1085 = vst [vmem:[%s2 + $0xbc] sm:$0xf] %v957
  %1086 = vst [vmem:[%s2 + $0xc0] sm:$0xf] %v958
  %1087 = vst [vmem:[%s2 + $0xc4] sm:$0xf] %v959
  %1088 = vst [vmem:[%s2 + $0xc8] sm:$0xf] %v960
  %1089 = vst [vmem:[%s2 + $0xcc] sm:$0xf] %v961
  %1090 = vst [vmem:[%s2 + $0xd0] sm:$0xf] %v962
  %1091 = vst [vmem:[%s2 + $0xd4] sm:$0xf] %v963
  %1092 = vst [vmem:[%s2 + $0xd8] sm:$0xf] %v964
  %1093 = vst [vmem:[%s2 + $0xdc] sm:$0xf] %v965
  %1094 = vst [vmem:[%s2 + $0xe0] sm:$0xf] %v966
  %1095 = vst [vmem:[%s2 + $0xe4] sm:$0xf] %v967
  %1096 = vst [vmem:[%s2 + $0xe8] sm:$0xf] %v968
  %1097 = vst [vmem:[%s2 + $0xec] sm:$0xf] %v969
  %1098 = vst [vmem:[%s2 + $0xf0] sm:$0xf] %v970
  %1099 = vst [vmem:[%s2 + $0xf4] sm:$0xf] %v971
  %1100 = vst [vmem:[%s2 + $0xf8] sm:$0xf] %v972
  %1101 = vst [vmem:[%s2 + $0xfc] sm:$0xf] %v973
  // Predicated region
  $region10: #{skunit_forward.4} parent=0 // pred_check
    _
  $region11: #{skunit_forward.4} parent=0 // pred_check_branch
    %1103 = sbr.rel (0) target = $region13
  $region12: #{skunit_forward.4} parent=0 // pred_region
    _
  $region13: #{skunit_forward.4} parent=0 // pred_fallthru
    _
  // Predicated region
  $region14: #{skunit_forward.4} parent=0 // pred_check
    _
  $region15: #{skunit_forward.4} parent=0 // pred_check_branch
    %1105 = sbr.rel (0) target = $region17
  $region16: #{skunit_forward.4} parent=0 // pred_region
    _
  $region17: #{skunit_forward.4} parent=0 // pred_fallthru
    _

// kernel: skunit_forward.5
$region0: #{skunit_forward.5}
  #allocation0 [shape = 'u32[]', space=smem, size = 0x4, offset = 0x4, fixed_abs, tag = 'smem constant byte address 0x4 - core index']
  #allocation1 [shape = 'u32[144,128]{1,0:T(1,128)}', space=vmem, size = 0x12000, scoped, tag = 'internal scratch']
  %s0 = inlined_call_operand.vmem [shape: bf16[2,2,20,20,64], index: 0, kind: input, shape index: {}]
  %s1 = inlined_call_operand.vmem [shape: f32[36,64], index: 1, kind: input, shape index: {}]
  %s2 = inlined_call_operand.vmem [shape: bf16[2,16,16,128], index: 2, kind: output, shape index: {}]
  %s3 = sld [smem:[#allocation0]]
  $region41: #{skunit_forward.5} parent=0
    _
  %s5 = ssub.s32 1, %s3
  %s6 = scalar_select 0, %s5, %s3
  loop: start=0, step=1, limit=4
  $region2: #{skunit_forward.5} parent=0 // loop_pre_header
    _
  $region3: #{skunit_forward.5} parent=0 // loop_header
    %s8 = sphi 0, %s12
    %p9 = scmp.ge.s32.totalorder %s8, 4
    %s18 = sphi 0, %s20
    %s21 = sphi 0, %s18
    %s22 = sphi 0, %s21
    %s38 = sphi 0, %s22
    %s42 = sphi 0, %s42
    %s44 = sphi 0, %s42
    %s45 = sphi 0, %s44
    %s59 = sphi 0, %s45
    %s65 = sphi 0, %s67
    %s68 = sphi 0, %s65
    %s69 = sphi 0, %s68
    %s85 = sphi 0, %s69
  $region4: #{skunit_forward.5} parent=0 // loop_header_branch
    %11 = sbr.rel (%p9) target = $region8
  $region5: #{skunit_forward.5} parent=0 // loop_body
    %s13 = ssub.s32 %s8, 1
    %s14 = ssub.s32 %s8, 2
    %s15 = sadd.s32 %s8, 1
    %s16 = ssub.s32 %s8, %s15
    %p17 = scmp.eq.s32.totalorder %s16, 0
    %s19 = sadd.s32 %s18, 1
    %s20 = scalar_select %p17, %s18, %s19
    %p23 = pneg %p17
    %p24 = scmp.eq.s32.totalorder %s8, 1
    %p25 = por %p23, %p24
    %p26 = scmp.ne.s32.totalorder %s18, %s21
    %p27 = scmp.eq.s32.totalorder %s8, 0
    %p28 = por %p26, %p27
    %p29 = scmp.ne.s32.totalorder %s18, %s21
    %p30 = scmp.eq.s32.totalorder %s13, 1
    %p31 = por %p29, %p30
    %p32 = scmp.ne.s32.totalorder %s21, %s22
    %p33 = scmp.eq.s32.totalorder %s13, 0
    %p34 = por %p32, %p33
    %p35 = scmp.ne.s32.totalorder %s21, %s22
    %p36 = scmp.eq.s32.totalorder %s14, 1
    %p37 = por %p35, %p36
    %p39 = scmp.ne.s32.totalorder %s22, %s38
    %p40 = scmp.eq.s32.totalorder %s14, 0
    %p41 = por %p39, %p40
    %s43 = sadd.s32 %s42, 1
    %p46 = scmp.eq.s32.totalorder %s8, 1
    %p47 = scmp.ne.s32.totalorder %s42, %s44
    %p48 = scmp.eq.s32.totalorder %s8, 0
    %p49 = por %p47, %p48
    %p50 = scmp.ne.s32.totalorder %s42, %s44
    %p51 = scmp.eq.s32.totalorder %s13, 1
    %p52 = por %p50, %p51
    %p53 = scmp.ne.s32.totalorder %s44, %s45
    %p54 = scmp.eq.s32.totalorder %s13, 0
    %p55 = por %p53, %p54
    %p56 = scmp.ne.s32.totalorder %s44, %s45
    %p57 = scmp.eq.s32.totalorder %s14, 1
    %p58 = por %p56, %p57
    %p60 = scmp.ne.s32.totalorder %s45, %s59
    %p61 = scmp.eq.s32.totalorder %s14, 0
    %p62 = por %p60, %p61
    %s63 = ssub.s32 %s8, %s15
    %p64 = scmp.eq.s32.totalorder %s63, 0
    %s66 = sadd.s32 %s65, 1
    %s67 = scalar_select %p64, %s65, %s66
    %p70 = pneg %p64
    %p71 = scmp.eq.s32.totalorder %s8, 1
    %p72 = por %p70, %p71
    %p73 = scmp.ne.s32.totalorder %s65, %s68
    %p74 = scmp.eq.s32.totalorder %s8, 0
    %p75 = por %p73, %p74
    %p76 = scmp.ne.s32.totalorder %s65, %s68
    %p77 = scmp.eq.s32.totalorder %s13, 1
    %p78 = por %p76, %p77
    %p79 = scmp.ne.s32.totalorder %s68, %s69
    %p80 = scmp.eq.s32.totalorder %s13, 0
    %p81 = por %p79, %p80
    %p82 = scmp.ne.s32.totalorder %s68, %s69
    %p83 = scmp.eq.s32.totalorder %s14, 1
    %p84 = por %p82, %p83
    %p86 = scmp.ne.s32.totalorder %s69, %s85
    %p87 = scmp.eq.s32.totalorder %s14, 0
    %p88 = por %p86, %p87
    %p89 = scmp.le.s32.totalorder 1, %s8
    %p90 = scmp.lt.s32.totalorder %s8, 3
    %p91 = pnand %p89, %p90
    %p92 = pneg %p91
    // Predicated region
    $region9: #{skunit_forward.5} parent=5 // pred_check
      _
    $region10: #{skunit_forward.5} parent=5 // pred_check_branch
      %94 = sbr.rel (%p91) target = $region12
    $region11: #{skunit_forward.5} parent=5 // pred_region
      %s95 = ssub.s32 %s8, 1
      // Predicated region
      $region13: #{skunit_forward.5} parent=11 // pred_check
        %p96 = pneg %p55
      $region14: #{skunit_forward.5} parent=11 // pred_check_branch
        %98 = sbr.rel (%p96) target = $region16
      $region15: #{skunit_forward.5} parent=11 // pred_region
        _
      $region16: #{skunit_forward.5} parent=11 // pred_fallthru
        _
    $region12: #{skunit_forward.5} parent=5 // pred_fallthru
      _
    %p99 = scmp.lt.s32.totalorder %s8, 2
    // Predicated region
    $region17: #{skunit_forward.5} parent=5 // pred_check
      %p100 = pneg %p99
    $region18: #{skunit_forward.5} parent=5 // pred_check_branch
      %102 = sbr.rel (%p100) target = $region20
    $region19: #{skunit_forward.5} parent=5 // pred_region
      // Predicated region
      $region21: #{skunit_forward.5} parent=19 // pred_check
        %p103 = pneg %p28
      $region22: #{skunit_forward.5} parent=19 // pred_check_branch
        %105 = sbr.rel (%p103) target = $region24
      $region23: #{skunit_forward.5} parent=19 // pred_region
        %p106 = scmp.lt.s32.totalorder %s8, 1
        %s107 = scalar_select %p106, %s8, 1
        %s108 = smul.addr %s107, 120
        %s109 = smul.addr %s108, 4
        %s110 = scalar_lea.vmem %s0, %s109
      $region24: #{skunit_forward.5} parent=19 // pred_fallthru
        _
    $region20: #{skunit_forward.5} parent=5 // pred_fallthru
      _
    %p111 = scmp.le.s32.totalorder 1, %s8
    %p112 = scmp.lt.s32.totalorder %s8, 3
    %p113 = pnand %p111, %p112
    %p114 = pneg %p113
    // Predicated region
    $region25: #{skunit_forward.5} parent=5 // pred_check
      _
    $region26: #{skunit_forward.5} parent=5 // pred_check_branch
      %116 = sbr.rel (%p113) target = $region28
    $region27: #{skunit_forward.5} parent=5 // pred_region
      %s117 = ssub.s32 %s8, 1
      %p118 = scmp.lt.s32.totalorder %s13, 1
      %s119 = scalar_select %p118, %s13, 1
      %s120 = smul.addr %s119, 120
      %s121 = smul.addr %s120, 4
      %s122 = scalar_lea.vmem %s0, %s121
      %p123 = pneg %p34
      %p124 = pneg %p31
      %p125 = pneg %p55
      %p126 = pneg %p52
      %p127 = pneg %p81
      %p128 = pneg %p78
      %p129 = scmp.lt.s32.totalorder %s13, 1
      %s130 = scalar_select %p129, %s13, 1
      %s131 = smul.addr %s130, 32
      %s132 = smul.addr %s131, 4
      %s133 = scalar_lea.vmem %s2, %s132
      %p134 = scmp.lt.s32.totalorder %s13, 1
      %s135 = scalar_select %p134, %s13, 1
      %s136 = smul.addr %s135, 120
      %s137 = smul.addr %s136, 4
      %s138 = scalar_lea.vmem %s0, %s137
      %p139 = scmp.lt.s32.totalorder %s13, 1
      %s140 = scalar_select %p139, %s13, 1
      %s141 = smul.addr %s140, 32
      %s142 = smul.addr %s141, 4
      %s143 = scalar_lea.vmem %s2, %s142
      %v144 = vld [vmem:[%s138] sm:$0xf]
      %v145 = vld [vmem:[%s138 + $0x4] sm:$0xf]
      %v146 = vld [vmem:[%s138 + $0x8] sm:$0x3]
      %v147 = vld [vmem:[%s138 + $0xc] sm:$0xf]
      %v148 = vld [vmem:[%s138 + $0x10] sm:$0xf]
      %v149 = vld [vmem:[%s138 + $0x14] sm:$0x3]
      %v150 = vld [vmem:[%s138 + $0x18] sm:$0xf]
      %v151 = vld [vmem:[%s138 + $0x1c] sm:$0xf]
      %v152 = vld [vmem:[%s138 + $0x20] sm:$0x3]
      %v153 = vld [vmem:[%s138 + $0x24] sm:$0xf]
      %v154 = vld [vmem:[%s138 + $0x28] sm:$0xf]
      %v155 = vld [vmem:[%s138 + $0x2c] sm:$0x3]
      %v156 = vld [vmem:[%s138 + $0x30] sm:$0xf]
      %v157 = vld [vmem:[%s138 + $0x34] sm:$0xf]
      %v158 = vld [vmem:[%s138 + $0x38] sm:$0x3]
      %v159 = vld [vmem:[%s138 + $0x3c] sm:$0xf]
      %v160 = vld [vmem:[%s138 + $0x40] sm:$0xf]
      %v161 = vld [vmem:[%s138 + $0x44] sm:$0x3]
      %v162 = vld [vmem:[%s138 + $0x48] sm:$0xf]
      %v163 = vld [vmem:[%s138 + $0x4c] sm:$0xf]
      %v164 = vld [vmem:[%s138 + $0x50] sm:$0x3]
      %v165 = vld [vmem:[%s138 + $0x54] sm:$0xf]
      %v166 = vld [vmem:[%s138 + $0x58] sm:$0xf]
      %v167 = vld [vmem:[%s138 + $0x5c] sm:$0x3]
      %v168 = vld [vmem:[%s138 + $0x60] sm:$0xf]
      %v169 = vld [vmem:[%s138 + $0x64] sm:$0xf]
      %v170 = vld [vmem:[%s138 + $0x68] sm:$0x3]
      %v171 = vld [vmem:[%s138 + $0x6c] sm:$0xf]
      %v172 = vld [vmem:[%s138 + $0x70] sm:$0xf]
      %v173 = vld [vmem:[%s138 + $0x74] sm:$0x3]
      %v174 = vld [vmem:[%s138 + $0x78] sm:$0xf]
      %v175 = vld [vmem:[%s138 + $0x7c] sm:$0xf]
      %v176 = vld [vmem:[%s138 + $0x80] sm:$0x3]
      %v177 = vld [vmem:[%s138 + $0x84] sm:$0xf]
      %v178 = vld [vmem:[%s138 + $0x88] sm:$0xf]
      %v179 = vld [vmem:[%s138 + $0x8c] sm:$0x3]
      %v180 = vld [vmem:[%s138 + $0x90] sm:$0xf]
      %v181 = vld [vmem:[%s138 + $0x94] sm:$0xf]
      %v182 = vld [vmem:[%s138 + $0x98] sm:$0x3]
      %v183 = vld [vmem:[%s138 + $0x9c] sm:$0xf]
      %v184 = vld [vmem:[%s138 + $0xa0] sm:$0xf]
      %v185 = vld [vmem:[%s138 + $0xa4] sm:$0x3]
      %v186 = vld [vmem:[%s138 + $0xa8] sm:$0xf]
      %v187 = vld [vmem:[%s138 + $0xac] sm:$0xf]
      %v188 = vld [vmem:[%s138 + $0xb0] sm:$0x3]
      %v189 = vld [vmem:[%s138 + $0xb4] sm:$0xf]
      %v190 = vld [vmem:[%s138 + $0xb8] sm:$0xf]
      %v191 = vld [vmem:[%s138 + $0xbc] sm:$0x3]
      %v192 = vld [vmem:[%s138 + $0xc0] sm:$0xf]
      %v193 = vld [vmem:[%s138 + $0xc4] sm:$0xf]
      %v194 = vld [vmem:[%s138 + $0xc8] sm:$0x3]
      %v195 = vld [vmem:[%s138 + $0xcc] sm:$0xf]
      %v196 = vld [vmem:[%s138 + $0xd0] sm:$0xf]
      %v197 = vld [vmem:[%s138 + $0xd4] sm:$0x3]
      %v198 = vld [vmem:[%s138 + $0xd8] sm:$0xf]
      %v199 = vld [vmem:[%s138 + $0xdc] sm:$0xf]
      %v200 = vld [vmem:[%s138 + $0xe0] sm:$0x3]
      %v201 = vld [vmem:[%s138 + $0xe4] sm:$0xf]
      %v202 = vld [vmem:[%s138 + $0xe8] sm:$0xf]
      %v203 = vld [vmem:[%s138 + $0xec] sm:$0x3]
      %v204 = vld [vmem:[%s1] sm:$0x1]
      %v205 = vunpack.c.l.bf16 %v147
      %v206 = vunpack.c.l.bf16 %v148
      %v207 = vunpack.c.l.bf16 %v149
      %v208 = vunpack.c.l.bf16 %v150
      %v209 = vunpack.c.l.bf16 %v151
      %v210 = vunpack.c.l.bf16 %v152
      %v211 = vunpack.c.l.bf16 %v153
      %v212 = vunpack.c.l.bf16 %v154
      %v213 = vunpack.c.l.bf16 %v155
      %v214 = vunpack.c.l.bf16 %v156
      %v215 = vunpack.c.l.bf16 %v157
      %v216 = vunpack.c.l.bf16 %v158
      %v217 = vunpack.c.l.bf16 %v159
      %v218 = vunpack.c.l.bf16 %v160
      %v219 = vunpack.c.l.bf16 %v161
      %v220 = vunpack.c.l.bf16 %v162
      %v221 = vunpack.c.l.bf16 %v163
      %v222 = vunpack.c.l.bf16 %v164
      %v223 = vunpack.c.l.bf16 %v165
      %v224 = vunpack.c.l.bf16 %v166
      %v225 = vunpack.c.l.bf16 %v167
      %v226 = vunpack.c.l.bf16 %v168
      %v227 = vunpack.c.l.bf16 %v169
      %v228 = vunpack.c.l.bf16 %v170
      %v229 = vunpack.c.l.bf16 %v171
      %v230 = vunpack.c.l.bf16 %v172
      %v231 = vunpack.c.l.bf16 %v173
      %v232 = vunpack.c.l.bf16 %v174
      %v233 = vunpack.c.l.bf16 %v175
      %v234 = vunpack.c.l.bf16 %v176
      %v235 = vunpack.c.l.bf16 %v177
      %v236 = vunpack.c.l.bf16 %v178
      %v237 = vunpack.c.l.bf16 %v179
      %v238 = vunpack.c.l.bf16 %v180
      %v239 = vunpack.c.l.bf16 %v181
      %v240 = vunpack.c.l.bf16 %v182
      %v241 = vunpack.c.l.bf16 %v183
      %v242 = vunpack.c.l.bf16 %v184
      %v243 = vunpack.c.l.bf16 %v185
      %v244 = vunpack.c.l.bf16 %v186
      %v245 = vunpack.c.l.bf16 %v187
      %v246 = vunpack.c.l.bf16 %v188
      %v247 = vunpack.c.l.bf16 %v189
      %v248 = vunpack.c.l.bf16 %v190
      %v249 = vunpack.c.l.bf16 %v191
      %v250 = vunpack.c.l.bf16 %v192
      %v251 = vunpack.c.l.bf16 %v193
      %v252 = vunpack.c.l.bf16 %v194
      %v253 = vlaneseq
      %v254 = vshrl.u32 %v253, 7
      %v255 = vsub.s32 0, %v254
      %v256 = vrot.slane %v204, %v255
      %v257 = vmul.f32 %v205, %v256
      %v258 = vmul.f32 %v206, %v256
      %v259 = vmul.f32 %v207, %v256
      %v260 = vmul.f32 %v208, %v256
      %v261 = vmul.f32 %v209, %v256
      %v262 = vmul.f32 %v210, %v256
      %v263 = vmul.f32 %v211, %v256
      %v264 = vmul.f32 %v212, %v256
      %v265 = vmul.f32 %v213, %v256
      %v266 = vmul.f32 %v214, %v256
      %v267 = vmul.f32 %v215, %v256
      %v268 = vmul.f32 %v216, %v256
      %v269 = vmul.f32 %v217, %v256
      %v270 = vmul.f32 %v218, %v256
      %v271 = vmul.f32 %v219, %v256
      %v272 = vmul.f32 %v220, %v256
      %v273 = vmul.f32 %v221, %v256
      %v274 = vmul.f32 %v222, %v256
      %v275 = vmul.f32 %v223, %v256
      %v276 = vmul.f32 %v224, %v256
      %v277 = vmul.f32 %v225, %v256
      %v278 = vmul.f32 %v226, %v256
      %v279 = vmul.f32 %v227, %v256
      %v280 = vmul.f32 %v228, %v256
      %v281 = vmul.f32 %v229, %v256
      %v282 = vmul.f32 %v230, %v256
      %v283 = vmul.f32 %v231, %v256
      %v284 = vmul.f32 %v232, %v256
      %v285 = vmul.f32 %v233, %v256
      %v286 = vmul.f32 %v234, %v256
      %v287 = vmul.f32 %v235, %v256
      %v288 = vmul.f32 %v236, %v256
      %v289 = vmul.f32 %v237, %v256
      %v290 = vmul.f32 %v238, %v256
      %v291 = vmul.f32 %v239, %v256
      %v292 = vmul.f32 %v240, %v256
      %v293 = vmul.f32 %v241, %v256
      %v294 = vmul.f32 %v242, %v256
      %v295 = vmul.f32 %v243, %v256
      %v296 = vmul.f32 %v244, %v256
      %v297 = vmul.f32 %v245, %v256
      %v298 = vmul.f32 %v246, %v256
      %v299 = vmul.f32 %v247, %v256
      %v300 = vmul.f32 %v248, %v256
      %v301 = vmul.f32 %v249, %v256
      %v302 = vmul.f32 %v250, %v256
      %v303 = vmul.f32 %v251, %v256
      %v304 = vmul.f32 %v252, %v256
      %v305 = vadd.f32 %v257, 0.0
      %v306 = vadd.f32 %v258, 0.0
      %v307 = vadd.f32 %v259, 0.0
      %v308 = vadd.f32 %v260, 0.0
      %v309 = vadd.f32 %v261, 0.0
      %v310 = vadd.f32 %v262, 0.0
      %v311 = vadd.f32 %v263, 0.0
      %v312 = vadd.f32 %v264, 0.0
      %v313 = vadd.f32 %v265, 0.0
      %v314 = vadd.f32 %v266, 0.0
      %v315 = vadd.f32 %v267, 0.0
      %v316 = vadd.f32 %v268, 0.0
      %v317 = vadd.f32 %v269, 0.0
      %v318 = vadd.f32 %v270, 0.0
      %v319 = vadd.f32 %v271, 0.0
      %v320 = vadd.f32 %v272, 0.0
      %v321 = vadd.f32 %v273, 0.0
      %v322 = vadd.f32 %v274, 0.0
      %v323 = vadd.f32 %v275, 0.0
      %v324 = vadd.f32 %v276, 0.0
      %v325 = vadd.f32 %v277, 0.0
      %v326 = vadd.f32 %v278, 0.0
      %v327 = vadd.f32 %v279, 0.0
      %v328 = vadd.f32 %v280, 0.0
      %v329 = vadd.f32 %v281, 0.0
      %v330 = vadd.f32 %v282, 0.0
      %v331 = vadd.f32 %v283, 0.0
      %v332 = vadd.f32 %v284, 0.0
      %v333 = vadd.f32 %v285, 0.0
      %v334 = vadd.f32 %v286, 0.0
      %v335 = vadd.f32 %v287, 0.0
      %v336 = vadd.f32 %v288, 0.0
      %v337 = vadd.f32 %v289, 0.0
      %v338 = vadd.f32 %v290, 0.0
      %v339 = vadd.f32 %v291, 0.0
      %v340 = vadd.f32 %v292, 0.0
      %v341 = vadd.f32 %v293, 0.0
      %v342 = vadd.f32 %v294, 0.0
      %v343 = vadd.f32 %v295, 0.0
      %v344 = vadd.f32 %v296, 0.0
      %v345 = vadd.f32 %v297, 0.0
      %v346 = vadd.f32 %v298, 0.0
      %v347 = vadd.f32 %v299, 0.0
      %v348 = vadd.f32 %v300, 0.0
      %v349 = vadd.f32 %v301, 0.0
      %v350 = vadd.f32 %v302, 0.0
      %v351 = vadd.f32 %v303, 0.0
      %v352 = vadd.f32 %v304, 0.0
      %v353 = vld [vmem:[%s1 + $0x2] sm:$0x1]
      %v354 = vlaneseq
      %v355 = vshrl.u32 %v354, 7
      %v356 = vsub.s32 0, %v355
      %v357 = vrot.slane %v353, %v356
      %v358 = vmul.f32 %v205, %v357
      %v359 = vmul.f32 %v206, %v357
      %v360 = vmul.f32 %v207, %v357
      %v361 = vmul.f32 %v208, %v357
      %v362 = vmul.f32 %v209, %v357
      %v363 = vmul.f32 %v210, %v357
      %v364 = vmul.f32 %v211, %v357
      %v365 = vmul.f32 %v212, %v357
      %v366 = vmul.f32 %v213, %v357
      %v367 = vmul.f32 %v214, %v357
      %v368 = vmul.f32 %v215, %v357
      %v369 = vmul.f32 %v216, %v357
      %v370 = vmul.f32 %v217, %v357
      %v371 = vmul.f32 %v218, %v357
      %v372 = vmul.f32 %v219, %v357
      %v373 = vmul.f32 %v220, %v357
      %v374 = vmul.f32 %v221, %v357
      %v375 = vmul.f32 %v222, %v357
      %v376 = vmul.f32 %v223, %v357
      %v377 = vmul.f32 %v224, %v357
      %v378 = vmul.f32 %v225, %v357
      %v379 = vmul.f32 %v226, %v357
      %v380 = vmul.f32 %v227, %v357
      %v381 = vmul.f32 %v228, %v357
      %v382 = vmul.f32 %v229, %v357
      %v383 = vmul.f32 %v230, %v357
      %v384 = vmul.f32 %v231, %v357
      %v385 = vmul.f32 %v232, %v357
      %v386 = vmul.f32 %v233, %v357
      %v387 = vmul.f32 %v234, %v357
      %v388 = vmul.f32 %v235, %v357
      %v389 = vmul.f32 %v236, %v357
      %v390 = vmul.f32 %v237, %v357
      %v391 = vmul.f32 %v238, %v357
      %v392 = vmul.f32 %v239, %v357
      %v393 = vmul.f32 %v240, %v357
      %v394 = vmul.f32 %v241, %v357
      %v395 = vmul.f32 %v242, %v357
      %v396 = vmul.f32 %v243, %v357
      %v397 = vmul.f32 %v244, %v357
      %v398 = vmul.f32 %v245, %v357
      %v399 = vmul.f32 %v246, %v357
      %v400 = vmul.f32 %v247, %v357
      %v401 = vmul.f32 %v248, %v357
      %v402 = vmul.f32 %v249, %v357
      %v403 = vmul.f32 %v250, %v357
      %v404 = vmul.f32 %v251, %v357
      %v405 = vmul.f32 %v252, %v357
      %vm454 = vcmask 1046528
      %v455 = vrot.slane %v358, 1
      %v456 = vrot.slane %v359, 1
      %v457 = vsel %vm454, %v455, %v456
      %v458 = vrot.slane %v360, 1
      %v459 = vsel %vm454, %v456, %v458
      %v460 = vrot.slane %v361, 1
      %v461 = vrot.slane %v362, 1
      %v462 = vsel %vm454, %v460, %v461
      %v463 = vrot.slane %v363, 1
      %v464 = vsel %vm454, %v461, %v463
      %v465 = vrot.slane %v364, 1
      %v466 = vrot.slane %v365, 1
      %v467 = vsel %vm454, %v465, %v466
      %v468 = vrot.slane %v366, 1
      %v469 = vsel %vm454, %v466, %v468
      %v470 = vrot.slane %v367, 1
      %v471 = vrot.slane %v368, 1
      %v472 = vsel %vm454, %v470, %v471
      %v473 = vrot.slane %v369, 1
      %v474 = vsel %vm454, %v471, %v473
      %v475 = vrot.slane %v370, 1
      %v476 = vrot.slane %v371, 1
      %v477 = vsel %vm454, %v475, %v476
      %v478 = vrot.slane %v372, 1
      %v479 = vsel %vm454, %v476, %v478
      %v480 = vrot.slane %v373, 1
      %v481 = vrot.slane %v374, 1
      %v482 = vsel %vm454, %v480, %v481
      %v483 = vrot.slane %v375, 1
      %v484 = vsel %vm454, %v481, %v483
      %v485 = vrot.slane %v376, 1
      %v486 = vrot.slane %v377, 1
      %v487 = vsel %vm454, %v485, %v486
      %v488 = vrot.slane %v378, 1
      %v489 = vsel %vm454, %v486, %v488
      %v490 = vrot.slane %v379, 1
      %v491 = vrot.slane %v380, 1
      %v492 = vsel %vm454, %v490, %v491
      %v493 = vrot.slane %v381, 1
      %v494 = vsel %vm454, %v491, %v493
      %v495 = vrot.slane %v382, 1
      %v496 = vrot.slane %v383, 1
      %v497 = vsel %vm454, %v495, %v496
      %v498 = vrot.slane %v384, 1
      %v499 = vsel %vm454, %v496, %v498
      %v500 = vrot.slane %v385, 1
      %v501 = vrot.slane %v386, 1
      %v502 = vsel %vm454, %v500, %v501
      %v503 = vrot.slane %v387, 1
      %v504 = vsel %vm454, %v501, %v503
      %v505 = vrot.slane %v388, 1
      %v506 = vrot.slane %v389, 1
      %v507 = vsel %vm454, %v505, %v506
      %v508 = vrot.slane %v390, 1
      %v509 = vsel %vm454, %v506, %v508
      %v510 = vrot.slane %v391, 1
      %v511 = vrot.slane %v392, 1
      %v512 = vsel %vm454, %v510, %v511
      %v513 = vrot.slane %v393, 1
      %v514 = vsel %vm454, %v511, %v513
      %v515 = vrot.slane %v394, 1
      %v516 = vrot.slane %v395, 1
      %v517 = vsel %vm454, %v515, %v516
      %v518 = vrot.slane %v396, 1
      %v519 = vsel %vm454, %v516, %v518
      %v520 = vrot.slane %v397, 1
      %v521 = vrot.slane %v398, 1
      %v522 = vsel %vm454, %v520, %v521
      %v523 = vrot.slane %v399, 1
      %v524 = vsel %vm454, %v521, %v523
      %v525 = vrot.slane %v400, 1
      %v526 = vrot.slane %v401, 1
      %v527 = vsel %vm454, %v525, %v526
      %v528 = vrot.slane %v402, 1
      %v529 = vsel %vm454, %v526, %v528
      %v530 = vrot.slane %v403, 1
      %v531 = vrot.slane %v404, 1
      %v532 = vsel %vm454, %v530, %v531
      %v533 = vrot.slane %v405, 1
      %v534 = vsel %vm454, %v531, %v533
      %v583 = vadd.f32 %v305, %v457
      %v584 = vadd.f32 %v306, %v459
      %v585 = vadd.f32 %v307, %v458
      %v586 = vadd.f32 %v308, %v462
      %v587 = vadd.f32 %v309, %v464
      %v588 = vadd.f32 %v310, %v463
      %v589 = vadd.f32 %v311, %v467
      %v590 = vadd.f32 %v312, %v469
      %v591 = vadd.f32 %v313, %v468
      %v592 = vadd.f32 %v314, %v472
      %v593 = vadd.f32 %v315, %v474
      %v594 = vadd.f32 %v316, %v473
      %v595 = vadd.f32 %v317, %v477
      %v596 = vadd.f32 %v318, %v479
      %v597 = vadd.f32 %v319, %v478
      %v598 = vadd.f32 %v320, %v482
      %v599 = vadd.f32 %v321, %v484
      %v600 = vadd.f32 %v322, %v483
      %v601 = vadd.f32 %v323, %v487
      %v602 = vadd.f32 %v324, %v489
      %v603 = vadd.f32 %v325, %v488
      %v604 = vadd.f32 %v326, %v492
      %v605 = vadd.f32 %v327, %v494
      %v606 = vadd.f32 %v328, %v493
      %v607 = vadd.f32 %v329, %v497
      %v608 = vadd.f32 %v330, %v499
      %v609 = vadd.f32 %v331, %v498
      %v610 = vadd.f32 %v332, %v502
      %v611 = vadd.f32 %v333, %v504
      %v612 = vadd.f32 %v334, %v503
      %v613 = vadd.f32 %v335, %v507
      %v614 = vadd.f32 %v336, %v509
      %v615 = vadd.f32 %v337, %v508
      %v616 = vadd.f32 %v338, %v512
      %v617 = vadd.f32 %v339, %v514
      %v618 = vadd.f32 %v340, %v513
      %v619 = vadd.f32 %v341, %v517
      %v620 = vadd.f32 %v342, %v519
      %v621 = vadd.f32 %v343, %v518
      %v622 = vadd.f32 %v344, %v522
      %v623 = vadd.f32 %v345, %v524
      %v624 = vadd.f32 %v346, %v523
      %v625 = vadd.f32 %v347, %v527
      %v626 = vadd.f32 %v348, %v529
      %v627 = vadd.f32 %v349, %v528
      %v628 = vadd.f32 %v350, %v532
      %v629 = vadd.f32 %v351, %v534
      %v630 = vadd.f32 %v352, %v533
      %v631 = vld [vmem:[%s1 + $0x4] sm:$0x1]
      %v632 = vlaneseq
      %v633 = vshrl.u32 %v632, 7
      %v634 = vsub.s32 0, %v633
      %v635 = vrot.slane %v631, %v634
      %v636 = vmul.f32 %v205, %v635
      %v637 = vmul.f32 %v206, %v635
      %v638 = vmul.f32 %v207, %v635
      %v639 = vmul.f32 %v208, %v635
      %v640 = vmul.f32 %v209, %v635
      %v641 = vmul.f32 %v210, %v635
      %v642 = vmul.f32 %v211, %v635
      %v643 = vmul.f32 %v212, %v635
      %v644 = vmul.f32 %v213, %v635
      %v645 = vmul.f32 %v214, %v635
      %v646 = vmul.f32 %v215, %v635
      %v647 = vmul.f32 %v216, %v635
      %v648 = vmul.f32 %v217, %v635
      %v649 = vmul.f32 %v218, %v635
      %v650 = vmul.f32 %v219, %v635
      %v651 = vmul.f32 %v220, %v635
      %v652 = vmul.f32 %v221, %v635
      %v653 = vmul.f32 %v222, %v635
      %v654 = vmul.f32 %v223, %v635
      %v655 = vmul.f32 %v224, %v635
      %v656 = vmul.f32 %v225, %v635
      %v657 = vmul.f32 %v226, %v635
      %v658 = vmul.f32 %v227, %v635
      %v659 = vmul.f32 %v228, %v635
      %v660 = vmul.f32 %v229, %v635
      %v661 = vmul.f32 %v230, %v635
      %v662 = vmul.f32 %v231, %v635
      %v663 = vmul.f32 %v232, %v635
      %v664 = vmul.f32 %v233, %v635
      %v665 = vmul.f32 %v234, %v635
      %v666 = vmul.f32 %v235, %v635
      %v667 = vmul.f32 %v236, %v635
      %v668 = vmul.f32 %v237, %v635
      %v669 = vmul.f32 %v238, %v635
      %v670 = vmul.f32 %v239, %v635
      %v671 = vmul.f32 %v240, %v635
      %v672 = vmul.f32 %v241, %v635
      %v673 = vmul.f32 %v242, %v635
      %v674 = vmul.f32 %v243, %v635
      %v675 = vmul.f32 %v244, %v635
      %v676 = vmul.f32 %v245, %v635
      %v677 = vmul.f32 %v246, %v635
      %v678 = vmul.f32 %v247, %v635
      %v679 = vmul.f32 %v248, %v635
      %v680 = vmul.f32 %v249, %v635
      %v681 = vmul.f32 %v250, %v635
      %v682 = vmul.f32 %v251, %v635
      %v683 = vmul.f32 %v252, %v635
      %vm732 = vcmask 1045504
      %v733 = vrot.slane %v636, 2
      %v734 = vrot.slane %v637, 2
      %v735 = vsel %vm732, %v733, %v734
      %v736 = vrot.slane %v638, 2
      %v737 = vsel %vm732, %v734, %v736
      %v738 = vrot.slane %v639, 2
      %v739 = vrot.slane %v640, 2
      %v740 = vsel %vm732, %v738, %v739
      %v741 = vrot.slane %v641, 2
      %v742 = vsel %vm732, %v739, %v741
      %v743 = vrot.slane %v642, 2
      %v744 = vrot.slane %v643, 2
      %v745 = vsel %vm732, %v743, %v744
      %v746 = vrot.slane %v644, 2
      %v747 = vsel %vm732, %v744, %v746
      %v748 = vrot.slane %v645, 2
      %v749 = vrot.slane %v646, 2
      %v750 = vsel %vm732, %v748, %v749
      %v751 = vrot.slane %v647, 2
      %v752 = vsel %vm732, %v749, %v751
      %v753 = vrot.slane %v648, 2
      %v754 = vrot.slane %v649, 2
      %v755 = vsel %vm732, %v753, %v754
      %v756 = vrot.slane %v650, 2
      %v757 = vsel %vm732, %v754, %v756
      %v758 = vrot.slane %v651, 2
      %v759 = vrot.slane %v652, 2
      %v760 = vsel %vm732, %v758, %v759
      %v761 = vrot.slane %v653, 2
      %v762 = vsel %vm732, %v759, %v761
      %v763 = vrot.slane %v654, 2
      %v764 = vrot.slane %v655, 2
      %v765 = vsel %vm732, %v763, %v764
      %v766 = vrot.slane %v656, 2
      %v767 = vsel %vm732, %v764, %v766
      %v768 = vrot.slane %v657, 2
      %v769 = vrot.slane %v658, 2
      %v770 = vsel %vm732, %v768, %v769
      %v771 = vrot.slane %v659, 2
      %v772 = vsel %vm732, %v769, %v771
      %v773 = vrot.slane %v660, 2
      %v774 = vrot.slane %v661, 2
      %v775 = vsel %vm732, %v773, %v774
      %v776 = vrot.slane %v662, 2
      %v777 = vsel %vm732, %v774, %v776
      %v778 = vrot.slane %v663, 2
      %v779 = vrot.slane %v664, 2
      %v780 = vsel %vm732, %v778, %v779
      %v781 = vrot.slane %v665, 2
      %v782 = vsel %vm732, %v779, %v781
      %v783 = vrot.slane %v666, 2
      %v784 = vrot.slane %v667, 2
      %v785 = vsel %vm732, %v783, %v784
      %v786 = vrot.slane %v668, 2
      %v787 = vsel %vm732, %v784, %v786
      %v788 = vrot.slane %v669, 2
      %v789 = vrot.slane %v670, 2
      %v790 = vsel %vm732, %v788, %v789
      %v791 = vrot.slane %v671, 2
      %v792 = vsel %vm732, %v789, %v791
      %v793 = vrot.slane %v672, 2
      %v794 = vrot.slane %v673, 2
      %v795 = vsel %vm732, %v793, %v794
      %v796 = vrot.slane %v674, 2
      %v797 = vsel %vm732, %v794, %v796
      %v798 = vrot.slane %v675, 2
      %v799 = vrot.slane %v676, 2
      %v800 = vsel %vm732, %v798, %v799
      %v801 = vrot.slane %v677, 2
      %v802 = vsel %vm732, %v799, %v801
      %v803 = vrot.slane %v678, 2
      %v804 = vrot.slane %v679, 2
      %v805 = vsel %vm732, %v803, %v804
      %v806 = vrot.slane %v680, 2
      %v807 = vsel %vm732, %v804, %v806
      %v808 = vrot.slane %v681, 2
      %v809 = vrot.slane %v682, 2
      %v810 = vsel %vm732, %v808, %v809
      %v811 = vrot.slane %v683, 2
      %v812 = vsel %vm732, %v809, %v811
      %v861 = vadd.f32 %v583, %v735
      %v862 = vadd.f32 %v584, %v737
      %v863 = vadd.f32 %v585, %v736
      %v864 = vadd.f32 %v586, %v740
      %v865 = vadd.f32 %v587, %v742
      %v866 = vadd.f32 %v588, %v741
      %v867 = vadd.f32 %v589, %v745
      %v868 = vadd.f32 %v590, %v747
      %v869 = vadd.f32 %v591, %v746
      %v870 = vadd.f32 %v592, %v750
      %v871 = vadd.f32 %v593, %v752
      %v872 = vadd.f32 %v594, %v751
      %v873 = vadd.f32 %v595, %v755
      %v874 = vadd.f32 %v596, %v757
      %v875 = vadd.f32 %v597, %v756
      %v876 = vadd.f32 %v598, %v760
      %v877 = vadd.f32 %v599, %v762
      %v878 = vadd.f32 %v600, %v761
      %v879 = vadd.f32 %v601, %v765
      %v880 = vadd.f32 %v602, %v767
      %v881 = vadd.f32 %v603, %v766
      %v882 = vadd.f32 %v604, %v770
      %v883 = vadd.f32 %v605, %v772
      %v884 = vadd.f32 %v606, %v771
      %v885 = vadd.f32 %v607, %v775
      %v886 = vadd.f32 %v608, %v777
      %v887 = vadd.f32 %v609, %v776
      %v888 = vadd.f32 %v610, %v780
      %v889 = vadd.f32 %v611, %v782
      %v890 = vadd.f32 %v612, %v781
      %v891 = vadd.f32 %v613, %v785
      %v892 = vadd.f32 %v614, %v787
      %v893 = vadd.f32 %v615, %v786
      %v894 = vadd.f32 %v616, %v790
      %v895 = vadd.f32 %v617, %v792
      %v896 = vadd.f32 %v618, %v791
      %v897 = vadd.f32 %v619, %v795
      %v898 = vadd.f32 %v620, %v797
      %v899 = vadd.f32 %v621, %v796
      %v900 = vadd.f32 %v622, %v800
      %v901 = vadd.f32 %v623, %v802
      %v902 = vadd.f32 %v624, %v801
      %v903 = vadd.f32 %v625, %v805
      %v904 = vadd.f32 %v626, %v807
      %v905 = vadd.f32 %v627, %v806
      %v906 = vadd.f32 %v628, %v810
      %v907 = vadd.f32 %v629, %v812
      %v908 = vadd.f32 %v630, %v811
      %v909 = vld [vmem:[%s1 + $0x6] sm:$0x1]
      %v910 = vunpack.c.l.bf16 %v195
      %v911 = vunpack.c.l.bf16 %v196
      %v912 = vunpack.c.l.bf16 %v197
      %v913 = vlaneseq
      %v914 = vshrl.u32 %v913, 7
      %v915 = vsub.s32 0, %v914
      %v916 = vrot.slane %v909, %v915
      %v917 = vmul.f32 %v208, %v916
      %v918 = vmul.f32 %v209, %v916
      %v919 = vmul.f32 %v210, %v916
      %v920 = vmul.f32 %v211, %v916
      %v921 = vmul.f32 %v212, %v916
      %v922 = vmul.f32 %v213, %v916
      %v923 = vmul.f32 %v214, %v916
      %v924 = vmul.f32 %v215, %v916
      %v925 = vmul.f32 %v216, %v916
      %v926 = vmul.f32 %v217, %v916
      %v927 = vmul.f32 %v218, %v916
      %v928 = vmul.f32 %v219, %v916
      %v929 = vmul.f32 %v220, %v916
      %v930 = vmul.f32 %v221, %v916
      %v931 = vmul.f32 %v222, %v916
      %v932 = vmul.f32 %v223, %v916
      %v933 = vmul.f32 %v224, %v916
      %v934 = vmul.f32 %v225, %v916
      %v935 = vmul.f32 %v226, %v916
      %v936 = vmul.f32 %v227, %v916
      %v937 = vmul.f32 %v228, %v916
      %v938 = vmul.f32 %v229, %v916
      %v939 = vmul.f32 %v230, %v916
      %v940 = vmul.f32 %v231, %v916
      %v941 = vmul.f32 %v232, %v916
      %v942 = vmul.f32 %v233, %v916
      %v943 = vmul.f32 %v234, %v916
      %v944 = vmul.f32 %v235, %v916
      %v945 = vmul.f32 %v236, %v916
      %v946 = vmul.f32 %v237, %v916
      %v947 = vmul.f32 %v238, %v916
      %v948 = vmul.f32 %v239, %v916
      %v949 = vmul.f32 %v240, %v916
      %v950 = vmul.f32 %v241, %v916
      %v951 = vmul.f32 %v242, %v916
      %v952 = vmul.f32 %v243, %v916
      %v953 = vmul.f32 %v244, %v916
      %v954 = vmul.f32 %v245, %v916
      %v955 = vmul.f32 %v246, %v916
      %v956 = vmul.f32 %v247, %v916
      %v957 = vmul.f32 %v248, %v916
      %v958 = vmul.f32 %v249, %v916
      %v959 = vmul.f32 %v250, %v916
      %v960 = vmul.f32 %v251, %v916
      %v961 = vmul.f32 %v252, %v916
      %v962 = vmul.f32 %v910, %v916
      %v963 = vmul.f32 %v911, %v916
      %v964 = vmul.f32 %v912, %v916
      %v965 = vadd.f32 %v861, %v917
      %v966 = vadd.f32 %v862, %v918
      %v967 = vadd.f32 %v863, %v919
      %v968 = vadd.f32 %v864, %v920
      %v969 = vadd.f32 %v865, %v921
      %v970 = vadd.f32 %v866, %v922
      %v971 = vadd.f32 %v867, %v923
      %v972 = vadd.f32 %v868, %v924
      %v973 = vadd.f32 %v869, %v925
      %v974 = vadd.f32 %v870, %v926
      %v975 = vadd.f32 %v871, %v927
      %v976 = vadd.f32 %v872, %v928
      %v977 = vadd.f32 %v873, %v929
      %v978 = vadd.f32 %v874, %v930
      %v979 = vadd.f32 %v875, %v931
      %v980 = vadd.f32 %v876, %v932
      %v981 = vadd.f32 %v877, %v933
      %v982 = vadd.f32 %v878, %v934
      %v983 = vadd.f32 %v879, %v935
      %v984 = vadd.f32 %v880, %v936
      %v985 = vadd.f32 %v881, %v937
      %v986 = vadd.f32 %v882, %v938
      %v987 = vadd.f32 %v883, %v939
      %v988 = vadd.f32 %v884, %v940
      %v989 = vadd.f32 %v885, %v941
      %v990 = vadd.f32 %v886, %v942
      %v991 = vadd.f32 %v887, %v943
      %v992 = vadd.f32 %v888, %v944
      %v993 = vadd.f32 %v889, %v945
      %v994 = vadd.f32 %v890, %v946
      %v995 = vadd.f32 %v891, %v947
      %v996 = vadd.f32 %v892, %v948
      %v997 = vadd.f32 %v893, %v949
      %v998 = vadd.f32 %v894, %v950
      %v999 = vadd.f32 %v895, %v951
      %v1000 = vadd.f32 %v896, %v952
      %v1001 = vadd.f32 %v897, %v953
      %v1002 = vadd.f32 %v898, %v954
      %v1003 = vadd.f32 %v899, %v955
      %v1004 = vadd.f32 %v900, %v956
      %v1005 = vadd.f32 %v901, %v957
      %v1006 = vadd.f32 %v902, %v958
      %v1007 = vadd.f32 %v903, %v959
      %v1008 = vadd.f32 %v904, %v960
      %v1009 = vadd.f32 %v905, %v961
      %v1010 = vadd.f32 %v906, %v962
      %v1011 = vadd.f32 %v907, %v963
      %v1012 = vadd.f32 %v908, %v964
      %v1013 = vld [vmem:[%s1 + $0x8] sm:$0x1]
      %v1014 = vlaneseq
      %v1015 = vshrl.u32 %v1014, 7
      %v1016 = vsub.s32 0, %v1015
      %v1017 = vrot.slane %v1013, %v1016
      %v1018 = vmul.f32 %v208, %v1017
      %v1019 = vmul.f32 %v209, %v1017
      %v1020 = vmul.f32 %v210, %v1017
      %v1021 = vmul.f32 %v211, %v1017
      %v1022 = vmul.f32 %v212, %v1017
      %v1023 = vmul.f32 %v213, %v1017
      %v1024 = vmul.f32 %v214, %v1017
      %v1025 = vmul.f32 %v215, %v1017
      %v1026 = vmul.f32 %v216, %v1017
      %v1027 = vmul.f32 %v217, %v1017
      %v1028 = vmul.f32 %v218, %v1017
      %v1029 = vmul.f32 %v219, %v1017
      %v1030 = vmul.f32 %v220, %v1017
      %v1031 = vmul.f32 %v221, %v1017
      %v1032 = vmul.f32 %v222, %v1017
      %v1033 = vmul.f32 %v223, %v1017
      %v1034 = vmul.f32 %v224, %v1017
      %v1035 = vmul.f32 %v225, %v1017
      %v1036 = vmul.f32 %v226, %v1017
      %v1037 = vmul.f32 %v227, %v1017
      %v1038 = vmul.f32 %v228, %v1017
      %v1039 = vmul.f32 %v229, %v1017
      %v1040 = vmul.f32 %v230, %v1017
      %v1041 = vmul.f32 %v231, %v1017
      %v1042 = vmul.f32 %v232, %v1017
      %v1043 = vmul.f32 %v233, %v1017
      %v1044 = vmul.f32 %v234, %v1017
      %v1045 = vmul.f32 %v235, %v1017
      %v1046 = vmul.f32 %v236, %v1017
      %v1047 = vmul.f32 %v237, %v1017
      %v1048 = vmul.f32 %v238, %v1017
      %v1049 = vmul.f32 %v239, %v1017
      %v1050 = vmul.f32 %v240, %v1017
      %v1051 = vmul.f32 %v241, %v1017
      %v1052 = vmul.f32 %v242, %v1017
      %v1053 = vmul.f32 %v243, %v1017
      %v1054 = vmul.f32 %v244, %v1017
      %v1055 = vmul.f32 %v245, %v1017
      %v1056 = vmul.f32 %v246, %v1017
      %v1057 = vmul.f32 %v247, %v1017
      %v1058 = vmul.f32 %v248, %v1017
      %v1059 = vmul.f32 %v249, %v1017
      %v1060 = vmul.f32 %v250, %v1017
      %v1061 = vmul.f32 %v251, %v1017
      %v1062 = vmul.f32 %v252, %v1017
      %v1063 = vmul.f32 %v910, %v1017
      %v1064 = vmul.f32 %v911, %v1017
      %v1065 = vmul.f32 %v912, %v1017
      %v1114 = vrot.slane %v1018, 1
      %v1115 = vrot.slane %v1019, 1
      %v1116 = vsel %vm454, %v1114, %v1115
      %v1117 = vrot.slane %v1020, 1
      %v1118 = vsel %vm454, %v1115, %v1117
      %v1119 = vrot.slane %v1021, 1
      %v1120 = vrot.slane %v1022, 1
      %v1121 = vsel %vm454, %v1119, %v1120
      %v1122 = vrot.slane %v1023, 1
      %v1123 = vsel %vm454, %v1120, %v1122
      %v1124 = vrot.slane %v1024, 1
      %v1125 = vrot.slane %v1025, 1
      %v1126 = vsel %vm454, %v1124, %v1125
      %v1127 = vrot.slane %v1026, 1
      %v1128 = vsel %vm454, %v1125, %v1127
      %v1129 = vrot.slane %v1027, 1
      %v1130 = vrot.slane %v1028, 1
      %v1131 = vsel %vm454, %v1129, %v1130
      %v1132 = vrot.slane %v1029, 1
      %v1133 = vsel %vm454, %v1130, %v1132
      %v1134 = vrot.slane %v1030, 1
      %v1135 = vrot.slane %v1031, 1
      %v1136 = vsel %vm454, %v1134, %v1135
      %v1137 = vrot.slane %v1032, 1
      %v1138 = vsel %vm454, %v1135, %v1137
      %v1139 = vrot.slane %v1033, 1
      %v1140 = vrot.slane %v1034, 1
      %v1141 = vsel %vm454, %v1139, %v1140
      %v1142 = vrot.slane %v1035, 1
      %v1143 = vsel %vm454, %v1140, %v1142
      %v1144 = vrot.slane %v1036, 1
      %v1145 = vrot.slane %v1037, 1
      %v1146 = vsel %vm454, %v1144, %v1145
      %v1147 = vrot.slane %v1038, 1
      %v1148 = vsel %vm454, %v1145, %v1147
      %v1149 = vrot.slane %v1039, 1
      %v1150 = vrot.slane %v1040, 1
      %v1151 = vsel %vm454, %v1149, %v1150
      %v1152 = vrot.slane %v1041, 1
      %v1153 = vsel %vm454, %v1150, %v1152
      %v1154 = vrot.slane %v1042, 1
      %v1155 = vrot.slane %v1043, 1
      %v1156 = vsel %vm454, %v1154, %v1155
      %v1157 = vrot.slane %v1044, 1
      %v1158 = vsel %vm454, %v1155, %v1157
      %v1159 = vrot.slane %v1045, 1
      %v1160 = vrot.slane %v1046, 1
      %v1161 = vsel %vm454, %v1159, %v1160
      %v1162 = vrot.slane %v1047, 1
      %v1163 = vsel %vm454, %v1160, %v1162
      %v1164 = vrot.slane %v1048, 1
      %v1165 = vrot.slane %v1049, 1
      %v1166 = vsel %vm454, %v1164, %v1165
      %v1167 = vrot.slane %v1050, 1
      %v1168 = vsel %vm454, %v1165, %v1167
      %v1169 = vrot.slane %v1051, 1
      %v1170 = vrot.slane %v1052, 1
      %v1171 = vsel %vm454, %v1169, %v1170
      %v1172 = vrot.slane %v1053, 1
      %v1173 = vsel %vm454, %v1170, %v1172
      %v1174 = vrot.slane %v1054, 1
      %v1175 = vrot.slane %v1055, 1
      %v1176 = vsel %vm454, %v1174, %v1175
      %v1177 = vrot.slane %v1056, 1
      %v1178 = vsel %vm454, %v1175, %v1177
      %v1179 = vrot.slane %v1057, 1
      %v1180 = vrot.slane %v1058, 1
      %v1181 = vsel %vm454, %v1179, %v1180
      %v1182 = vrot.slane %v1059, 1
      %v1183 = vsel %vm454, %v1180, %v1182
      %v1184 = vrot.slane %v1060, 1
      %v1185 = vrot.slane %v1061, 1
      %v1186 = vsel %vm454, %v1184, %v1185
      %v1187 = vrot.slane %v1062, 1
      %v1188 = vsel %vm454, %v1185, %v1187
      %v1189 = vrot.slane %v1063, 1
      %v1190 = vrot.slane %v1064, 1
      %v1191 = vsel %vm454, %v1189, %v1190
      %v1192 = vrot.slane %v1065, 1
      %v1193 = vsel %vm454, %v1190, %v1192
      %v1242 = vadd.f32 %v965, %v1116
      %v1243 = vadd.f32 %v966, %v1118
      %v1244 = vadd.f32 %v967, %v1117
      %v1245 = vadd.f32 %v968, %v1121
      %v1246 = vadd.f32 %v969, %v1123
      %v1247 = vadd.f32 %v970, %v1122
      %v1248 = vadd.f32 %v971, %v1126
      %v1249 = vadd.f32 %v972, %v1128
      %v1250 = vadd.f32 %v973, %v1127
      %v1251 = vadd.f32 %v974, %v1131
      %v1252 = vadd.f32 %v975, %v1133
      %v1253 = vadd.f32 %v976, %v1132
      %v1254 = vadd.f32 %v977, %v1136
      %v1255 = vadd.f32 %v978, %v1138
      %v1256 = vadd.f32 %v979, %v1137
      %v1257 = vadd.f32 %v980, %v1141
      %v1258 = vadd.f32 %v981, %v1143
      %v1259 = vadd.f32 %v982, %v1142
      %v1260 = vadd.f32 %v983, %v1146
      %v1261 = vadd.f32 %v984, %v1148
      %v1262 = vadd.f32 %v985, %v1147
      %v1263 = vadd.f32 %v986, %v1151
      %v1264 = vadd.f32 %v987, %v1153
      %v1265 = vadd.f32 %v988, %v1152
      %v1266 = vadd.f32 %v989, %v1156
      %v1267 = vadd.f32 %v990, %v1158
      %v1268 = vadd.f32 %v991, %v1157
      %v1269 = vadd.f32 %v992, %v1161
      %v1270 = vadd.f32 %v993, %v1163
      %v1271 = vadd.f32 %v994, %v1162
      %v1272 = vadd.f32 %v995, %v1166
      %v1273 = vadd.f32 %v996, %v1168
      %v1274 = vadd.f32 %v997, %v1167
      %v1275 = vadd.f32 %v998, %v1171
      %v1276 = vadd.f32 %v999, %v1173
      %v1277 = vadd.f32 %v1000, %v1172
      %v1278 = vadd.f32 %v1001, %v1176
      %v1279 = vadd.f32 %v1002, %v1178
      %v1280 = vadd.f32 %v1003, %v1177
      %v1281 = vadd.f32 %v1004, %v1181
      %v1282 = vadd.f32 %v1005, %v1183
      %v1283 = vadd.f32 %v1006, %v1182
      %v1284 = vadd.f32 %v1007, %v1186
      %v1285 = vadd.f32 %v1008, %v1188
      %v1286 = vadd.f32 %v1009, %v1187
      %v1287 = vadd.f32 %v1010, %v1191
      %v1288 = vadd.f32 %v1011, %v1193
      %v1289 = vadd.f32 %v1012, %v1192
      %v1290 = vld [vmem:[%s1 + $0xa] sm:$0x1]
      %v1291 = vlaneseq
      %v1292 = vshrl.u32 %v1291, 7
      %v1293 = vsub.s32 0, %v1292
      %v1294 = vrot.slane %v1290, %v1293
      %v1295 = vmul.f32 %v208, %v1294
      %v1296 = vmul.f32 %v209, %v1294
      %v1297 = vmul.f32 %v210, %v1294
      %v1298 = vmul.f32 %v211, %v1294
      %v1299 = vmul.f32 %v212, %v1294
      %v1300 = vmul.f32 %v213, %v1294
      %v1301 = vmul.f32 %v214, %v1294
      %v1302 = vmul.f32 %v215, %v1294
      %v1303 = vmul.f32 %v216, %v1294
      %v1304 = vmul.f32 %v217, %v1294
      %v1305 = vmul.f32 %v218, %v1294
      %v1306 = vmul.f32 %v219, %v1294
      %v1307 = vmul.f32 %v220, %v1294
      %v1308 = vmul.f32 %v221, %v1294
      %v1309 = vmul.f32 %v222, %v1294
      %v1310 = vmul.f32 %v223, %v1294
      %v1311 = vmul.f32 %v224, %v1294
      %v1312 = vmul.f32 %v225, %v1294
      %v1313 = vmul.f32 %v226, %v1294
      %v1314 = vmul.f32 %v227, %v1294
      %v1315 = vmul.f32 %v228, %v1294
      %v1316 = vmul.f32 %v229, %v1294
      %v1317 = vmul.f32 %v230, %v1294
      %v1318 = vmul.f32 %v231, %v1294
      %v1319 = vmul.f32 %v232, %v1294
      %v1320 = vmul.f32 %v233, %v1294
      %v1321 = vmul.f32 %v234, %v1294
      %v1322 = vmul.f32 %v235, %v1294
      %v1323 = vmul.f32 %v236, %v1294
      %v1324 = vmul.f32 %v237, %v1294
      %v1325 = vmul.f32 %v238, %v1294
      %v1326 = vmul.f32 %v239, %v1294
      %v1327 = vmul.f32 %v240, %v1294
      %v1328 = vmul.f32 %v241, %v1294
      %v1329 = vmul.f32 %v242, %v1294
      %v1330 = vmul.f32 %v243, %v1294
      %v1331 = vmul.f32 %v244, %v1294
      %v1332 = vmul.f32 %v245, %v1294
      %v1333 = vmul.f32 %v246, %v1294
      %v1334 = vmul.f32 %v247, %v1294
      %v1335 = vmul.f32 %v248, %v1294
      %v1336 = vmul.f32 %v249, %v1294
      %v1337 = vmul.f32 %v250, %v1294
      %v1338 = vmul.f32 %v251, %v1294
      %v1339 = vmul.f32 %v252, %v1294
      %v1340 = vmul.f32 %v910, %v1294
      %v1341 = vmul.f32 %v911, %v1294
      %v1342 = vmul.f32 %v912, %v1294
      %v1391 = vrot.slane %v1295, 2
      %v1392 = vrot.slane %v1296, 2
      %v1393 = vsel %vm732, %v1391, %v1392
      %v1394 = vrot.slane %v1297, 2
      %v1395 = vsel %vm732, %v1392, %v1394
      %v1396 = vrot.slane %v1298, 2
      %v1397 = vrot.slane %v1299, 2
      %v1398 = vsel %vm732, %v1396, %v1397
      %v1399 = vrot.slane %v1300, 2
      %v1400 = vsel %vm732, %v1397, %v1399
      %v1401 = vrot.slane %v1301, 2
      %v1402 = vrot.slane %v1302, 2
      %v1403 = vsel %vm732, %v1401, %v1402
      %v1404 = vrot.slane %v1303, 2
      %v1405 = vsel %vm732, %v1402, %v1404
      %v1406 = vrot.slane %v1304, 2
      %v1407 = vrot.slane %v1305, 2
      %v1408 = vsel %vm732, %v1406, %v1407
      %v1409 = vrot.slane %v1306, 2
      %v1410 = vsel %vm732, %v1407, %v1409
      %v1411 = vrot.slane %v1307, 2
      %v1412 = vrot.slane %v1308, 2
      %v1413 = vsel %vm732, %v1411, %v1412
      %v1414 = vrot.slane %v1309, 2
      %v1415 = vsel %vm732, %v1412, %v1414
      %v1416 = vrot.slane %v1310, 2
      %v1417 = vrot.slane %v1311, 2
      %v1418 = vsel %vm732, %v1416, %v1417
      %v1419 = vrot.slane %v1312, 2
      %v1420 = vsel %vm732, %v1417, %v1419
      %v1421 = vrot.slane %v1313, 2
      %v1422 = vrot.slane %v1314, 2
      %v1423 = vsel %vm732, %v1421, %v1422
      %v1424 = vrot.slane %v1315, 2
      %v1425 = vsel %vm732, %v1422, %v1424
      %v1426 = vrot.slane %v1316, 2
      %v1427 = vrot.slane %v1317, 2
      %v1428 = vsel %vm732, %v1426, %v1427
      %v1429 = vrot.slane %v1318, 2
      %v1430 = vsel %vm732, %v1427, %v1429
      %v1431 = vrot.slane %v1319, 2
      %v1432 = vrot.slane %v1320, 2
      %v1433 = vsel %vm732, %v1431, %v1432
      %v1434 = vrot.slane %v1321, 2
      %v1435 = vsel %vm732, %v1432, %v1434
      %v1436 = vrot.slane %v1322, 2
      %v1437 = vrot.slane %v1323, 2
      %v1438 = vsel %vm732, %v1436, %v1437
      %v1439 = vrot.slane %v1324, 2
      %v1440 = vsel %vm732, %v1437, %v1439
      %v1441 = vrot.slane %v1325, 2
      %v1442 = vrot.slane %v1326, 2
      %v1443 = vsel %vm732, %v1441, %v1442
      %v1444 = vrot.slane %v1327, 2
      %v1445 = vsel %vm732, %v1442, %v1444
      %v1446 = vrot.slane %v1328, 2
      %v1447 = vrot.slane %v1329, 2
      %v1448 = vsel %vm732, %v1446, %v1447
      %v1449 = vrot.slane %v1330, 2
      %v1450 = vsel %vm732, %v1447, %v1449
      %v1451 = vrot.slane %v1331, 2
      %v1452 = vrot.slane %v1332, 2
      %v1453 = vsel %vm732, %v1451, %v1452
      %v1454 = vrot.slane %v1333, 2
      %v1455 = vsel %vm732, %v1452, %v1454
      %v1456 = vrot.slane %v1334, 2
      %v1457 = vrot.slane %v1335, 2
      %v1458 = vsel %vm732, %v1456, %v1457
      %v1459 = vrot.slane %v1336, 2
      %v1460 = vsel %vm732, %v1457, %v1459
      %v1461 = vrot.slane %v1337, 2
      %v1462 = vrot.slane %v1338, 2
      %v1463 = vsel %vm732, %v1461, %v1462
      %v1464 = vrot.slane %v1339, 2
      %v1465 = vsel %vm732, %v1462, %v1464
      %v1466 = vrot.slane %v1340, 2
      %v1467 = vrot.slane %v1341, 2
      %v1468 = vsel %vm732, %v1466, %v1467
      %v1469 = vrot.slane %v1342, 2
      %v1470 = vsel %vm732, %v1467, %v1469
      %v1519 = vadd.f32 %v1242, %v1393
      %v1520 = vadd.f32 %v1243, %v1395
      %v1521 = vadd.f32 %v1244, %v1394
      %v1522 = vadd.f32 %v1245, %v1398
      %v1523 = vadd.f32 %v1246, %v1400
      %v1524 = vadd.f32 %v1247, %v1399
      %v1525 = vadd.f32 %v1248, %v1403
      %v1526 = vadd.f32 %v1249, %v1405
      %v1527 = vadd.f32 %v1250, %v1404
      %v1528 = vadd.f32 %v1251, %v1408
      %v1529 = vadd.f32 %v1252, %v1410
      %v1530 = vadd.f32 %v1253, %v1409
      %v1531 = vadd.f32 %v1254, %v1413
      %v1532 = vadd.f32 %v1255, %v1415
      %v1533 = vadd.f32 %v1256, %v1414
      %v1534 = vadd.f32 %v1257, %v1418
      %v1535 = vadd.f32 %v1258, %v1420
      %v1536 = vadd.f32 %v1259, %v1419
      %v1537 = vadd.f32 %v1260, %v1423
      %v1538 = vadd.f32 %v1261, %v1425
      %v1539 = vadd.f32 %v1262, %v1424
      %v1540 = vadd.f32 %v1263, %v1428
      %v1541 = vadd.f32 %v1264, %v1430
      %v1542 = vadd.f32 %v1265, %v1429
      %v1543 = vadd.f32 %v1266, %v1433
      %v1544 = vadd.f32 %v1267, %v1435
      %v1545 = vadd.f32 %v1268, %v1434
      %v1546 = vadd.f32 %v1269, %v1438
      %v1547 = vadd.f32 %v1270, %v1440
      %v1548 = vadd.f32 %v1271, %v1439
      %v1549 = vadd.f32 %v1272, %v1443
      %v1550 = vadd.f32 %v1273, %v1445
      %v1551 = vadd.f32 %v1274, %v1444
      %v1552 = vadd.f32 %v1275, %v1448
      %v1553 = vadd.f32 %v1276, %v1450
      %v1554 = vadd.f32 %v1277, %v1449
      %v1555 = vadd.f32 %v1278, %v1453
      %v1556 = vadd.f32 %v1279, %v1455
      %v1557 = vadd.f32 %v1280, %v1454
      %v1558 = vadd.f32 %v1281, %v1458
      %v1559 = vadd.f32 %v1282, %v1460
      %v1560 = vadd.f32 %v1283, %v1459
      %v1561 = vadd.f32 %v1284, %v1463
      %v1562 = vadd.f32 %v1285, %v1465
      %v1563 = vadd.f32 %v1286, %v1464
      %v1564 = vadd.f32 %v1287, %v1468
      %v1565 = vadd.f32 %v1288, %v1470
      %v1566 = vadd.f32 %v1289, %v1469
      %v1567 = vld [vmem:[%s1 + $0xc] sm:$0x1]
      %v1568 = vunpack.c.l.bf16 %v198
      %v1569 = vunpack.c.l.bf16 %v199
      %v1570 = vunpack.c.l.bf16 %v200
      %v1571 = vlaneseq
      %v1572 = vshrl.u32 %v1571, 7
      %v1573 = vsub.s32 0, %v1572
      %v1574 = vrot.slane %v1567, %v1573
      %v1575 = vmul.f32 %v211, %v1574
      %v1576 = vmul.f32 %v212, %v1574
      %v1577 = vmul.f32 %v213, %v1574
      %v1578 = vmul.f32 %v214, %v1574
      %v1579 = vmul.f32 %v215, %v1574
      %v1580 = vmul.f32 %v216, %v1574
      %v1581 = vmul.f32 %v217, %v1574
      %v1582 = vmul.f32 %v218, %v1574
      %v1583 = vmul.f32 %v219, %v1574
      %v1584 = vmul.f32 %v220, %v1574
      %v1585 = vmul.f32 %v221, %v1574
      %v1586 = vmul.f32 %v222, %v1574
      %v1587 = vmul.f32 %v223, %v1574
      %v1588 = vmul.f32 %v224, %v1574
      %v1589 = vmul.f32 %v225, %v1574
      %v1590 = vmul.f32 %v226, %v1574
      %v1591 = vmul.f32 %v227, %v1574
      %v1592 = vmul.f32 %v228, %v1574
      %v1593 = vmul.f32 %v229, %v1574
      %v1594 = vmul.f32 %v230, %v1574
      %v1595 = vmul.f32 %v231, %v1574
      %v1596 = vmul.f32 %v232, %v1574
      %v1597 = vmul.f32 %v233, %v1574
      %v1598 = vmul.f32 %v234, %v1574
      %v1599 = vmul.f32 %v235, %v1574
      %v1600 = vmul.f32 %v236, %v1574
      %v1601 = vmul.f32 %v237, %v1574
      %v1602 = vmul.f32 %v238, %v1574
      %v1603 = vmul.f32 %v239, %v1574
      %v1604 = vmul.f32 %v240, %v1574
      %v1605 = vmul.f32 %v241, %v1574
      %v1606 = vmul.f32 %v242, %v1574
      %v1607 = vmul.f32 %v243, %v1574
      %v1608 = vmul.f32 %v244, %v1574
      %v1609 = vmul.f32 %v245, %v1574
      %v1610 = vmul.f32 %v246, %v1574
      %v1611 = vmul.f32 %v247, %v1574
      %v1612 = vmul.f32 %v248, %v1574
      %v1613 = vmul.f32 %v249, %v1574
      %v1614 = vmul.f32 %v250, %v1574
      %v1615 = vmul.f32 %v251, %v1574
      %v1616 = vmul.f32 %v252, %v1574
      %v1617 = vmul.f32 %v910, %v1574
      %v1618 = vmul.f32 %v911, %v1574
      %v1619 = vmul.f32 %v912, %v1574
      %v1620 = vmul.f32 %v1568, %v1574
      %v1621 = vmul.f32 %v1569, %v1574
      %v1622 = vmul.f32 %v1570, %v1574
      %v1623 = vadd.f32 %v1519, %v1575
      %v1624 = vadd.f32 %v1520, %v1576
      %v1625 = vadd.f32 %v1521, %v1577
      %v1626 = vadd.f32 %v1522, %v1578
      %v1627 = vadd.f32 %v1523, %v1579
      %v1628 = vadd.f32 %v1524, %v1580
      %v1629 = vadd.f32 %v1525, %v1581
      %v1630 = vadd.f32 %v1526, %v1582
      %v1631 = vadd.f32 %v1527, %v1583
      %v1632 = vadd.f32 %v1528, %v1584
      %v1633 = vadd.f32 %v1529, %v1585
      %v1634 = vadd.f32 %v1530, %v1586
      %v1635 = vadd.f32 %v1531, %v1587
      %v1636 = vadd.f32 %v1532, %v1588
      %v1637 = vadd.f32 %v1533, %v1589
      %v1638 = vadd.f32 %v1534, %v1590
      %v1639 = vadd.f32 %v1535, %v1591
      %v1640 = vadd.f32 %v1536, %v1592
      %v1641 = vadd.f32 %v1537, %v1593
      %v1642 = vadd.f32 %v1538, %v1594
      %v1643 = vadd.f32 %v1539, %v1595
      %v1644 = vadd.f32 %v1540, %v1596
      %v1645 = vadd.f32 %v1541, %v1597
      %v1646 = vadd.f32 %v1542, %v1598
      %v1647 = vadd.f32 %v1543, %v1599
      %v1648 = vadd.f32 %v1544, %v1600
      %v1649 = vadd.f32 %v1545, %v1601
      %v1650 = vadd.f32 %v1546, %v1602
      %v1651 = vadd.f32 %v1547, %v1603
      %v1652 = vadd.f32 %v1548, %v1604
      %v1653 = vadd.f32 %v1549, %v1605
      %v1654 = vadd.f32 %v1550, %v1606
      %v1655 = vadd.f32 %v1551, %v1607
      %v1656 = vadd.f32 %v1552, %v1608
      %v1657 = vadd.f32 %v1553, %v1609
      %v1658 = vadd.f32 %v1554, %v1610
      %v1659 = vadd.f32 %v1555, %v1611
      %v1660 = vadd.f32 %v1556, %v1612
      %v1661 = vadd.f32 %v1557, %v1613
      %v1662 = vadd.f32 %v1558, %v1614
      %v1663 = vadd.f32 %v1559, %v1615
      %v1664 = vadd.f32 %v1560, %v1616
      %v1665 = vadd.f32 %v1561, %v1617
      %v1666 = vadd.f32 %v1562, %v1618
      %v1667 = vadd.f32 %v1563, %v1619
      %v1668 = vadd.f32 %v1564, %v1620
      %v1669 = vadd.f32 %v1565, %v1621
      %v1670 = vadd.f32 %v1566, %v1622
      %v1671 = vld [vmem:[%s1 + $0xe] sm:$0x1]
      %v1672 = vlaneseq
      %v1673 = vshrl.u32 %v1672, 7
      %v1674 = vsub.s32 0, %v1673
      %v1675 = vrot.slane %v1671, %v1674
      %v1676 = vmul.f32 %v211, %v1675
      %v1677 = vmul.f32 %v212, %v1675
      %v1678 = vmul.f32 %v213, %v1675
      %v1679 = vmul.f32 %v214, %v1675
      %v1680 = vmul.f32 %v215, %v1675
      %v1681 = vmul.f32 %v216, %v1675
      %v1682 = vmul.f32 %v217, %v1675
      %v1683 = vmul.f32 %v218, %v1675
      %v1684 = vmul.f32 %v219, %v1675
      %v1685 = vmul.f32 %v220, %v1675
      %v1686 = vmul.f32 %v221, %v1675
      %v1687 = vmul.f32 %v222, %v1675
      %v1688 = vmul.f32 %v223, %v1675
      %v1689 = vmul.f32 %v224, %v1675
      %v1690 = vmul.f32 %v225, %v1675
      %v1691 = vmul.f32 %v226, %v1675
      %v1692 = vmul.f32 %v227, %v1675
      %v1693 = vmul.f32 %v228, %v1675
      %v1694 = vmul.f32 %v229, %v1675
      %v1695 = vmul.f32 %v230, %v1675
      %v1696 = vmul.f32 %v231, %v1675
      %v1697 = vmul.f32 %v232, %v1675
      %v1698 = vmul.f32 %v233, %v1675
      %v1699 = vmul.f32 %v234, %v1675
      %v1700 = vmul.f32 %v235, %v1675
      %v1701 = vmul.f32 %v236, %v1675
      %v1702 = vmul.f32 %v237, %v1675
      %v1703 = vmul.f32 %v238, %v1675
      %v1704 = vmul.f32 %v239, %v1675
      %v1705 = vmul.f32 %v240, %v1675
      %v1706 = vmul.f32 %v241, %v1675
      %v1707 = vmul.f32 %v242, %v1675
      %v1708 = vmul.f32 %v243, %v1675
      %v1709 = vmul.f32 %v244, %v1675
      %v1710 = vmul.f32 %v245, %v1675
      %v1711 = vmul.f32 %v246, %v1675
      %v1712 = vmul.f32 %v247, %v1675
      %v1713 = vmul.f32 %v248, %v1675
      %v1714 = vmul.f32 %v249, %v1675
      %v1715 = vmul.f32 %v250, %v1675
      %v1716 = vmul.f32 %v251, %v1675
      %v1717 = vmul.f32 %v252, %v1675
      %v1718 = vmul.f32 %v910, %v1675
      %v1719 = vmul.f32 %v911, %v1675
      %v1720 = vmul.f32 %v912, %v1675
      %v1721 = vmul.f32 %v1568, %v1675
      %v1722 = vmul.f32 %v1569, %v1675
      %v1723 = vmul.f32 %v1570, %v1675
      %v1772 = vrot.slane %v1676, 1
      %v1773 = vrot.slane %v1677, 1
      %v1774 = vsel %vm454, %v1772, %v1773
      %v1775 = vrot.slane %v1678, 1
      %v1776 = vsel %vm454, %v1773, %v1775
      %v1777 = vrot.slane %v1679, 1
      %v1778 = vrot.slane %v1680, 1
      %v1779 = vsel %vm454, %v1777, %v1778
      %v1780 = vrot.slane %v1681, 1
      %v1781 = vsel %vm454, %v1778, %v1780
      %v1782 = vrot.slane %v1682, 1
      %v1783 = vrot.slane %v1683, 1
      %v1784 = vsel %vm454, %v1782, %v1783
      %v1785 = vrot.slane %v1684, 1
      %v1786 = vsel %vm454, %v1783, %v1785
      %v1787 = vrot.slane %v1685, 1
      %v1788 = vrot.slane %v1686, 1
      %v1789 = vsel %vm454, %v1787, %v1788
      %v1790 = vrot.slane %v1687, 1
      %v1791 = vsel %vm454, %v1788, %v1790
      %v1792 = vrot.slane %v1688, 1
      %v1793 = vrot.slane %v1689, 1
      %v1794 = vsel %vm454, %v1792, %v1793
      %v1795 = vrot.slane %v1690, 1
      %v1796 = vsel %vm454, %v1793, %v1795
      %v1797 = vrot.slane %v1691, 1
      %v1798 = vrot.slane %v1692, 1
      %v1799 = vsel %vm454, %v1797, %v1798
      %v1800 = vrot.slane %v1693, 1
      %v1801 = vsel %vm454, %v1798, %v1800
      %v1802 = vrot.slane %v1694, 1
      %v1803 = vrot.slane %v1695, 1
      %v1804 = vsel %vm454, %v1802, %v1803
      %v1805 = vrot.slane %v1696, 1
      %v1806 = vsel %vm454, %v1803, %v1805
      %v1807 = vrot.slane %v1697, 1
      %v1808 = vrot.slane %v1698, 1
      %v1809 = vsel %vm454, %v1807, %v1808
      %v1810 = vrot.slane %v1699, 1
      %v1811 = vsel %vm454, %v1808, %v1810
      %v1812 = vrot.slane %v1700, 1
      %v1813 = vrot.slane %v1701, 1
      %v1814 = vsel %vm454, %v1812, %v1813
      %v1815 = vrot.slane %v1702, 1
      %v1816 = vsel %vm454, %v1813, %v1815
      %v1817 = vrot.slane %v1703, 1
      %v1818 = vrot.slane %v1704, 1
      %v1819 = vsel %vm454, %v1817, %v1818
      %v1820 = vrot.slane %v1705, 1
      %v1821 = vsel %vm454, %v1818, %v1820
      %v1822 = vrot.slane %v1706, 1
      %v1823 = vrot.slane %v1707, 1
      %v1824 = vsel %vm454, %v1822, %v1823
      %v1825 = vrot.slane %v1708, 1
      %v1826 = vsel %vm454, %v1823, %v1825
      %v1827 = vrot.slane %v1709, 1
      %v1828 = vrot.slane %v1710, 1
      %v1829 = vsel %vm454, %v1827, %v1828
      %v1830 = vrot.slane %v1711, 1
      %v1831 = vsel %vm454, %v1828, %v1830
      %v1832 = vrot.slane %v1712, 1
      %v1833 = vrot.slane %v1713, 1
      %v1834 = vsel %vm454, %v1832, %v1833
      %v1835 = vrot.slane %v1714, 1
      %v1836 = vsel %vm454, %v1833, %v1835
      %v1837 = vrot.slane %v1715, 1
      %v1838 = vrot.slane %v1716, 1
      %v1839 = vsel %vm454, %v1837, %v1838
      %v1840 = vrot.slane %v1717, 1
      %v1841 = vsel %vm454, %v1838, %v1840
      %v1842 = vrot.slane %v1718, 1
      %v1843 = vrot.slane %v1719, 1
      %v1844 = vsel %vm454, %v1842, %v1843
      %v1845 = vrot.slane %v1720, 1
      %v1846 = vsel %vm454, %v1843, %v1845
      %v1847 = vrot.slane %v1721, 1
      %v1848 = vrot.slane %v1722, 1
      %v1849 = vsel %vm454, %v1847, %v1848
      %v1850 = vrot.slane %v1723, 1
      %v1851 = vsel %vm454, %v1848, %v1850
      %v1900 = vadd.f32 %v1623, %v1774
      %v1901 = vadd.f32 %v1624, %v1776
      %v1902 = vadd.f32 %v1625, %v1775
      %v1903 = vadd.f32 %v1626, %v1779
      %v1904 = vadd.f32 %v1627, %v1781
      %v1905 = vadd.f32 %v1628, %v1780
      %v1906 = vadd.f32 %v1629, %v1784
      %v1907 = vadd.f32 %v1630, %v1786
      %v1908 = vadd.f32 %v1631, %v1785
      %v1909 = vadd.f32 %v1632, %v1789
      %v1910 = vadd.f32 %v1633, %v1791
      %v1911 = vadd.f32 %v1634, %v1790
      %v1912 = vadd.f32 %v1635, %v1794
      %v1913 = vadd.f32 %v1636, %v1796
      %v1914 = vadd.f32 %v1637, %v1795
      %v1915 = vadd.f32 %v1638, %v1799
      %v1916 = vadd.f32 %v1639, %v1801
      %v1917 = vadd.f32 %v1640, %v1800
      %v1918 = vadd.f32 %v1641, %v1804
      %v1919 = vadd.f32 %v1642, %v1806
      %v1920 = vadd.f32 %v1643, %v1805
      %v1921 = vadd.f32 %v1644, %v1809
      %v1922 = vadd.f32 %v1645, %v1811
      %v1923 = vadd.f32 %v1646, %v1810
      %v1924 = vadd.f32 %v1647, %v1814
      %v1925 = vadd.f32 %v1648, %v1816
      %v1926 = vadd.f32 %v1649, %v1815
      %v1927 = vadd.f32 %v1650, %v1819
      %v1928 = vadd.f32 %v1651, %v1821
      %v1929 = vadd.f32 %v1652, %v1820
      %v1930 = vadd.f32 %v1653, %v1824
      %v1931 = vadd.f32 %v1654, %v1826
      %v1932 = vadd.f32 %v1655, %v1825
      %v1933 = vadd.f32 %v1656, %v1829
      %v1934 = vadd.f32 %v1657, %v1831
      %v1935 = vadd.f32 %v1658, %v1830
      %v1936 = vadd.f32 %v1659, %v1834
      %v1937 = vadd.f32 %v1660, %v1836
      %v1938 = vadd.f32 %v1661, %v1835
      %v1939 = vadd.f32 %v1662, %v1839
      %v1940 = vadd.f32 %v1663, %v1841
      %v1941 = vadd.f32 %v1664, %v1840
      %v1942 = vadd.f32 %v1665, %v1844
      %v1943 = vadd.f32 %v1666, %v1846
      %v1944 = vadd.f32 %v1667, %v1845
      %v1945 = vadd.f32 %v1668, %v1849
      %v1946 = vadd.f32 %v1669, %v1851
      %v1947 = vadd.f32 %v1670, %v1850
      %v1948 = vld [vmem:[%s1 + $0x10] sm:$0x1]
      %v1949 = vlaneseq
      %v1950 = vshrl.u32 %v1949, 7
      %v1951 = vsub.s32 0, %v1950
      %v1952 = vrot.slane %v1948, %v1951
      %v1953 = vmul.f32 %v211, %v1952
      %v1954 = vmul.f32 %v212, %v1952
      %v1955 = vmul.f32 %v213, %v1952
      %v1956 = vmul.f32 %v214, %v1952
      %v1957 = vmul.f32 %v215, %v1952
      %v1958 = vmul.f32 %v216, %v1952
      %v1959 = vmul.f32 %v217, %v1952
      %v1960 = vmul.f32 %v218, %v1952
      %v1961 = vmul.f32 %v219, %v1952
      %v1962 = vmul.f32 %v220, %v1952
      %v1963 = vmul.f32 %v221, %v1952
      %v1964 = vmul.f32 %v222, %v1952
      %v1965 = vmul.f32 %v223, %v1952
      %v1966 = vmul.f32 %v224, %v1952
      %v1967 = vmul.f32 %v225, %v1952
      %v1968 = vmul.f32 %v226, %v1952
      %v1969 = vmul.f32 %v227, %v1952
      %v1970 = vmul.f32 %v228, %v1952
      %v1971 = vmul.f32 %v229, %v1952
      %v1972 = vmul.f32 %v230, %v1952
      %v1973 = vmul.f32 %v231, %v1952
      %v1974 = vmul.f32 %v232, %v1952
      %v1975 = vmul.f32 %v233, %v1952
      %v1976 = vmul.f32 %v234, %v1952
      %v1977 = vmul.f32 %v235, %v1952
      %v1978 = vmul.f32 %v236, %v1952
      %v1979 = vmul.f32 %v237, %v1952
      %v1980 = vmul.f32 %v238, %v1952
      %v1981 = vmul.f32 %v239, %v1952
      %v1982 = vmul.f32 %v240, %v1952
      %v1983 = vmul.f32 %v241, %v1952
      %v1984 = vmul.f32 %v242, %v1952
      %v1985 = vmul.f32 %v243, %v1952
      %v1986 = vmul.f32 %v244, %v1952
      %v1987 = vmul.f32 %v245, %v1952
      %v1988 = vmul.f32 %v246, %v1952
      %v1989 = vmul.f32 %v247, %v1952
      %v1990 = vmul.f32 %v248, %v1952
      %v1991 = vmul.f32 %v249, %v1952
      %v1992 = vmul.f32 %v250, %v1952
      %v1993 = vmul.f32 %v251, %v1952
      %v1994 = vmul.f32 %v252, %v1952
      %v1995 = vmul.f32 %v910, %v1952
      %v1996 = vmul.f32 %v911, %v1952
      %v1997 = vmul.f32 %v912, %v1952
      %v1998 = vmul.f32 %v1568, %v1952
      %v1999 = vmul.f32 %v1569, %v1952
      %v2000 = vmul.f32 %v1570, %v1952
      %v2049 = vrot.slane %v1953, 2
      %v2050 = vrot.slane %v1954, 2
      %v2051 = vsel %vm732, %v2049, %v2050
      %v2052 = vrot.slane %v1955, 2
      %v2053 = vsel %vm732, %v2050, %v2052
      %v2054 = vrot.slane %v1956, 2
      %v2055 = vrot.slane %v1957, 2
      %v2056 = vsel %vm732, %v2054, %v2055
      %v2057 = vrot.slane %v1958, 2
      %v2058 = vsel %vm732, %v2055, %v2057
      %v2059 = vrot.slane %v1959, 2
      %v2060 = vrot.slane %v1960, 2
      %v2061 = vsel %vm732, %v2059, %v2060
      %v2062 = vrot.slane %v1961, 2
      %v2063 = vsel %vm732, %v2060, %v2062
      %v2064 = vrot.slane %v1962, 2
      %v2065 = vrot.slane %v1963, 2
      %v2066 = vsel %vm732, %v2064, %v2065
      %v2067 = vrot.slane %v1964, 2
      %v2068 = vsel %vm732, %v2065, %v2067
      %v2069 = vrot.slane %v1965, 2
      %v2070 = vrot.slane %v1966, 2
      %v2071 = vsel %vm732, %v2069, %v2070
      %v2072 = vrot.slane %v1967, 2
      %v2073 = vsel %vm732, %v2070, %v2072
      %v2074 = vrot.slane %v1968, 2
      %v2075 = vrot.slane %v1969, 2
      %v2076 = vsel %vm732, %v2074, %v2075
      %v2077 = vrot.slane %v1970, 2
      %v2078 = vsel %vm732, %v2075, %v2077
      %v2079 = vrot.slane %v1971, 2
      %v2080 = vrot.slane %v1972, 2
      %v2081 = vsel %vm732, %v2079, %v2080
      %v2082 = vrot.slane %v1973, 2
      %v2083 = vsel %vm732, %v2080, %v2082
      %v2084 = vrot.slane %v1974, 2
      %v2085 = vrot.slane %v1975, 2
      %v2086 = vsel %vm732, %v2084, %v2085
      %v2087 = vrot.slane %v1976, 2
      %v2088 = vsel %vm732, %v2085, %v2087
      %v2089 = vrot.slane %v1977, 2
      %v2090 = vrot.slane %v1978, 2
      %v2091 = vsel %vm732, %v2089, %v2090
      %v2092 = vrot.slane %v1979, 2
      %v2093 = vsel %vm732, %v2090, %v2092
      %v2094 = vrot.slane %v1980, 2
      %v2095 = vrot.slane %v1981, 2
      %v2096 = vsel %vm732, %v2094, %v2095
      %v2097 = vrot.slane %v1982, 2
      %v2098 = vsel %vm732, %v2095, %v2097
      %v2099 = vrot.slane %v1983, 2
      %v2100 = vrot.slane %v1984, 2
      %v2101 = vsel %vm732, %v2099, %v2100
      %v2102 = vrot.slane %v1985, 2
      %v2103 = vsel %vm732, %v2100, %v2102
      %v2104 = vrot.slane %v1986, 2
      %v2105 = vrot.slane %v1987, 2
      %v2106 = vsel %vm732, %v2104, %v2105
      %v2107 = vrot.slane %v1988, 2
      %v2108 = vsel %vm732, %v2105, %v2107
      %v2109 = vrot.slane %v1989, 2
      %v2110 = vrot.slane %v1990, 2
      %v2111 = vsel %vm732, %v2109, %v2110
      %v2112 = vrot.slane %v1991, 2
      %v2113 = vsel %vm732, %v2110, %v2112
      %v2114 = vrot.slane %v1992, 2
      %v2115 = vrot.slane %v1993, 2
      %v2116 = vsel %vm732, %v2114, %v2115
      %v2117 = vrot.slane %v1994, 2
      %v2118 = vsel %vm732, %v2115, %v2117
      %v2119 = vrot.slane %v1995, 2
      %v2120 = vrot.slane %v1996, 2
      %v2121 = vsel %vm732, %v2119, %v2120
      %v2122 = vrot.slane %v1997, 2
      %v2123 = vsel %vm732, %v2120, %v2122
      %v2124 = vrot.slane %v1998, 2
      %v2125 = vrot.slane %v1999, 2
      %v2126 = vsel %vm732, %v2124, %v2125
      %v2127 = vrot.slane %v2000, 2
      %v2128 = vsel %vm732, %v2125, %v2127
      %v2177 = vadd.f32 %v1900, %v2051
      %v2178 = vadd.f32 %v1901, %v2053
      %v2179 = vadd.f32 %v1902, %v2052
      %v2180 = vadd.f32 %v1903, %v2056
      %v2181 = vadd.f32 %v1904, %v2058
      %v2182 = vadd.f32 %v1905, %v2057
      %v2183 = vadd.f32 %v1906, %v2061
      %v2184 = vadd.f32 %v1907, %v2063
      %v2185 = vadd.f32 %v1908, %v2062
      %v2186 = vadd.f32 %v1909, %v2066
      %v2187 = vadd.f32 %v1910, %v2068
      %v2188 = vadd.f32 %v1911, %v2067
      %v2189 = vadd.f32 %v1912, %v2071
      %v2190 = vadd.f32 %v1913, %v2073
      %v2191 = vadd.f32 %v1914, %v2072
      %v2192 = vadd.f32 %v1915, %v2076
      %v2193 = vadd.f32 %v1916, %v2078
      %v2194 = vadd.f32 %v1917, %v2077
      %v2195 = vadd.f32 %v1918, %v2081
      %v2196 = vadd.f32 %v1919, %v2083
      %v2197 = vadd.f32 %v1920, %v2082
      %v2198 = vadd.f32 %v1921, %v2086
      %v2199 = vadd.f32 %v1922, %v2088
      %v2200 = vadd.f32 %v1923, %v2087
      %v2201 = vadd.f32 %v1924, %v2091
      %v2202 = vadd.f32 %v1925, %v2093
      %v2203 = vadd.f32 %v1926, %v2092
      %v2204 = vadd.f32 %v1927, %v2096
      %v2205 = vadd.f32 %v1928, %v2098
      %v2206 = vadd.f32 %v1929, %v2097
      %v2207 = vadd.f32 %v1930, %v2101
      %v2208 = vadd.f32 %v1931, %v2103
      %v2209 = vadd.f32 %v1932, %v2102
      %v2210 = vadd.f32 %v1933, %v2106
      %v2211 = vadd.f32 %v1934, %v2108
      %v2212 = vadd.f32 %v1935, %v2107
      %v2213 = vadd.f32 %v1936, %v2111
      %v2214 = vadd.f32 %v1937, %v2113
      %v2215 = vadd.f32 %v1938, %v2112
      %v2216 = vadd.f32 %v1939, %v2116
      %v2217 = vadd.f32 %v1940, %v2118
      %v2218 = vadd.f32 %v1941, %v2117
      %v2219 = vadd.f32 %v1942, %v2121
      %v2220 = vadd.f32 %v1943, %v2123
      %v2221 = vadd.f32 %v1944, %v2122
      %v2222 = vadd.f32 %v1945, %v2126
      %v2223 = vadd.f32 %v1946, %v2128
      %v2224 = vadd.f32 %v1947, %v2127
      %s2225 = scalar_lea.vmem %s138, 240
      %v2226 = vld [vmem:[%s2225] sm:$0xf]
      %v2227 = vld [vmem:[%s2225 + $0x4] sm:$0xf]
      %v2228 = vld [vmem:[%s2225 + $0x8] sm:$0x3]
      %v2229 = vld [vmem:[%s2225 + $0xc] sm:$0xf]
      %v2230 = vld [vmem:[%s2225 + $0x10] sm:$0xf]
      %v2231 = vld [vmem:[%s2225 + $0x14] sm:$0x3]
      %v2232 = vld [vmem:[%s2225 + $0x18] sm:$0xf]
      %v2233 = vld [vmem:[%s2225 + $0x1c] sm:$0xf]
      %v2234 = vld [vmem:[%s2225 + $0x20] sm:$0x3]
      %v2235 = vld [vmem:[%s2225 + $0x24] sm:$0xf]
      %v2236 = vld [vmem:[%s2225 + $0x28] sm:$0xf]
      %v2237 = vld [vmem:[%s2225 + $0x2c] sm:$0x3]
      %v2238 = vld [vmem:[%s2225 + $0x30] sm:$0xf]
      %v2239 = vld [vmem:[%s2225 + $0x34] sm:$0xf]
      %v2240 = vld [vmem:[%s2225 + $0x38] sm:$0x3]
      %v2241 = vld [vmem:[%s2225 + $0x3c] sm:$0xf]
      %v2242 = vld [vmem:[%s2225 + $0x40] sm:$0xf]
      %v2243 = vld [vmem:[%s2225 + $0x44] sm:$0x3]
      %v2244 = vld [vmem:[%s2225 + $0x48] sm:$0xf]
      %v2245 = vld [vmem:[%s2225 + $0x4c] sm:$0xf]
      %v2246 = vld [vmem:[%s2225 + $0x50] sm:$0x3]
      %v2247 = vld [vmem:[%s2225 + $0x54] sm:$0xf]
      %v2248 = vld [vmem:[%s2225 + $0x58] sm:$0xf]
      %v2249 = vld [vmem:[%s2225 + $0x5c] sm:$0x3]
      %v2250 = vld [vmem:[%s2225 + $0x60] sm:$0xf]
      %v2251 = vld [vmem:[%s2225 + $0x64] sm:$0xf]
      %v2252 = vld [vmem:[%s2225 + $0x68] sm:$0x3]
      %v2253 = vld [vmem:[%s2225 + $0x6c] sm:$0xf]
      %v2254 = vld [vmem:[%s2225 + $0x70] sm:$0xf]
      %v2255 = vld [vmem:[%s2225 + $0x74] sm:$0x3]
      %v2256 = vld [vmem:[%s2225 + $0x78] sm:$0xf]
      %v2257 = vld [vmem:[%s2225 + $0x7c] sm:$0xf]
      %v2258 = vld [vmem:[%s2225 + $0x80] sm:$0x3]
      %v2259 = vld [vmem:[%s2225 + $0x84] sm:$0xf]
      %v2260 = vld [vmem:[%s2225 + $0x88] sm:$0xf]
      %v2261 = vld [vmem:[%s2225 + $0x8c] sm:$0x3]
      %v2262 = vld [vmem:[%s2225 + $0x90] sm:$0xf]
      %v2263 = vld [vmem:[%s2225 + $0x94] sm:$0xf]
      %v2264 = vld [vmem:[%s2225 + $0x98] sm:$0x3]
      %v2265 = vld [vmem:[%s2225 + $0x9c] sm:$0xf]
      %v2266 = vld [vmem:[%s2225 + $0xa0] sm:$0xf]
      %v2267 = vld [vmem:[%s2225 + $0xa4] sm:$0x3]
      %v2268 = vld [vmem:[%s2225 + $0xa8] sm:$0xf]
      %v2269 = vld [vmem:[%s2225 + $0xac] sm:$0xf]
      %v2270 = vld [vmem:[%s2225 + $0xb0] sm:$0x3]
      %v2271 = vld [vmem:[%s2225 + $0xb4] sm:$0xf]
      %v2272 = vld [vmem:[%s2225 + $0xb8] sm:$0xf]
      %v2273 = vld [vmem:[%s2225 + $0xbc] sm:$0x3]
      %v2274 = vld [vmem:[%s2225 + $0xc0] sm:$0xf]
      %v2275 = vld [vmem:[%s2225 + $0xc4] sm:$0xf]
      %v2276 = vld [vmem:[%s2225 + $0xc8] sm:$0x3]
      %v2277 = vld [vmem:[%s2225 + $0xcc] sm:$0xf]
      %v2278 = vld [vmem:[%s2225 + $0xd0] sm:$0xf]
      %v2279 = vld [vmem:[%s2225 + $0xd4] sm:$0x3]
      %v2280 = vld [vmem:[%s2225 + $0xd8] sm:$0xf]
      %v2281 = vld [vmem:[%s2225 + $0xdc] sm:$0xf]
      %v2282 = vld [vmem:[%s2225 + $0xe0] sm:$0x3]
      %v2283 = vld [vmem:[%s2225 + $0xe4] sm:$0xf]
      %v2284 = vld [vmem:[%s2225 + $0xe8] sm:$0xf]
      %v2285 = vld [vmem:[%s2225 + $0xec] sm:$0x3]
      %v2286 = vld [vmem:[%s1 + $0x1] sm:$0x1]
      %v2287 = vunpack.c.l.bf16 %v2229
      %v2288 = vunpack.c.l.bf16 %v2230
      %v2289 = vunpack.c.l.bf16 %v2231
      %v2290 = vunpack.c.l.bf16 %v2232
      %v2291 = vunpack.c.l.bf16 %v2233
      %v2292 = vunpack.c.l.bf16 %v2234
      %v2293 = vunpack.c.l.bf16 %v2235
      %v2294 = vunpack.c.l.bf16 %v2236
      %v2295 = vunpack.c.l.bf16 %v2237
      %v2296 = vunpack.c.l.bf16 %v2238
      %v2297 = vunpack.c.l.bf16 %v2239
      %v2298 = vunpack.c.l.bf16 %v2240
      %v2299 = vunpack.c.l.bf16 %v2241
      %v2300 = vunpack.c.l.bf16 %v2242
      %v2301 = vunpack.c.l.bf16 %v2243
      %v2302 = vunpack.c.l.bf16 %v2244
      %v2303 = vunpack.c.l.bf16 %v2245
      %v2304 = vunpack.c.l.bf16 %v2246
      %v2305 = vunpack.c.l.bf16 %v2247
      %v2306 = vunpack.c.l.bf16 %v2248
      %v2307 = vunpack.c.l.bf16 %v2249
      %v2308 = vunpack.c.l.bf16 %v2250
      %v2309 = vunpack.c.l.bf16 %v2251
      %v2310 = vunpack.c.l.bf16 %v2252
      %v2311 = vunpack.c.l.bf16 %v2253
      %v2312 = vunpack.c.l.bf16 %v2254
      %v2313 = vunpack.c.l.bf16 %v2255
      %v2314 = vunpack.c.l.bf16 %v2256
      %v2315 = vunpack.c.l.bf16 %v2257
      %v2316 = vunpack.c.l.bf16 %v2258
      %v2317 = vunpack.c.l.bf16 %v2259
      %v2318 = vunpack.c.l.bf16 %v2260
      %v2319 = vunpack.c.l.bf16 %v2261
      %v2320 = vunpack.c.l.bf16 %v2262
      %v2321 = vunpack.c.l.bf16 %v2263
      %v2322 = vunpack.c.l.bf16 %v2264
      %v2323 = vunpack.c.l.bf16 %v2265
      %v2324 = vunpack.c.l.bf16 %v2266
      %v2325 = vunpack.c.l.bf16 %v2267
      %v2326 = vunpack.c.l.bf16 %v2268
      %v2327 = vunpack.c.l.bf16 %v2269
      %v2328 = vunpack.c.l.bf16 %v2270
      %v2329 = vunpack.c.l.bf16 %v2271
      %v2330 = vunpack.c.l.bf16 %v2272
      %v2331 = vunpack.c.l.bf16 %v2273
      %v2332 = vunpack.c.l.bf16 %v2274
      %v2333 = vunpack.c.l.bf16 %v2275
      %v2334 = vunpack.c.l.bf16 %v2276
      %v2335 = vlaneseq
      %v2336 = vshrl.u32 %v2335, 7
      %v2337 = vsub.s32 0, %v2336
      %v2338 = vrot.slane %v2286, %v2337
      %v2339 = vmul.f32 %v2287, %v2338
      %v2340 = vmul.f32 %v2288, %v2338
      %v2341 = vmul.f32 %v2289, %v2338
      %v2342 = vmul.f32 %v2290, %v2338
      %v2343 = vmul.f32 %v2291, %v2338
      %v2344 = vmul.f32 %v2292, %v2338
      %v2345 = vmul.f32 %v2293, %v2338
      %v2346 = vmul.f32 %v2294, %v2338
      %v2347 = vmul.f32 %v2295, %v2338
      %v2348 = vmul.f32 %v2296, %v2338
      %v2349 = vmul.f32 %v2297, %v2338
      %v2350 = vmul.f32 %v2298, %v2338
      %v2351 = vmul.f32 %v2299, %v2338
      %v2352 = vmul.f32 %v2300, %v2338
      %v2353 = vmul.f32 %v2301, %v2338
      %v2354 = vmul.f32 %v2302, %v2338
      %v2355 = vmul.f32 %v2303, %v2338
      %v2356 = vmul.f32 %v2304, %v2338
      %v2357 = vmul.f32 %v2305, %v2338
      %v2358 = vmul.f32 %v2306, %v2338
      %v2359 = vmul.f32 %v2307, %v2338
      %v2360 = vmul.f32 %v2308, %v2338
      %v2361 = vmul.f32 %v2309, %v2338
      %v2362 = vmul.f32 %v2310, %v2338
      %v2363 = vmul.f32 %v2311, %v2338
      %v2364 = vmul.f32 %v2312, %v2338
      %v2365 = vmul.f32 %v2313, %v2338
      %v2366 = vmul.f32 %v2314, %v2338
      %v2367 = vmul.f32 %v2315, %v2338
      %v2368 = vmul.f32 %v2316, %v2338
      %v2369 = vmul.f32 %v2317, %v2338
      %v2370 = vmul.f32 %v2318, %v2338
      %v2371 = vmul.f32 %v2319, %v2338
      %v2372 = vmul.f32 %v2320, %v2338
      %v2373 = vmul.f32 %v2321, %v2338
      %v2374 = vmul.f32 %v2322, %v2338
      %v2375 = vmul.f32 %v2323, %v2338
      %v2376 = vmul.f32 %v2324, %v2338
      %v2377 = vmul.f32 %v2325, %v2338
      %v2378 = vmul.f32 %v2326, %v2338
      %v2379 = vmul.f32 %v2327, %v2338
      %v2380 = vmul.f32 %v2328, %v2338
      %v2381 = vmul.f32 %v2329, %v2338
      %v2382 = vmul.f32 %v2330, %v2338
      %v2383 = vmul.f32 %v2331, %v2338
      %v2384 = vmul.f32 %v2332, %v2338
      %v2385 = vmul.f32 %v2333, %v2338
      %v2386 = vmul.f32 %v2334, %v2338
      %v2387 = vadd.f32 %v2177, %v2339
      %v2388 = vadd.f32 %v2178, %v2340
      %v2389 = vadd.f32 %v2179, %v2341
      %v2390 = vadd.f32 %v2180, %v2342
      %v2391 = vadd.f32 %v2181, %v2343
      %v2392 = vadd.f32 %v2182, %v2344
      %v2393 = vadd.f32 %v2183, %v2345
      %v2394 = vadd.f32 %v2184, %v2346
      %v2395 = vadd.f32 %v2185, %v2347
      %v2396 = vadd.f32 %v2186, %v2348
      %v2397 = vadd.f32 %v2187, %v2349
      %v2398 = vadd.f32 %v2188, %v2350
      %v2399 = vadd.f32 %v2189, %v2351
      %v2400 = vadd.f32 %v2190, %v2352
      %v2401 = vadd.f32 %v2191, %v2353
      %v2402 = vadd.f32 %v2192, %v2354
      %v2403 = vadd.f32 %v2193, %v2355
      %v2404 = vadd.f32 %v2194, %v2356
      %v2405 = vadd.f32 %v2195, %v2357
      %v2406 = vadd.f32 %v2196, %v2358
      %v2407 = vadd.f32 %v2197, %v2359
      %v2408 = vadd.f32 %v2198, %v2360
      %v2409 = vadd.f32 %v2199, %v2361
      %v2410 = vadd.f32 %v2200, %v2362
      %v2411 = vadd.f32 %v2201, %v2363
      %v2412 = vadd.f32 %v2202, %v2364
      %v2413 = vadd.f32 %v2203, %v2365
      %v2414 = vadd.f32 %v2204, %v2366
      %v2415 = vadd.f32 %v2205, %v2367
      %v2416 = vadd.f32 %v2206, %v2368
      %v2417 = vadd.f32 %v2207, %v2369
      %v2418 = vadd.f32 %v2208, %v2370
      %v2419 = vadd.f32 %v2209, %v2371
      %v2420 = vadd.f32 %v2210, %v2372
      %v2421 = vadd.f32 %v2211, %v2373
      %v2422 = vadd.f32 %v2212, %v2374
      %v2423 = vadd.f32 %v2213, %v2375
      %v2424 = vadd.f32 %v2214, %v2376
      %v2425 = vadd.f32 %v2215, %v2377
      %v2426 = vadd.f32 %v2216, %v2378
      %v2427 = vadd.f32 %v2217, %v2379
      %v2428 = vadd.f32 %v2218, %v2380
      %v2429 = vadd.f32 %v2219, %v2381
      %v2430 = vadd.f32 %v2220, %v2382
      %v2431 = vadd.f32 %v2221, %v2383
      %v2432 = vadd.f32 %v2222, %v2384
      %v2433 = vadd.f32 %v2223, %v2385
      %v2434 = vadd.f32 %v2224, %v2386
      %v2435 = vld [vmem:[%s1 + $0x3] sm:$0x1]
      %v2436 = vlaneseq
      %v2437 = vshrl.u32 %v2436, 7
      %v2438 = vsub.s32 0, %v2437
      %v2439 = vrot.slane %v2435, %v2438
      %v2440 = vmul.f32 %v2287, %v2439
      %v2441 = vmul.f32 %v2288, %v2439
      %v2442 = vmul.f32 %v2289, %v2439
      %v2443 = vmul.f32 %v2290, %v2439
      %v2444 = vmul.f32 %v2291, %v2439
      %v2445 = vmul.f32 %v2292, %v2439
      %v2446 = vmul.f32 %v2293, %v2439
      %v2447 = vmul.f32 %v2294, %v2439
      %v2448 = vmul.f32 %v2295, %v2439
      %v2449 = vmul.f32 %v2296, %v2439
      %v2450 = vmul.f32 %v2297, %v2439
      %v2451 = vmul.f32 %v2298, %v2439
      %v2452 = vmul.f32 %v2299, %v2439
      %v2453 = vmul.f32 %v2300, %v2439
      %v2454 = vmul.f32 %v2301, %v2439
      %v2455 = vmul.f32 %v2302, %v2439
      %v2456 = vmul.f32 %v2303, %v2439
      %v2457 = vmul.f32 %v2304, %v2439
      %v2458 = vmul.f32 %v2305, %v2439
      %v2459 = vmul.f32 %v2306, %v2439
      %v2460 = vmul.f32 %v2307, %v2439
      %v2461 = vmul.f32 %v2308, %v2439
      %v2462 = vmul.f32 %v2309, %v2439
      %v2463 = vmul.f32 %v2310, %v2439
      %v2464 = vmul.f32 %v2311, %v2439
      %v2465 = vmul.f32 %v2312, %v2439
      %v2466 = vmul.f32 %v2313, %v2439
      %v2467 = vmul.f32 %v2314, %v2439
      %v2468 = vmul.f32 %v2315, %v2439
      %v2469 = vmul.f32 %v2316, %v2439
      %v2470 = vmul.f32 %v2317, %v2439
      %v2471 = vmul.f32 %v2318, %v2439
      %v2472 = vmul.f32 %v2319, %v2439
      %v2473 = vmul.f32 %v2320, %v2439
      %v2474 = vmul.f32 %v2321, %v2439
      %v2475 = vmul.f32 %v2322, %v2439
      %v2476 = vmul.f32 %v2323, %v2439
      %v2477 = vmul.f32 %v2324, %v2439
      %v2478 = vmul.f32 %v2325, %v2439
      %v2479 = vmul.f32 %v2326, %v2439
      %v2480 = vmul.f32 %v2327, %v2439
      %v2481 = vmul.f32 %v2328, %v2439
      %v2482 = vmul.f32 %v2329, %v2439
      %v2483 = vmul.f32 %v2330, %v2439
      %v2484 = vmul.f32 %v2331, %v2439
      %v2485 = vmul.f32 %v2332, %v2439
      %v2486 = vmul.f32 %v2333, %v2439
      %v2487 = vmul.f32 %v2334, %v2439
      %v2536 = vrot.slane %v2440, 1
      %v2537 = vrot.slane %v2441, 1
      %v2538 = vsel %vm454, %v2536, %v2537
      %v2539 = vrot.slane %v2442, 1
      %v2540 = vsel %vm454, %v2537, %v2539
      %v2541 = vrot.slane %v2443, 1
      %v2542 = vrot.slane %v2444, 1
      %v2543 = vsel %vm454, %v2541, %v2542
      %v2544 = vrot.slane %v2445, 1
      %v2545 = vsel %vm454, %v2542, %v2544
      %v2546 = vrot.slane %v2446, 1
      %v2547 = vrot.slane %v2447, 1
      %v2548 = vsel %vm454, %v2546, %v2547
      %v2549 = vrot.slane %v2448, 1
      %v2550 = vsel %vm454, %v2547, %v2549
      %v2551 = vrot.slane %v2449, 1
      %v2552 = vrot.slane %v2450, 1
      %v2553 = vsel %vm454, %v2551, %v2552
      %v2554 = vrot.slane %v2451, 1
      %v2555 = vsel %vm454, %v2552, %v2554
      %v2556 = vrot.slane %v2452, 1
      %v2557 = vrot.slane %v2453, 1
      %v2558 = vsel %vm454, %v2556, %v2557
      %v2559 = vrot.slane %v2454, 1
      %v2560 = vsel %vm454, %v2557, %v2559
      %v2561 = vrot.slane %v2455, 1
      %v2562 = vrot.slane %v2456, 1
      %v2563 = vsel %vm454, %v2561, %v2562
      %v2564 = vrot.slane %v2457, 1
      %v2565 = vsel %vm454, %v2562, %v2564
      %v2566 = vrot.slane %v2458, 1
      %v2567 = vrot.slane %v2459, 1
      %v2568 = vsel %vm454, %v2566, %v2567
      %v2569 = vrot.slane %v2460, 1
      %v2570 = vsel %vm454, %v2567, %v2569
      %v2571 = vrot.slane %v2461, 1
      %v2572 = vrot.slane %v2462, 1
      %v2573 = vsel %vm454, %v2571, %v2572
      %v2574 = vrot.slane %v2463, 1
      %v2575 = vsel %vm454, %v2572, %v2574
      %v2576 = vrot.slane %v2464, 1
      %v2577 = vrot.slane %v2465, 1
      %v2578 = vsel %vm454, %v2576, %v2577
      %v2579 = vrot.slane %v2466, 1
      %v2580 = vsel %vm454, %v2577, %v2579
      %v2581 = vrot.slane %v2467, 1
      %v2582 = vrot.slane %v2468, 1
      %v2583 = vsel %vm454, %v2581, %v2582
      %v2584 = vrot.slane %v2469, 1
      %v2585 = vsel %vm454, %v2582, %v2584
      %v2586 = vrot.slane %v2470, 1
      %v2587 = vrot.slane %v2471, 1
      %v2588 = vsel %vm454, %v2586, %v2587
      %v2589 = vrot.slane %v2472, 1
      %v2590 = vsel %vm454, %v2587, %v2589
      %v2591 = vrot.slane %v2473, 1
      %v2592 = vrot.slane %v2474, 1
      %v2593 = vsel %vm454, %v2591, %v2592
      %v2594 = vrot.slane %v2475, 1
      %v2595 = vsel %vm454, %v2592, %v2594
      %v2596 = vrot.slane %v2476, 1
      %v2597 = vrot.slane %v2477, 1
      %v2598 = vsel %vm454, %v2596, %v2597
      %v2599 = vrot.slane %v2478, 1
      %v2600 = vsel %vm454, %v2597, %v2599
      %v2601 = vrot.slane %v2479, 1
      %v2602 = vrot.slane %v2480, 1
      %v2603 = vsel %vm454, %v2601, %v2602
      %v2604 = vrot.slane %v2481, 1
      %v2605 = vsel %vm454, %v2602, %v2604
      %v2606 = vrot.slane %v2482, 1
      %v2607 = vrot.slane %v2483, 1
      %v2608 = vsel %vm454, %v2606, %v2607
      %v2609 = vrot.slane %v2484, 1
      %v2610 = vsel %vm454, %v2607, %v2609
      %v2611 = vrot.slane %v2485, 1
      %v2612 = vrot.slane %v2486, 1
      %v2613 = vsel %vm454, %v2611, %v2612
      %v2614 = vrot.slane %v2487, 1
      %v2615 = vsel %vm454, %v2612, %v2614
      %v2664 = vadd.f32 %v2387, %v2538
      %v2665 = vadd.f32 %v2388, %v2540
      %v2666 = vadd.f32 %v2389, %v2539
      %v2667 = vadd.f32 %v2390, %v2543
      %v2668 = vadd.f32 %v2391, %v2545
      %v2669 = vadd.f32 %v2392, %v2544
      %v2670 = vadd.f32 %v2393, %v2548
      %v2671 = vadd.f32 %v2394, %v2550
      %v2672 = vadd.f32 %v2395, %v2549
      %v2673 = vadd.f32 %v2396, %v2553
      %v2674 = vadd.f32 %v2397, %v2555
      %v2675 = vadd.f32 %v2398, %v2554
      %v2676 = vadd.f32 %v2399, %v2558
      %v2677 = vadd.f32 %v2400, %v2560
      %v2678 = vadd.f32 %v2401, %v2559
      %v2679 = vadd.f32 %v2402, %v2563
      %v2680 = vadd.f32 %v2403, %v2565
      %v2681 = vadd.f32 %v2404, %v2564
      %v2682 = vadd.f32 %v2405, %v2568
      %v2683 = vadd.f32 %v2406, %v2570
      %v2684 = vadd.f32 %v2407, %v2569
      %v2685 = vadd.f32 %v2408, %v2573
      %v2686 = vadd.f32 %v2409, %v2575
      %v2687 = vadd.f32 %v2410, %v2574
      %v2688 = vadd.f32 %v2411, %v2578
      %v2689 = vadd.f32 %v2412, %v2580
      %v2690 = vadd.f32 %v2413, %v2579
      %v2691 = vadd.f32 %v2414, %v2583
      %v2692 = vadd.f32 %v2415, %v2585
      %v2693 = vadd.f32 %v2416, %v2584
      %v2694 = vadd.f32 %v2417, %v2588
      %v2695 = vadd.f32 %v2418, %v2590
      %v2696 = vadd.f32 %v2419, %v2589
      %v2697 = vadd.f32 %v2420, %v2593
      %v2698 = vadd.f32 %v2421, %v2595
      %v2699 = vadd.f32 %v2422, %v2594
      %v2700 = vadd.f32 %v2423, %v2598
      %v2701 = vadd.f32 %v2424, %v2600
      %v2702 = vadd.f32 %v2425, %v2599
      %v2703 = vadd.f32 %v2426, %v2603
      %v2704 = vadd.f32 %v2427, %v2605
      %v2705 = vadd.f32 %v2428, %v2604
      %v2706 = vadd.f32 %v2429, %v2608
      %v2707 = vadd.f32 %v2430, %v2610
      %v2708 = vadd.f32 %v2431, %v2609
      %v2709 = vadd.f32 %v2432, %v2613
      %v2710 = vadd.f32 %v2433, %v2615
      %v2711 = vadd.f32 %v2434, %v2614
      %v2712 = vld [vmem:[%s1 + $0x5] sm:$0x1]
      %v2713 = vlaneseq
      %v2714 = vshrl.u32 %v2713, 7
      %v2715 = vsub.s32 0, %v2714
      %v2716 = vrot.slane %v2712, %v2715
      %v2717 = vmul.f32 %v2287, %v2716
      %v2718 = vmul.f32 %v2288, %v2716
      %v2719 = vmul.f32 %v2289, %v2716
      %v2720 = vmul.f32 %v2290, %v2716
      %v2721 = vmul.f32 %v2291, %v2716
      %v2722 = vmul.f32 %v2292, %v2716
      %v2723 = vmul.f32 %v2293, %v2716
      %v2724 = vmul.f32 %v2294, %v2716
      %v2725 = vmul.f32 %v2295, %v2716
      %v2726 = vmul.f32 %v2296, %v2716
      %v2727 = vmul.f32 %v2297, %v2716
      %v2728 = vmul.f32 %v2298, %v2716
      %v2729 = vmul.f32 %v2299, %v2716
      %v2730 = vmul.f32 %v2300, %v2716
      %v2731 = vmul.f32 %v2301, %v2716
      %v2732 = vmul.f32 %v2302, %v2716
      %v2733 = vmul.f32 %v2303, %v2716
      %v2734 = vmul.f32 %v2304, %v2716
      %v2735 = vmul.f32 %v2305, %v2716
      %v2736 = vmul.f32 %v2306, %v2716
      %v2737 = vmul.f32 %v2307, %v2716
      %v2738 = vmul.f32 %v2308, %v2716
      %v2739 = vmul.f32 %v2309, %v2716
      %v2740 = vmul.f32 %v2310, %v2716
      %v2741 = vmul.f32 %v2311, %v2716
      %v2742 = vmul.f32 %v2312, %v2716
      %v2743 = vmul.f32 %v2313, %v2716
      %v2744 = vmul.f32 %v2314, %v2716
      %v2745 = vmul.f32 %v2315, %v2716
      %v2746 = vmul.f32 %v2316, %v2716
      %v2747 = vmul.f32 %v2317, %v2716
      %v2748 = vmul.f32 %v2318, %v2716
      %v2749 = vmul.f32 %v2319, %v2716
      %v2750 = vmul.f32 %v2320, %v2716
      %v2751 = vmul.f32 %v2321, %v2716
      %v2752 = vmul.f32 %v2322, %v2716
      %v2753 = vmul.f32 %v2323, %v2716
      %v2754 = vmul.f32 %v2324, %v2716
      %v2755 = vmul.f32 %v2325, %v2716
      %v2756 = vmul.f32 %v2326, %v2716
      %v2757 = vmul.f32 %v2327, %v2716
      %v2758 = vmul.f32 %v2328, %v2716
      %v2759 = vmul.f32 %v2329, %v2716
      %v2760 = vmul.f32 %v2330, %v2716
      %v2761 = vmul.f32 %v2331, %v2716
      %v2762 = vmul.f32 %v2332, %v2716
      %v2763 = vmul.f32 %v2333, %v2716
      %v2764 = vmul.f32 %v2334, %v2716
      %v2813 = vrot.slane %v2717, 2
      %v2814 = vrot.slane %v2718, 2
      %v2815 = vsel %vm732, %v2813, %v2814
      %v2816 = vrot.slane %v2719, 2
      %v2817 = vsel %vm732, %v2814, %v2816
      %v2818 = vrot.slane %v2720, 2
      %v2819 = vrot.slane %v2721, 2
      %v2820 = vsel %vm732, %v2818, %v2819
      %v2821 = vrot.slane %v2722, 2
      %v2822 = vsel %vm732, %v2819, %v2821
      %v2823 = vrot.slane %v2723, 2
      %v2824 = vrot.slane %v2724, 2
      %v2825 = vsel %vm732, %v2823, %v2824
      %v2826 = vrot.slane %v2725, 2
      %v2827 = vsel %vm732, %v2824, %v2826
      %v2828 = vrot.slane %v2726, 2
      %v2829 = vrot.slane %v2727, 2
      %v2830 = vsel %vm732, %v2828, %v2829
      %v2831 = vrot.slane %v2728, 2
      %v2832 = vsel %vm732, %v2829, %v2831
      %v2833 = vrot.slane %v2729, 2
      %v2834 = vrot.slane %v2730, 2
      %v2835 = vsel %vm732, %v2833, %v2834
      %v2836 = vrot.slane %v2731, 2
      %v2837 = vsel %vm732, %v2834, %v2836
      %v2838 = vrot.slane %v2732, 2
      %v2839 = vrot.slane %v2733, 2
      %v2840 = vsel %vm732, %v2838, %v2839
      %v2841 = vrot.slane %v2734, 2
      %v2842 = vsel %vm732, %v2839, %v2841
      %v2843 = vrot.slane %v2735, 2
      %v2844 = vrot.slane %v2736, 2
      %v2845 = vsel %vm732, %v2843, %v2844
      %v2846 = vrot.slane %v2737, 2
      %v2847 = vsel %vm732, %v2844, %v2846
      %v2848 = vrot.slane %v2738, 2
      %v2849 = vrot.slane %v2739, 2
      %v2850 = vsel %vm732, %v2848, %v2849
      %v2851 = vrot.slane %v2740, 2
      %v2852 = vsel %vm732, %v2849, %v2851
      %v2853 = vrot.slane %v2741, 2
      %v2854 = vrot.slane %v2742, 2
      %v2855 = vsel %vm732, %v2853, %v2854
      %v2856 = vrot.slane %v2743, 2
      %v2857 = vsel %vm732, %v2854, %v2856
      %v2858 = vrot.slane %v2744, 2
      %v2859 = vrot.slane %v2745, 2
      %v2860 = vsel %vm732, %v2858, %v2859
      %v2861 = vrot.slane %v2746, 2
      %v2862 = vsel %vm732, %v2859, %v2861
      %v2863 = vrot.slane %v2747, 2
      %v2864 = vrot.slane %v2748, 2
      %v2865 = vsel %vm732, %v2863, %v2864
      %v2866 = vrot.slane %v2749, 2
      %v2867 = vsel %vm732, %v2864, %v2866
      %v2868 = vrot.slane %v2750, 2
      %v2869 = vrot.slane %v2751, 2
      %v2870 = vsel %vm732, %v2868, %v2869
      %v2871 = vrot.slane %v2752, 2
      %v2872 = vsel %vm732, %v2869, %v2871
      %v2873 = vrot.slane %v2753, 2
      %v2874 = vrot.slane %v2754, 2
      %v2875 = vsel %vm732, %v2873, %v2874
      %v2876 = vrot.slane %v2755, 2
      %v2877 = vsel %vm732, %v2874, %v2876
      %v2878 = vrot.slane %v2756, 2
      %v2879 = vrot.slane %v2757, 2
      %v2880 = vsel %vm732, %v2878, %v2879
      %v2881 = vrot.slane %v2758, 2
      %v2882 = vsel %vm732, %v2879, %v2881
      %v2883 = vrot.slane %v2759, 2
      %v2884 = vrot.slane %v2760, 2
      %v2885 = vsel %vm732, %v2883, %v2884
      %v2886 = vrot.slane %v2761, 2
      %v2887 = vsel %vm732, %v2884, %v2886
      %v2888 = vrot.slane %v2762, 2
      %v2889 = vrot.slane %v2763, 2
      %v2890 = vsel %vm732, %v2888, %v2889
      %v2891 = vrot.slane %v2764, 2
      %v2892 = vsel %vm732, %v2889, %v2891
      %v2941 = vadd.f32 %v2664, %v2815
      %v2942 = vadd.f32 %v2665, %v2817
      %v2943 = vadd.f32 %v2666, %v2816
      %v2944 = vadd.f32 %v2667, %v2820
      %v2945 = vadd.f32 %v2668, %v2822
      %v2946 = vadd.f32 %v2669, %v2821
      %v2947 = vadd.f32 %v2670, %v2825
      %v2948 = vadd.f32 %v2671, %v2827
      %v2949 = vadd.f32 %v2672, %v2826
      %v2950 = vadd.f32 %v2673, %v2830
      %v2951 = vadd.f32 %v2674, %v2832
      %v2952 = vadd.f32 %v2675, %v2831
      %v2953 = vadd.f32 %v2676, %v2835
      %v2954 = vadd.f32 %v2677, %v2837
      %v2955 = vadd.f32 %v2678, %v2836
      %v2956 = vadd.f32 %v2679, %v2840
      %v2957 = vadd.f32 %v2680, %v2842
      %v2958 = vadd.f32 %v2681, %v2841
      %v2959 = vadd.f32 %v2682, %v2845
      %v2960 = vadd.f32 %v2683, %v2847
      %v2961 = vadd.f32 %v2684, %v2846
      %v2962 = vadd.f32 %v2685, %v2850
      %v2963 = vadd.f32 %v2686, %v2852
      %v2964 = vadd.f32 %v2687, %v2851
      %v2965 = vadd.f32 %v2688, %v2855
      %v2966 = vadd.f32 %v2689, %v2857
      %v2967 = vadd.f32 %v2690, %v2856
      %v2968 = vadd.f32 %v2691, %v2860
      %v2969 = vadd.f32 %v2692, %v2862
      %v2970 = vadd.f32 %v2693, %v2861
      %v2971 = vadd.f32 %v2694, %v2865
      %v2972 = vadd.f32 %v2695, %v2867
      %v2973 = vadd.f32 %v2696, %v2866
      %v2974 = vadd.f32 %v2697, %v2870
      %v2975 = vadd.f32 %v2698, %v2872
      %v2976 = vadd.f32 %v2699, %v2871
      %v2977 = vadd.f32 %v2700, %v2875
      %v2978 = vadd.f32 %v2701, %v2877
      %v2979 = vadd.f32 %v2702, %v2876
      %v2980 = vadd.f32 %v2703, %v2880
      %v2981 = vadd.f32 %v2704, %v2882
      %v2982 = vadd.f32 %v2705, %v2881
      %v2983 = vadd.f32 %v2706, %v2885
      %v2984 = vadd.f32 %v2707, %v2887
      %v2985 = vadd.f32 %v2708, %v2886
      %v2986 = vadd.f32 %v2709, %v2890
      %v2987 = vadd.f32 %v2710, %v2892
      %v2988 = vadd.f32 %v2711, %v2891
      %v2989 = vld [vmem:[%s1 + $0x7] sm:$0x1]
      %v2990 = vunpack.c.l.bf16 %v2277
      %v2991 = vunpack.c.l.bf16 %v2278
      %v2992 = vunpack.c.l.bf16 %v2279
      %v2993 = vlaneseq
      %v2994 = vshrl.u32 %v2993, 7
      %v2995 = vsub.s32 0, %v2994
      %v2996 = vrot.slane %v2989, %v2995
      %v2997 = vmul.f32 %v2290, %v2996
      %v2998 = vmul.f32 %v2291, %v2996
      %v2999 = vmul.f32 %v2292, %v2996
      %v3000 = vmul.f32 %v2293, %v2996
      %v3001 = vmul.f32 %v2294, %v2996
      %v3002 = vmul.f32 %v2295, %v2996
      %v3003 = vmul.f32 %v2296, %v2996
      %v3004 = vmul.f32 %v2297, %v2996
      %v3005 = vmul.f32 %v2298, %v2996
      %v3006 = vmul.f32 %v2299, %v2996
      %v3007 = vmul.f32 %v2300, %v2996
      %v3008 = vmul.f32 %v2301, %v2996
      %v3009 = vmul.f32 %v2302, %v2996
      %v3010 = vmul.f32 %v2303, %v2996
      %v3011 = vmul.f32 %v2304, %v2996
      %v3012 = vmul.f32 %v2305, %v2996
      %v3013 = vmul.f32 %v2306, %v2996
      %v3014 = vmul.f32 %v2307, %v2996
      %v3015 = vmul.f32 %v2308, %v2996
      %v3016 = vmul.f32 %v2309, %v2996
      %v3017 = vmul.f32 %v2310, %v2996
      %v3018 = vmul.f32 %v2311, %v2996
      %v3019 = vmul.f32 %v2312, %v2996
      %v3020 = vmul.f32 %v2313, %v2996
      %v3021 = vmul.f32 %v2314, %v2996
      %v3022 = vmul.f32 %v2315, %v2996
      %v3023 = vmul.f32 %v2316, %v2996
      %v3024 = vmul.f32 %v2317, %v2996
      %v3025 = vmul.f32 %v2318, %v2996
      %v3026 = vmul.f32 %v2319, %v2996
      %v3027 = vmul.f32 %v2320, %v2996
      %v3028 = vmul.f32 %v2321, %v2996
      %v3029 = vmul.f32 %v2322, %v2996
      %v3030 = vmul.f32 %v2323, %v2996
      %v3031 = vmul.f32 %v2324, %v2996
      %v3032 = vmul.f32 %v2325, %v2996
      %v3033 = vmul.f32 %v2326, %v2996
      %v3034 = vmul.f32 %v2327, %v2996
      %v3035 = vmul.f32 %v2328, %v2996
      %v3036 = vmul.f32 %v2329, %v2996
      %v3037 = vmul.f32 %v2330, %v2996
      %v3038 = vmul.f32 %v2331, %v2996
      %v3039 = vmul.f32 %v2332, %v2996
      %v3040 = vmul.f32 %v2333, %v2996
      %v3041 = vmul.f32 %v2334, %v2996
      %v3042 = vmul.f32 %v2990, %v2996
      %v3043 = vmul.f32 %v2991, %v2996
      %v3044 = vmul.f32 %v2992, %v2996
      %v3045 = vadd.f32 %v2941, %v2997
      %v3046 = vadd.f32 %v2942, %v2998
      %v3047 = vadd.f32 %v2943, %v2999
      %v3048 = vadd.f32 %v2944, %v3000
      %v3049 = vadd.f32 %v2945, %v3001
      %v3050 = vadd.f32 %v2946, %v3002
      %v3051 = vadd.f32 %v2947, %v3003
      %v3052 = vadd.f32 %v2948, %v3004
      %v3053 = vadd.f32 %v2949, %v3005
      %v3054 = vadd.f32 %v2950, %v3006
      %v3055 = vadd.f32 %v2951, %v3007
      %v3056 = vadd.f32 %v2952, %v3008
      %v3057 = vadd.f32 %v2953, %v3009
      %v3058 = vadd.f32 %v2954, %v3010
      %v3059 = vadd.f32 %v2955, %v3011
      %v3060 = vadd.f32 %v2956, %v3012
      %v3061 = vadd.f32 %v2957, %v3013
      %v3062 = vadd.f32 %v2958, %v3014
      %v3063 = vadd.f32 %v2959, %v3015
      %v3064 = vadd.f32 %v2960, %v3016
      %v3065 = vadd.f32 %v2961, %v3017
      %v3066 = vadd.f32 %v2962, %v3018
      %v3067 = vadd.f32 %v2963, %v3019
      %v3068 = vadd.f32 %v2964, %v3020
      %v3069 = vadd.f32 %v2965, %v3021
      %v3070 = vadd.f32 %v2966, %v3022
      %v3071 = vadd.f32 %v2967, %v3023
      %v3072 = vadd.f32 %v2968, %v3024
      %v3073 = vadd.f32 %v2969, %v3025
      %v3074 = vadd.f32 %v2970, %v3026
      %v3075 = vadd.f32 %v2971, %v3027
      %v3076 = vadd.f32 %v2972, %v3028
      %v3077 = vadd.f32 %v2973, %v3029
      %v3078 = vadd.f32 %v2974, %v3030
      %v3079 = vadd.f32 %v2975, %v3031
      %v3080 = vadd.f32 %v2976, %v3032
      %v3081 = vadd.f32 %v2977, %v3033
      %v3082 = vadd.f32 %v2978, %v3034
      %v3083 = vadd.f32 %v2979, %v3035
      %v3084 = vadd.f32 %v2980, %v3036
      %v3085 = vadd.f32 %v2981, %v3037
      %v3086 = vadd.f32 %v2982, %v3038
      %v3087 = vadd.f32 %v2983, %v3039
      %v3088 = vadd.f32 %v2984, %v3040
      %v3089 = vadd.f32 %v2985, %v3041
      %v3090 = vadd.f32 %v2986, %v3042
      %v3091 = vadd.f32 %v2987, %v3043
      %v3092 = vadd.f32 %v2988, %v3044
      %v3093 = vld [vmem:[%s1 + $0x9] sm:$0x1]
      %v3094 = vlaneseq
      %v3095 = vshrl.u32 %v3094, 7
      %v3096 = vsub.s32 0, %v3095
      %v3097 = vrot.slane %v3093, %v3096
      %v3098 = vmul.f32 %v2290, %v3097
      %v3099 = vmul.f32 %v2291, %v3097
      %v3100 = vmul.f32 %v2292, %v3097
      %v3101 = vmul.f32 %v2293, %v3097
      %v3102 = vmul.f32 %v2294, %v3097
      %v3103 = vmul.f32 %v2295, %v3097
      %v3104 = vmul.f32 %v2296, %v3097
      %v3105 = vmul.f32 %v2297, %v3097
      %v3106 = vmul.f32 %v2298, %v3097
      %v3107 = vmul.f32 %v2299, %v3097
      %v3108 = vmul.f32 %v2300, %v3097
      %v3109 = vmul.f32 %v2301, %v3097
      %v3110 = vmul.f32 %v2302, %v3097
      %v3111 = vmul.f32 %v2303, %v3097
      %v3112 = vmul.f32 %v2304, %v3097
      %v3113 = vmul.f32 %v2305, %v3097
      %v3114 = vmul.f32 %v2306, %v3097
      %v3115 = vmul.f32 %v2307, %v3097
      %v3116 = vmul.f32 %v2308, %v3097
      %v3117 = vmul.f32 %v2309, %v3097
      %v3118 = vmul.f32 %v2310, %v3097
      %v3119 = vmul.f32 %v2311, %v3097
      %v3120 = vmul.f32 %v2312, %v3097
      %v3121 = vmul.f32 %v2313, %v3097
      %v3122 = vmul.f32 %v2314, %v3097
      %v3123 = vmul.f32 %v2315, %v3097
      %v3124 = vmul.f32 %v2316, %v3097
      %v3125 = vmul.f32 %v2317, %v3097
      %v3126 = vmul.f32 %v2318, %v3097
      %v3127 = vmul.f32 %v2319, %v3097
      %v3128 = vmul.f32 %v2320, %v3097
      %v3129 = vmul.f32 %v2321, %v3097
      %v3130 = vmul.f32 %v2322, %v3097
      %v3131 = vmul.f32 %v2323, %v3097
      %v3132 = vmul.f32 %v2324, %v3097
      %v3133 = vmul.f32 %v2325, %v3097
      %v3134 = vmul.f32 %v2326, %v3097
      %v3135 = vmul.f32 %v2327, %v3097
      %v3136 = vmul.f32 %v2328, %v3097
      %v3137 = vmul.f32 %v2329, %v3097
      %v3138 = vmul.f32 %v2330, %v3097
      %v3139 = vmul.f32 %v2331, %v3097
      %v3140 = vmul.f32 %v2332, %v3097
      %v3141 = vmul.f32 %v2333, %v3097
      %v3142 = vmul.f32 %v2334, %v3097
      %v3143 = vmul.f32 %v2990, %v3097
      %v3144 = vmul.f32 %v2991, %v3097
      %v3145 = vmul.f32 %v2992, %v3097
      %v3194 = vrot.slane %v3098, 1
      %v3195 = vrot.slane %v3099, 1
      %v3196 = vsel %vm454, %v3194, %v3195
      %v3197 = vrot.slane %v3100, 1
      %v3198 = vsel %vm454, %v3195, %v3197
      %v3199 = vrot.slane %v3101, 1
      %v3200 = vrot.slane %v3102, 1
      %v3201 = vsel %vm454, %v3199, %v3200
      %v3202 = vrot.slane %v3103, 1
      %v3203 = vsel %vm454, %v3200, %v3202
      %v3204 = vrot.slane %v3104, 1
      %v3205 = vrot.slane %v3105, 1
      %v3206 = vsel %vm454, %v3204, %v3205
      %v3207 = vrot.slane %v3106, 1
      %v3208 = vsel %vm454, %v3205, %v3207
      %v3209 = vrot.slane %v3107, 1
      %v3210 = vrot.slane %v3108, 1
      %v3211 = vsel %vm454, %v3209, %v3210
      %v3212 = vrot.slane %v3109, 1
      %v3213 = vsel %vm454, %v3210, %v3212
      %v3214 = vrot.slane %v3110, 1
      %v3215 = vrot.slane %v3111, 1
      %v3216 = vsel %vm454, %v3214, %v3215
      %v3217 = vrot.slane %v3112, 1
      %v3218 = vsel %vm454, %v3215, %v3217
      %v3219 = vrot.slane %v3113, 1
      %v3220 = vrot.slane %v3114, 1
      %v3221 = vsel %vm454, %v3219, %v3220
      %v3222 = vrot.slane %v3115, 1
      %v3223 = vsel %vm454, %v3220, %v3222
      %v3224 = vrot.slane %v3116, 1
      %v3225 = vrot.slane %v3117, 1
      %v3226 = vsel %vm454, %v3224, %v3225
      %v3227 = vrot.slane %v3118, 1
      %v3228 = vsel %vm454, %v3225, %v3227
      %v3229 = vrot.slane %v3119, 1
      %v3230 = vrot.slane %v3120, 1
      %v3231 = vsel %vm454, %v3229, %v3230
      %v3232 = vrot.slane %v3121, 1
      %v3233 = vsel %vm454, %v3230, %v3232
      %v3234 = vrot.slane %v3122, 1
      %v3235 = vrot.slane %v3123, 1
      %v3236 = vsel %vm454, %v3234, %v3235
      %v3237 = vrot.slane %v3124, 1
      %v3238 = vsel %vm454, %v3235, %v3237
      %v3239 = vrot.slane %v3125, 1
      %v3240 = vrot.slane %v3126, 1
      %v3241 = vsel %vm454, %v3239, %v3240
      %v3242 = vrot.slane %v3127, 1
      %v3243 = vsel %vm454, %v3240, %v3242
      %v3244 = vrot.slane %v3128, 1
      %v3245 = vrot.slane %v3129, 1
      %v3246 = vsel %vm454, %v3244, %v3245
      %v3247 = vrot.slane %v3130, 1
      %v3248 = vsel %vm454, %v3245, %v3247
      %v3249 = vrot.slane %v3131, 1
      %v3250 = vrot.slane %v3132, 1
      %v3251 = vsel %vm454, %v3249, %v3250
      %v3252 = vrot.slane %v3133, 1
      %v3253 = vsel %vm454, %v3250, %v3252
      %v3254 = vrot.slane %v3134, 1
      %v3255 = vrot.slane %v3135, 1
      %v3256 = vsel %vm454, %v3254, %v3255
      %v3257 = vrot.slane %v3136, 1
      %v3258 = vsel %vm454, %v3255, %v3257
      %v3259 = vrot.slane %v3137, 1
      %v3260 = vrot.slane %v3138, 1
      %v3261 = vsel %vm454, %v3259, %v3260
      %v3262 = vrot.slane %v3139, 1
      %v3263 = vsel %vm454, %v3260, %v3262
      %v3264 = vrot.slane %v3140, 1
      %v3265 = vrot.slane %v3141, 1
      %v3266 = vsel %vm454, %v3264, %v3265
      %v3267 = vrot.slane %v3142, 1
      %v3268 = vsel %vm454, %v3265, %v3267
      %v3269 = vrot.slane %v3143, 1
      %v3270 = vrot.slane %v3144, 1
      %v3271 = vsel %vm454, %v3269, %v3270
      %v3272 = vrot.slane %v3145, 1
      %v3273 = vsel %vm454, %v3270, %v3272
      %v3322 = vadd.f32 %v3045, %v3196
      %v3323 = vadd.f32 %v3046, %v3198
      %v3324 = vadd.f32 %v3047, %v3197
      %v3325 = vadd.f32 %v3048, %v3201
      %v3326 = vadd.f32 %v3049, %v3203
      %v3327 = vadd.f32 %v3050, %v3202
      %v3328 = vadd.f32 %v3051, %v3206
      %v3329 = vadd.f32 %v3052, %v3208
      %v3330 = vadd.f32 %v3053, %v3207
      %v3331 = vadd.f32 %v3054, %v3211
      %v3332 = vadd.f32 %v3055, %v3213
      %v3333 = vadd.f32 %v3056, %v3212
      %v3334 = vadd.f32 %v3057, %v3216
      %v3335 = vadd.f32 %v3058, %v3218
      %v3336 = vadd.f32 %v3059, %v3217
      %v3337 = vadd.f32 %v3060, %v3221
      %v3338 = vadd.f32 %v3061, %v3223
      %v3339 = vadd.f32 %v3062, %v3222
      %v3340 = vadd.f32 %v3063, %v3226
      %v3341 = vadd.f32 %v3064, %v3228
      %v3342 = vadd.f32 %v3065, %v3227
      %v3343 = vadd.f32 %v3066, %v3231
      %v3344 = vadd.f32 %v3067, %v3233
      %v3345 = vadd.f32 %v3068, %v3232
      %v3346 = vadd.f32 %v3069, %v3236
      %v3347 = vadd.f32 %v3070, %v3238
      %v3348 = vadd.f32 %v3071, %v3237
      %v3349 = vadd.f32 %v3072, %v3241
      %v3350 = vadd.f32 %v3073, %v3243
      %v3351 = vadd.f32 %v3074, %v3242
      %v3352 = vadd.f32 %v3075, %v3246
      %v3353 = vadd.f32 %v3076, %v3248
      %v3354 = vadd.f32 %v3077, %v3247
      %v3355 = vadd.f32 %v3078, %v3251
      %v3356 = vadd.f32 %v3079, %v3253
      %v3357 = vadd.f32 %v3080, %v3252
      %v3358 = vadd.f32 %v3081, %v3256
      %v3359 = vadd.f32 %v3082, %v3258
      %v3360 = vadd.f32 %v3083, %v3257
      %v3361 = vadd.f32 %v3084, %v3261
      %v3362 = vadd.f32 %v3085, %v3263
      %v3363 = vadd.f32 %v3086, %v3262
      %v3364 = vadd.f32 %v3087, %v3266
      %v3365 = vadd.f32 %v3088, %v3268
      %v3366 = vadd.f32 %v3089, %v3267
      %v3367 = vadd.f32 %v3090, %v3271
      %v3368 = vadd.f32 %v3091, %v3273
      %v3369 = vadd.f32 %v3092, %v3272
      %v3370 = vld [vmem:[%s1 + $0xb] sm:$0x1]
      %v3371 = vlaneseq
      %v3372 = vshrl.u32 %v3371, 7
      %v3373 = vsub.s32 0, %v3372
      %v3374 = vrot.slane %v3370, %v3373
      %v3375 = vmul.f32 %v2290, %v3374
      %v3376 = vmul.f32 %v2291, %v3374
      %v3377 = vmul.f32 %v2292, %v3374
      %v3378 = vmul.f32 %v2293, %v3374
      %v3379 = vmul.f32 %v2294, %v3374
      %v3380 = vmul.f32 %v2295, %v3374
      %v3381 = vmul.f32 %v2296, %v3374
      %v3382 = vmul.f32 %v2297, %v3374
      %v3383 = vmul.f32 %v2298, %v3374
      %v3384 = vmul.f32 %v2299, %v3374
      %v3385 = vmul.f32 %v2300, %v3374
      %v3386 = vmul.f32 %v2301, %v3374
      %v3387 = vmul.f32 %v2302, %v3374
      %v3388 = vmul.f32 %v2303, %v3374
      %v3389 = vmul.f32 %v2304, %v3374
      %v3390 = vmul.f32 %v2305, %v3374
      %v3391 = vmul.f32 %v2306, %v3374
      %v3392 = vmul.f32 %v2307, %v3374
      %v3393 = vmul.f32 %v2308, %v3374
      %v3394 = vmul.f32 %v2309, %v3374
      %v3395 = vmul.f32 %v2310, %v3374
      %v3396 = vmul.f32 %v2311, %v3374
      %v3397 = vmul.f32 %v2312, %v3374
      %v3398 = vmul.f32 %v2313, %v3374
      %v3399 = vmul.f32 %v2314, %v3374
      %v3400 = vmul.f32 %v2315, %v3374
      %v3401 = vmul.f32 %v2316, %v3374
      %v3402 = vmul.f32 %v2317, %v3374
      %v3403 = vmul.f32 %v2318, %v3374
      %v3404 = vmul.f32 %v2319, %v3374
      %v3405 = vmul.f32 %v2320, %v3374
      %v3406 = vmul.f32 %v2321, %v3374
      %v3407 = vmul.f32 %v2322, %v3374
      %v3408 = vmul.f32 %v2323, %v3374
      %v3409 = vmul.f32 %v2324, %v3374
      %v3410 = vmul.f32 %v2325, %v3374
      %v3411 = vmul.f32 %v2326, %v3374
      %v3412 = vmul.f32 %v2327, %v3374
      %v3413 = vmul.f32 %v2328, %v3374
      %v3414 = vmul.f32 %v2329, %v3374
      %v3415 = vmul.f32 %v2330, %v3374
      %v3416 = vmul.f32 %v2331, %v3374
      %v3417 = vmul.f32 %v2332, %v3374
      %v3418 = vmul.f32 %v2333, %v3374
      %v3419 = vmul.f32 %v2334, %v3374
      %v3420 = vmul.f32 %v2990, %v3374
      %v3421 = vmul.f32 %v2991, %v3374
      %v3422 = vmul.f32 %v2992, %v3374
      %v3471 = vrot.slane %v3375, 2
      %v3472 = vrot.slane %v3376, 2
      %v3473 = vsel %vm732, %v3471, %v3472
      %v3474 = vrot.slane %v3377, 2
      %v3475 = vsel %vm732, %v3472, %v3474
      %v3476 = vrot.slane %v3378, 2
      %v3477 = vrot.slane %v3379, 2
      %v3478 = vsel %vm732, %v3476, %v3477
      %v3479 = vrot.slane %v3380, 2
      %v3480 = vsel %vm732, %v3477, %v3479
      %v3481 = vrot.slane %v3381, 2
      %v3482 = vrot.slane %v3382, 2
      %v3483 = vsel %vm732, %v3481, %v3482
      %v3484 = vrot.slane %v3383, 2
      %v3485 = vsel %vm732, %v3482, %v3484
      %v3486 = vrot.slane %v3384, 2
      %v3487 = vrot.slane %v3385, 2
      %v3488 = vsel %vm732, %v3486, %v3487
      %v3489 = vrot.slane %v3386, 2
      %v3490 = vsel %vm732, %v3487, %v3489
      %v3491 = vrot.slane %v3387, 2
      %v3492 = vrot.slane %v3388, 2
      %v3493 = vsel %vm732, %v3491, %v3492
      %v3494 = vrot.slane %v3389, 2
      %v3495 = vsel %vm732, %v3492, %v3494
      %v3496 = vrot.slane %v3390, 2
      %v3497 = vrot.slane %v3391, 2
      %v3498 = vsel %vm732, %v3496, %v3497
      %v3499 = vrot.slane %v3392, 2
      %v3500 = vsel %vm732, %v3497, %v3499
      %v3501 = vrot.slane %v3393, 2
      %v3502 = vrot.slane %v3394, 2
      %v3503 = vsel %vm732, %v3501, %v3502
      %v3504 = vrot.slane %v3395, 2
      %v3505 = vsel %vm732, %v3502, %v3504
      %v3506 = vrot.slane %v3396, 2
      %v3507 = vrot.slane %v3397, 2
      %v3508 = vsel %vm732, %v3506, %v3507
      %v3509 = vrot.slane %v3398, 2
      %v3510 = vsel %vm732, %v3507, %v3509
      %v3511 = vrot.slane %v3399, 2
      %v3512 = vrot.slane %v3400, 2
      %v3513 = vsel %vm732, %v3511, %v3512
      %v3514 = vrot.slane %v3401, 2
      %v3515 = vsel %vm732, %v3512, %v3514
      %v3516 = vrot.slane %v3402, 2
      %v3517 = vrot.slane %v3403, 2
      %v3518 = vsel %vm732, %v3516, %v3517
      %v3519 = vrot.slane %v3404, 2
      %v3520 = vsel %vm732, %v3517, %v3519
      %v3521 = vrot.slane %v3405, 2
      %v3522 = vrot.slane %v3406, 2
      %v3523 = vsel %vm732, %v3521, %v3522
      %v3524 = vrot.slane %v3407, 2
      %v3525 = vsel %vm732, %v3522, %v3524
      %v3526 = vrot.slane %v3408, 2
      %v3527 = vrot.slane %v3409, 2
      %v3528 = vsel %vm732, %v3526, %v3527
      %v3529 = vrot.slane %v3410, 2
      %v3530 = vsel %vm732, %v3527, %v3529
      %v3531 = vrot.slane %v3411, 2
      %v3532 = vrot.slane %v3412, 2
      %v3533 = vsel %vm732, %v3531, %v3532
      %v3534 = vrot.slane %v3413, 2
      %v3535 = vsel %vm732, %v3532, %v3534
      %v3536 = vrot.slane %v3414, 2
      %v3537 = vrot.slane %v3415, 2
      %v3538 = vsel %vm732, %v3536, %v3537
      %v3539 = vrot.slane %v3416, 2
      %v3540 = vsel %vm732, %v3537, %v3539
      %v3541 = vrot.slane %v3417, 2
      %v3542 = vrot.slane %v3418, 2
      %v3543 = vsel %vm732, %v3541, %v3542
      %v3544 = vrot.slane %v3419, 2
      %v3545 = vsel %vm732, %v3542, %v3544
      %v3546 = vrot.slane %v3420, 2
      %v3547 = vrot.slane %v3421, 2
      %v3548 = vsel %vm732, %v3546, %v3547
      %v3549 = vrot.slane %v3422, 2
      %v3550 = vsel %vm732, %v3547, %v3549
      %v3599 = vadd.f32 %v3322, %v3473
      %v3600 = vadd.f32 %v3323, %v3475
      %v3601 = vadd.f32 %v3324, %v3474
      %v3602 = vadd.f32 %v3325, %v3478
      %v3603 = vadd.f32 %v3326, %v3480
      %v3604 = vadd.f32 %v3327, %v3479
      %v3605 = vadd.f32 %v3328, %v3483
      %v3606 = vadd.f32 %v3329, %v3485
      %v3607 = vadd.f32 %v3330, %v3484
      %v3608 = vadd.f32 %v3331, %v3488
      %v3609 = vadd.f32 %v3332, %v3490
      %v3610 = vadd.f32 %v3333, %v3489
      %v3611 = vadd.f32 %v3334, %v3493
      %v3612 = vadd.f32 %v3335, %v3495
      %v3613 = vadd.f32 %v3336, %v3494
      %v3614 = vadd.f32 %v3337, %v3498
      %v3615 = vadd.f32 %v3338, %v3500
      %v3616 = vadd.f32 %v3339, %v3499
      %v3617 = vadd.f32 %v3340, %v3503
      %v3618 = vadd.f32 %v3341, %v3505
      %v3619 = vadd.f32 %v3342, %v3504
      %v3620 = vadd.f32 %v3343, %v3508
      %v3621 = vadd.f32 %v3344, %v3510
      %v3622 = vadd.f32 %v3345, %v3509
      %v3623 = vadd.f32 %v3346, %v3513
      %v3624 = vadd.f32 %v3347, %v3515
      %v3625 = vadd.f32 %v3348, %v3514
      %v3626 = vadd.f32 %v3349, %v3518
      %v3627 = vadd.f32 %v3350, %v3520
      %v3628 = vadd.f32 %v3351, %v3519
      %v3629 = vadd.f32 %v3352, %v3523
      %v3630 = vadd.f32 %v3353, %v3525
      %v3631 = vadd.f32 %v3354, %v3524
      %v3632 = vadd.f32 %v3355, %v3528
      %v3633 = vadd.f32 %v3356, %v3530
      %v3634 = vadd.f32 %v3357, %v3529
      %v3635 = vadd.f32 %v3358, %v3533
      %v3636 = vadd.f32 %v3359, %v3535
      %v3637 = vadd.f32 %v3360, %v3534
      %v3638 = vadd.f32 %v3361, %v3538
      %v3639 = vadd.f32 %v3362, %v3540
      %v3640 = vadd.f32 %v3363, %v3539
      %v3641 = vadd.f32 %v3364, %v3543
      %v3642 = vadd.f32 %v3365, %v3545
      %v3643 = vadd.f32 %v3366, %v3544
      %v3644 = vadd.f32 %v3367, %v3548
      %v3645 = vadd.f32 %v3368, %v3550
      %v3646 = vadd.f32 %v3369, %v3549
      %v3647 = vld [vmem:[%s1 + $0xd] sm:$0x1]
      %v3648 = vunpack.c.l.bf16 %v2280
      %v3649 = vunpack.c.l.bf16 %v2281
      %v3650 = vunpack.c.l.bf16 %v2282
      %v3651 = vlaneseq
      %v3652 = vshrl.u32 %v3651, 7
      %v3653 = vsub.s32 0, %v3652
      %v3654 = vrot.slane %v3647, %v3653
      %v3655 = vmul.f32 %v2293, %v3654
      %v3656 = vmul.f32 %v2294, %v3654
      %v3657 = vmul.f32 %v2295, %v3654
      %v3658 = vmul.f32 %v2296, %v3654
      %v3659 = vmul.f32 %v2297, %v3654
      %v3660 = vmul.f32 %v2298, %v3654
      %v3661 = vmul.f32 %v2299, %v3654
      %v3662 = vmul.f32 %v2300, %v3654
      %v3663 = vmul.f32 %v2301, %v3654
      %v3664 = vmul.f32 %v2302, %v3654
      %v3665 = vmul.f32 %v2303, %v3654
      %v3666 = vmul.f32 %v2304, %v3654
      %v3667 = vmul.f32 %v2305, %v3654
      %v3668 = vmul.f32 %v2306, %v3654
      %v3669 = vmul.f32 %v2307, %v3654
      %v3670 = vmul.f32 %v2308, %v3654
      %v3671 = vmul.f32 %v2309, %v3654
      %v3672 = vmul.f32 %v2310, %v3654
      %v3673 = vmul.f32 %v2311, %v3654
      %v3674 = vmul.f32 %v2312, %v3654
      %v3675 = vmul.f32 %v2313, %v3654
      %v3676 = vmul.f32 %v2314, %v3654
      %v3677 = vmul.f32 %v2315, %v3654
      %v3678 = vmul.f32 %v2316, %v3654
      %v3679 = vmul.f32 %v2317, %v3654
      %v3680 = vmul.f32 %v2318, %v3654
      %v3681 = vmul.f32 %v2319, %v3654
      %v3682 = vmul.f32 %v2320, %v3654
      %v3683 = vmul.f32 %v2321, %v3654
      %v3684 = vmul.f32 %v2322, %v3654
      %v3685 = vmul.f32 %v2323, %v3654
      %v3686 = vmul.f32 %v2324, %v3654
      %v3687 = vmul.f32 %v2325, %v3654
      %v3688 = vmul.f32 %v2326, %v3654
      %v3689 = vmul.f32 %v2327, %v3654
      %v3690 = vmul.f32 %v2328, %v3654
      %v3691 = vmul.f32 %v2329, %v3654
      %v3692 = vmul.f32 %v2330, %v3654
      %v3693 = vmul.f32 %v2331, %v3654
      %v3694 = vmul.f32 %v2332, %v3654
      %v3695 = vmul.f32 %v2333, %v3654
      %v3696 = vmul.f32 %v2334, %v3654
      %v3697 = vmul.f32 %v2990, %v3654
      %v3698 = vmul.f32 %v2991, %v3654
      %v3699 = vmul.f32 %v2992, %v3654
      %v3700 = vmul.f32 %v3648, %v3654
      %v3701 = vmul.f32 %v3649, %v3654
      %v3702 = vmul.f32 %v3650, %v3654
      %v3703 = vadd.f32 %v3599, %v3655
      %v3704 = vadd.f32 %v3600, %v3656
      %v3705 = vadd.f32 %v3601, %v3657
      %v3706 = vadd.f32 %v3602, %v3658
      %v3707 = vadd.f32 %v3603, %v3659
      %v3708 = vadd.f32 %v3604, %v3660
      %v3709 = vadd.f32 %v3605, %v3661
      %v3710 = vadd.f32 %v3606, %v3662
      %v3711 = vadd.f32 %v3607, %v3663
      %v3712 = vadd.f32 %v3608, %v3664
      %v3713 = vadd.f32 %v3609, %v3665
      %v3714 = vadd.f32 %v3610, %v3666
      %v3715 = vadd.f32 %v3611, %v3667
      %v3716 = vadd.f32 %v3612, %v3668
      %v3717 = vadd.f32 %v3613, %v3669
      %v3718 = vadd.f32 %v3614, %v3670
      %v3719 = vadd.f32 %v3615, %v3671
      %v3720 = vadd.f32 %v3616, %v3672
      %v3721 = vadd.f32 %v3617, %v3673
      %v3722 = vadd.f32 %v3618, %v3674
      %v3723 = vadd.f32 %v3619, %v3675
      %v3724 = vadd.f32 %v3620, %v3676
      %v3725 = vadd.f32 %v3621, %v3677
      %v3726 = vadd.f32 %v3622, %v3678
      %v3727 = vadd.f32 %v3623, %v3679
      %v3728 = vadd.f32 %v3624, %v3680
      %v3729 = vadd.f32 %v3625, %v3681
      %v3730 = vadd.f32 %v3626, %v3682
      %v3731 = vadd.f32 %v3627, %v3683
      %v3732 = vadd.f32 %v3628, %v3684
      %v3733 = vadd.f32 %v3629, %v3685
      %v3734 = vadd.f32 %v3630, %v3686
      %v3735 = vadd.f32 %v3631, %v3687
      %v3736 = vadd.f32 %v3632, %v3688
      %v3737 = vadd.f32 %v3633, %v3689
      %v3738 = vadd.f32 %v3634, %v3690
      %v3739 = vadd.f32 %v3635, %v3691
      %v3740 = vadd.f32 %v3636, %v3692
      %v3741 = vadd.f32 %v3637, %v3693
      %v3742 = vadd.f32 %v3638, %v3694
      %v3743 = vadd.f32 %v3639, %v3695
      %v3744 = vadd.f32 %v3640, %v3696
      %v3745 = vadd.f32 %v3641, %v3697
      %v3746 = vadd.f32 %v3642, %v3698
      %v3747 = vadd.f32 %v3643, %v3699
      %v3748 = vadd.f32 %v3644, %v3700
      %v3749 = vadd.f32 %v3645, %v3701
      %v3750 = vadd.f32 %v3646, %v3702
      %v3751 = vld [vmem:[%s1 + $0xf] sm:$0x1]
      %v3752 = vlaneseq
      %v3753 = vshrl.u32 %v3752, 7
      %v3754 = vsub.s32 0, %v3753
      %v3755 = vrot.slane %v3751, %v3754
      %v3756 = vmul.f32 %v2293, %v3755
      %v3757 = vmul.f32 %v2294, %v3755
      %v3758 = vmul.f32 %v2295, %v3755
      %v3759 = vmul.f32 %v2296, %v3755
      %v3760 = vmul.f32 %v2297, %v3755
      %v3761 = vmul.f32 %v2298, %v3755
      %v3762 = vmul.f32 %v2299, %v3755
      %v3763 = vmul.f32 %v2300, %v3755
      %v3764 = vmul.f32 %v2301, %v3755
      %v3765 = vmul.f32 %v2302, %v3755
      %v3766 = vmul.f32 %v2303, %v3755
      %v3767 = vmul.f32 %v2304, %v3755
      %v3768 = vmul.f32 %v2305, %v3755
      %v3769 = vmul.f32 %v2306, %v3755
      %v3770 = vmul.f32 %v2307, %v3755
      %v3771 = vmul.f32 %v2308, %v3755
      %v3772 = vmul.f32 %v2309, %v3755
      %v3773 = vmul.f32 %v2310, %v3755
      %v3774 = vmul.f32 %v2311, %v3755
      %v3775 = vmul.f32 %v2312, %v3755
      %v3776 = vmul.f32 %v2313, %v3755
      %v3777 = vmul.f32 %v2314, %v3755
      %v3778 = vmul.f32 %v2315, %v3755
      %v3779 = vmul.f32 %v2316, %v3755
      %v3780 = vmul.f32 %v2317, %v3755
      %v3781 = vmul.f32 %v2318, %v3755
      %v3782 = vmul.f32 %v2319, %v3755
      %v3783 = vmul.f32 %v2320, %v3755
      %v3784 = vmul.f32 %v2321, %v3755
      %v3785 = vmul.f32 %v2322, %v3755
      %v3786 = vmul.f32 %v2323, %v3755
      %v3787 = vmul.f32 %v2324, %v3755
      %v3788 = vmul.f32 %v2325, %v3755
      %v3789 = vmul.f32 %v2326, %v3755
      %v3790 = vmul.f32 %v2327, %v3755
      %v3791 = vmul.f32 %v2328, %v3755
      %v3792 = vmul.f32 %v2329, %v3755
      %v3793 = vmul.f32 %v2330, %v3755
      %v3794 = vmul.f32 %v2331, %v3755
      %v3795 = vmul.f32 %v2332, %v3755
      %v3796 = vmul.f32 %v2333, %v3755
      %v3797 = vmul.f32 %v2334, %v3755
      %v3798 = vmul.f32 %v2990, %v3755
      %v3799 = vmul.f32 %v2991, %v3755
      %v3800 = vmul.f32 %v2992, %v3755
      %v3801 = vmul.f32 %v3648, %v3755
      %v3802 = vmul.f32 %v3649, %v3755
      %v3803 = vmul.f32 %v3650, %v3755
      %v3852 = vrot.slane %v3756, 1
      %v3853 = vrot.slane %v3757, 1
      %v3854 = vsel %vm454, %v3852, %v3853
      %v3855 = vrot.slane %v3758, 1
      %v3856 = vsel %vm454, %v3853, %v3855
      %v3857 = vrot.slane %v3759, 1
      %v3858 = vrot.slane %v3760, 1
      %v3859 = vsel %vm454, %v3857, %v3858
      %v3860 = vrot.slane %v3761, 1
      %v3861 = vsel %vm454, %v3858, %v3860
      %v3862 = vrot.slane %v3762, 1
      %v3863 = vrot.slane %v3763, 1
      %v3864 = vsel %vm454, %v3862, %v3863
      %v3865 = vrot.slane %v3764, 1
      %v3866 = vsel %vm454, %v3863, %v3865
      %v3867 = vrot.slane %v3765, 1
      %v3868 = vrot.slane %v3766, 1
      %v3869 = vsel %vm454, %v3867, %v3868
      %v3870 = vrot.slane %v3767, 1
      %v3871 = vsel %vm454, %v3868, %v3870
      %v3872 = vrot.slane %v3768, 1
      %v3873 = vrot.slane %v3769, 1
      %v3874 = vsel %vm454, %v3872, %v3873
      %v3875 = vrot.slane %v3770, 1
      %v3876 = vsel %vm454, %v3873, %v3875
      %v3877 = vrot.slane %v3771, 1
      %v3878 = vrot.slane %v3772, 1
      %v3879 = vsel %vm454, %v3877, %v3878
      %v3880 = vrot.slane %v3773, 1
      %v3881 = vsel %vm454, %v3878, %v3880
      %v3882 = vrot.slane %v3774, 1
      %v3883 = vrot.slane %v3775, 1
      %v3884 = vsel %vm454, %v3882, %v3883
      %v3885 = vrot.slane %v3776, 1
      %v3886 = vsel %vm454, %v3883, %v3885
      %v3887 = vrot.slane %v3777, 1
      %v3888 = vrot.slane %v3778, 1
      %v3889 = vsel %vm454, %v3887, %v3888
      %v3890 = vrot.slane %v3779, 1
      %v3891 = vsel %vm454, %v3888, %v3890
      %v3892 = vrot.slane %v3780, 1
      %v3893 = vrot.slane %v3781, 1
      %v3894 = vsel %vm454, %v3892, %v3893
      %v3895 = vrot.slane %v3782, 1
      %v3896 = vsel %vm454, %v3893, %v3895
      %v3897 = vrot.slane %v3783, 1
      %v3898 = vrot.slane %v3784, 1
      %v3899 = vsel %vm454, %v3897, %v3898
      %v3900 = vrot.slane %v3785, 1
      %v3901 = vsel %vm454, %v3898, %v3900
      %v3902 = vrot.slane %v3786, 1
      %v3903 = vrot.slane %v3787, 1
      %v3904 = vsel %vm454, %v3902, %v3903
      %v3905 = vrot.slane %v3788, 1
      %v3906 = vsel %vm454, %v3903, %v3905
      %v3907 = vrot.slane %v3789, 1
      %v3908 = vrot.slane %v3790, 1
      %v3909 = vsel %vm454, %v3907, %v3908
      %v3910 = vrot.slane %v3791, 1
      %v3911 = vsel %vm454, %v3908, %v3910
      %v3912 = vrot.slane %v3792, 1
      %v3913 = vrot.slane %v3793, 1
      %v3914 = vsel %vm454, %v3912, %v3913
      %v3915 = vrot.slane %v3794, 1
      %v3916 = vsel %vm454, %v3913, %v3915
      %v3917 = vrot.slane %v3795, 1
      %v3918 = vrot.slane %v3796, 1
      %v3919 = vsel %vm454, %v3917, %v3918
      %v3920 = vrot.slane %v3797, 1
      %v3921 = vsel %vm454, %v3918, %v3920
      %v3922 = vrot.slane %v3798, 1
      %v3923 = vrot.slane %v3799, 1
      %v3924 = vsel %vm454, %v3922, %v3923
      %v3925 = vrot.slane %v3800, 1
      %v3926 = vsel %vm454, %v3923, %v3925
      %v3927 = vrot.slane %v3801, 1
      %v3928 = vrot.slane %v3802, 1
      %v3929 = vsel %vm454, %v3927, %v3928
      %v3930 = vrot.slane %v3803, 1
      %v3931 = vsel %vm454, %v3928, %v3930
      %v3980 = vadd.f32 %v3703, %v3854
      %v3981 = vadd.f32 %v3704, %v3856
      %v3982 = vadd.f32 %v3705, %v3855
      %v3983 = vadd.f32 %v3706, %v3859
      %v3984 = vadd.f32 %v3707, %v3861
      %v3985 = vadd.f32 %v3708, %v3860
      %v3986 = vadd.f32 %v3709, %v3864
      %v3987 = vadd.f32 %v3710, %v3866
      %v3988 = vadd.f32 %v3711, %v3865
      %v3989 = vadd.f32 %v3712, %v3869
      %v3990 = vadd.f32 %v3713, %v3871
      %v3991 = vadd.f32 %v3714, %v3870
      %v3992 = vadd.f32 %v3715, %v3874
      %v3993 = vadd.f32 %v3716, %v3876
      %v3994 = vadd.f32 %v3717, %v3875
      %v3995 = vadd.f32 %v3718, %v3879
      %v3996 = vadd.f32 %v3719, %v3881
      %v3997 = vadd.f32 %v3720, %v3880
      %v3998 = vadd.f32 %v3721, %v3884
      %v3999 = vadd.f32 %v3722, %v3886
      %v4000 = vadd.f32 %v3723, %v3885
      %v4001 = vadd.f32 %v3724, %v3889
      %v4002 = vadd.f32 %v3725, %v3891
      %v4003 = vadd.f32 %v3726, %v3890
      %v4004 = vadd.f32 %v3727, %v3894
      %v4005 = vadd.f32 %v3728, %v3896
      %v4006 = vadd.f32 %v3729, %v3895
      %v4007 = vadd.f32 %v3730, %v3899
      %v4008 = vadd.f32 %v3731, %v3901
      %v4009 = vadd.f32 %v3732, %v3900
      %v4010 = vadd.f32 %v3733, %v3904
      %v4011 = vadd.f32 %v3734, %v3906
      %v4012 = vadd.f32 %v3735, %v3905
      %v4013 = vadd.f32 %v3736, %v3909
      %v4014 = vadd.f32 %v3737, %v3911
      %v4015 = vadd.f32 %v3738, %v3910
      %v4016 = vadd.f32 %v3739, %v3914
      %v4017 = vadd.f32 %v3740, %v3916
      %v4018 = vadd.f32 %v3741, %v3915
      %v4019 = vadd.f32 %v3742, %v3919
      %v4020 = vadd.f32 %v3743, %v3921
      %v4021 = vadd.f32 %v3744, %v3920
      %v4022 = vadd.f32 %v3745, %v3924
      %v4023 = vadd.f32 %v3746, %v3926
      %v4024 = vadd.f32 %v3747, %v3925
      %v4025 = vadd.f32 %v3748, %v3929
      %v4026 = vadd.f32 %v3749, %v3931
      %v4027 = vadd.f32 %v3750, %v3930
      %v4028 = vld [vmem:[%s1 + $0x11] sm:$0x1]
      %v4029 = vlaneseq
      %v4030 = vshrl.u32 %v4029, 7
      %v4031 = vsub.s32 0, %v4030
      %v4032 = vrot.slane %v4028, %v4031
      %v4033 = vmul.f32 %v2293, %v4032
      %v4034 = vmul.f32 %v2294, %v4032
      %v4035 = vmul.f32 %v2295, %v4032
      %v4036 = vmul.f32 %v2296, %v4032
      %v4037 = vmul.f32 %v2297, %v4032
      %v4038 = vmul.f32 %v2298, %v4032
      %v4039 = vmul.f32 %v2299, %v4032
      %v4040 = vmul.f32 %v2300, %v4032
      %v4041 = vmul.f32 %v2301, %v4032
      %v4042 = vmul.f32 %v2302, %v4032
      %v4043 = vmul.f32 %v2303, %v4032
      %v4044 = vmul.f32 %v2304, %v4032
      %v4045 = vmul.f32 %v2305, %v4032
      %v4046 = vmul.f32 %v2306, %v4032
      %v4047 = vmul.f32 %v2307, %v4032
      %v4048 = vmul.f32 %v2308, %v4032
      %v4049 = vmul.f32 %v2309, %v4032
      %v4050 = vmul.f32 %v2310, %v4032
      %v4051 = vmul.f32 %v2311, %v4032
      %v4052 = vmul.f32 %v2312, %v4032
      %v4053 = vmul.f32 %v2313, %v4032
      %v4054 = vmul.f32 %v2314, %v4032
      %v4055 = vmul.f32 %v2315, %v4032
      %v4056 = vmul.f32 %v2316, %v4032
      %v4057 = vmul.f32 %v2317, %v4032
      %v4058 = vmul.f32 %v2318, %v4032
      %v4059 = vmul.f32 %v2319, %v4032
      %v4060 = vmul.f32 %v2320, %v4032
      %v4061 = vmul.f32 %v2321, %v4032
      %v4062 = vmul.f32 %v2322, %v4032
      %v4063 = vmul.f32 %v2323, %v4032
      %v4064 = vmul.f32 %v2324, %v4032
      %v4065 = vmul.f32 %v2325, %v4032
      %v4066 = vmul.f32 %v2326, %v4032
      %v4067 = vmul.f32 %v2327, %v4032
      %v4068 = vmul.f32 %v2328, %v4032
      %v4069 = vmul.f32 %v2329, %v4032
      %v4070 = vmul.f32 %v2330, %v4032
      %v4071 = vmul.f32 %v2331, %v4032
      %v4072 = vmul.f32 %v2332, %v4032
      %v4073 = vmul.f32 %v2333, %v4032
      %v4074 = vmul.f32 %v2334, %v4032
      %v4075 = vmul.f32 %v2990, %v4032
      %v4076 = vmul.f32 %v2991, %v4032
      %v4077 = vmul.f32 %v2992, %v4032
      %v4078 = vmul.f32 %v3648, %v4032
      %v4079 = vmul.f32 %v3649, %v4032
      %v4080 = vmul.f32 %v3650, %v4032
      %v4129 = vrot.slane %v4033, 2
      %v4130 = vrot.slane %v4034, 2
      %v4131 = vsel %vm732, %v4129, %v4130
      %v4132 = vrot.slane %v4035, 2
      %v4133 = vsel %vm732, %v4130, %v4132
      %v4134 = vrot.slane %v4036, 2
      %v4135 = vrot.slane %v4037, 2
      %v4136 = vsel %vm732, %v4134, %v4135
      %v4137 = vrot.slane %v4038, 2
      %v4138 = vsel %vm732, %v4135, %v4137
      %v4139 = vrot.slane %v4039, 2
      %v4140 = vrot.slane %v4040, 2
      %v4141 = vsel %vm732, %v4139, %v4140
      %v4142 = vrot.slane %v4041, 2
      %v4143 = vsel %vm732, %v4140, %v4142
      %v4144 = vrot.slane %v4042, 2
      %v4145 = vrot.slane %v4043, 2
      %v4146 = vsel %vm732, %v4144, %v4145
      %v4147 = vrot.slane %v4044, 2
      %v4148 = vsel %vm732, %v4145, %v4147
      %v4149 = vrot.slane %v4045, 2
      %v4150 = vrot.slane %v4046, 2
      %v4151 = vsel %vm732, %v4149, %v4150
      %v4152 = vrot.slane %v4047, 2
      %v4153 = vsel %vm732, %v4150, %v4152
      %v4154 = vrot.slane %v4048, 2
      %v4155 = vrot.slane %v4049, 2
      %v4156 = vsel %vm732, %v4154, %v4155
      %v4157 = vrot.slane %v4050, 2
      %v4158 = vsel %vm732, %v4155, %v4157
      %v4159 = vrot.slane %v4051, 2
      %v4160 = vrot.slane %v4052, 2
      %v4161 = vsel %vm732, %v4159, %v4160
      %v4162 = vrot.slane %v4053, 2
      %v4163 = vsel %vm732, %v4160, %v4162
      %v4164 = vrot.slane %v4054, 2
      %v4165 = vrot.slane %v4055, 2
      %v4166 = vsel %vm732, %v4164, %v4165
      %v4167 = vrot.slane %v4056, 2
      %v4168 = vsel %vm732, %v4165, %v4167
      %v4169 = vrot.slane %v4057, 2
      %v4170 = vrot.slane %v4058, 2
      %v4171 = vsel %vm732, %v4169, %v4170
      %v4172 = vrot.slane %v4059, 2
      %v4173 = vsel %vm732, %v4170, %v4172
      %v4174 = vrot.slane %v4060, 2
      %v4175 = vrot.slane %v4061, 2
      %v4176 = vsel %vm732, %v4174, %v4175
      %v4177 = vrot.slane %v4062, 2
      %v4178 = vsel %vm732, %v4175, %v4177
      %v4179 = vrot.slane %v4063, 2
      %v4180 = vrot.slane %v4064, 2
      %v4181 = vsel %vm732, %v4179, %v4180
      %v4182 = vrot.slane %v4065, 2
      %v4183 = vsel %vm732, %v4180, %v4182
      %v4184 = vrot.slane %v4066, 2
      %v4185 = vrot.slane %v4067, 2
      %v4186 = vsel %vm732, %v4184, %v4185
      %v4187 = vrot.slane %v4068, 2
      %v4188 = vsel %vm732, %v4185, %v4187
      %v4189 = vrot.slane %v4069, 2
      %v4190 = vrot.slane %v4070, 2
      %v4191 = vsel %vm732, %v4189, %v4190
      %v4192 = vrot.slane %v4071, 2
      %v4193 = vsel %vm732, %v4190, %v4192
      %v4194 = vrot.slane %v4072, 2
      %v4195 = vrot.slane %v4073, 2
      %v4196 = vsel %vm732, %v4194, %v4195
      %v4197 = vrot.slane %v4074, 2
      %v4198 = vsel %vm732, %v4195, %v4197
      %v4199 = vrot.slane %v4075, 2
      %v4200 = vrot.slane %v4076, 2
      %v4201 = vsel %vm732, %v4199, %v4200
      %v4202 = vrot.slane %v4077, 2
      %v4203 = vsel %vm732, %v4200, %v4202
      %v4204 = vrot.slane %v4078, 2
      %v4205 = vrot.slane %v4079, 2
      %v4206 = vsel %vm732, %v4204, %v4205
      %v4207 = vrot.slane %v4080, 2
      %v4208 = vsel %vm732, %v4205, %v4207
      %v4257 = vadd.f32 %v3980, %v4131
      %v4258 = vadd.f32 %v3981, %v4133
      %v4259 = vadd.f32 %v3982, %v4132
      %v4260 = vadd.f32 %v3983, %v4136
      %v4261 = vadd.f32 %v3984, %v4138
      %v4262 = vadd.f32 %v3985, %v4137
      %v4263 = vadd.f32 %v3986, %v4141
      %v4264 = vadd.f32 %v3987, %v4143
      %v4265 = vadd.f32 %v3988, %v4142
      %v4266 = vadd.f32 %v3989, %v4146
      %v4267 = vadd.f32 %v3990, %v4148
      %v4268 = vadd.f32 %v3991, %v4147
      %v4269 = vadd.f32 %v3992, %v4151
      %v4270 = vadd.f32 %v3993, %v4153
      %v4271 = vadd.f32 %v3994, %v4152
      %v4272 = vadd.f32 %v3995, %v4156
      %v4273 = vadd.f32 %v3996, %v4158
      %v4274 = vadd.f32 %v3997, %v4157
      %v4275 = vadd.f32 %v3998, %v4161
      %v4276 = vadd.f32 %v3999, %v4163
      %v4277 = vadd.f32 %v4000, %v4162
      %v4278 = vadd.f32 %v4001, %v4166
      %v4279 = vadd.f32 %v4002, %v4168
      %v4280 = vadd.f32 %v4003, %v4167
      %v4281 = vadd.f32 %v4004, %v4171
      %v4282 = vadd.f32 %v4005, %v4173
      %v4283 = vadd.f32 %v4006, %v4172
      %v4284 = vadd.f32 %v4007, %v4176
      %v4285 = vadd.f32 %v4008, %v4178
      %v4286 = vadd.f32 %v4009, %v4177
      %v4287 = vadd.f32 %v4010, %v4181
      %v4288 = vadd.f32 %v4011, %v4183
      %v4289 = vadd.f32 %v4012, %v4182
      %v4290 = vadd.f32 %v4013, %v4186
      %v4291 = vadd.f32 %v4014, %v4188
      %v4292 = vadd.f32 %v4015, %v4187
      %v4293 = vadd.f32 %v4016, %v4191
      %v4294 = vadd.f32 %v4017, %v4193
      %v4295 = vadd.f32 %v4018, %v4192
      %v4296 = vadd.f32 %v4019, %v4196
      %v4297 = vadd.f32 %v4020, %v4198
      %v4298 = vadd.f32 %v4021, %v4197
      %v4299 = vadd.f32 %v4022, %v4201
      %v4300 = vadd.f32 %v4023, %v4203
      %v4301 = vadd.f32 %v4024, %v4202
      %v4302 = vadd.f32 %v4025, %v4206
      %v4303 = vadd.f32 %v4026, %v4208
      %v4304 = vadd.f32 %v4027, %v4207
      %v4305 = vmul.f32 %v4257, 0.999995
      %v4306 = vmul.f32 %v4258, 0.999995
      %v4307 = vmul.f32 %v4259, 0.999995
      %v4308 = vmul.f32 %v4260, 0.999995
      %v4309 = vmul.f32 %v4261, 0.999995
      %v4310 = vmul.f32 %v4262, 0.999995
      %v4311 = vmul.f32 %v4263, 0.999995
      %v4312 = vmul.f32 %v4264, 0.999995
      %v4313 = vmul.f32 %v4265, 0.999995
      %v4314 = vmul.f32 %v4266, 0.999995
      %v4315 = vmul.f32 %v4267, 0.999995
      %v4316 = vmul.f32 %v4268, 0.999995
      %v4317 = vmul.f32 %v4269, 0.999995
      %v4318 = vmul.f32 %v4270, 0.999995
      %v4319 = vmul.f32 %v4271, 0.999995
      %v4320 = vmul.f32 %v4272, 0.999995
      %v4321 = vmul.f32 %v4273, 0.999995
      %v4322 = vmul.f32 %v4274, 0.999995
      %v4323 = vmul.f32 %v4275, 0.999995
      %v4324 = vmul.f32 %v4276, 0.999995
      %v4325 = vmul.f32 %v4277, 0.999995
      %v4326 = vmul.f32 %v4278, 0.999995
      %v4327 = vmul.f32 %v4279, 0.999995
      %v4328 = vmul.f32 %v4280, 0.999995
      %v4329 = vmul.f32 %v4281, 0.999995
      %v4330 = vmul.f32 %v4282, 0.999995
      %v4331 = vmul.f32 %v4283, 0.999995
      %v4332 = vmul.f32 %v4284, 0.999995
      %v4333 = vmul.f32 %v4285, 0.999995
      %v4334 = vmul.f32 %v4286, 0.999995
      %v4335 = vmul.f32 %v4287, 0.999995
      %v4336 = vmul.f32 %v4288, 0.999995
      %v4337 = vmul.f32 %v4289, 0.999995
      %v4338 = vmul.f32 %v4290, 0.999995
      %v4339 = vmul.f32 %v4291, 0.999995
      %v4340 = vmul.f32 %v4292, 0.999995
      %v4341 = vmul.f32 %v4293, 0.999995
      %v4342 = vmul.f32 %v4294, 0.999995
      %v4343 = vmul.f32 %v4295, 0.999995
      %v4344 = vmul.f32 %v4296, 0.999995
      %v4345 = vmul.f32 %v4297, 0.999995
      %v4346 = vmul.f32 %v4298, 0.999995
      %v4347 = vmul.f32 %v4299, 0.999995
      %v4348 = vmul.f32 %v4300, 0.999995
      %v4349 = vmul.f32 %v4301, 0.999995
      %v4350 = vmul.f32 %v4302, 0.999995
      %v4351 = vmul.f32 %v4303, 0.999995
      %v4352 = vmul.f32 %v4304, 0.999995
      %v4353 = vmax.f32 %v4305, 0.0
      %v4354 = vmax.f32 %v4306, 0.0
      %v4355 = vmax.f32 %v4307, 0.0
      %v4356 = vmax.f32 %v4308, 0.0
      %v4357 = vmax.f32 %v4309, 0.0
      %v4358 = vmax.f32 %v4310, 0.0
      %v4359 = vmax.f32 %v4311, 0.0
      %v4360 = vmax.f32 %v4312, 0.0
      %v4361 = vmax.f32 %v4313, 0.0
      %v4362 = vmax.f32 %v4314, 0.0
      %v4363 = vmax.f32 %v4315, 0.0
      %v4364 = vmax.f32 %v4316, 0.0
      %v4365 = vmax.f32 %v4317, 0.0
      %v4366 = vmax.f32 %v4318, 0.0
      %v4367 = vmax.f32 %v4319, 0.0
      %v4368 = vmax.f32 %v4320, 0.0
      %v4369 = vmax.f32 %v4321, 0.0
      %v4370 = vmax.f32 %v4322, 0.0
      %v4371 = vmax.f32 %v4323, 0.0
      %v4372 = vmax.f32 %v4324, 0.0
      %v4373 = vmax.f32 %v4325, 0.0
      %v4374 = vmax.f32 %v4326, 0.0
      %v4375 = vmax.f32 %v4327, 0.0
      %v4376 = vmax.f32 %v4328, 0.0
      %v4377 = vmax.f32 %v4329, 0.0
      %v4378 = vmax.f32 %v4330, 0.0
      %v4379 = vmax.f32 %v4331, 0.0
      %v4380 = vmax.f32 %v4332, 0.0
      %v4381 = vmax.f32 %v4333, 0.0
      %v4382 = vmax.f32 %v4334, 0.0
      %v4383 = vmax.f32 %v4335, 0.0
      %v4384 = vmax.f32 %v4336, 0.0
      %v4385 = vmax.f32 %v4337, 0.0
      %v4386 = vmax.f32 %v4338, 0.0
      %v4387 = vmax.f32 %v4339, 0.0
      %v4388 = vmax.f32 %v4340, 0.0
      %v4389 = vmax.f32 %v4341, 0.0
      %v4390 = vmax.f32 %v4342, 0.0
      %v4391 = vmax.f32 %v4343, 0.0
      %v4392 = vmax.f32 %v4344, 0.0
      %v4393 = vmax.f32 %v4345, 0.0
      %v4394 = vmax.f32 %v4346, 0.0
      %v4395 = vmax.f32 %v4347, 0.0
      %v4396 = vmax.f32 %v4348, 0.0
      %v4397 = vmax.f32 %v4349, 0.0
      %v4398 = vmax.f32 %v4350, 0.0
      %v4399 = vmax.f32 %v4351, 0.0
      %v4400 = vmax.f32 %v4352, 0.0
      %v4401 = vpack.c.bf16 %v4354, %v4353
      %v4402 = vpack.c.bf16 %v4355, %v4355
      %v4403 = vpack.c.bf16 %v4357, %v4356
      %v4404 = vpack.c.bf16 %v4358, %v4358
      %v4405 = vpack.c.bf16 %v4360, %v4359
      %v4406 = vpack.c.bf16 %v4361, %v4361
      %v4407 = vpack.c.bf16 %v4363, %v4362
      %v4408 = vpack.c.bf16 %v4364, %v4364
      %v4409 = vpack.c.bf16 %v4366, %v4365
      %v4410 = vpack.c.bf16 %v4367, %v4367
      %v4411 = vpack.c.bf16 %v4369, %v4368
      %v4412 = vpack.c.bf16 %v4370, %v4370
      %v4413 = vpack.c.bf16 %v4372, %v4371
      %v4414 = vpack.c.bf16 %v4373, %v4373
      %v4415 = vpack.c.bf16 %v4375, %v4374
      %v4416 = vpack.c.bf16 %v4376, %v4376
      %v4417 = vpack.c.bf16 %v4378, %v4377
      %v4418 = vpack.c.bf16 %v4379, %v4379
      %v4419 = vpack.c.bf16 %v4381, %v4380
      %v4420 = vpack.c.bf16 %v4382, %v4382
      %v4421 = vpack.c.bf16 %v4384, %v4383
      %v4422 = vpack.c.bf16 %v4385, %v4385
      %v4423 = vpack.c.bf16 %v4387, %v4386
      %v4424 = vpack.c.bf16 %v4388, %v4388
      %v4425 = vpack.c.bf16 %v4390, %v4389
      %v4426 = vpack.c.bf16 %v4391, %v4391
      %v4427 = vpack.c.bf16 %v4393, %v4392
      %v4428 = vpack.c.bf16 %v4394, %v4394
      %v4429 = vpack.c.bf16 %v4396, %v4395
      %v4430 = vpack.c.bf16 %v4397, %v4397
      %v4431 = vpack.c.bf16 %v4399, %v4398
      %v4432 = vpack.c.bf16 %v4400, %v4400
      %v4433 = vld [vmem:[%s1 + $0x12] sm:$0x1]
      %v4434 = vunpack.c.l.bf16 %v144
      %v4435 = vunpack.c.l.bf16 %v145
      %v4436 = vlaneseq
      %v4437 = vshrl.u32 %v4436, 7
      %v4438 = vsub.s32 0, %v4437
      %v4439 = vrot.slane %v4433, %v4438
      %v4440 = vmul.f32 %v4434, %v4439
      %v4441 = vmul.f32 %v4435, %v4439
      %v4442 = vmul.f32 %v205, %v4439
      %v4443 = vmul.f32 %v206, %v4439
      %v4444 = vmul.f32 %v208, %v4439
      %v4445 = vmul.f32 %v209, %v4439
      %v4446 = vmul.f32 %v211, %v4439
      %v4447 = vmul.f32 %v212, %v4439
      %v4448 = vmul.f32 %v214, %v4439
      %v4449 = vmul.f32 %v215, %v4439
      %v4450 = vmul.f32 %v217, %v4439
      %v4451 = vmul.f32 %v218, %v4439
      %v4452 = vmul.f32 %v220, %v4439
      %v4453 = vmul.f32 %v221, %v4439
      %v4454 = vmul.f32 %v223, %v4439
      %v4455 = vmul.f32 %v224, %v4439
      %v4456 = vmul.f32 %v226, %v4439
      %v4457 = vmul.f32 %v227, %v4439
      %v4458 = vmul.f32 %v229, %v4439
      %v4459 = vmul.f32 %v230, %v4439
      %v4460 = vmul.f32 %v232, %v4439
      %v4461 = vmul.f32 %v233, %v4439
      %v4462 = vmul.f32 %v235, %v4439
      %v4463 = vmul.f32 %v236, %v4439
      %v4464 = vmul.f32 %v238, %v4439
      %v4465 = vmul.f32 %v239, %v4439
      %v4466 = vmul.f32 %v241, %v4439
      %v4467 = vmul.f32 %v242, %v4439
      %v4468 = vmul.f32 %v244, %v4439
      %v4469 = vmul.f32 %v245, %v4439
      %v4470 = vmul.f32 %v247, %v4439
      %v4471 = vmul.f32 %v248, %v4439
      %v4472 = vadd.f32 %v4440, 0.0
      %v4473 = vadd.f32 %v4441, 0.0
      %v4474 = vadd.f32 %v4442, 0.0
      %v4475 = vadd.f32 %v4443, 0.0
      %v4476 = vadd.f32 %v4444, 0.0
      %v4477 = vadd.f32 %v4445, 0.0
      %v4478 = vadd.f32 %v4446, 0.0
      %v4479 = vadd.f32 %v4447, 0.0
      %v4480 = vadd.f32 %v4448, 0.0
      %v4481 = vadd.f32 %v4449, 0.0
      %v4482 = vadd.f32 %v4450, 0.0
      %v4483 = vadd.f32 %v4451, 0.0
      %v4484 = vadd.f32 %v4452, 0.0
      %v4485 = vadd.f32 %v4453, 0.0
      %v4486 = vadd.f32 %v4454, 0.0
      %v4487 = vadd.f32 %v4455, 0.0
      %v4488 = vadd.f32 %v4456, 0.0
      %v4489 = vadd.f32 %v4457, 0.0
      %v4490 = vadd.f32 %v4458, 0.0
      %v4491 = vadd.f32 %v4459, 0.0
      %v4492 = vadd.f32 %v4460, 0.0
      %v4493 = vadd.f32 %v4461, 0.0
      %v4494 = vadd.f32 %v4462, 0.0
      %v4495 = vadd.f32 %v4463, 0.0
      %v4496 = vadd.f32 %v4464, 0.0
      %v4497 = vadd.f32 %v4465, 0.0
      %v4498 = vadd.f32 %v4466, 0.0
      %v4499 = vadd.f32 %v4467, 0.0
      %v4500 = vadd.f32 %v4468, 0.0
      %v4501 = vadd.f32 %v4469, 0.0
      %v4502 = vadd.f32 %v4470, 0.0
      %v4503 = vadd.f32 %v4471, 0.0
      %v4504 = vld [vmem:[%s1 + $0x14] sm:$0x1]
      %v4505 = vunpack.c.l.bf16 %v146
      %v4506 = vlaneseq
      %v4507 = vshrl.u32 %v4506, 7
      %v4508 = vsub.s32 0, %v4507
      %v4509 = vrot.slane %v4504, %v4508
      %v4510 = vmul.f32 %v4434, %v4509
      %v4511 = vmul.f32 %v4435, %v4509
      %v4512 = vmul.f32 %v4505, %v4509
      %v4513 = vmul.f32 %v205, %v4509
      %v4514 = vmul.f32 %v206, %v4509
      %v4515 = vmul.f32 %v207, %v4509
      %v4516 = vmul.f32 %v208, %v4509
      %v4517 = vmul.f32 %v209, %v4509
      %v4518 = vmul.f32 %v210, %v4509
      %v4519 = vmul.f32 %v211, %v4509
      %v4520 = vmul.f32 %v212, %v4509
      %v4521 = vmul.f32 %v213, %v4509
      %v4522 = vmul.f32 %v214, %v4509
      %v4523 = vmul.f32 %v215, %v4509
      %v4524 = vmul.f32 %v216, %v4509
      %v4525 = vmul.f32 %v217, %v4509
      %v4526 = vmul.f32 %v218, %v4509
      %v4527 = vmul.f32 %v219, %v4509
      %v4528 = vmul.f32 %v220, %v4509
      %v4529 = vmul.f32 %v221, %v4509
      %v4530 = vmul.f32 %v222, %v4509
      %v4531 = vmul.f32 %v223, %v4509
      %v4532 = vmul.f32 %v224, %v4509
      %v4533 = vmul.f32 %v225, %v4509
      %v4534 = vmul.f32 %v226, %v4509
      %v4535 = vmul.f32 %v227, %v4509
      %v4536 = vmul.f32 %v228, %v4509
      %v4537 = vmul.f32 %v229, %v4509
      %v4538 = vmul.f32 %v230, %v4509
      %v4539 = vmul.f32 %v231, %v4509
      %v4540 = vmul.f32 %v232, %v4509
      %v4541 = vmul.f32 %v233, %v4509
      %v4542 = vmul.f32 %v234, %v4509
      %v4543 = vmul.f32 %v235, %v4509
      %v4544 = vmul.f32 %v236, %v4509
      %v4545 = vmul.f32 %v237, %v4509
      %v4546 = vmul.f32 %v238, %v4509
      %v4547 = vmul.f32 %v239, %v4509
      %v4548 = vmul.f32 %v240, %v4509
      %v4549 = vmul.f32 %v241, %v4509
      %v4550 = vmul.f32 %v242, %v4509
      %v4551 = vmul.f32 %v243, %v4509
      %v4552 = vmul.f32 %v244, %v4509
      %v4553 = vmul.f32 %v245, %v4509
      %v4554 = vmul.f32 %v246, %v4509
      %v4555 = vmul.f32 %v247, %v4509
      %v4556 = vmul.f32 %v248, %v4509
      %v4557 = vmul.f32 %v249, %v4509
      %v4606 = vrot.slane %v4510, 2
      %v4607 = vrot.slane %v4511, 2
      %v4608 = vsel %vm732, %v4606, %v4607
      %v4609 = vrot.slane %v4512, 2
      %v4610 = vsel %vm732, %v4607, %v4609
      %v4611 = vrot.slane %v4513, 2
      %v4612 = vrot.slane %v4514, 2
      %v4613 = vsel %vm732, %v4611, %v4612
      %v4614 = vrot.slane %v4515, 2
      %v4615 = vsel %vm732, %v4612, %v4614
      %v4616 = vrot.slane %v4516, 2
      %v4617 = vrot.slane %v4517, 2
      %v4618 = vsel %vm732, %v4616, %v4617
      %v4619 = vrot.slane %v4518, 2
      %v4620 = vsel %vm732, %v4617, %v4619
      %v4621 = vrot.slane %v4519, 2
      %v4622 = vrot.slane %v4520, 2
      %v4623 = vsel %vm732, %v4621, %v4622
      %v4624 = vrot.slane %v4521, 2
      %v4625 = vsel %vm732, %v4622, %v4624
      %v4626 = vrot.slane %v4522, 2
      %v4627 = vrot.slane %v4523, 2
      %v4628 = vsel %vm732, %v4626, %v4627
      %v4629 = vrot.slane %v4524, 2
      %v4630 = vsel %vm732, %v4627, %v4629
      %v4631 = vrot.slane %v4525, 2
      %v4632 = vrot.slane %v4526, 2
      %v4633 = vsel %vm732, %v4631, %v4632
      %v4634 = vrot.slane %v4527, 2
      %v4635 = vsel %vm732, %v4632, %v4634
      %v4636 = vrot.slane %v4528, 2
      %v4637 = vrot.slane %v4529, 2
      %v4638 = vsel %vm732, %v4636, %v4637
      %v4639 = vrot.slane %v4530, 2
      %v4640 = vsel %vm732, %v4637, %v4639
      %v4641 = vrot.slane %v4531, 2
      %v4642 = vrot.slane %v4532, 2
      %v4643 = vsel %vm732, %v4641, %v4642
      %v4644 = vrot.slane %v4533, 2
      %v4645 = vsel %vm732, %v4642, %v4644
      %v4646 = vrot.slane %v4534, 2
      %v4647 = vrot.slane %v4535, 2
      %v4648 = vsel %vm732, %v4646, %v4647
      %v4649 = vrot.slane %v4536, 2
      %v4650 = vsel %vm732, %v4647, %v4649
      %v4651 = vrot.slane %v4537, 2
      %v4652 = vrot.slane %v4538, 2
      %v4653 = vsel %vm732, %v4651, %v4652
      %v4654 = vrot.slane %v4539, 2
      %v4655 = vsel %vm732, %v4652, %v4654
      %v4656 = vrot.slane %v4540, 2
      %v4657 = vrot.slane %v4541, 2
      %v4658 = vsel %vm732, %v4656, %v4657
      %v4659 = vrot.slane %v4542, 2
      %v4660 = vsel %vm732, %v4657, %v4659
      %v4661 = vrot.slane %v4543, 2
      %v4662 = vrot.slane %v4544, 2
      %v4663 = vsel %vm732, %v4661, %v4662
      %v4664 = vrot.slane %v4545, 2
      %v4665 = vsel %vm732, %v4662, %v4664
      %v4666 = vrot.slane %v4546, 2
      %v4667 = vrot.slane %v4547, 2
      %v4668 = vsel %vm732, %v4666, %v4667
      %v4669 = vrot.slane %v4548, 2
      %v4670 = vsel %vm732, %v4667, %v4669
      %v4671 = vrot.slane %v4549, 2
      %v4672 = vrot.slane %v4550, 2
      %v4673 = vsel %vm732, %v4671, %v4672
      %v4674 = vrot.slane %v4551, 2
      %v4675 = vsel %vm732, %v4672, %v4674
      %v4676 = vrot.slane %v4552, 2
      %v4677 = vrot.slane %v4553, 2
      %v4678 = vsel %vm732, %v4676, %v4677
      %v4679 = vrot.slane %v4554, 2
      %v4680 = vsel %vm732, %v4677, %v4679
      %v4681 = vrot.slane %v4555, 2
      %v4682 = vrot.slane %v4556, 2
      %v4683 = vsel %vm732, %v4681, %v4682
      %v4684 = vrot.slane %v4557, 2
      %v4685 = vsel %vm732, %v4682, %v4684
      %v4718 = vadd.f32 %v4472, %v4608
      %v4719 = vadd.f32 %v4473, %v4610
      %v4720 = vadd.f32 %v4474, %v4613
      %v4721 = vadd.f32 %v4475, %v4615
      %v4722 = vadd.f32 %v4476, %v4618
      %v4723 = vadd.f32 %v4477, %v4620
      %v4724 = vadd.f32 %v4478, %v4623
      %v4725 = vadd.f32 %v4479, %v4625
      %v4726 = vadd.f32 %v4480, %v4628
      %v4727 = vadd.f32 %v4481, %v4630
      %v4728 = vadd.f32 %v4482, %v4633
      %v4729 = vadd.f32 %v4483, %v4635
      %v4730 = vadd.f32 %v4484, %v4638
      %v4731 = vadd.f32 %v4485, %v4640
      %v4732 = vadd.f32 %v4486, %v4643
      %v4733 = vadd.f32 %v4487, %v4645
      %v4734 = vadd.f32 %v4488, %v4648
      %v4735 = vadd.f32 %v4489, %v4650
      %v4736 = vadd.f32 %v4490, %v4653
      %v4737 = vadd.f32 %v4491, %v4655
      %v4738 = vadd.f32 %v4492, %v4658
      %v4739 = vadd.f32 %v4493, %v4660
      %v4740 = vadd.f32 %v4494, %v4663
      %v4741 = vadd.f32 %v4495, %v4665
      %v4742 = vadd.f32 %v4496, %v4668
      %v4743 = vadd.f32 %v4497, %v4670
      %v4744 = vadd.f32 %v4498, %v4673
      %v4745 = vadd.f32 %v4499, %v4675
      %v4746 = vadd.f32 %v4500, %v4678
      %v4747 = vadd.f32 %v4501, %v4680
      %v4748 = vadd.f32 %v4502, %v4683
      %v4749 = vadd.f32 %v4503, %v4685
      %v4750 = vld [vmem:[%s1 + $0x16] sm:$0x1]
      %v4751 = vlaneseq
      %v4752 = vshrl.u32 %v4751, 7
      %v4753 = vsub.s32 0, %v4752
      %v4754 = vrot.slane %v4750, %v4753
      %v4755 = vmul.f32 %v4434, %v4754
      %v4756 = vmul.f32 %v4435, %v4754
      %v4757 = vmul.f32 %v4505, %v4754
      %v4758 = vmul.f32 %v205, %v4754
      %v4759 = vmul.f32 %v206, %v4754
      %v4760 = vmul.f32 %v207, %v4754
      %v4761 = vmul.f32 %v208, %v4754
      %v4762 = vmul.f32 %v209, %v4754
      %v4763 = vmul.f32 %v210, %v4754
      %v4764 = vmul.f32 %v211, %v4754
      %v4765 = vmul.f32 %v212, %v4754
      %v4766 = vmul.f32 %v213, %v4754
      %v4767 = vmul.f32 %v214, %v4754
      %v4768 = vmul.f32 %v215, %v4754
      %v4769 = vmul.f32 %v216, %v4754
      %v4770 = vmul.f32 %v217, %v4754
      %v4771 = vmul.f32 %v218, %v4754
      %v4772 = vmul.f32 %v219, %v4754
      %v4773 = vmul.f32 %v220, %v4754
      %v4774 = vmul.f32 %v221, %v4754
      %v4775 = vmul.f32 %v222, %v4754
      %v4776 = vmul.f32 %v223, %v4754
      %v4777 = vmul.f32 %v224, %v4754
      %v4778 = vmul.f32 %v225, %v4754
      %v4779 = vmul.f32 %v226, %v4754
      %v4780 = vmul.f32 %v227, %v4754
      %v4781 = vmul.f32 %v228, %v4754
      %v4782 = vmul.f32 %v229, %v4754
      %v4783 = vmul.f32 %v230, %v4754
      %v4784 = vmul.f32 %v231, %v4754
      %v4785 = vmul.f32 %v232, %v4754
      %v4786 = vmul.f32 %v233, %v4754
      %v4787 = vmul.f32 %v234, %v4754
      %v4788 = vmul.f32 %v235, %v4754
      %v4789 = vmul.f32 %v236, %v4754
      %v4790 = vmul.f32 %v237, %v4754
      %v4791 = vmul.f32 %v238, %v4754
      %v4792 = vmul.f32 %v239, %v4754
      %v4793 = vmul.f32 %v240, %v4754
      %v4794 = vmul.f32 %v241, %v4754
      %v4795 = vmul.f32 %v242, %v4754
      %v4796 = vmul.f32 %v243, %v4754
      %v4797 = vmul.f32 %v244, %v4754
      %v4798 = vmul.f32 %v245, %v4754
      %v4799 = vmul.f32 %v246, %v4754
      %v4800 = vmul.f32 %v247, %v4754
      %v4801 = vmul.f32 %v248, %v4754
      %v4802 = vmul.f32 %v249, %v4754
      %vm4851 = vcmask 1043456
      %v4852 = vrot.slane %v4755, 4
      %v4853 = vrot.slane %v4756, 4
      %v4854 = vsel %vm4851, %v4852, %v4853
      %v4855 = vrot.slane %v4757, 4
      %v4856 = vsel %vm4851, %v4853, %v4855
      %v4857 = vrot.slane %v4758, 4
      %v4858 = vrot.slane %v4759, 4
      %v4859 = vsel %vm4851, %v4857, %v4858
      %v4860 = vrot.slane %v4760, 4
      %v4861 = vsel %vm4851, %v4858, %v4860
      %v4862 = vrot.slane %v4761, 4
      %v4863 = vrot.slane %v4762, 4
      %v4864 = vsel %vm4851, %v4862, %v4863
      %v4865 = vrot.slane %v4763, 4
      %v4866 = vsel %vm4851, %v4863, %v4865
      %v4867 = vrot.slane %v4764, 4
      %v4868 = vrot.slane %v4765, 4
      %v4869 = vsel %vm4851, %v4867, %v4868
      %v4870 = vrot.slane %v4766, 4
      %v4871 = vsel %vm4851, %v4868, %v4870
      %v4872 = vrot.slane %v4767, 4
      %v4873 = vrot.slane %v4768, 4
      %v4874 = vsel %vm4851, %v4872, %v4873
      %v4875 = vrot.slane %v4769, 4
      %v4876 = vsel %vm4851, %v4873, %v4875
      %v4877 = vrot.slane %v4770, 4
      %v4878 = vrot.slane %v4771, 4
      %v4879 = vsel %vm4851, %v4877, %v4878
      %v4880 = vrot.slane %v4772, 4
      %v4881 = vsel %vm4851, %v4878, %v4880
      %v4882 = vrot.slane %v4773, 4
      %v4883 = vrot.slane %v4774, 4
      %v4884 = vsel %vm4851, %v4882, %v4883
      %v4885 = vrot.slane %v4775, 4
      %v4886 = vsel %vm4851, %v4883, %v4885
      %v4887 = vrot.slane %v4776, 4
      %v4888 = vrot.slane %v4777, 4
      %v4889 = vsel %vm4851, %v4887, %v4888
      %v4890 = vrot.slane %v4778, 4
      %v4891 = vsel %vm4851, %v4888, %v4890
      %v4892 = vrot.slane %v4779, 4
      %v4893 = vrot.slane %v4780, 4
      %v4894 = vsel %vm4851, %v4892, %v4893
      %v4895 = vrot.slane %v4781, 4
      %v4896 = vsel %vm4851, %v4893, %v4895
      %v4897 = vrot.slane %v4782, 4
      %v4898 = vrot.slane %v4783, 4
      %v4899 = vsel %vm4851, %v4897, %v4898
      %v4900 = vrot.slane %v4784, 4
      %v4901 = vsel %vm4851, %v4898, %v4900
      %v4902 = vrot.slane %v4785, 4
      %v4903 = vrot.slane %v4786, 4
      %v4904 = vsel %vm4851, %v4902, %v4903
      %v4905 = vrot.slane %v4787, 4
      %v4906 = vsel %vm4851, %v4903, %v4905
      %v4907 = vrot.slane %v4788, 4
      %v4908 = vrot.slane %v4789, 4
      %v4909 = vsel %vm4851, %v4907, %v4908
      %v4910 = vrot.slane %v4790, 4
      %v4911 = vsel %vm4851, %v4908, %v4910
      %v4912 = vrot.slane %v4791, 4
      %v4913 = vrot.slane %v4792, 4
      %v4914 = vsel %vm4851, %v4912, %v4913
      %v4915 = vrot.slane %v4793, 4
      %v4916 = vsel %vm4851, %v4913, %v4915
      %v4917 = vrot.slane %v4794, 4
      %v4918 = vrot.slane %v4795, 4
      %v4919 = vsel %vm4851, %v4917, %v4918
      %v4920 = vrot.slane %v4796, 4
      %v4921 = vsel %vm4851, %v4918, %v4920
      %v4922 = vrot.slane %v4797, 4
      %v4923 = vrot.slane %v4798, 4
      %v4924 = vsel %vm4851, %v4922, %v4923
      %v4925 = vrot.slane %v4799, 4
      %v4926 = vsel %vm4851, %v4923, %v4925
      %v4927 = vrot.slane %v4800, 4
      %v4928 = vrot.slane %v4801, 4
      %v4929 = vsel %vm4851, %v4927, %v4928
      %v4930 = vrot.slane %v4802, 4
      %v4931 = vsel %vm4851, %v4928, %v4930
      %v4964 = vadd.f32 %v4718, %v4854
      %v4965 = vadd.f32 %v4719, %v4856
      %v4966 = vadd.f32 %v4720, %v4859
      %v4967 = vadd.f32 %v4721, %v4861
      %v4968 = vadd.f32 %v4722, %v4864
      %v4969 = vadd.f32 %v4723, %v4866
      %v4970 = vadd.f32 %v4724, %v4869
      %v4971 = vadd.f32 %v4725, %v4871
      %v4972 = vadd.f32 %v4726, %v4874
      %v4973 = vadd.f32 %v4727, %v4876
      %v4974 = vadd.f32 %v4728, %v4879
      %v4975 = vadd.f32 %v4729, %v4881
      %v4976 = vadd.f32 %v4730, %v4884
      %v4977 = vadd.f32 %v4731, %v4886
      %v4978 = vadd.f32 %v4732, %v4889
      %v4979 = vadd.f32 %v4733, %v4891
      %v4980 = vadd.f32 %v4734, %v4894
      %v4981 = vadd.f32 %v4735, %v4896
      %v4982 = vadd.f32 %v4736, %v4899
      %v4983 = vadd.f32 %v4737, %v4901
      %v4984 = vadd.f32 %v4738, %v4904
      %v4985 = vadd.f32 %v4739, %v4906
      %v4986 = vadd.f32 %v4740, %v4909
      %v4987 = vadd.f32 %v4741, %v4911
      %v4988 = vadd.f32 %v4742, %v4914
      %v4989 = vadd.f32 %v4743, %v4916
      %v4990 = vadd.f32 %v4744, %v4919
      %v4991 = vadd.f32 %v4745, %v4921
      %v4992 = vadd.f32 %v4746, %v4924
      %v4993 = vadd.f32 %v4747, %v4926
      %v4994 = vadd.f32 %v4748, %v4929
      %v4995 = vadd.f32 %v4749, %v4931
      %v4996 = vld [vmem:[%s1 + $0x18] sm:$0x1]
      %v4997 = vlaneseq
      %v4998 = vshrl.u32 %v4997, 7
      %v4999 = vsub.s32 0, %v4998
      %v5000 = vrot.slane %v4996, %v4999
      %v5001 = vmul.f32 %v208, %v5000
      %v5002 = vmul.f32 %v209, %v5000
      %v5003 = vmul.f32 %v211, %v5000
      %v5004 = vmul.f32 %v212, %v5000
      %v5005 = vmul.f32 %v214, %v5000
      %v5006 = vmul.f32 %v215, %v5000
      %v5007 = vmul.f32 %v217, %v5000
      %v5008 = vmul.f32 %v218, %v5000
      %v5009 = vmul.f32 %v220, %v5000
      %v5010 = vmul.f32 %v221, %v5000
      %v5011 = vmul.f32 %v223, %v5000
      %v5012 = vmul.f32 %v224, %v5000
      %v5013 = vmul.f32 %v226, %v5000
      %v5014 = vmul.f32 %v227, %v5000
      %v5015 = vmul.f32 %v229, %v5000
      %v5016 = vmul.f32 %v230, %v5000
      %v5017 = vmul.f32 %v232, %v5000
      %v5018 = vmul.f32 %v233, %v5000
      %v5019 = vmul.f32 %v235, %v5000
      %v5020 = vmul.f32 %v236, %v5000
      %v5021 = vmul.f32 %v238, %v5000
      %v5022 = vmul.f32 %v239, %v5000
      %v5023 = vmul.f32 %v241, %v5000
      %v5024 = vmul.f32 %v242, %v5000
      %v5025 = vmul.f32 %v244, %v5000
      %v5026 = vmul.f32 %v245, %v5000
      %v5027 = vmul.f32 %v247, %v5000
      %v5028 = vmul.f32 %v248, %v5000
      %v5029 = vmul.f32 %v250, %v5000
      %v5030 = vmul.f32 %v251, %v5000
      %v5031 = vmul.f32 %v910, %v5000
      %v5032 = vmul.f32 %v911, %v5000
      %v5033 = vadd.f32 %v4964, %v5001
      %v5034 = vadd.f32 %v4965, %v5002
      %v5035 = vadd.f32 %v4966, %v5003
      %v5036 = vadd.f32 %v4967, %v5004
      %v5037 = vadd.f32 %v4968, %v5005
      %v5038 = vadd.f32 %v4969, %v5006
      %v5039 = vadd.f32 %v4970, %v5007
      %v5040 = vadd.f32 %v4971, %v5008
      %v5041 = vadd.f32 %v4972, %v5009
      %v5042 = vadd.f32 %v4973, %v5010
      %v5043 = vadd.f32 %v4974, %v5011
      %v5044 = vadd.f32 %v4975, %v5012
      %v5045 = vadd.f32 %v4976, %v5013
      %v5046 = vadd.f32 %v4977, %v5014
      %v5047 = vadd.f32 %v4978, %v5015
      %v5048 = vadd.f32 %v4979, %v5016
      %v5049 = vadd.f32 %v4980, %v5017
      %v5050 = vadd.f32 %v4981, %v5018
      %v5051 = vadd.f32 %v4982, %v5019
      %v5052 = vadd.f32 %v4983, %v5020
      %v5053 = vadd.f32 %v4984, %v5021
      %v5054 = vadd.f32 %v4985, %v5022
      %v5055 = vadd.f32 %v4986, %v5023
      %v5056 = vadd.f32 %v4987, %v5024
      %v5057 = vadd.f32 %v4988, %v5025
      %v5058 = vadd.f32 %v4989, %v5026
      %v5059 = vadd.f32 %v4990, %v5027
      %v5060 = vadd.f32 %v4991, %v5028
      %v5061 = vadd.f32 %v4992, %v5029
      %v5062 = vadd.f32 %v4993, %v5030
      %v5063 = vadd.f32 %v4994, %v5031
      %v5064 = vadd.f32 %v4995, %v5032
      %v5065 = vld [vmem:[%s1 + $0x1a] sm:$0x1]
      %v5066 = vlaneseq
      %v5067 = vshrl.u32 %v5066, 7
      %v5068 = vsub.s32 0, %v5067
      %v5069 = vrot.slane %v5065, %v5068
      %v5070 = vmul.f32 %v208, %v5069
      %v5071 = vmul.f32 %v209, %v5069
      %v5072 = vmul.f32 %v210, %v5069
      %v5073 = vmul.f32 %v211, %v5069
      %v5074 = vmul.f32 %v212, %v5069
      %v5075 = vmul.f32 %v213, %v5069
      %v5076 = vmul.f32 %v214, %v5069
      %v5077 = vmul.f32 %v215, %v5069
      %v5078 = vmul.f32 %v216, %v5069
      %v5079 = vmul.f32 %v217, %v5069
      %v5080 = vmul.f32 %v218, %v5069
      %v5081 = vmul.f32 %v219, %v5069
      %v5082 = vmul.f32 %v220, %v5069
      %v5083 = vmul.f32 %v221, %v5069
      %v5084 = vmul.f32 %v222, %v5069
      %v5085 = vmul.f32 %v223, %v5069
      %v5086 = vmul.f32 %v224, %v5069
      %v5087 = vmul.f32 %v225, %v5069
      %v5088 = vmul.f32 %v226, %v5069
      %v5089 = vmul.f32 %v227, %v5069
      %v5090 = vmul.f32 %v228, %v5069
      %v5091 = vmul.f32 %v229, %v5069
      %v5092 = vmul.f32 %v230, %v5069
      %v5093 = vmul.f32 %v231, %v5069
      %v5094 = vmul.f32 %v232, %v5069
      %v5095 = vmul.f32 %v233, %v5069
      %v5096 = vmul.f32 %v234, %v5069
      %v5097 = vmul.f32 %v235, %v5069
      %v5098 = vmul.f32 %v236, %v5069
      %v5099 = vmul.f32 %v237, %v5069
      %v5100 = vmul.f32 %v238, %v5069
      %v5101 = vmul.f32 %v239, %v5069
      %v5102 = vmul.f32 %v240, %v5069
      %v5103 = vmul.f32 %v241, %v5069
      %v5104 = vmul.f32 %v242, %v5069
      %v5105 = vmul.f32 %v243, %v5069
      %v5106 = vmul.f32 %v244, %v5069
      %v5107 = vmul.f32 %v245, %v5069
      %v5108 = vmul.f32 %v246, %v5069
      %v5109 = vmul.f32 %v247, %v5069
      %v5110 = vmul.f32 %v248, %v5069
      %v5111 = vmul.f32 %v249, %v5069
      %v5112 = vmul.f32 %v250, %v5069
      %v5113 = vmul.f32 %v251, %v5069
      %v5114 = vmul.f32 %v252, %v5069
      %v5115 = vmul.f32 %v910, %v5069
      %v5116 = vmul.f32 %v911, %v5069
      %v5117 = vmul.f32 %v912, %v5069
      %v5166 = vrot.slane %v5070, 2
      %v5167 = vrot.slane %v5071, 2
      %v5168 = vsel %vm732, %v5166, %v5167
      %v5169 = vrot.slane %v5072, 2
      %v5170 = vsel %vm732, %v5167, %v5169
      %v5171 = vrot.slane %v5073, 2
      %v5172 = vrot.slane %v5074, 2
      %v5173 = vsel %vm732, %v5171, %v5172
      %v5174 = vrot.slane %v5075, 2
      %v5175 = vsel %vm732, %v5172, %v5174
      %v5176 = vrot.slane %v5076, 2
      %v5177 = vrot.slane %v5077, 2
      %v5178 = vsel %vm732, %v5176, %v5177
      %v5179 = vrot.slane %v5078, 2
      %v5180 = vsel %vm732, %v5177, %v5179
      %v5181 = vrot.slane %v5079, 2
      %v5182 = vrot.slane %v5080, 2
      %v5183 = vsel %vm732, %v5181, %v5182
      %v5184 = vrot.slane %v5081, 2
      %v5185 = vsel %vm732, %v5182, %v5184
      %v5186 = vrot.slane %v5082, 2
      %v5187 = vrot.slane %v5083, 2
      %v5188 = vsel %vm732, %v5186, %v5187
      %v5189 = vrot.slane %v5084, 2
      %v5190 = vsel %vm732, %v5187, %v5189
      %v5191 = vrot.slane %v5085, 2
      %v5192 = vrot.slane %v5086, 2
      %v5193 = vsel %vm732, %v5191, %v5192
      %v5194 = vrot.slane %v5087, 2
      %v5195 = vsel %vm732, %v5192, %v5194
      %v5196 = vrot.slane %v5088, 2
      %v5197 = vrot.slane %v5089, 2
      %v5198 = vsel %vm732, %v5196, %v5197
      %v5199 = vrot.slane %v5090, 2
      %v5200 = vsel %vm732, %v5197, %v5199
      %v5201 = vrot.slane %v5091, 2
      %v5202 = vrot.slane %v5092, 2
      %v5203 = vsel %vm732, %v5201, %v5202
      %v5204 = vrot.slane %v5093, 2
      %v5205 = vsel %vm732, %v5202, %v5204
      %v5206 = vrot.slane %v5094, 2
      %v5207 = vrot.slane %v5095, 2
      %v5208 = vsel %vm732, %v5206, %v5207
      %v5209 = vrot.slane %v5096, 2
      %v5210 = vsel %vm732, %v5207, %v5209
      %v5211 = vrot.slane %v5097, 2
      %v5212 = vrot.slane %v5098, 2
      %v5213 = vsel %vm732, %v5211, %v5212
      %v5214 = vrot.slane %v5099, 2
      %v5215 = vsel %vm732, %v5212, %v5214
      %v5216 = vrot.slane %v5100, 2
      %v5217 = vrot.slane %v5101, 2
      %v5218 = vsel %vm732, %v5216, %v5217
      %v5219 = vrot.slane %v5102, 2
      %v5220 = vsel %vm732, %v5217, %v5219
      %v5221 = vrot.slane %v5103, 2
      %v5222 = vrot.slane %v5104, 2
      %v5223 = vsel %vm732, %v5221, %v5222
      %v5224 = vrot.slane %v5105, 2
      %v5225 = vsel %vm732, %v5222, %v5224
      %v5226 = vrot.slane %v5106, 2
      %v5227 = vrot.slane %v5107, 2
      %v5228 = vsel %vm732, %v5226, %v5227
      %v5229 = vrot.slane %v5108, 2
      %v5230 = vsel %vm732, %v5227, %v5229
      %v5231 = vrot.slane %v5109, 2
      %v5232 = vrot.slane %v5110, 2
      %v5233 = vsel %vm732, %v5231, %v5232
      %v5234 = vrot.slane %v5111, 2
      %v5235 = vsel %vm732, %v5232, %v5234
      %v5236 = vrot.slane %v5112, 2
      %v5237 = vrot.slane %v5113, 2
      %v5238 = vsel %vm732, %v5236, %v5237
      %v5239 = vrot.slane %v5114, 2
      %v5240 = vsel %vm732, %v5237, %v5239
      %v5241 = vrot.slane %v5115, 2
      %v5242 = vrot.slane %v5116, 2
      %v5243 = vsel %vm732, %v5241, %v5242
      %v5244 = vrot.slane %v5117, 2
      %v5245 = vsel %vm732, %v5242, %v5244
      %v5278 = vadd.f32 %v5033, %v5168
      %v5279 = vadd.f32 %v5034, %v5170
      %v5280 = vadd.f32 %v5035, %v5173
      %v5281 = vadd.f32 %v5036, %v5175
      %v5282 = vadd.f32 %v5037, %v5178
      %v5283 = vadd.f32 %v5038, %v5180
      %v5284 = vadd.f32 %v5039, %v5183
      %v5285 = vadd.f32 %v5040, %v5185
      %v5286 = vadd.f32 %v5041, %v5188
      %v5287 = vadd.f32 %v5042, %v5190
      %v5288 = vadd.f32 %v5043, %v5193
      %v5289 = vadd.f32 %v5044, %v5195
      %v5290 = vadd.f32 %v5045, %v5198
      %v5291 = vadd.f32 %v5046, %v5200
      %v5292 = vadd.f32 %v5047, %v5203
      %v5293 = vadd.f32 %v5048, %v5205
      %v5294 = vadd.f32 %v5049, %v5208
      %v5295 = vadd.f32 %v5050, %v5210
      %v5296 = vadd.f32 %v5051, %v5213
      %v5297 = vadd.f32 %v5052, %v5215
      %v5298 = vadd.f32 %v5053, %v5218
      %v5299 = vadd.f32 %v5054, %v5220
      %v5300 = vadd.f32 %v5055, %v5223
      %v5301 = vadd.f32 %v5056, %v5225
      %v5302 = vadd.f32 %v5057, %v5228
      %v5303 = vadd.f32 %v5058, %v5230
      %v5304 = vadd.f32 %v5059, %v5233
      %v5305 = vadd.f32 %v5060, %v5235
      %v5306 = vadd.f32 %v5061, %v5238
      %v5307 = vadd.f32 %v5062, %v5240
      %v5308 = vadd.f32 %v5063, %v5243
      %v5309 = vadd.f32 %v5064, %v5245
      %v5310 = vld [vmem:[%s1 + $0x1c] sm:$0x1]
      %v5311 = vlaneseq
      %v5312 = vshrl.u32 %v5311, 7
      %v5313 = vsub.s32 0, %v5312
      %v5314 = vrot.slane %v5310, %v5313
      %v5315 = vmul.f32 %v208, %v5314
      %v5316 = vmul.f32 %v209, %v5314
      %v5317 = vmul.f32 %v210, %v5314
      %v5318 = vmul.f32 %v211, %v5314
      %v5319 = vmul.f32 %v212, %v5314
      %v5320 = vmul.f32 %v213, %v5314
      %v5321 = vmul.f32 %v214, %v5314
      %v5322 = vmul.f32 %v215, %v5314
      %v5323 = vmul.f32 %v216, %v5314
      %v5324 = vmul.f32 %v217, %v5314
      %v5325 = vmul.f32 %v218, %v5314
      %v5326 = vmul.f32 %v219, %v5314
      %v5327 = vmul.f32 %v220, %v5314
      %v5328 = vmul.f32 %v221, %v5314
      %v5329 = vmul.f32 %v222, %v5314
      %v5330 = vmul.f32 %v223, %v5314
      %v5331 = vmul.f32 %v224, %v5314
      %v5332 = vmul.f32 %v225, %v5314
      %v5333 = vmul.f32 %v226, %v5314
      %v5334 = vmul.f32 %v227, %v5314
      %v5335 = vmul.f32 %v228, %v5314
      %v5336 = vmul.f32 %v229, %v5314
      %v5337 = vmul.f32 %v230, %v5314
      %v5338 = vmul.f32 %v231, %v5314
      %v5339 = vmul.f32 %v232, %v5314
      %v5340 = vmul.f32 %v233, %v5314
      %v5341 = vmul.f32 %v234, %v5314
      %v5342 = vmul.f32 %v235, %v5314
      %v5343 = vmul.f32 %v236, %v5314
      %v5344 = vmul.f32 %v237, %v5314
      %v5345 = vmul.f32 %v238, %v5314
      %v5346 = vmul.f32 %v239, %v5314
      %v5347 = vmul.f32 %v240, %v5314
      %v5348 = vmul.f32 %v241, %v5314
      %v5349 = vmul.f32 %v242, %v5314
      %v5350 = vmul.f32 %v243, %v5314
      %v5351 = vmul.f32 %v244, %v5314
      %v5352 = vmul.f32 %v245, %v5314
      %v5353 = vmul.f32 %v246, %v5314
      %v5354 = vmul.f32 %v247, %v5314
      %v5355 = vmul.f32 %v248, %v5314
      %v5356 = vmul.f32 %v249, %v5314
      %v5357 = vmul.f32 %v250, %v5314
      %v5358 = vmul.f32 %v251, %v5314
      %v5359 = vmul.f32 %v252, %v5314
      %v5360 = vmul.f32 %v910, %v5314
      %v5361 = vmul.f32 %v911, %v5314
      %v5362 = vmul.f32 %v912, %v5314
      %v5411 = vrot.slane %v5315, 4
      %v5412 = vrot.slane %v5316, 4
      %v5413 = vsel %vm4851, %v5411, %v5412
      %v5414 = vrot.slane %v5317, 4
      %v5415 = vsel %vm4851, %v5412, %v5414
      %v5416 = vrot.slane %v5318, 4
      %v5417 = vrot.slane %v5319, 4
      %v5418 = vsel %vm4851, %v5416, %v5417
      %v5419 = vrot.slane %v5320, 4
      %v5420 = vsel %vm4851, %v5417, %v5419
      %v5421 = vrot.slane %v5321, 4
      %v5422 = vrot.slane %v5322, 4
      %v5423 = vsel %vm4851, %v5421, %v5422
      %v5424 = vrot.slane %v5323, 4
      %v5425 = vsel %vm4851, %v5422, %v5424
      %v5426 = vrot.slane %v5324, 4
      %v5427 = vrot.slane %v5325, 4
      %v5428 = vsel %vm4851, %v5426, %v5427
      %v5429 = vrot.slane %v5326, 4
      %v5430 = vsel %vm4851, %v5427, %v5429
      %v5431 = vrot.slane %v5327, 4
      %v5432 = vrot.slane %v5328, 4
      %v5433 = vsel %vm4851, %v5431, %v5432
      %v5434 = vrot.slane %v5329, 4
      %v5435 = vsel %vm4851, %v5432, %v5434
      %v5436 = vrot.slane %v5330, 4
      %v5437 = vrot.slane %v5331, 4
      %v5438 = vsel %vm4851, %v5436, %v5437
      %v5439 = vrot.slane %v5332, 4
      %v5440 = vsel %vm4851, %v5437, %v5439
      %v5441 = vrot.slane %v5333, 4
      %v5442 = vrot.slane %v5334, 4
      %v5443 = vsel %vm4851, %v5441, %v5442
      %v5444 = vrot.slane %v5335, 4
      %v5445 = vsel %vm4851, %v5442, %v5444
      %v5446 = vrot.slane %v5336, 4
      %v5447 = vrot.slane %v5337, 4
      %v5448 = vsel %vm4851, %v5446, %v5447
      %v5449 = vrot.slane %v5338, 4
      %v5450 = vsel %vm4851, %v5447, %v5449
      %v5451 = vrot.slane %v5339, 4
      %v5452 = vrot.slane %v5340, 4
      %v5453 = vsel %vm4851, %v5451, %v5452
      %v5454 = vrot.slane %v5341, 4
      %v5455 = vsel %vm4851, %v5452, %v5454
      %v5456 = vrot.slane %v5342, 4
      %v5457 = vrot.slane %v5343, 4
      %v5458 = vsel %vm4851, %v5456, %v5457
      %v5459 = vrot.slane %v5344, 4
      %v5460 = vsel %vm4851, %v5457, %v5459
      %v5461 = vrot.slane %v5345, 4
      %v5462 = vrot.slane %v5346, 4
      %v5463 = vsel %vm4851, %v5461, %v5462
      %v5464 = vrot.slane %v5347, 4
      %v5465 = vsel %vm4851, %v5462, %v5464
      %v5466 = vrot.slane %v5348, 4
      %v5467 = vrot.slane %v5349, 4
      %v5468 = vsel %vm4851, %v5466, %v5467
      %v5469 = vrot.slane %v5350, 4
      %v5470 = vsel %vm4851, %v5467, %v5469
      %v5471 = vrot.slane %v5351, 4
      %v5472 = vrot.slane %v5352, 4
      %v5473 = vsel %vm4851, %v5471, %v5472
      %v5474 = vrot.slane %v5353, 4
      %v5475 = vsel %vm4851, %v5472, %v5474
      %v5476 = vrot.slane %v5354, 4
      %v5477 = vrot.slane %v5355, 4
      %v5478 = vsel %vm4851, %v5476, %v5477
      %v5479 = vrot.slane %v5356, 4
      %v5480 = vsel %vm4851, %v5477, %v5479
      %v5481 = vrot.slane %v5357, 4
      %v5482 = vrot.slane %v5358, 4
      %v5483 = vsel %vm4851, %v5481, %v5482
      %v5484 = vrot.slane %v5359, 4
      %v5485 = vsel %vm4851, %v5482, %v5484
      %v5486 = vrot.slane %v5360, 4
      %v5487 = vrot.slane %v5361, 4
      %v5488 = vsel %vm4851, %v5486, %v5487
      %v5489 = vrot.slane %v5362, 4
      %v5490 = vsel %vm4851, %v5487, %v5489
      %v5523 = vadd.f32 %v5278, %v5413
      %v5524 = vadd.f32 %v5279, %v5415
      %v5525 = vadd.f32 %v5280, %v5418
      %v5526 = vadd.f32 %v5281, %v5420
      %v5527 = vadd.f32 %v5282, %v5423
      %v5528 = vadd.f32 %v5283, %v5425
      %v5529 = vadd.f32 %v5284, %v5428
      %v5530 = vadd.f32 %v5285, %v5430
      %v5531 = vadd.f32 %v5286, %v5433
      %v5532 = vadd.f32 %v5287, %v5435
      %v5533 = vadd.f32 %v5288, %v5438
      %v5534 = vadd.f32 %v5289, %v5440
      %v5535 = vadd.f32 %v5290, %v5443
      %v5536 = vadd.f32 %v5291, %v5445
      %v5537 = vadd.f32 %v5292, %v5448
      %v5538 = vadd.f32 %v5293, %v5450
      %v5539 = vadd.f32 %v5294, %v5453
      %v5540 = vadd.f32 %v5295, %v5455
      %v5541 = vadd.f32 %v5296, %v5458
      %v5542 = vadd.f32 %v5297, %v5460
      %v5543 = vadd.f32 %v5298, %v5463
      %v5544 = vadd.f32 %v5299, %v5465
      %v5545 = vadd.f32 %v5300, %v5468
      %v5546 = vadd.f32 %v5301, %v5470
      %v5547 = vadd.f32 %v5302, %v5473
      %v5548 = vadd.f32 %v5303, %v5475
      %v5549 = vadd.f32 %v5304, %v5478
      %v5550 = vadd.f32 %v5305, %v5480
      %v5551 = vadd.f32 %v5306, %v5483
      %v5552 = vadd.f32 %v5307, %v5485
      %v5553 = vadd.f32 %v5308, %v5488
      %v5554 = vadd.f32 %v5309, %v5490
      %v5555 = vld [vmem:[%s1 + $0x1e] sm:$0x1]
      %v5556 = vunpack.c.l.bf16 %v201
      %v5557 = vunpack.c.l.bf16 %v202
      %v5558 = vlaneseq
      %v5559 = vshrl.u32 %v5558, 7
      %v5560 = vsub.s32 0, %v5559
      %v5561 = vrot.slane %v5555, %v5560
      %v5562 = vmul.f32 %v214, %v5561
      %v5563 = vmul.f32 %v215, %v5561
      %v5564 = vmul.f32 %v217, %v5561
      %v5565 = vmul.f32 %v218, %v5561
      %v5566 = vmul.f32 %v220, %v5561
      %v5567 = vmul.f32 %v221, %v5561
      %v5568 = vmul.f32 %v223, %v5561
      %v5569 = vmul.f32 %v224, %v5561
      %v5570 = vmul.f32 %v226, %v5561
      %v5571 = vmul.f32 %v227, %v5561
      %v5572 = vmul.f32 %v229, %v5561
      %v5573 = vmul.f32 %v230, %v5561
      %v5574 = vmul.f32 %v232, %v5561
      %v5575 = vmul.f32 %v233, %v5561
      %v5576 = vmul.f32 %v235, %v5561
      %v5577 = vmul.f32 %v236, %v5561
      %v5578 = vmul.f32 %v238, %v5561
      %v5579 = vmul.f32 %v239, %v5561
      %v5580 = vmul.f32 %v241, %v5561
      %v5581 = vmul.f32 %v242, %v5561
      %v5582 = vmul.f32 %v244, %v5561
      %v5583 = vmul.f32 %v245, %v5561
      %v5584 = vmul.f32 %v247, %v5561
      %v5585 = vmul.f32 %v248, %v5561
      %v5586 = vmul.f32 %v250, %v5561
      %v5587 = vmul.f32 %v251, %v5561
      %v5588 = vmul.f32 %v910, %v5561
      %v5589 = vmul.f32 %v911, %v5561
      %v5590 = vmul.f32 %v1568, %v5561
      %v5591 = vmul.f32 %v1569, %v5561
      %v5592 = vmul.f32 %v5556, %v5561
      %v5593 = vmul.f32 %v5557, %v5561
      %v5594 = vadd.f32 %v5523, %v5562
      %v5595 = vadd.f32 %v5524, %v5563
      %v5596 = vadd.f32 %v5525, %v5564
      %v5597 = vadd.f32 %v5526, %v5565
      %v5598 = vadd.f32 %v5527, %v5566
      %v5599 = vadd.f32 %v5528, %v5567
      %v5600 = vadd.f32 %v5529, %v5568
      %v5601 = vadd.f32 %v5530, %v5569
      %v5602 = vadd.f32 %v5531, %v5570
      %v5603 = vadd.f32 %v5532, %v5571
      %v5604 = vadd.f32 %v5533, %v5572
      %v5605 = vadd.f32 %v5534, %v5573
      %v5606 = vadd.f32 %v5535, %v5574
      %v5607 = vadd.f32 %v5536, %v5575
      %v5608 = vadd.f32 %v5537, %v5576
      %v5609 = vadd.f32 %v5538, %v5577
      %v5610 = vadd.f32 %v5539, %v5578
      %v5611 = vadd.f32 %v5540, %v5579
      %v5612 = vadd.f32 %v5541, %v5580
      %v5613 = vadd.f32 %v5542, %v5581
      %v5614 = vadd.f32 %v5543, %v5582
      %v5615 = vadd.f32 %v5544, %v5583
      %v5616 = vadd.f32 %v5545, %v5584
      %v5617 = vadd.f32 %v5546, %v5585
      %v5618 = vadd.f32 %v5547, %v5586
      %v5619 = vadd.f32 %v5548, %v5587
      %v5620 = vadd.f32 %v5549, %v5588
      %v5621 = vadd.f32 %v5550, %v5589
      %v5622 = vadd.f32 %v5551, %v5590
      %v5623 = vadd.f32 %v5552, %v5591
      %v5624 = vadd.f32 %v5553, %v5592
      %v5625 = vadd.f32 %v5554, %v5593
      %v5626 = vld [vmem:[%s1 + $0x20] sm:$0x1]
      %v5627 = vunpack.c.l.bf16 %v203
      %v5628 = vlaneseq
      %v5629 = vshrl.u32 %v5628, 7
      %v5630 = vsub.s32 0, %v5629
      %v5631 = vrot.slane %v5626, %v5630
      %v5632 = vmul.f32 %v214, %v5631
      %v5633 = vmul.f32 %v215, %v5631
      %v5634 = vmul.f32 %v216, %v5631
      %v5635 = vmul.f32 %v217, %v5631
      %v5636 = vmul.f32 %v218, %v5631
      %v5637 = vmul.f32 %v219, %v5631
      %v5638 = vmul.f32 %v220, %v5631
      %v5639 = vmul.f32 %v221, %v5631
      %v5640 = vmul.f32 %v222, %v5631
      %v5641 = vmul.f32 %v223, %v5631
      %v5642 = vmul.f32 %v224, %v5631
      %v5643 = vmul.f32 %v225, %v5631
      %v5644 = vmul.f32 %v226, %v5631
      %v5645 = vmul.f32 %v227, %v5631
      %v5646 = vmul.f32 %v228, %v5631
      %v5647 = vmul.f32 %v229, %v5631
      %v5648 = vmul.f32 %v230, %v5631
      %v5649 = vmul.f32 %v231, %v5631
      %v5650 = vmul.f32 %v232, %v5631
      %v5651 = vmul.f32 %v233, %v5631
      %v5652 = vmul.f32 %v234, %v5631
      %v5653 = vmul.f32 %v235, %v5631
      %v5654 = vmul.f32 %v236, %v5631
      %v5655 = vmul.f32 %v237, %v5631
      %v5656 = vmul.f32 %v238, %v5631
      %v5657 = vmul.f32 %v239, %v5631
      %v5658 = vmul.f32 %v240, %v5631
      %v5659 = vmul.f32 %v241, %v5631
      %v5660 = vmul.f32 %v242, %v5631
      %v5661 = vmul.f32 %v243, %v5631
      %v5662 = vmul.f32 %v244, %v5631
      %v5663 = vmul.f32 %v245, %v5631
      %v5664 = vmul.f32 %v246, %v5631
      %v5665 = vmul.f32 %v247, %v5631
      %v5666 = vmul.f32 %v248, %v5631
      %v5667 = vmul.f32 %v249, %v5631
      %v5668 = vmul.f32 %v250, %v5631
      %v5669 = vmul.f32 %v251, %v5631
      %v5670 = vmul.f32 %v252, %v5631
      %v5671 = vmul.f32 %v910, %v5631
      %v5672 = vmul.f32 %v911, %v5631
      %v5673 = vmul.f32 %v912, %v5631
      %v5674 = vmul.f32 %v1568, %v5631
      %v5675 = vmul.f32 %v1569, %v5631
      %v5676 = vmul.f32 %v1570, %v5631
      %v5677 = vmul.f32 %v5556, %v5631
      %v5678 = vmul.f32 %v5557, %v5631
      %v5679 = vmul.f32 %v5627, %v5631
      %v5728 = vrot.slane %v5632, 2
      %v5729 = vrot.slane %v5633, 2
      %v5730 = vsel %vm732, %v5728, %v5729
      %v5731 = vrot.slane %v5634, 2
      %v5732 = vsel %vm732, %v5729, %v5731
      %v5733 = vrot.slane %v5635, 2
      %v5734 = vrot.slane %v5636, 2
      %v5735 = vsel %vm732, %v5733, %v5734
      %v5736 = vrot.slane %v5637, 2
      %v5737 = vsel %vm732, %v5734, %v5736
      %v5738 = vrot.slane %v5638, 2
      %v5739 = vrot.slane %v5639, 2
      %v5740 = vsel %vm732, %v5738, %v5739
      %v5741 = vrot.slane %v5640, 2
      %v5742 = vsel %vm732, %v5739, %v5741
      %v5743 = vrot.slane %v5641, 2
      %v5744 = vrot.slane %v5642, 2
      %v5745 = vsel %vm732, %v5743, %v5744
      %v5746 = vrot.slane %v5643, 2
      %v5747 = vsel %vm732, %v5744, %v5746
      %v5748 = vrot.slane %v5644, 2
      %v5749 = vrot.slane %v5645, 2
      %v5750 = vsel %vm732, %v5748, %v5749
      %v5751 = vrot.slane %v5646, 2
      %v5752 = vsel %vm732, %v5749, %v5751
      %v5753 = vrot.slane %v5647, 2
      %v5754 = vrot.slane %v5648, 2
      %v5755 = vsel %vm732, %v5753, %v5754
      %v5756 = vrot.slane %v5649, 2
      %v5757 = vsel %vm732, %v5754, %v5756
      %v5758 = vrot.slane %v5650, 2
      %v5759 = vrot.slane %v5651, 2
      %v5760 = vsel %vm732, %v5758, %v5759
      %v5761 = vrot.slane %v5652, 2
      %v5762 = vsel %vm732, %v5759, %v5761
      %v5763 = vrot.slane %v5653, 2
      %v5764 = vrot.slane %v5654, 2
      %v5765 = vsel %vm732, %v5763, %v5764
      %v5766 = vrot.slane %v5655, 2
      %v5767 = vsel %vm732, %v5764, %v5766
      %v5768 = vrot.slane %v5656, 2
      %v5769 = vrot.slane %v5657, 2
      %v5770 = vsel %vm732, %v5768, %v5769
      %v5771 = vrot.slane %v5658, 2
      %v5772 = vsel %vm732, %v5769, %v5771
      %v5773 = vrot.slane %v5659, 2
      %v5774 = vrot.slane %v5660, 2
      %v5775 = vsel %vm732, %v5773, %v5774
      %v5776 = vrot.slane %v5661, 2
      %v5777 = vsel %vm732, %v5774, %v5776
      %v5778 = vrot.slane %v5662, 2
      %v5779 = vrot.slane %v5663, 2
      %v5780 = vsel %vm732, %v5778, %v5779
      %v5781 = vrot.slane %v5664, 2
      %v5782 = vsel %vm732, %v5779, %v5781
      %v5783 = vrot.slane %v5665, 2
      %v5784 = vrot.slane %v5666, 2
      %v5785 = vsel %vm732, %v5783, %v5784
      %v5786 = vrot.slane %v5667, 2
      %v5787 = vsel %vm732, %v5784, %v5786
      %v5788 = vrot.slane %v5668, 2
      %v5789 = vrot.slane %v5669, 2
      %v5790 = vsel %vm732, %v5788, %v5789
      %v5791 = vrot.slane %v5670, 2
      %v5792 = vsel %vm732, %v5789, %v5791
      %v5793 = vrot.slane %v5671, 2
      %v5794 = vrot.slane %v5672, 2
      %v5795 = vsel %vm732, %v5793, %v5794
      %v5796 = vrot.slane %v5673, 2
      %v5797 = vsel %vm732, %v5794, %v5796
      %v5798 = vrot.slane %v5674, 2
      %v5799 = vrot.slane %v5675, 2
      %v5800 = vsel %vm732, %v5798, %v5799
      %v5801 = vrot.slane %v5676, 2
      %v5802 = vsel %vm732, %v5799, %v5801
      %v5803 = vrot.slane %v5677, 2
      %v5804 = vrot.slane %v5678, 2
      %v5805 = vsel %vm732, %v5803, %v5804
      %v5806 = vrot.slane %v5679, 2
      %v5807 = vsel %vm732, %v5804, %v5806
      %v5840 = vadd.f32 %v5594, %v5730
      %v5841 = vadd.f32 %v5595, %v5732
      %v5842 = vadd.f32 %v5596, %v5735
      %v5843 = vadd.f32 %v5597, %v5737
      %v5844 = vadd.f32 %v5598, %v5740
      %v5845 = vadd.f32 %v5599, %v5742
      %v5846 = vadd.f32 %v5600, %v5745
      %v5847 = vadd.f32 %v5601, %v5747
      %v5848 = vadd.f32 %v5602, %v5750
      %v5849 = vadd.f32 %v5603, %v5752
      %v5850 = vadd.f32 %v5604, %v5755
      %v5851 = vadd.f32 %v5605, %v5757
      %v5852 = vadd.f32 %v5606, %v5760
      %v5853 = vadd.f32 %v5607, %v5762
      %v5854 = vadd.f32 %v5608, %v5765
      %v5855 = vadd.f32 %v5609, %v5767
      %v5856 = vadd.f32 %v5610, %v5770
      %v5857 = vadd.f32 %v5611, %v5772
      %v5858 = vadd.f32 %v5612, %v5775
      %v5859 = vadd.f32 %v5613, %v5777
      %v5860 = vadd.f32 %v5614, %v5780
      %v5861 = vadd.f32 %v5615, %v5782
      %v5862 = vadd.f32 %v5616, %v5785
      %v5863 = vadd.f32 %v5617, %v5787
      %v5864 = vadd.f32 %v5618, %v5790
      %v5865 = vadd.f32 %v5619, %v5792
      %v5866 = vadd.f32 %v5620, %v5795
      %v5867 = vadd.f32 %v5621, %v5797
      %v5868 = vadd.f32 %v5622, %v5800
      %v5869 = vadd.f32 %v5623, %v5802
      %v5870 = vadd.f32 %v5624, %v5805
      %v5871 = vadd.f32 %v5625, %v5807
      %v5872 = vld [vmem:[%s1 + $0x22] sm:$0x1]
      %v5873 = vlaneseq
      %v5874 = vshrl.u32 %v5873, 7
      %v5875 = vsub.s32 0, %v5874
      %v5876 = vrot.slane %v5872, %v5875
      %v5877 = vmul.f32 %v214, %v5876
      %v5878 = vmul.f32 %v215, %v5876
      %v5879 = vmul.f32 %v216, %v5876
      %v5880 = vmul.f32 %v217, %v5876
      %v5881 = vmul.f32 %v218, %v5876
      %v5882 = vmul.f32 %v219, %v5876
      %v5883 = vmul.f32 %v220, %v5876
      %v5884 = vmul.f32 %v221, %v5876
      %v5885 = vmul.f32 %v222, %v5876
      %v5886 = vmul.f32 %v223, %v5876
      %v5887 = vmul.f32 %v224, %v5876
      %v5888 = vmul.f32 %v225, %v5876
      %v5889 = vmul.f32 %v226, %v5876
      %v5890 = vmul.f32 %v227, %v5876
      %v5891 = vmul.f32 %v228, %v5876
      %v5892 = vmul.f32 %v229, %v5876
      %v5893 = vmul.f32 %v230, %v5876
      %v5894 = vmul.f32 %v231, %v5876
      %v5895 = vmul.f32 %v232, %v5876
      %v5896 = vmul.f32 %v233, %v5876
      %v5897 = vmul.f32 %v234, %v5876
      %v5898 = vmul.f32 %v235, %v5876
      %v5899 = vmul.f32 %v236, %v5876
      %v5900 = vmul.f32 %v237, %v5876
      %v5901 = vmul.f32 %v238, %v5876
      %v5902 = vmul.f32 %v239, %v5876
      %v5903 = vmul.f32 %v240, %v5876
      %v5904 = vmul.f32 %v241, %v5876
      %v5905 = vmul.f32 %v242, %v5876
      %v5906 = vmul.f32 %v243, %v5876
      %v5907 = vmul.f32 %v244, %v5876
      %v5908 = vmul.f32 %v245, %v5876
      %v5909 = vmul.f32 %v246, %v5876
      %v5910 = vmul.f32 %v247, %v5876
      %v5911 = vmul.f32 %v248, %v5876
      %v5912 = vmul.f32 %v249, %v5876
      %v5913 = vmul.f32 %v250, %v5876
      %v5914 = vmul.f32 %v251, %v5876
      %v5915 = vmul.f32 %v252, %v5876
      %v5916 = vmul.f32 %v910, %v5876
      %v5917 = vmul.f32 %v911, %v5876
      %v5918 = vmul.f32 %v912, %v5876
      %v5919 = vmul.f32 %v1568, %v5876
      %v5920 = vmul.f32 %v1569, %v5876
      %v5921 = vmul.f32 %v1570, %v5876
      %v5922 = vmul.f32 %v5556, %v5876
      %v5923 = vmul.f32 %v5557, %v5876
      %v5924 = vmul.f32 %v5627, %v5876
      %v5973 = vrot.slane %v5877, 4
      %v5974 = vrot.slane %v5878, 4
      %v5975 = vsel %vm4851, %v5973, %v5974
      %v5976 = vrot.slane %v5879, 4
      %v5977 = vsel %vm4851, %v5974, %v5976
      %v5978 = vrot.slane %v5880, 4
      %v5979 = vrot.slane %v5881, 4
      %v5980 = vsel %vm4851, %v5978, %v5979
      %v5981 = vrot.slane %v5882, 4
      %v5982 = vsel %vm4851, %v5979, %v5981
      %v5983 = vrot.slane %v5883, 4
      %v5984 = vrot.slane %v5884, 4
      %v5985 = vsel %vm4851, %v5983, %v5984
      %v5986 = vrot.slane %v5885, 4
      %v5987 = vsel %vm4851, %v5984, %v5986
      %v5988 = vrot.slane %v5886, 4
      %v5989 = vrot.slane %v5887, 4
      %v5990 = vsel %vm4851, %v5988, %v5989
      %v5991 = vrot.slane %v5888, 4
      %v5992 = vsel %vm4851, %v5989, %v5991
      %v5993 = vrot.slane %v5889, 4
      %v5994 = vrot.slane %v5890, 4
      %v5995 = vsel %vm4851, %v5993, %v5994
      %v5996 = vrot.slane %v5891, 4
      %v5997 = vsel %vm4851, %v5994, %v5996
      %v5998 = vrot.slane %v5892, 4
      %v5999 = vrot.slane %v5893, 4
      %v6000 = vsel %vm4851, %v5998, %v5999
      %v6001 = vrot.slane %v5894, 4
      %v6002 = vsel %vm4851, %v5999, %v6001
      %v6003 = vrot.slane %v5895, 4
      %v6004 = vrot.slane %v5896, 4
      %v6005 = vsel %vm4851, %v6003, %v6004
      %v6006 = vrot.slane %v5897, 4
      %v6007 = vsel %vm4851, %v6004, %v6006
      %v6008 = vrot.slane %v5898, 4
      %v6009 = vrot.slane %v5899, 4
      %v6010 = vsel %vm4851, %v6008, %v6009
      %v6011 = vrot.slane %v5900, 4
      %v6012 = vsel %vm4851, %v6009, %v6011
      %v6013 = vrot.slane %v5901, 4
      %v6014 = vrot.slane %v5902, 4
      %v6015 = vsel %vm4851, %v6013, %v6014
      %v6016 = vrot.slane %v5903, 4
      %v6017 = vsel %vm4851, %v6014, %v6016
      %v6018 = vrot.slane %v5904, 4
      %v6019 = vrot.slane %v5905, 4
      %v6020 = vsel %vm4851, %v6018, %v6019
      %v6021 = vrot.slane %v5906, 4
      %v6022 = vsel %vm4851, %v6019, %v6021
      %v6023 = vrot.slane %v5907, 4
      %v6024 = vrot.slane %v5908, 4
      %v6025 = vsel %vm4851, %v6023, %v6024
      %v6026 = vrot.slane %v5909, 4
      %v6027 = vsel %vm4851, %v6024, %v6026
      %v6028 = vrot.slane %v5910, 4
      %v6029 = vrot.slane %v5911, 4
      %v6030 = vsel %vm4851, %v6028, %v6029
      %v6031 = vrot.slane %v5912, 4
      %v6032 = vsel %vm4851, %v6029, %v6031
      %v6033 = vrot.slane %v5913, 4
      %v6034 = vrot.slane %v5914, 4
      %v6035 = vsel %vm4851, %v6033, %v6034
      %v6036 = vrot.slane %v5915, 4
      %v6037 = vsel %vm4851, %v6034, %v6036
      %v6038 = vrot.slane %v5916, 4
      %v6039 = vrot.slane %v5917, 4
      %v6040 = vsel %vm4851, %v6038, %v6039
      %v6041 = vrot.slane %v5918, 4
      %v6042 = vsel %vm4851, %v6039, %v6041
      %v6043 = vrot.slane %v5919, 4
      %v6044 = vrot.slane %v5920, 4
      %v6045 = vsel %vm4851, %v6043, %v6044
      %v6046 = vrot.slane %v5921, 4
      %v6047 = vsel %vm4851, %v6044, %v6046
      %v6048 = vrot.slane %v5922, 4
      %v6049 = vrot.slane %v5923, 4
      %v6050 = vsel %vm4851, %v6048, %v6049
      %v6051 = vrot.slane %v5924, 4
      %v6052 = vsel %vm4851, %v6049, %v6051
      %v6085 = vadd.f32 %v5840, %v5975
      %v6086 = vadd.f32 %v5841, %v5977
      %v6087 = vadd.f32 %v5842, %v5980
      %v6088 = vadd.f32 %v5843, %v5982
      %v6089 = vadd.f32 %v5844, %v5985
      %v6090 = vadd.f32 %v5845, %v5987
      %v6091 = vadd.f32 %v5846, %v5990
      %v6092 = vadd.f32 %v5847, %v5992
      %v6093 = vadd.f32 %v5848, %v5995
      %v6094 = vadd.f32 %v5849, %v5997
      %v6095 = vadd.f32 %v5850, %v6000
      %v6096 = vadd.f32 %v5851, %v6002
      %v6097 = vadd.f32 %v5852, %v6005
      %v6098 = vadd.f32 %v5853, %v6007
      %v6099 = vadd.f32 %v5854, %v6010
      %v6100 = vadd.f32 %v5855, %v6012
      %v6101 = vadd.f32 %v5856, %v6015
      %v6102 = vadd.f32 %v5857, %v6017
      %v6103 = vadd.f32 %v5858, %v6020
      %v6104 = vadd.f32 %v5859, %v6022
      %v6105 = vadd.f32 %v5860, %v6025
      %v6106 = vadd.f32 %v5861, %v6027
      %v6107 = vadd.f32 %v5862, %v6030
      %v6108 = vadd.f32 %v5863, %v6032
      %v6109 = vadd.f32 %v5864, %v6035
      %v6110 = vadd.f32 %v5865, %v6037
      %v6111 = vadd.f32 %v5866, %v6040
      %v6112 = vadd.f32 %v5867, %v6042
      %v6113 = vadd.f32 %v5868, %v6045
      %v6114 = vadd.f32 %v5869, %v6047
      %v6115 = vadd.f32 %v5870, %v6050
      %v6116 = vadd.f32 %v5871, %v6052
      %v6117 = vld [vmem:[%s1 + $0x13] sm:$0x1]
      %v6118 = vunpack.c.l.bf16 %v2226
      %v6119 = vunpack.c.l.bf16 %v2227
      %v6120 = vlaneseq
      %v6121 = vshrl.u32 %v6120, 7
      %v6122 = vsub.s32 0, %v6121
      %v6123 = vrot.slane %v6117, %v6122
      %v6124 = vmul.f32 %v6118, %v6123
      %v6125 = vmul.f32 %v6119, %v6123
      %v6126 = vmul.f32 %v2287, %v6123
      %v6127 = vmul.f32 %v2288, %v6123
      %v6128 = vmul.f32 %v2290, %v6123
      %v6129 = vmul.f32 %v2291, %v6123
      %v6130 = vmul.f32 %v2293, %v6123
      %v6131 = vmul.f32 %v2294, %v6123
      %v6132 = vmul.f32 %v2296, %v6123
      %v6133 = vmul.f32 %v2297, %v6123
      %v6134 = vmul.f32 %v2299, %v6123
      %v6135 = vmul.f32 %v2300, %v6123
      %v6136 = vmul.f32 %v2302, %v6123
      %v6137 = vmul.f32 %v2303, %v6123
      %v6138 = vmul.f32 %v2305, %v6123
      %v6139 = vmul.f32 %v2306, %v6123
      %v6140 = vmul.f32 %v2308, %v6123
      %v6141 = vmul.f32 %v2309, %v6123
      %v6142 = vmul.f32 %v2311, %v6123
      %v6143 = vmul.f32 %v2312, %v6123
      %v6144 = vmul.f32 %v2314, %v6123
      %v6145 = vmul.f32 %v2315, %v6123
      %v6146 = vmul.f32 %v2317, %v6123
      %v6147 = vmul.f32 %v2318, %v6123
      %v6148 = vmul.f32 %v2320, %v6123
      %v6149 = vmul.f32 %v2321, %v6123
      %v6150 = vmul.f32 %v2323, %v6123
      %v6151 = vmul.f32 %v2324, %v6123
      %v6152 = vmul.f32 %v2326, %v6123
      %v6153 = vmul.f32 %v2327, %v6123
      %v6154 = vmul.f32 %v2329, %v6123
      %v6155 = vmul.f32 %v2330, %v6123
      %v6156 = vadd.f32 %v6085, %v6124
      %v6157 = vadd.f32 %v6086, %v6125
      %v6158 = vadd.f32 %v6087, %v6126
      %v6159 = vadd.f32 %v6088, %v6127
      %v6160 = vadd.f32 %v6089, %v6128
      %v6161 = vadd.f32 %v6090, %v6129
      %v6162 = vadd.f32 %v6091, %v6130
      %v6163 = vadd.f32 %v6092, %v6131
      %v6164 = vadd.f32 %v6093, %v6132
      %v6165 = vadd.f32 %v6094, %v6133
      %v6166 = vadd.f32 %v6095, %v6134
      %v6167 = vadd.f32 %v6096, %v6135
      %v6168 = vadd.f32 %v6097, %v6136
      %v6169 = vadd.f32 %v6098, %v6137
      %v6170 = vadd.f32 %v6099, %v6138
      %v6171 = vadd.f32 %v6100, %v6139
      %v6172 = vadd.f32 %v6101, %v6140
      %v6173 = vadd.f32 %v6102, %v6141
      %v6174 = vadd.f32 %v6103, %v6142
      %v6175 = vadd.f32 %v6104, %v6143
      %v6176 = vadd.f32 %v6105, %v6144
      %v6177 = vadd.f32 %v6106, %v6145
      %v6178 = vadd.f32 %v6107, %v6146
      %v6179 = vadd.f32 %v6108, %v6147
      %v6180 = vadd.f32 %v6109, %v6148
      %v6181 = vadd.f32 %v6110, %v6149
      %v6182 = vadd.f32 %v6111, %v6150
      %v6183 = vadd.f32 %v6112, %v6151
      %v6184 = vadd.f32 %v6113, %v6152
      %v6185 = vadd.f32 %v6114, %v6153
      %v6186 = vadd.f32 %v6115, %v6154
      %v6187 = vadd.f32 %v6116, %v6155
      %v6188 = vld [vmem:[%s1 + $0x15] sm:$0x1]
      %v6189 = vunpack.c.l.bf16 %v2228
      %v6190 = vlaneseq
      %v6191 = vshrl.u32 %v6190, 7
      %v6192 = vsub.s32 0, %v6191
      %v6193 = vrot.slane %v6188, %v6192
      %v6194 = vmul.f32 %v6118, %v6193
      %v6195 = vmul.f32 %v6119, %v6193
      %v6196 = vmul.f32 %v6189, %v6193
      %v6197 = vmul.f32 %v2287, %v6193
      %v6198 = vmul.f32 %v2288, %v6193
      %v6199 = vmul.f32 %v2289, %v6193
      %v6200 = vmul.f32 %v2290, %v6193
      %v6201 = vmul.f32 %v2291, %v6193
      %v6202 = vmul.f32 %v2292, %v6193
      %v6203 = vmul.f32 %v2293, %v6193
      %v6204 = vmul.f32 %v2294, %v6193
      %v6205 = vmul.f32 %v2295, %v6193
      %v6206 = vmul.f32 %v2296, %v6193
      %v6207 = vmul.f32 %v2297, %v6193
      %v6208 = vmul.f32 %v2298, %v6193
      %v6209 = vmul.f32 %v2299, %v6193
      %v6210 = vmul.f32 %v2300, %v6193
      %v6211 = vmul.f32 %v2301, %v6193
      %v6212 = vmul.f32 %v2302, %v6193
      %v6213 = vmul.f32 %v2303, %v6193
      %v6214 = vmul.f32 %v2304, %v6193
      %v6215 = vmul.f32 %v2305, %v6193
      %v6216 = vmul.f32 %v2306, %v6193
      %v6217 = vmul.f32 %v2307, %v6193
      %v6218 = vmul.f32 %v2308, %v6193
      %v6219 = vmul.f32 %v2309, %v6193
      %v6220 = vmul.f32 %v2310, %v6193
      %v6221 = vmul.f32 %v2311, %v6193
      %v6222 = vmul.f32 %v2312, %v6193
      %v6223 = vmul.f32 %v2313, %v6193
      %v6224 = vmul.f32 %v2314, %v6193
      %v6225 = vmul.f32 %v2315, %v6193
      %v6226 = vmul.f32 %v2316, %v6193
      %v6227 = vmul.f32 %v2317, %v6193
      %v6228 = vmul.f32 %v2318, %v6193
      %v6229 = vmul.f32 %v2319, %v6193
      %v6230 = vmul.f32 %v2320, %v6193
      %v6231 = vmul.f32 %v2321, %v6193
      %v6232 = vmul.f32 %v2322, %v6193
      %v6233 = vmul.f32 %v2323, %v6193
      %v6234 = vmul.f32 %v2324, %v6193
      %v6235 = vmul.f32 %v2325, %v6193
      %v6236 = vmul.f32 %v2326, %v6193
      %v6237 = vmul.f32 %v2327, %v6193
      %v6238 = vmul.f32 %v2328, %v6193
      %v6239 = vmul.f32 %v2329, %v6193
      %v6240 = vmul.f32 %v2330, %v6193
      %v6241 = vmul.f32 %v2331, %v6193
      %v6290 = vrot.slane %v6194, 2
      %v6291 = vrot.slane %v6195, 2
      %v6292 = vsel %vm732, %v6290, %v6291
      %v6293 = vrot.slane %v6196, 2
      %v6294 = vsel %vm732, %v6291, %v6293
      %v6295 = vrot.slane %v6197, 2
      %v6296 = vrot.slane %v6198, 2
      %v6297 = vsel %vm732, %v6295, %v6296
      %v6298 = vrot.slane %v6199, 2
      %v6299 = vsel %vm732, %v6296, %v6298
      %v6300 = vrot.slane %v6200, 2
      %v6301 = vrot.slane %v6201, 2
      %v6302 = vsel %vm732, %v6300, %v6301
      %v6303 = vrot.slane %v6202, 2
      %v6304 = vsel %vm732, %v6301, %v6303
      %v6305 = vrot.slane %v6203, 2
      %v6306 = vrot.slane %v6204, 2
      %v6307 = vsel %vm732, %v6305, %v6306
      %v6308 = vrot.slane %v6205, 2
      %v6309 = vsel %vm732, %v6306, %v6308
      %v6310 = vrot.slane %v6206, 2
      %v6311 = vrot.slane %v6207, 2
      %v6312 = vsel %vm732, %v6310, %v6311
      %v6313 = vrot.slane %v6208, 2
      %v6314 = vsel %vm732, %v6311, %v6313
      %v6315 = vrot.slane %v6209, 2
      %v6316 = vrot.slane %v6210, 2
      %v6317 = vsel %vm732, %v6315, %v6316
      %v6318 = vrot.slane %v6211, 2
      %v6319 = vsel %vm732, %v6316, %v6318
      %v6320 = vrot.slane %v6212, 2
      %v6321 = vrot.slane %v6213, 2
      %v6322 = vsel %vm732, %v6320, %v6321
      %v6323 = vrot.slane %v6214, 2
      %v6324 = vsel %vm732, %v6321, %v6323
      %v6325 = vrot.slane %v6215, 2
      %v6326 = vrot.slane %v6216, 2
      %v6327 = vsel %vm732, %v6325, %v6326
      %v6328 = vrot.slane %v6217, 2
      %v6329 = vsel %vm732, %v6326, %v6328
      %v6330 = vrot.slane %v6218, 2
      %v6331 = vrot.slane %v6219, 2
      %v6332 = vsel %vm732, %v6330, %v6331
      %v6333 = vrot.slane %v6220, 2
      %v6334 = vsel %vm732, %v6331, %v6333
      %v6335 = vrot.slane %v6221, 2
      %v6336 = vrot.slane %v6222, 2
      %v6337 = vsel %vm732, %v6335, %v6336
      %v6338 = vrot.slane %v6223, 2
      %v6339 = vsel %vm732, %v6336, %v6338
      %v6340 = vrot.slane %v6224, 2
      %v6341 = vrot.slane %v6225, 2
      %v6342 = vsel %vm732, %v6340, %v6341
      %v6343 = vrot.slane %v6226, 2
      %v6344 = vsel %vm732, %v6341, %v6343
      %v6345 = vrot.slane %v6227, 2
      %v6346 = vrot.slane %v6228, 2
      %v6347 = vsel %vm732, %v6345, %v6346
      %v6348 = vrot.slane %v6229, 2
      %v6349 = vsel %vm732, %v6346, %v6348
      %v6350 = vrot.slane %v6230, 2
      %v6351 = vrot.slane %v6231, 2
      %v6352 = vsel %vm732, %v6350, %v6351
      %v6353 = vrot.slane %v6232, 2
      %v6354 = vsel %vm732, %v6351, %v6353
      %v6355 = vrot.slane %v6233, 2
      %v6356 = vrot.slane %v6234, 2
      %v6357 = vsel %vm732, %v6355, %v6356
      %v6358 = vrot.slane %v6235, 2
      %v6359 = vsel %vm732, %v6356, %v6358
      %v6360 = vrot.slane %v6236, 2
      %v6361 = vrot.slane %v6237, 2
      %v6362 = vsel %vm732, %v6360, %v6361
      %v6363 = vrot.slane %v6238, 2
      %v6364 = vsel %vm732, %v6361, %v6363
      %v6365 = vrot.slane %v6239, 2
      %v6366 = vrot.slane %v6240, 2
      %v6367 = vsel %vm732, %v6365, %v6366
      %v6368 = vrot.slane %v6241, 2
      %v6369 = vsel %vm732, %v6366, %v6368
      %v6402 = vadd.f32 %v6156, %v6292
      %v6403 = vadd.f32 %v6157, %v6294
      %v6404 = vadd.f32 %v6158, %v6297
      %v6405 = vadd.f32 %v6159, %v6299
      %v6406 = vadd.f32 %v6160, %v6302
      %v6407 = vadd.f32 %v6161, %v6304
      %v6408 = vadd.f32 %v6162, %v6307
      %v6409 = vadd.f32 %v6163, %v6309
      %v6410 = vadd.f32 %v6164, %v6312
      %v6411 = vadd.f32 %v6165, %v6314
      %v6412 = vadd.f32 %v6166, %v6317
      %v6413 = vadd.f32 %v6167, %v6319
      %v6414 = vadd.f32 %v6168, %v6322
      %v6415 = vadd.f32 %v6169, %v6324
      %v6416 = vadd.f32 %v6170, %v6327
      %v6417 = vadd.f32 %v6171, %v6329
      %v6418 = vadd.f32 %v6172, %v6332
      %v6419 = vadd.f32 %v6173, %v6334
      %v6420 = vadd.f32 %v6174, %v6337
      %v6421 = vadd.f32 %v6175, %v6339
      %v6422 = vadd.f32 %v6176, %v6342
      %v6423 = vadd.f32 %v6177, %v6344
      %v6424 = vadd.f32 %v6178, %v6347
      %v6425 = vadd.f32 %v6179, %v6349
      %v6426 = vadd.f32 %v6180, %v6352
      %v6427 = vadd.f32 %v6181, %v6354
      %v6428 = vadd.f32 %v6182, %v6357
      %v6429 = vadd.f32 %v6183, %v6359
      %v6430 = vadd.f32 %v6184, %v6362
      %v6431 = vadd.f32 %v6185, %v6364
      %v6432 = vadd.f32 %v6186, %v6367
      %v6433 = vadd.f32 %v6187, %v6369
      %v6434 = vld [vmem:[%s1 + $0x17] sm:$0x1]
      %v6435 = vlaneseq
      %v6436 = vshrl.u32 %v6435, 7
      %v6437 = vsub.s32 0, %v6436
      %v6438 = vrot.slane %v6434, %v6437
      %v6439 = vmul.f32 %v6118, %v6438
      %v6440 = vmul.f32 %v6119, %v6438
      %v6441 = vmul.f32 %v6189, %v6438
      %v6442 = vmul.f32 %v2287, %v6438
      %v6443 = vmul.f32 %v2288, %v6438
      %v6444 = vmul.f32 %v2289, %v6438
      %v6445 = vmul.f32 %v2290, %v6438
      %v6446 = vmul.f32 %v2291, %v6438
      %v6447 = vmul.f32 %v2292, %v6438
      %v6448 = vmul.f32 %v2293, %v6438
      %v6449 = vmul.f32 %v2294, %v6438
      %v6450 = vmul.f32 %v2295, %v6438
      %v6451 = vmul.f32 %v2296, %v6438
      %v6452 = vmul.f32 %v2297, %v6438
      %v6453 = vmul.f32 %v2298, %v6438
      %v6454 = vmul.f32 %v2299, %v6438
      %v6455 = vmul.f32 %v2300, %v6438
      %v6456 = vmul.f32 %v2301, %v6438
      %v6457 = vmul.f32 %v2302, %v6438
      %v6458 = vmul.f32 %v2303, %v6438
      %v6459 = vmul.f32 %v2304, %v6438
      %v6460 = vmul.f32 %v2305, %v6438
      %v6461 = vmul.f32 %v2306, %v6438
      %v6462 = vmul.f32 %v2307, %v6438
      %v6463 = vmul.f32 %v2308, %v6438
      %v6464 = vmul.f32 %v2309, %v6438
      %v6465 = vmul.f32 %v2310, %v6438
      %v6466 = vmul.f32 %v2311, %v6438
      %v6467 = vmul.f32 %v2312, %v6438
      %v6468 = vmul.f32 %v2313, %v6438
      %v6469 = vmul.f32 %v2314, %v6438
      %v6470 = vmul.f32 %v2315, %v6438
      %v6471 = vmul.f32 %v2316, %v6438
      %v6472 = vmul.f32 %v2317, %v6438
      %v6473 = vmul.f32 %v2318, %v6438
      %v6474 = vmul.f32 %v2319, %v6438
      %v6475 = vmul.f32 %v2320, %v6438
      %v6476 = vmul.f32 %v2321, %v6438
      %v6477 = vmul.f32 %v2322, %v6438
      %v6478 = vmul.f32 %v2323, %v6438
      %v6479 = vmul.f32 %v2324, %v6438
      %v6480 = vmul.f32 %v2325, %v6438
      %v6481 = vmul.f32 %v2326, %v6438
      %v6482 = vmul.f32 %v2327, %v6438
      %v6483 = vmul.f32 %v2328, %v6438
      %v6484 = vmul.f32 %v2329, %v6438
      %v6485 = vmul.f32 %v2330, %v6438
      %v6486 = vmul.f32 %v2331, %v6438
      %v6535 = vrot.slane %v6439, 4
      %v6536 = vrot.slane %v6440, 4
      %v6537 = vsel %vm4851, %v6535, %v6536
      %v6538 = vrot.slane %v6441, 4
      %v6539 = vsel %vm4851, %v6536, %v6538
      %v6540 = vrot.slane %v6442, 4
      %v6541 = vrot.slane %v6443, 4
      %v6542 = vsel %vm4851, %v6540, %v6541
      %v6543 = vrot.slane %v6444, 4
      %v6544 = vsel %vm4851, %v6541, %v6543
      %v6545 = vrot.slane %v6445, 4
      %v6546 = vrot.slane %v6446, 4
      %v6547 = vsel %vm4851, %v6545, %v6546
      %v6548 = vrot.slane %v6447, 4
      %v6549 = vsel %vm4851, %v6546, %v6548
      %v6550 = vrot.slane %v6448, 4
      %v6551 = vrot.slane %v6449, 4
      %v6552 = vsel %vm4851, %v6550, %v6551
      %v6553 = vrot.slane %v6450, 4
      %v6554 = vsel %vm4851, %v6551, %v6553
      %v6555 = vrot.slane %v6451, 4
      %v6556 = vrot.slane %v6452, 4
      %v6557 = vsel %vm4851, %v6555, %v6556
      %v6558 = vrot.slane %v6453, 4
      %v6559 = vsel %vm4851, %v6556, %v6558
      %v6560 = vrot.slane %v6454, 4
      %v6561 = vrot.slane %v6455, 4
      %v6562 = vsel %vm4851, %v6560, %v6561
      %v6563 = vrot.slane %v6456, 4
      %v6564 = vsel %vm4851, %v6561, %v6563
      %v6565 = vrot.slane %v6457, 4
      %v6566 = vrot.slane %v6458, 4
      %v6567 = vsel %vm4851, %v6565, %v6566
      %v6568 = vrot.slane %v6459, 4
      %v6569 = vsel %vm4851, %v6566, %v6568
      %v6570 = vrot.slane %v6460, 4
      %v6571 = vrot.slane %v6461, 4
      %v6572 = vsel %vm4851, %v6570, %v6571
      %v6573 = vrot.slane %v6462, 4
      %v6574 = vsel %vm4851, %v6571, %v6573
      %v6575 = vrot.slane %v6463, 4
      %v6576 = vrot.slane %v6464, 4
      %v6577 = vsel %vm4851, %v6575, %v6576
      %v6578 = vrot.slane %v6465, 4
      %v6579 = vsel %vm4851, %v6576, %v6578
      %v6580 = vrot.slane %v6466, 4
      %v6581 = vrot.slane %v6467, 4
      %v6582 = vsel %vm4851, %v6580, %v6581
      %v6583 = vrot.slane %v6468, 4
      %v6584 = vsel %vm4851, %v6581, %v6583
      %v6585 = vrot.slane %v6469, 4
      %v6586 = vrot.slane %v6470, 4
      %v6587 = vsel %vm4851, %v6585, %v6586
      %v6588 = vrot.slane %v6471, 4
      %v6589 = vsel %vm4851, %v6586, %v6588
      %v6590 = vrot.slane %v6472, 4
      %v6591 = vrot.slane %v6473, 4
      %v6592 = vsel %vm4851, %v6590, %v6591
      %v6593 = vrot.slane %v6474, 4
      %v6594 = vsel %vm4851, %v6591, %v6593
      %v6595 = vrot.slane %v6475, 4
      %v6596 = vrot.slane %v6476, 4
      %v6597 = vsel %vm4851, %v6595, %v6596
      %v6598 = vrot.slane %v6477, 4
      %v6599 = vsel %vm4851, %v6596, %v6598
      %v6600 = vrot.slane %v6478, 4
      %v6601 = vrot.slane %v6479, 4
      %v6602 = vsel %vm4851, %v6600, %v6601
      %v6603 = vrot.slane %v6480, 4
      %v6604 = vsel %vm4851, %v6601, %v6603
      %v6605 = vrot.slane %v6481, 4
      %v6606 = vrot.slane %v6482, 4
      %v6607 = vsel %vm4851, %v6605, %v6606
      %v6608 = vrot.slane %v6483, 4
      %v6609 = vsel %vm4851, %v6606, %v6608
      %v6610 = vrot.slane %v6484, 4
      %v6611 = vrot.slane %v6485, 4
      %v6612 = vsel %vm4851, %v6610, %v6611
      %v6613 = vrot.slane %v6486, 4
      %v6614 = vsel %vm4851, %v6611, %v6613
      %v6647 = vadd.f32 %v6402, %v6537
      %v6648 = vadd.f32 %v6403, %v6539
      %v6649 = vadd.f32 %v6404, %v6542
      %v6650 = vadd.f32 %v6405, %v6544
      %v6651 = vadd.f32 %v6406, %v6547
      %v6652 = vadd.f32 %v6407, %v6549
      %v6653 = vadd.f32 %v6408, %v6552
      %v6654 = vadd.f32 %v6409, %v6554
      %v6655 = vadd.f32 %v6410, %v6557
      %v6656 = vadd.f32 %v6411, %v6559
      %v6657 = vadd.f32 %v6412, %v6562
      %v6658 = vadd.f32 %v6413, %v6564
      %v6659 = vadd.f32 %v6414, %v6567
      %v6660 = vadd.f32 %v6415, %v6569
      %v6661 = vadd.f32 %v6416, %v6572
      %v6662 = vadd.f32 %v6417, %v6574
      %v6663 = vadd.f32 %v6418, %v6577
      %v6664 = vadd.f32 %v6419, %v6579
      %v6665 = vadd.f32 %v6420, %v6582
      %v6666 = vadd.f32 %v6421, %v6584
      %v6667 = vadd.f32 %v6422, %v6587
      %v6668 = vadd.f32 %v6423, %v6589
      %v6669 = vadd.f32 %v6424, %v6592
      %v6670 = vadd.f32 %v6425, %v6594
      %v6671 = vadd.f32 %v6426, %v6597
      %v6672 = vadd.f32 %v6427, %v6599
      %v6673 = vadd.f32 %v6428, %v6602
      %v6674 = vadd.f32 %v6429, %v6604
      %v6675 = vadd.f32 %v6430, %v6607
      %v6676 = vadd.f32 %v6431, %v6609
      %v6677 = vadd.f32 %v6432, %v6612
      %v6678 = vadd.f32 %v6433, %v6614
      %v6679 = vld [vmem:[%s1 + $0x19] sm:$0x1]
      %v6680 = vlaneseq
      %v6681 = vshrl.u32 %v6680, 7
      %v6682 = vsub.s32 0, %v6681
      %v6683 = vrot.slane %v6679, %v6682
      %v6684 = vmul.f32 %v2290, %v6683
      %v6685 = vmul.f32 %v2291, %v6683
      %v6686 = vmul.f32 %v2293, %v6683
      %v6687 = vmul.f32 %v2294, %v6683
      %v6688 = vmul.f32 %v2296, %v6683
      %v6689 = vmul.f32 %v2297, %v6683
      %v6690 = vmul.f32 %v2299, %v6683
      %v6691 = vmul.f32 %v2300, %v6683
      %v6692 = vmul.f32 %v2302, %v6683
      %v6693 = vmul.f32 %v2303, %v6683
      %v6694 = vmul.f32 %v2305, %v6683
      %v6695 = vmul.f32 %v2306, %v6683
      %v6696 = vmul.f32 %v2308, %v6683
      %v6697 = vmul.f32 %v2309, %v6683
      %v6698 = vmul.f32 %v2311, %v6683
      %v6699 = vmul.f32 %v2312, %v6683
      %v6700 = vmul.f32 %v2314, %v6683
      %v6701 = vmul.f32 %v2315, %v6683
      %v6702 = vmul.f32 %v2317, %v6683
      %v6703 = vmul.f32 %v2318, %v6683
      %v6704 = vmul.f32 %v2320, %v6683
      %v6705 = vmul.f32 %v2321, %v6683
      %v6706 = vmul.f32 %v2323, %v6683
      %v6707 = vmul.f32 %v2324, %v6683
      %v6708 = vmul.f32 %v2326, %v6683
      %v6709 = vmul.f32 %v2327, %v6683
      %v6710 = vmul.f32 %v2329, %v6683
      %v6711 = vmul.f32 %v2330, %v6683
      %v6712 = vmul.f32 %v2332, %v6683
      %v6713 = vmul.f32 %v2333, %v6683
      %v6714 = vmul.f32 %v2990, %v6683
      %v6715 = vmul.f32 %v2991, %v6683
      %v6716 = vadd.f32 %v6647, %v6684
      %v6717 = vadd.f32 %v6648, %v6685
      %v6718 = vadd.f32 %v6649, %v6686
      %v6719 = vadd.f32 %v6650, %v6687
      %v6720 = vadd.f32 %v6651, %v6688
      %v6721 = vadd.f32 %v6652, %v6689
      %v6722 = vadd.f32 %v6653, %v6690
      %v6723 = vadd.f32 %v6654, %v6691
      %v6724 = vadd.f32 %v6655, %v6692
      %v6725 = vadd.f32 %v6656, %v6693
      %v6726 = vadd.f32 %v6657, %v6694
      %v6727 = vadd.f32 %v6658, %v6695
      %v6728 = vadd.f32 %v6659, %v6696
      %v6729 = vadd.f32 %v6660, %v6697
      %v6730 = vadd.f32 %v6661, %v6698
      %v6731 = vadd.f32 %v6662, %v6699
      %v6732 = vadd.f32 %v6663, %v6700
      %v6733 = vadd.f32 %v6664, %v6701
      %v6734 = vadd.f32 %v6665, %v6702
      %v6735 = vadd.f32 %v6666, %v6703
      %v6736 = vadd.f32 %v6667, %v6704
      %v6737 = vadd.f32 %v6668, %v6705
      %v6738 = vadd.f32 %v6669, %v6706
      %v6739 = vadd.f32 %v6670, %v6707
      %v6740 = vadd.f32 %v6671, %v6708
      %v6741 = vadd.f32 %v6672, %v6709
      %v6742 = vadd.f32 %v6673, %v6710
      %v6743 = vadd.f32 %v6674, %v6711
      %v6744 = vadd.f32 %v6675, %v6712
      %v6745 = vadd.f32 %v6676, %v6713
      %v6746 = vadd.f32 %v6677, %v6714
      %v6747 = vadd.f32 %v6678, %v6715
      %v6748 = vld [vmem:[%s1 + $0x1b] sm:$0x1]
      %v6749 = vlaneseq
      %v6750 = vshrl.u32 %v6749, 7
      %v6751 = vsub.s32 0, %v6750
      %v6752 = vrot.slane %v6748, %v6751
      %v6753 = vmul.f32 %v2290, %v6752
      %v6754 = vmul.f32 %v2291, %v6752
      %v6755 = vmul.f32 %v2292, %v6752
      %v6756 = vmul.f32 %v2293, %v6752
      %v6757 = vmul.f32 %v2294, %v6752
      %v6758 = vmul.f32 %v2295, %v6752
      %v6759 = vmul.f32 %v2296, %v6752
      %v6760 = vmul.f32 %v2297, %v6752
      %v6761 = vmul.f32 %v2298, %v6752
      %v6762 = vmul.f32 %v2299, %v6752
      %v6763 = vmul.f32 %v2300, %v6752
      %v6764 = vmul.f32 %v2301, %v6752
      %v6765 = vmul.f32 %v2302, %v6752
      %v6766 = vmul.f32 %v2303, %v6752
      %v6767 = vmul.f32 %v2304, %v6752
      %v6768 = vmul.f32 %v2305, %v6752
      %v6769 = vmul.f32 %v2306, %v6752
      %v6770 = vmul.f32 %v2307, %v6752
      %v6771 = vmul.f32 %v2308, %v6752
      %v6772 = vmul.f32 %v2309, %v6752
      %v6773 = vmul.f32 %v2310, %v6752
      %v6774 = vmul.f32 %v2311, %v6752
      %v6775 = vmul.f32 %v2312, %v6752
      %v6776 = vmul.f32 %v2313, %v6752
      %v6777 = vmul.f32 %v2314, %v6752
      %v6778 = vmul.f32 %v2315, %v6752
      %v6779 = vmul.f32 %v2316, %v6752
      %v6780 = vmul.f32 %v2317, %v6752
      %v6781 = vmul.f32 %v2318, %v6752
      %v6782 = vmul.f32 %v2319, %v6752
      %v6783 = vmul.f32 %v2320, %v6752
      %v6784 = vmul.f32 %v2321, %v6752
      %v6785 = vmul.f32 %v2322, %v6752
      %v6786 = vmul.f32 %v2323, %v6752
      %v6787 = vmul.f32 %v2324, %v6752
      %v6788 = vmul.f32 %v2325, %v6752
      %v6789 = vmul.f32 %v2326, %v6752
      %v6790 = vmul.f32 %v2327, %v6752
      %v6791 = vmul.f32 %v2328, %v6752
      %v6792 = vmul.f32 %v2329, %v6752
      %v6793 = vmul.f32 %v2330, %v6752
      %v6794 = vmul.f32 %v2331, %v6752
      %v6795 = vmul.f32 %v2332, %v6752
      %v6796 = vmul.f32 %v2333, %v6752
      %v6797 = vmul.f32 %v2334, %v6752
      %v6798 = vmul.f32 %v2990, %v6752
      %v6799 = vmul.f32 %v2991, %v6752
      %v6800 = vmul.f32 %v2992, %v6752
      %v6849 = vrot.slane %v6753, 2
      %v6850 = vrot.slane %v6754, 2
      %v6851 = vsel %vm732, %v6849, %v6850
      %v6852 = vrot.slane %v6755, 2
      %v6853 = vsel %vm732, %v6850, %v6852
      %v6854 = vrot.slane %v6756, 2
      %v6855 = vrot.slane %v6757, 2
      %v6856 = vsel %vm732, %v6854, %v6855
      %v6857 = vrot.slane %v6758, 2
      %v6858 = vsel %vm732, %v6855, %v6857
      %v6859 = vrot.slane %v6759, 2
      %v6860 = vrot.slane %v6760, 2
      %v6861 = vsel %vm732, %v6859, %v6860
      %v6862 = vrot.slane %v6761, 2
      %v6863 = vsel %vm732, %v6860, %v6862
      %v6864 = vrot.slane %v6762, 2
      %v6865 = vrot.slane %v6763, 2
      %v6866 = vsel %vm732, %v6864, %v6865
      %v6867 = vrot.slane %v6764, 2
      %v6868 = vsel %vm732, %v6865, %v6867
      %v6869 = vrot.slane %v6765, 2
      %v6870 = vrot.slane %v6766, 2
      %v6871 = vsel %vm732, %v6869, %v6870
      %v6872 = vrot.slane %v6767, 2
      %v6873 = vsel %vm732, %v6870, %v6872
      %v6874 = vrot.slane %v6768, 2
      %v6875 = vrot.slane %v6769, 2
      %v6876 = vsel %vm732, %v6874, %v6875
      %v6877 = vrot.slane %v6770, 2
      %v6878 = vsel %vm732, %v6875, %v6877
      %v6879 = vrot.slane %v6771, 2
      %v6880 = vrot.slane %v6772, 2
      %v6881 = vsel %vm732, %v6879, %v6880
      %v6882 = vrot.slane %v6773, 2
      %v6883 = vsel %vm732, %v6880, %v6882
      %v6884 = vrot.slane %v6774, 2
      %v6885 = vrot.slane %v6775, 2
      %v6886 = vsel %vm732, %v6884, %v6885
      %v6887 = vrot.slane %v6776, 2
      %v6888 = vsel %vm732, %v6885, %v6887
      %v6889 = vrot.slane %v6777, 2
      %v6890 = vrot.slane %v6778, 2
      %v6891 = vsel %vm732, %v6889, %v6890
      %v6892 = vrot.slane %v6779, 2
      %v6893 = vsel %vm732, %v6890, %v6892
      %v6894 = vrot.slane %v6780, 2
      %v6895 = vrot.slane %v6781, 2
      %v6896 = vsel %vm732, %v6894, %v6895
      %v6897 = vrot.slane %v6782, 2
      %v6898 = vsel %vm732, %v6895, %v6897
      %v6899 = vrot.slane %v6783, 2
      %v6900 = vrot.slane %v6784, 2
      %v6901 = vsel %vm732, %v6899, %v6900
      %v6902 = vrot.slane %v6785, 2
      %v6903 = vsel %vm732, %v6900, %v6902
      %v6904 = vrot.slane %v6786, 2
      %v6905 = vrot.slane %v6787, 2
      %v6906 = vsel %vm732, %v6904, %v6905
      %v6907 = vrot.slane %v6788, 2
      %v6908 = vsel %vm732, %v6905, %v6907
      %v6909 = vrot.slane %v6789, 2
      %v6910 = vrot.slane %v6790, 2
      %v6911 = vsel %vm732, %v6909, %v6910
      %v6912 = vrot.slane %v6791, 2
      %v6913 = vsel %vm732, %v6910, %v6912
      %v6914 = vrot.slane %v6792, 2
      %v6915 = vrot.slane %v6793, 2
      %v6916 = vsel %vm732, %v6914, %v6915
      %v6917 = vrot.slane %v6794, 2
      %v6918 = vsel %vm732, %v6915, %v6917
      %v6919 = vrot.slane %v6795, 2
      %v6920 = vrot.slane %v6796, 2
      %v6921 = vsel %vm732, %v6919, %v6920
      %v6922 = vrot.slane %v6797, 2
      %v6923 = vsel %vm732, %v6920, %v6922
      %v6924 = vrot.slane %v6798, 2
      %v6925 = vrot.slane %v6799, 2
      %v6926 = vsel %vm732, %v6924, %v6925
      %v6927 = vrot.slane %v6800, 2
      %v6928 = vsel %vm732, %v6925, %v6927
      %v6961 = vadd.f32 %v6716, %v6851
      %v6962 = vadd.f32 %v6717, %v6853
      %v6963 = vadd.f32 %v6718, %v6856
      %v6964 = vadd.f32 %v6719, %v6858
      %v6965 = vadd.f32 %v6720, %v6861
      %v6966 = vadd.f32 %v6721, %v6863
      %v6967 = vadd.f32 %v6722, %v6866
      %v6968 = vadd.f32 %v6723, %v6868
      %v6969 = vadd.f32 %v6724, %v6871
      %v6970 = vadd.f32 %v6725, %v6873
      %v6971 = vadd.f32 %v6726, %v6876
      %v6972 = vadd.f32 %v6727, %v6878
      %v6973 = vadd.f32 %v6728, %v6881
      %v6974 = vadd.f32 %v6729, %v6883
      %v6975 = vadd.f32 %v6730, %v6886
      %v6976 = vadd.f32 %v6731, %v6888
      %v6977 = vadd.f32 %v6732, %v6891
      %v6978 = vadd.f32 %v6733, %v6893
      %v6979 = vadd.f32 %v6734, %v6896
      %v6980 = vadd.f32 %v6735, %v6898
      %v6981 = vadd.f32 %v6736, %v6901
      %v6982 = vadd.f32 %v6737, %v6903
      %v6983 = vadd.f32 %v6738, %v6906
      %v6984 = vadd.f32 %v6739, %v6908
      %v6985 = vadd.f32 %v6740, %v6911
      %v6986 = vadd.f32 %v6741, %v6913
      %v6987 = vadd.f32 %v6742, %v6916
      %v6988 = vadd.f32 %v6743, %v6918
      %v6989 = vadd.f32 %v6744, %v6921
      %v6990 = vadd.f32 %v6745, %v6923
      %v6991 = vadd.f32 %v6746, %v6926
      %v6992 = vadd.f32 %v6747, %v6928
      %v6993 = vld [vmem:[%s1 + $0x1d] sm:$0x1]
      %v6994 = vlaneseq
      %v6995 = vshrl.u32 %v6994, 7
      %v6996 = vsub.s32 0, %v6995
      %v6997 = vrot.slane %v6993, %v6996
      %v6998 = vmul.f32 %v2290, %v6997
      %v6999 = vmul.f32 %v2291, %v6997
      %v7000 = vmul.f32 %v2292, %v6997
      %v7001 = vmul.f32 %v2293, %v6997
      %v7002 = vmul.f32 %v2294, %v6997
      %v7003 = vmul.f32 %v2295, %v6997
      %v7004 = vmul.f32 %v2296, %v6997
      %v7005 = vmul.f32 %v2297, %v6997
      %v7006 = vmul.f32 %v2298, %v6997
      %v7007 = vmul.f32 %v2299, %v6997
      %v7008 = vmul.f32 %v2300, %v6997
      %v7009 = vmul.f32 %v2301, %v6997
      %v7010 = vmul.f32 %v2302, %v6997
      %v7011 = vmul.f32 %v2303, %v6997
      %v7012 = vmul.f32 %v2304, %v6997
      %v7013 = vmul.f32 %v2305, %v6997
      %v7014 = vmul.f32 %v2306, %v6997
      %v7015 = vmul.f32 %v2307, %v6997
      %v7016 = vmul.f32 %v2308, %v6997
      %v7017 = vmul.f32 %v2309, %v6997
      %v7018 = vmul.f32 %v2310, %v6997
      %v7019 = vmul.f32 %v2311, %v6997
      %v7020 = vmul.f32 %v2312, %v6997
      %v7021 = vmul.f32 %v2313, %v6997
      %v7022 = vmul.f32 %v2314, %v6997
      %v7023 = vmul.f32 %v2315, %v6997
      %v7024 = vmul.f32 %v2316, %v6997
      %v7025 = vmul.f32 %v2317, %v6997
      %v7026 = vmul.f32 %v2318, %v6997
      %v7027 = vmul.f32 %v2319, %v6997
      %v7028 = vmul.f32 %v2320, %v6997
      %v7029 = vmul.f32 %v2321, %v6997
      %v7030 = vmul.f32 %v2322, %v6997
      %v7031 = vmul.f32 %v2323, %v6997
      %v7032 = vmul.f32 %v2324, %v6997
      %v7033 = vmul.f32 %v2325, %v6997
      %v7034 = vmul.f32 %v2326, %v6997
      %v7035 = vmul.f32 %v2327, %v6997
      %v7036 = vmul.f32 %v2328, %v6997
      %v7037 = vmul.f32 %v2329, %v6997
      %v7038 = vmul.f32 %v2330, %v6997
      %v7039 = vmul.f32 %v2331, %v6997
      %v7040 = vmul.f32 %v2332, %v6997
      %v7041 = vmul.f32 %v2333, %v6997
      %v7042 = vmul.f32 %v2334, %v6997
      %v7043 = vmul.f32 %v2990, %v6997
      %v7044 = vmul.f32 %v2991, %v6997
      %v7045 = vmul.f32 %v2992, %v6997
      %v7094 = vrot.slane %v6998, 4
      %v7095 = vrot.slane %v6999, 4
      %v7096 = vsel %vm4851, %v7094, %v7095
      %v7097 = vrot.slane %v7000, 4
      %v7098 = vsel %vm4851, %v7095, %v7097
      %v7099 = vrot.slane %v7001, 4
      %v7100 = vrot.slane %v7002, 4
      %v7101 = vsel %vm4851, %v7099, %v7100
      %v7102 = vrot.slane %v7003, 4
      %v7103 = vsel %vm4851, %v7100, %v7102
      %v7104 = vrot.slane %v7004, 4
      %v7105 = vrot.slane %v7005, 4
      %v7106 = vsel %vm4851, %v7104, %v7105
      %v7107 = vrot.slane %v7006, 4
      %v7108 = vsel %vm4851, %v7105, %v7107
      %v7109 = vrot.slane %v7007, 4
      %v7110 = vrot.slane %v7008, 4
      %v7111 = vsel %vm4851, %v7109, %v7110
      %v7112 = vrot.slane %v7009, 4
      %v7113 = vsel %vm4851, %v7110, %v7112
      %v7114 = vrot.slane %v7010, 4
      %v7115 = vrot.slane %v7011, 4
      %v7116 = vsel %vm4851, %v7114, %v7115
      %v7117 = vrot.slane %v7012, 4
      %v7118 = vsel %vm4851, %v7115, %v7117
      %v7119 = vrot.slane %v7013, 4
      %v7120 = vrot.slane %v7014, 4
      %v7121 = vsel %vm4851, %v7119, %v7120
      %v7122 = vrot.slane %v7015, 4
      %v7123 = vsel %vm4851, %v7120, %v7122
      %v7124 = vrot.slane %v7016, 4
      %v7125 = vrot.slane %v7017, 4
      %v7126 = vsel %vm4851, %v7124, %v7125
      %v7127 = vrot.slane %v7018, 4
      %v7128 = vsel %vm4851, %v7125, %v7127
      %v7129 = vrot.slane %v7019, 4
      %v7130 = vrot.slane %v7020, 4
      %v7131 = vsel %vm4851, %v7129, %v7130
      %v7132 = vrot.slane %v7021, 4
      %v7133 = vsel %vm4851, %v7130, %v7132
      %v7134 = vrot.slane %v7022, 4
      %v7135 = vrot.slane %v7023, 4
      %v7136 = vsel %vm4851, %v7134, %v7135
      %v7137 = vrot.slane %v7024, 4
      %v7138 = vsel %vm4851, %v7135, %v7137
      %v7139 = vrot.slane %v7025, 4
      %v7140 = vrot.slane %v7026, 4
      %v7141 = vsel %vm4851, %v7139, %v7140
      %v7142 = vrot.slane %v7027, 4
      %v7143 = vsel %vm4851, %v7140, %v7142
      %v7144 = vrot.slane %v7028, 4
      %v7145 = vrot.slane %v7029, 4
      %v7146 = vsel %vm4851, %v7144, %v7145
      %v7147 = vrot.slane %v7030, 4
      %v7148 = vsel %vm4851, %v7145, %v7147
      %v7149 = vrot.slane %v7031, 4
      %v7150 = vrot.slane %v7032, 4
      %v7151 = vsel %vm4851, %v7149, %v7150
      %v7152 = vrot.slane %v7033, 4
      %v7153 = vsel %vm4851, %v7150, %v7152
      %v7154 = vrot.slane %v7034, 4
      %v7155 = vrot.slane %v7035, 4
      %v7156 = vsel %vm4851, %v7154, %v7155
      %v7157 = vrot.slane %v7036, 4
      %v7158 = vsel %vm4851, %v7155, %v7157
      %v7159 = vrot.slane %v7037, 4
      %v7160 = vrot.slane %v7038, 4
      %v7161 = vsel %vm4851, %v7159, %v7160
      %v7162 = vrot.slane %v7039, 4
      %v7163 = vsel %vm4851, %v7160, %v7162
      %v7164 = vrot.slane %v7040, 4
      %v7165 = vrot.slane %v7041, 4
      %v7166 = vsel %vm4851, %v7164, %v7165
      %v7167 = vrot.slane %v7042, 4
      %v7168 = vsel %vm4851, %v7165, %v7167
      %v7169 = vrot.slane %v7043, 4
      %v7170 = vrot.slane %v7044, 4
      %v7171 = vsel %vm4851, %v7169, %v7170
      %v7172 = vrot.slane %v7045, 4
      %v7173 = vsel %vm4851, %v7170, %v7172
      %v7206 = vadd.f32 %v6961, %v7096
      %v7207 = vadd.f32 %v6962, %v7098
      %v7208 = vadd.f32 %v6963, %v7101
      %v7209 = vadd.f32 %v6964, %v7103
      %v7210 = vadd.f32 %v6965, %v7106
      %v7211 = vadd.f32 %v6966, %v7108
      %v7212 = vadd.f32 %v6967, %v7111
      %v7213 = vadd.f32 %v6968, %v7113
      %v7214 = vadd.f32 %v6969, %v7116
      %v7215 = vadd.f32 %v6970, %v7118
      %v7216 = vadd.f32 %v6971, %v7121
      %v7217 = vadd.f32 %v6972, %v7123
      %v7218 = vadd.f32 %v6973, %v7126
      %v7219 = vadd.f32 %v6974, %v7128
      %v7220 = vadd.f32 %v6975, %v7131
      %v7221 = vadd.f32 %v6976, %v7133
      %v7222 = vadd.f32 %v6977, %v7136
      %v7223 = vadd.f32 %v6978, %v7138
      %v7224 = vadd.f32 %v6979, %v7141
      %v7225 = vadd.f32 %v6980, %v7143
      %v7226 = vadd.f32 %v6981, %v7146
      %v7227 = vadd.f32 %v6982, %v7148
      %v7228 = vadd.f32 %v6983, %v7151
      %v7229 = vadd.f32 %v6984, %v7153
      %v7230 = vadd.f32 %v6985, %v7156
      %v7231 = vadd.f32 %v6986, %v7158
      %v7232 = vadd.f32 %v6987, %v7161
      %v7233 = vadd.f32 %v6988, %v7163
      %v7234 = vadd.f32 %v6989, %v7166
      %v7235 = vadd.f32 %v6990, %v7168
      %v7236 = vadd.f32 %v6991, %v7171
      %v7237 = vadd.f32 %v6992, %v7173
      %v7238 = vld [vmem:[%s1 + $0x1f] sm:$0x1]
      %v7239 = vunpack.c.l.bf16 %v2283
      %v7240 = vunpack.c.l.bf16 %v2284
      %v7241 = vlaneseq
      %v7242 = vshrl.u32 %v7241, 7
      %v7243 = vsub.s32 0, %v7242
      %v7244 = vrot.slane %v7238, %v7243
      %v7245 = vmul.f32 %v2296, %v7244
      %v7246 = vmul.f32 %v2297, %v7244
      %v7247 = vmul.f32 %v2299, %v7244
      %v7248 = vmul.f32 %v2300, %v7244
      %v7249 = vmul.f32 %v2302, %v7244
      %v7250 = vmul.f32 %v2303, %v7244
      %v7251 = vmul.f32 %v2305, %v7244
      %v7252 = vmul.f32 %v2306, %v7244
      %v7253 = vmul.f32 %v2308, %v7244
      %v7254 = vmul.f32 %v2309, %v7244
      %v7255 = vmul.f32 %v2311, %v7244
      %v7256 = vmul.f32 %v2312, %v7244
      %v7257 = vmul.f32 %v2314, %v7244
      %v7258 = vmul.f32 %v2315, %v7244
      %v7259 = vmul.f32 %v2317, %v7244
      %v7260 = vmul.f32 %v2318, %v7244
      %v7261 = vmul.f32 %v2320, %v7244
      %v7262 = vmul.f32 %v2321, %v7244
      %v7263 = vmul.f32 %v2323, %v7244
      %v7264 = vmul.f32 %v2324, %v7244
      %v7265 = vmul.f32 %v2326, %v7244
      %v7266 = vmul.f32 %v2327, %v7244
      %v7267 = vmul.f32 %v2329, %v7244
      %v7268 = vmul.f32 %v2330, %v7244
      %v7269 = vmul.f32 %v2332, %v7244
      %v7270 = vmul.f32 %v2333, %v7244
      %v7271 = vmul.f32 %v2990, %v7244
      %v7272 = vmul.f32 %v2991, %v7244
      %v7273 = vmul.f32 %v3648, %v7244
      %v7274 = vmul.f32 %v3649, %v7244
      %v7275 = vmul.f32 %v7239, %v7244
      %v7276 = vmul.f32 %v7240, %v7244
      %v7277 = vadd.f32 %v7206, %v7245
      %v7278 = vadd.f32 %v7207, %v7246
      %v7279 = vadd.f32 %v7208, %v7247
      %v7280 = vadd.f32 %v7209, %v7248
      %v7281 = vadd.f32 %v7210, %v7249
      %v7282 = vadd.f32 %v7211, %v7250
      %v7283 = vadd.f32 %v7212, %v7251
      %v7284 = vadd.f32 %v7213, %v7252
      %v7285 = vadd.f32 %v7214, %v7253
      %v7286 = vadd.f32 %v7215, %v7254
      %v7287 = vadd.f32 %v7216, %v7255
      %v7288 = vadd.f32 %v7217, %v7256
      %v7289 = vadd.f32 %v7218, %v7257
      %v7290 = vadd.f32 %v7219, %v7258
      %v7291 = vadd.f32 %v7220, %v7259
      %v7292 = vadd.f32 %v7221, %v7260
      %v7293 = vadd.f32 %v7222, %v7261
      %v7294 = vadd.f32 %v7223, %v7262
      %v7295 = vadd.f32 %v7224, %v7263
      %v7296 = vadd.f32 %v7225, %v7264
      %v7297 = vadd.f32 %v7226, %v7265
      %v7298 = vadd.f32 %v7227, %v7266
      %v7299 = vadd.f32 %v7228, %v7267
      %v7300 = vadd.f32 %v7229, %v7268
      %v7301 = vadd.f32 %v7230, %v7269
      %v7302 = vadd.f32 %v7231, %v7270
      %v7303 = vadd.f32 %v7232, %v7271
      %v7304 = vadd.f32 %v7233, %v7272
      %v7305 = vadd.f32 %v7234, %v7273
      %v7306 = vadd.f32 %v7235, %v7274
      %v7307 = vadd.f32 %v7236, %v7275
      %v7308 = vadd.f32 %v7237, %v7276
      %v7309 = vld [vmem:[%s1 + $0x21] sm:$0x1]
      %v7310 = vunpack.c.l.bf16 %v2285
      %v7311 = vlaneseq
      %v7312 = vshrl.u32 %v7311, 7
      %v7313 = vsub.s32 0, %v7312
      %v7314 = vrot.slane %v7309, %v7313
      %v7315 = vmul.f32 %v2296, %v7314
      %v7316 = vmul.f32 %v2297, %v7314
      %v7317 = vmul.f32 %v2298, %v7314
      %v7318 = vmul.f32 %v2299, %v7314
      %v7319 = vmul.f32 %v2300, %v7314
      %v7320 = vmul.f32 %v2301, %v7314
      %v7321 = vmul.f32 %v2302, %v7314
      %v7322 = vmul.f32 %v2303, %v7314
      %v7323 = vmul.f32 %v2304, %v7314
      %v7324 = vmul.f32 %v2305, %v7314
      %v7325 = vmul.f32 %v2306, %v7314
      %v7326 = vmul.f32 %v2307, %v7314
      %v7327 = vmul.f32 %v2308, %v7314
      %v7328 = vmul.f32 %v2309, %v7314
      %v7329 = vmul.f32 %v2310, %v7314
      %v7330 = vmul.f32 %v2311, %v7314
      %v7331 = vmul.f32 %v2312, %v7314
      %v7332 = vmul.f32 %v2313, %v7314
      %v7333 = vmul.f32 %v2314, %v7314
      %v7334 = vmul.f32 %v2315, %v7314
      %v7335 = vmul.f32 %v2316, %v7314
      %v7336 = vmul.f32 %v2317, %v7314
      %v7337 = vmul.f32 %v2318, %v7314
      %v7338 = vmul.f32 %v2319, %v7314
      %v7339 = vmul.f32 %v2320, %v7314
      %v7340 = vmul.f32 %v2321, %v7314
      %v7341 = vmul.f32 %v2322, %v7314
      %v7342 = vmul.f32 %v2323, %v7314
      %v7343 = vmul.f32 %v2324, %v7314
      %v7344 = vmul.f32 %v2325, %v7314
      %v7345 = vmul.f32 %v2326, %v7314
      %v7346 = vmul.f32 %v2327, %v7314
      %v7347 = vmul.f32 %v2328, %v7314
      %v7348 = vmul.f32 %v2329, %v7314
      %v7349 = vmul.f32 %v2330, %v7314
      %v7350 = vmul.f32 %v2331, %v7314
      %v7351 = vmul.f32 %v2332, %v7314
      %v7352 = vmul.f32 %v2333, %v7314
      %v7353 = vmul.f32 %v2334, %v7314
      %v7354 = vmul.f32 %v2990, %v7314
      %v7355 = vmul.f32 %v2991, %v7314
      %v7356 = vmul.f32 %v2992, %v7314
      %v7357 = vmul.f32 %v3648, %v7314
      %v7358 = vmul.f32 %v3649, %v7314
      %v7359 = vmul.f32 %v3650, %v7314
      %v7360 = vmul.f32 %v7239, %v7314
      %v7361 = vmul.f32 %v7240, %v7314
      %v7362 = vmul.f32 %v7310, %v7314
      %v7411 = vrot.slane %v7315, 2
      %v7412 = vrot.slane %v7316, 2
      %v7413 = vsel %vm732, %v7411, %v7412
      %v7414 = vrot.slane %v7317, 2
      %v7415 = vsel %vm732, %v7412, %v7414
      %v7416 = vrot.slane %v7318, 2
      %v7417 = vrot.slane %v7319, 2
      %v7418 = vsel %vm732, %v7416, %v7417
      %v7419 = vrot.slane %v7320, 2
      %v7420 = vsel %vm732, %v7417, %v7419
      %v7421 = vrot.slane %v7321, 2
      %v7422 = vrot.slane %v7322, 2
      %v7423 = vsel %vm732, %v7421, %v7422
      %v7424 = vrot.slane %v7323, 2
      %v7425 = vsel %vm732, %v7422, %v7424
      %v7426 = vrot.slane %v7324, 2
      %v7427 = vrot.slane %v7325, 2
      %v7428 = vsel %vm732, %v7426, %v7427
      %v7429 = vrot.slane %v7326, 2
      %v7430 = vsel %vm732, %v7427, %v7429
      %v7431 = vrot.slane %v7327, 2
      %v7432 = vrot.slane %v7328, 2
      %v7433 = vsel %vm732, %v7431, %v7432
      %v7434 = vrot.slane %v7329, 2
      %v7435 = vsel %vm732, %v7432, %v7434
      %v7436 = vrot.slane %v7330, 2
      %v7437 = vrot.slane %v7331, 2
      %v7438 = vsel %vm732, %v7436, %v7437
      %v7439 = vrot.slane %v7332, 2
      %v7440 = vsel %vm732, %v7437, %v7439
      %v7441 = vrot.slane %v7333, 2
      %v7442 = vrot.slane %v7334, 2
      %v7443 = vsel %vm732, %v7441, %v7442
      %v7444 = vrot.slane %v7335, 2
      %v7445 = vsel %vm732, %v7442, %v7444
      %v7446 = vrot.slane %v7336, 2
      %v7447 = vrot.slane %v7337, 2
      %v7448 = vsel %vm732, %v7446, %v7447
      %v7449 = vrot.slane %v7338, 2
      %v7450 = vsel %vm732, %v7447, %v7449
      %v7451 = vrot.slane %v7339, 2
      %v7452 = vrot.slane %v7340, 2
      %v7453 = vsel %vm732, %v7451, %v7452
      %v7454 = vrot.slane %v7341, 2
      %v7455 = vsel %vm732, %v7452, %v7454
      %v7456 = vrot.slane %v7342, 2
      %v7457 = vrot.slane %v7343, 2
      %v7458 = vsel %vm732, %v7456, %v7457
      %v7459 = vrot.slane %v7344, 2
      %v7460 = vsel %vm732, %v7457, %v7459
      %v7461 = vrot.slane %v7345, 2
      %v7462 = vrot.slane %v7346, 2
      %v7463 = vsel %vm732, %v7461, %v7462
      %v7464 = vrot.slane %v7347, 2
      %v7465 = vsel %vm732, %v7462, %v7464
      %v7466 = vrot.slane %v7348, 2
      %v7467 = vrot.slane %v7349, 2
      %v7468 = vsel %vm732, %v7466, %v7467
      %v7469 = vrot.slane %v7350, 2
      %v7470 = vsel %vm732, %v7467, %v7469
      %v7471 = vrot.slane %v7351, 2
      %v7472 = vrot.slane %v7352, 2
      %v7473 = vsel %vm732, %v7471, %v7472
      %v7474 = vrot.slane %v7353, 2
      %v7475 = vsel %vm732, %v7472, %v7474
      %v7476 = vrot.slane %v7354, 2
      %v7477 = vrot.slane %v7355, 2
      %v7478 = vsel %vm732, %v7476, %v7477
      %v7479 = vrot.slane %v7356, 2
      %v7480 = vsel %vm732, %v7477, %v7479
      %v7481 = vrot.slane %v7357, 2
      %v7482 = vrot.slane %v7358, 2
      %v7483 = vsel %vm732, %v7481, %v7482
      %v7484 = vrot.slane %v7359, 2
      %v7485 = vsel %vm732, %v7482, %v7484
      %v7486 = vrot.slane %v7360, 2
      %v7487 = vrot.slane %v7361, 2
      %v7488 = vsel %vm732, %v7486, %v7487
      %v7489 = vrot.slane %v7362, 2
      %v7490 = vsel %vm732, %v7487, %v7489
      %v7523 = vadd.f32 %v7277, %v7413
      %v7524 = vadd.f32 %v7278, %v7415
      %v7525 = vadd.f32 %v7279, %v7418
      %v7526 = vadd.f32 %v7280, %v7420
      %v7527 = vadd.f32 %v7281, %v7423
      %v7528 = vadd.f32 %v7282, %v7425
      %v7529 = vadd.f32 %v7283, %v7428
      %v7530 = vadd.f32 %v7284, %v7430
      %v7531 = vadd.f32 %v7285, %v7433
      %v7532 = vadd.f32 %v7286, %v7435
      %v7533 = vadd.f32 %v7287, %v7438
      %v7534 = vadd.f32 %v7288, %v7440
      %v7535 = vadd.f32 %v7289, %v7443
      %v7536 = vadd.f32 %v7290, %v7445
      %v7537 = vadd.f32 %v7291, %v7448
      %v7538 = vadd.f32 %v7292, %v7450
      %v7539 = vadd.f32 %v7293, %v7453
      %v7540 = vadd.f32 %v7294, %v7455
      %v7541 = vadd.f32 %v7295, %v7458
      %v7542 = vadd.f32 %v7296, %v7460
      %v7543 = vadd.f32 %v7297, %v7463
      %v7544 = vadd.f32 %v7298, %v7465
      %v7545 = vadd.f32 %v7299, %v7468
      %v7546 = vadd.f32 %v7300, %v7470
      %v7547 = vadd.f32 %v7301, %v7473
      %v7548 = vadd.f32 %v7302, %v7475
      %v7549 = vadd.f32 %v7303, %v7478
      %v7550 = vadd.f32 %v7304, %v7480
      %v7551 = vadd.f32 %v7305, %v7483
      %v7552 = vadd.f32 %v7306, %v7485
      %v7553 = vadd.f32 %v7307, %v7488
      %v7554 = vadd.f32 %v7308, %v7490
      %v7555 = vld [vmem:[%s1 + $0x23] sm:$0x1]
      %v7556 = vlaneseq
      %v7557 = vshrl.u32 %v7556, 7
      %v7558 = vsub.s32 0, %v7557
      %v7559 = vrot.slane %v7555, %v7558
      %v7560 = vmul.f32 %v2296, %v7559
      %v7561 = vmul.f32 %v2297, %v7559
      %v7562 = vmul.f32 %v2298, %v7559
      %v7563 = vmul.f32 %v2299, %v7559
      %v7564 = vmul.f32 %v2300, %v7559
      %v7565 = vmul.f32 %v2301, %v7559
      %v7566 = vmul.f32 %v2302, %v7559
      %v7567 = vmul.f32 %v2303, %v7559
      %v7568 = vmul.f32 %v2304, %v7559
      %v7569 = vmul.f32 %v2305, %v7559
      %v7570 = vmul.f32 %v2306, %v7559
      %v7571 = vmul.f32 %v2307, %v7559
      %v7572 = vmul.f32 %v2308, %v7559
      %v7573 = vmul.f32 %v2309, %v7559
      %v7574 = vmul.f32 %v2310, %v7559
      %v7575 = vmul.f32 %v2311, %v7559
      %v7576 = vmul.f32 %v2312, %v7559
      %v7577 = vmul.f32 %v2313, %v7559
      %v7578 = vmul.f32 %v2314, %v7559
      %v7579 = vmul.f32 %v2315, %v7559
      %v7580 = vmul.f32 %v2316, %v7559
      %v7581 = vmul.f32 %v2317, %v7559
      %v7582 = vmul.f32 %v2318, %v7559
      %v7583 = vmul.f32 %v2319, %v7559
      %v7584 = vmul.f32 %v2320, %v7559
      %v7585 = vmul.f32 %v2321, %v7559
      %v7586 = vmul.f32 %v2322, %v7559
      %v7587 = vmul.f32 %v2323, %v7559
      %v7588 = vmul.f32 %v2324, %v7559
      %v7589 = vmul.f32 %v2325, %v7559
      %v7590 = vmul.f32 %v2326, %v7559
      %v7591 = vmul.f32 %v2327, %v7559
      %v7592 = vmul.f32 %v2328, %v7559
      %v7593 = vmul.f32 %v2329, %v7559
      %v7594 = vmul.f32 %v2330, %v7559
      %v7595 = vmul.f32 %v2331, %v7559
      %v7596 = vmul.f32 %v2332, %v7559
      %v7597 = vmul.f32 %v2333, %v7559
      %v7598 = vmul.f32 %v2334, %v7559
      %v7599 = vmul.f32 %v2990, %v7559
      %v7600 = vmul.f32 %v2991, %v7559
      %v7601 = vmul.f32 %v2992, %v7559
      %v7602 = vmul.f32 %v3648, %v7559
      %v7603 = vmul.f32 %v3649, %v7559
      %v7604 = vmul.f32 %v3650, %v7559
      %v7605 = vmul.f32 %v7239, %v7559
      %v7606 = vmul.f32 %v7240, %v7559
      %v7607 = vmul.f32 %v7310, %v7559
      %v7656 = vrot.slane %v7560, 4
      %v7657 = vrot.slane %v7561, 4
      %v7658 = vsel %vm4851, %v7656, %v7657
      %v7659 = vrot.slane %v7562, 4
      %v7660 = vsel %vm4851, %v7657, %v7659
      %v7661 = vrot.slane %v7563, 4
      %v7662 = vrot.slane %v7564, 4
      %v7663 = vsel %vm4851, %v7661, %v7662
      %v7664 = vrot.slane %v7565, 4
      %v7665 = vsel %vm4851, %v7662, %v7664
      %v7666 = vrot.slane %v7566, 4
      %v7667 = vrot.slane %v7567, 4
      %v7668 = vsel %vm4851, %v7666, %v7667
      %v7669 = vrot.slane %v7568, 4
      %v7670 = vsel %vm4851, %v7667, %v7669
      %v7671 = vrot.slane %v7569, 4
      %v7672 = vrot.slane %v7570, 4
      %v7673 = vsel %vm4851, %v7671, %v7672
      %v7674 = vrot.slane %v7571, 4
      %v7675 = vsel %vm4851, %v7672, %v7674
      %v7676 = vrot.slane %v7572, 4
      %v7677 = vrot.slane %v7573, 4
      %v7678 = vsel %vm4851, %v7676, %v7677
      %v7679 = vrot.slane %v7574, 4
      %v7680 = vsel %vm4851, %v7677, %v7679
      %v7681 = vrot.slane %v7575, 4
      %v7682 = vrot.slane %v7576, 4
      %v7683 = vsel %vm4851, %v7681, %v7682
      %v7684 = vrot.slane %v7577, 4
      %v7685 = vsel %vm4851, %v7682, %v7684
      %v7686 = vrot.slane %v7578, 4
      %v7687 = vrot.slane %v7579, 4
      %v7688 = vsel %vm4851, %v7686, %v7687
      %v7689 = vrot.slane %v7580, 4
      %v7690 = vsel %vm4851, %v7687, %v7689
      %v7691 = vrot.slane %v7581, 4
      %v7692 = vrot.slane %v7582, 4
      %v7693 = vsel %vm4851, %v7691, %v7692
      %v7694 = vrot.slane %v7583, 4
      %v7695 = vsel %vm4851, %v7692, %v7694
      %v7696 = vrot.slane %v7584, 4
      %v7697 = vrot.slane %v7585, 4
      %v7698 = vsel %vm4851, %v7696, %v7697
      %v7699 = vrot.slane %v7586, 4
      %v7700 = vsel %vm4851, %v7697, %v7699
      %v7701 = vrot.slane %v7587, 4
      %v7702 = vrot.slane %v7588, 4
      %v7703 = vsel %vm4851, %v7701, %v7702
      %v7704 = vrot.slane %v7589, 4
      %v7705 = vsel %vm4851, %v7702, %v7704
      %v7706 = vrot.slane %v7590, 4
      %v7707 = vrot.slane %v7591, 4
      %v7708 = vsel %vm4851, %v7706, %v7707
      %v7709 = vrot.slane %v7592, 4
      %v7710 = vsel %vm4851, %v7707, %v7709
      %v7711 = vrot.slane %v7593, 4
      %v7712 = vrot.slane %v7594, 4
      %v7713 = vsel %vm4851, %v7711, %v7712
      %v7714 = vrot.slane %v7595, 4
      %v7715 = vsel %vm4851, %v7712, %v7714
      %v7716 = vrot.slane %v7596, 4
      %v7717 = vrot.slane %v7597, 4
      %v7718 = vsel %vm4851, %v7716, %v7717
      %v7719 = vrot.slane %v7598, 4
      %v7720 = vsel %vm4851, %v7717, %v7719
      %v7721 = vrot.slane %v7599, 4
      %v7722 = vrot.slane %v7600, 4
      %v7723 = vsel %vm4851, %v7721, %v7722
      %v7724 = vrot.slane %v7601, 4
      %v7725 = vsel %vm4851, %v7722, %v7724
      %v7726 = vrot.slane %v7602, 4
      %v7727 = vrot.slane %v7603, 4
      %v7728 = vsel %vm4851, %v7726, %v7727
      %v7729 = vrot.slane %v7604, 4
      %v7730 = vsel %vm4851, %v7727, %v7729
      %v7731 = vrot.slane %v7605, 4
      %v7732 = vrot.slane %v7606, 4
      %v7733 = vsel %vm4851, %v7731, %v7732
      %v7734 = vrot.slane %v7607, 4
      %v7735 = vsel %vm4851, %v7732, %v7734
      %v7768 = vadd.f32 %v7523, %v7658
      %v7769 = vadd.f32 %v7524, %v7660
      %v7770 = vadd.f32 %v7525, %v7663
      %v7771 = vadd.f32 %v7526, %v7665
      %v7772 = vadd.f32 %v7527, %v7668
      %v7773 = vadd.f32 %v7528, %v7670
      %v7774 = vadd.f32 %v7529, %v7673
      %v7775 = vadd.f32 %v7530, %v7675
      %v7776 = vadd.f32 %v7531, %v7678
      %v7777 = vadd.f32 %v7532, %v7680
      %v7778 = vadd.f32 %v7533, %v7683
      %v7779 = vadd.f32 %v7534, %v7685
      %v7780 = vadd.f32 %v7535, %v7688
      %v7781 = vadd.f32 %v7536, %v7690
      %v7782 = vadd.f32 %v7537, %v7693
      %v7783 = vadd.f32 %v7538, %v7695
      %v7784 = vadd.f32 %v7539, %v7698
      %v7785 = vadd.f32 %v7540, %v7700
      %v7786 = vadd.f32 %v7541, %v7703
      %v7787 = vadd.f32 %v7542, %v7705
      %v7788 = vadd.f32 %v7543, %v7708
      %v7789 = vadd.f32 %v7544, %v7710
      %v7790 = vadd.f32 %v7545, %v7713
      %v7791 = vadd.f32 %v7546, %v7715
      %v7792 = vadd.f32 %v7547, %v7718
      %v7793 = vadd.f32 %v7548, %v7720
      %v7794 = vadd.f32 %v7549, %v7723
      %v7795 = vadd.f32 %v7550, %v7725
      %v7796 = vadd.f32 %v7551, %v7728
      %v7797 = vadd.f32 %v7552, %v7730
      %v7798 = vadd.f32 %v7553, %v7733
      %v7799 = vadd.f32 %v7554, %v7735
      %v7800 = vmul.f32 %v7768, 0.999995
      %v7801 = vmul.f32 %v7769, 0.999995
      %v7802 = vmul.f32 %v7770, 0.999995
      %v7803 = vmul.f32 %v7771, 0.999995
      %v7804 = vmul.f32 %v7772, 0.999995
      %v7805 = vmul.f32 %v7773, 0.999995
      %v7806 = vmul.f32 %v7774, 0.999995
      %v7807 = vmul.f32 %v7775, 0.999995
      %v7808 = vmul.f32 %v7776, 0.999995
      %v7809 = vmul.f32 %v7777, 0.999995
      %v7810 = vmul.f32 %v7778, 0.999995
      %v7811 = vmul.f32 %v7779, 0.999995
      %v7812 = vmul.f32 %v7780, 0.999995
      %v7813 = vmul.f32 %v7781, 0.999995
      %v7814 = vmul.f32 %v7782, 0.999995
      %v7815 = vmul.f32 %v7783, 0.999995
      %v7816 = vmul.f32 %v7784, 0.999995
      %v7817 = vmul.f32 %v7785, 0.999995
      %v7818 = vmul.f32 %v7786, 0.999995
      %v7819 = vmul.f32 %v7787, 0.999995
      %v7820 = vmul.f32 %v7788, 0.999995
      %v7821 = vmul.f32 %v7789, 0.999995
      %v7822 = vmul.f32 %v7790, 0.999995
      %v7823 = vmul.f32 %v7791, 0.999995
      %v7824 = vmul.f32 %v7792, 0.999995
      %v7825 = vmul.f32 %v7793, 0.999995
      %v7826 = vmul.f32 %v7794, 0.999995
      %v7827 = vmul.f32 %v7795, 0.999995
      %v7828 = vmul.f32 %v7796, 0.999995
      %v7829 = vmul.f32 %v7797, 0.999995
      %v7830 = vmul.f32 %v7798, 0.999995
      %v7831 = vmul.f32 %v7799, 0.999995
      %v7832 = vmax.f32 %v7800, 0.0
      %v7833 = vmax.f32 %v7801, 0.0
      %v7834 = vmax.f32 %v7802, 0.0
      %v7835 = vmax.f32 %v7803, 0.0
      %v7836 = vmax.f32 %v7804, 0.0
      %v7837 = vmax.f32 %v7805, 0.0
      %v7838 = vmax.f32 %v7806, 0.0
      %v7839 = vmax.f32 %v7807, 0.0
      %v7840 = vmax.f32 %v7808, 0.0
      %v7841 = vmax.f32 %v7809, 0.0
      %v7842 = vmax.f32 %v7810, 0.0
      %v7843 = vmax.f32 %v7811, 0.0
      %v7844 = vmax.f32 %v7812, 0.0
      %v7845 = vmax.f32 %v7813, 0.0
      %v7846 = vmax.f32 %v7814, 0.0
      %v7847 = vmax.f32 %v7815, 0.0
      %v7848 = vmax.f32 %v7816, 0.0
      %v7849 = vmax.f32 %v7817, 0.0
      %v7850 = vmax.f32 %v7818, 0.0
      %v7851 = vmax.f32 %v7819, 0.0
      %v7852 = vmax.f32 %v7820, 0.0
      %v7853 = vmax.f32 %v7821, 0.0
      %v7854 = vmax.f32 %v7822, 0.0
      %v7855 = vmax.f32 %v7823, 0.0
      %v7856 = vmax.f32 %v7824, 0.0
      %v7857 = vmax.f32 %v7825, 0.0
      %v7858 = vmax.f32 %v7826, 0.0
      %v7859 = vmax.f32 %v7827, 0.0
      %v7860 = vmax.f32 %v7828, 0.0
      %v7861 = vmax.f32 %v7829, 0.0
      %v7862 = vmax.f32 %v7830, 0.0
      %v7863 = vmax.f32 %v7831, 0.0
      %v7864 = vpack.c.bf16 %v7833, %v7832
      %v7865 = vpack.c.bf16 %v7835, %v7834
      %v7866 = vpack.c.bf16 %v7837, %v7836
      %v7867 = vpack.c.bf16 %v7839, %v7838
      %v7868 = vpack.c.bf16 %v7841, %v7840
      %v7869 = vpack.c.bf16 %v7843, %v7842
      %v7870 = vpack.c.bf16 %v7845, %v7844
      %v7871 = vpack.c.bf16 %v7847, %v7846
      %v7872 = vpack.c.bf16 %v7849, %v7848
      %v7873 = vpack.c.bf16 %v7851, %v7850
      %v7874 = vpack.c.bf16 %v7853, %v7852
      %v7875 = vpack.c.bf16 %v7855, %v7854
      %v7876 = vpack.c.bf16 %v7857, %v7856
      %v7877 = vpack.c.bf16 %v7859, %v7858
      %v7878 = vpack.c.bf16 %v7861, %v7860
      %v7879 = vpack.c.bf16 %v7863, %v7862
      %v7881 = vshrl.u32 %v7864, 16
      %v7883 = vrot.slane %v7881, 7
      %v7884 = vshll.u32 %v7864, 16
      %v7886 = vor.u32 %v7883, %v7884
      %v7888 = vshrl.u32 %v7865, 16
      %v7890 = vrot.slane %v7888, 7
      %v7891 = vshll.u32 %v7865, 16
      %v7893 = vor.u32 %v7890, %v7891
      %v7895 = vshrl.u32 %v7866, 16
      %v7897 = vrot.slane %v7895, 7
      %v7898 = vshll.u32 %v7866, 16
      %v7900 = vor.u32 %v7897, %v7898
      %v7902 = vshrl.u32 %v7867, 16
      %v7904 = vrot.slane %v7902, 7
      %v7905 = vshll.u32 %v7867, 16
      %v7907 = vor.u32 %v7904, %v7905
      %v7909 = vshrl.u32 %v7868, 16
      %v7911 = vrot.slane %v7909, 7
      %v7912 = vshll.u32 %v7868, 16
      %v7914 = vor.u32 %v7911, %v7912
      %v7916 = vshrl.u32 %v7869, 16
      %v7918 = vrot.slane %v7916, 7
      %v7919 = vshll.u32 %v7869, 16
      %v7921 = vor.u32 %v7918, %v7919
      %v7923 = vshrl.u32 %v7870, 16
      %v7925 = vrot.slane %v7923, 7
      %v7926 = vshll.u32 %v7870, 16
      %v7928 = vor.u32 %v7925, %v7926
      %v7930 = vshrl.u32 %v7871, 16
      %v7932 = vrot.slane %v7930, 7
      %v7933 = vshll.u32 %v7871, 16
      %v7935 = vor.u32 %v7932, %v7933
      %v7937 = vshrl.u32 %v7872, 16
      %v7939 = vrot.slane %v7937, 7
      %v7940 = vshll.u32 %v7872, 16
      %v7942 = vor.u32 %v7939, %v7940
      %v7944 = vshrl.u32 %v7873, 16
      %v7946 = vrot.slane %v7944, 7
      %v7947 = vshll.u32 %v7873, 16
      %v7949 = vor.u32 %v7946, %v7947
      %v7951 = vshrl.u32 %v7874, 16
      %v7953 = vrot.slane %v7951, 7
      %v7954 = vshll.u32 %v7874, 16
      %v7956 = vor.u32 %v7953, %v7954
      %v7958 = vshrl.u32 %v7875, 16
      %v7960 = vrot.slane %v7958, 7
      %v7961 = vshll.u32 %v7875, 16
      %v7963 = vor.u32 %v7960, %v7961
      %v7965 = vshrl.u32 %v7876, 16
      %v7967 = vrot.slane %v7965, 7
      %v7968 = vshll.u32 %v7876, 16
      %v7970 = vor.u32 %v7967, %v7968
      %v7972 = vshrl.u32 %v7877, 16
      %v7974 = vrot.slane %v7972, 7
      %v7975 = vshll.u32 %v7877, 16
      %v7977 = vor.u32 %v7974, %v7975
      %v7979 = vshrl.u32 %v7878, 16
      %v7981 = vrot.slane %v7979, 7
      %v7982 = vshll.u32 %v7878, 16
      %v7984 = vor.u32 %v7981, %v7982
      %v7986 = vshrl.u32 %v7879, 16
      %v7988 = vrot.slane %v7986, 7
      %v7989 = vshll.u32 %v7879, 16
      %v7991 = vor.u32 %v7988, %v7989
      %7992 = vrot.lane.b32.xlu0 %v7886, 64
      %v7993 = vpop.permute.xlu0 %7992
      %7994 = vrot.lane.b32.xlu0 %v7883, 64
      %v7995 = vpop.permute.xlu0 %7994
      %7996 = vrot.lane.b32.xlu0 %v7893, 64
      %v7997 = vpop.permute.xlu0 %7996
      %7998 = vrot.lane.b32.xlu0 %v7890, 64
      %v7999 = vpop.permute.xlu0 %7998
      %8000 = vrot.lane.b32.xlu0 %v7900, 64
      %v8001 = vpop.permute.xlu0 %8000
      %8002 = vrot.lane.b32.xlu0 %v7897, 64
      %v8003 = vpop.permute.xlu0 %8002
      %8004 = vrot.lane.b32.xlu0 %v7907, 64
      %v8005 = vpop.permute.xlu0 %8004
      %8006 = vrot.lane.b32.xlu0 %v7904, 64
      %v8007 = vpop.permute.xlu0 %8006
      %8008 = vrot.lane.b32.xlu0 %v7914, 64
      %v8009 = vpop.permute.xlu0 %8008
      %8010 = vrot.lane.b32.xlu0 %v7911, 64
      %v8011 = vpop.permute.xlu0 %8010
      %8012 = vrot.lane.b32.xlu0 %v7921, 64
      %v8013 = vpop.permute.xlu0 %8012
      %8014 = vrot.lane.b32.xlu0 %v7918, 64
      %v8015 = vpop.permute.xlu0 %8014
      %8016 = vrot.lane.b32.xlu0 %v7928, 64
      %v8017 = vpop.permute.xlu0 %8016
      %8018 = vrot.lane.b32.xlu0 %v7925, 64
      %v8019 = vpop.permute.xlu0 %8018
      %8020 = vrot.lane.b32.xlu0 %v7935, 64
      %v8021 = vpop.permute.xlu0 %8020
      %8022 = vrot.lane.b32.xlu0 %v7932, 64
      %v8023 = vpop.permute.xlu0 %8022
      %8024 = vrot.lane.b32.xlu0 %v7942, 64
      %v8025 = vpop.permute.xlu0 %8024
      %8026 = vrot.lane.b32.xlu0 %v7939, 64
      %v8027 = vpop.permute.xlu0 %8026
      %8028 = vrot.lane.b32.xlu0 %v7949, 64
      %v8029 = vpop.permute.xlu0 %8028
      %8030 = vrot.lane.b32.xlu0 %v7946, 64
      %v8031 = vpop.permute.xlu0 %8030
      %8032 = vrot.lane.b32.xlu0 %v7956, 64
      %v8033 = vpop.permute.xlu0 %8032
      %8034 = vrot.lane.b32.xlu0 %v7953, 64
      %v8035 = vpop.permute.xlu0 %8034
      %8036 = vrot.lane.b32.xlu0 %v7963, 64
      %v8037 = vpop.permute.xlu0 %8036
      %8038 = vrot.lane.b32.xlu0 %v7960, 64
      %v8039 = vpop.permute.xlu0 %8038
      %8040 = vrot.lane.b32.xlu0 %v7970, 64
      %v8041 = vpop.permute.xlu0 %8040
      %8042 = vrot.lane.b32.xlu0 %v7967, 64
      %v8043 = vpop.permute.xlu0 %8042
      %8044 = vrot.lane.b32.xlu0 %v7977, 64
      %v8045 = vpop.permute.xlu0 %8044
      %8046 = vrot.lane.b32.xlu0 %v7974, 64
      %v8047 = vpop.permute.xlu0 %8046
      %8048 = vrot.lane.b32.xlu0 %v7984, 64
      %v8049 = vpop.permute.xlu0 %8048
      %8050 = vrot.lane.b32.xlu0 %v7981, 64
      %v8051 = vpop.permute.xlu0 %8050
      %8052 = vrot.lane.b32.xlu0 %v7991, 64
      %v8053 = vpop.permute.xlu0 %8052
      %8054 = vrot.lane.b32.xlu0 %v7988, 64
      %v8055 = vpop.permute.xlu0 %8054
      %vm8056 = vcmask 523264
      %v8059 = vsel %vm8056, %v4401, %v7993
      %v8062 = vsel %vm8056, %v4402, %v7995
      %v8065 = vsel %vm8056, %v4403, %v7997
      %v8068 = vsel %vm8056, %v4404, %v7999
      %v8071 = vsel %vm8056, %v4405, %v8001
      %v8074 = vsel %vm8056, %v4406, %v8003
      %v8077 = vsel %vm8056, %v4407, %v8005
      %v8080 = vsel %vm8056, %v4408, %v8007
      %v8083 = vsel %vm8056, %v4409, %v8009
      %v8086 = vsel %vm8056, %v4410, %v8011
      %v8089 = vsel %vm8056, %v4411, %v8013
      %v8092 = vsel %vm8056, %v4412, %v8015
      %v8095 = vsel %vm8056, %v4413, %v8017
      %v8098 = vsel %vm8056, %v4414, %v8019
      %v8101 = vsel %vm8056, %v4415, %v8021
      %v8104 = vsel %vm8056, %v4416, %v8023
      %v8107 = vsel %vm8056, %v4417, %v8025
      %v8110 = vsel %vm8056, %v4418, %v8027
      %v8113 = vsel %vm8056, %v4419, %v8029
      %v8116 = vsel %vm8056, %v4420, %v8031
      %v8119 = vsel %vm8056, %v4421, %v8033
      %v8122 = vsel %vm8056, %v4422, %v8035
      %v8125 = vsel %vm8056, %v4423, %v8037
      %v8128 = vsel %vm8056, %v4424, %v8039
      %v8131 = vsel %vm8056, %v4425, %v8041
      %v8134 = vsel %vm8056, %v4426, %v8043
      %v8137 = vsel %vm8056, %v4427, %v8045
      %v8140 = vsel %vm8056, %v4428, %v8047
      %v8143 = vsel %vm8056, %v4429, %v8049
      %v8146 = vsel %vm8056, %v4430, %v8051
      %v8149 = vsel %vm8056, %v4431, %v8053
      %v8152 = vsel %vm8056, %v4432, %v8055
      %v8185 = vunpack.c.l.b16 %v8059
      %v8186 = vunpack.c.h.b16 %v8059
      %v8187 = vunpack.c.l.b16 %v8062
      %v8188 = vunpack.c.l.b16 %v8065
      %v8189 = vunpack.c.h.b16 %v8065
      %v8190 = vunpack.c.l.b16 %v8068
      %v8191 = vunpack.c.l.b16 %v8071
      %v8192 = vunpack.c.h.b16 %v8071
      %v8193 = vunpack.c.l.b16 %v8074
      %v8194 = vunpack.c.l.b16 %v8077
      %v8195 = vunpack.c.h.b16 %v8077
      %v8196 = vunpack.c.l.b16 %v8080
      %v8197 = vunpack.c.l.b16 %v8083
      %v8198 = vunpack.c.h.b16 %v8083
      %v8199 = vunpack.c.l.b16 %v8086
      %v8200 = vunpack.c.l.b16 %v8089
      %v8201 = vunpack.c.h.b16 %v8089
      %v8202 = vunpack.c.l.b16 %v8092
      %v8203 = vunpack.c.l.b16 %v8095
      %v8204 = vunpack.c.h.b16 %v8095
      %v8205 = vunpack.c.l.b16 %v8098
      %v8206 = vunpack.c.l.b16 %v8101
      %v8207 = vunpack.c.h.b16 %v8101
      %v8208 = vunpack.c.l.b16 %v8104
      %v8209 = vunpack.c.l.b16 %v8107
      %v8210 = vunpack.c.h.b16 %v8107
      %v8211 = vunpack.c.l.b16 %v8110
      %v8212 = vunpack.c.l.b16 %v8113
      %v8213 = vunpack.c.h.b16 %v8113
      %v8214 = vunpack.c.l.b16 %v8116
      %v8215 = vunpack.c.l.b16 %v8119
      %v8216 = vunpack.c.h.b16 %v8119
      %v8217 = vunpack.c.l.b16 %v8122
      %v8218 = vunpack.c.l.b16 %v8125
      %v8219 = vunpack.c.h.b16 %v8125
      %v8220 = vunpack.c.l.b16 %v8128
      %v8221 = vunpack.c.l.b16 %v8131
      %v8222 = vunpack.c.h.b16 %v8131
      %v8223 = vunpack.c.l.b16 %v8134
      %v8224 = vunpack.c.l.b16 %v8137
      %v8225 = vunpack.c.h.b16 %v8137
      %v8226 = vunpack.c.l.b16 %v8140
      %v8227 = vunpack.c.l.b16 %v8143
      %v8228 = vunpack.c.h.b16 %v8143
      %v8229 = vunpack.c.l.b16 %v8146
      %v8230 = vunpack.c.l.b16 %v8149
      %v8231 = vunpack.c.h.b16 %v8149
      %v8232 = vunpack.c.l.b16 %v8152
      %v8233 = vpack.c.b16 %v8185, %v8185
      %v8234 = vpack.c.b16 %v8186, %v8186
      %v8235 = vpack.c.b16 %v8187, %v8187
      %v8236 = vpack.c.b16 %v8188, %v8188
      %v8237 = vpack.c.b16 %v8189, %v8189
      %v8238 = vpack.c.b16 %v8190, %v8190
      %v8239 = vpack.c.b16 %v8191, %v8191
      %v8240 = vpack.c.b16 %v8192, %v8192
      %v8241 = vpack.c.b16 %v8193, %v8193
      %v8242 = vpack.c.b16 %v8194, %v8194
      %v8243 = vpack.c.b16 %v8195, %v8195
      %v8244 = vpack.c.b16 %v8196, %v8196
      %v8245 = vpack.c.b16 %v8197, %v8197
      %v8246 = vpack.c.b16 %v8198, %v8198
      %v8247 = vpack.c.b16 %v8199, %v8199
      %v8248 = vpack.c.b16 %v8200, %v8200
      %v8249 = vpack.c.b16 %v8201, %v8201
      %v8250 = vpack.c.b16 %v8202, %v8202
      %v8251 = vpack.c.b16 %v8203, %v8203
      %v8252 = vpack.c.b16 %v8204, %v8204
      %v8253 = vpack.c.b16 %v8205, %v8205
      %v8254 = vpack.c.b16 %v8206, %v8206
      %v8255 = vpack.c.b16 %v8207, %v8207
      %v8256 = vpack.c.b16 %v8208, %v8208
      %v8257 = vpack.c.b16 %v8209, %v8209
      %v8258 = vpack.c.b16 %v8210, %v8210
      %v8259 = vpack.c.b16 %v8211, %v8211
      %v8260 = vpack.c.b16 %v8212, %v8212
      %v8261 = vpack.c.b16 %v8213, %v8213
      %v8262 = vpack.c.b16 %v8214, %v8214
      %v8263 = vpack.c.b16 %v8215, %v8215
      %v8264 = vpack.c.b16 %v8216, %v8216
      %v8265 = vpack.c.b16 %v8217, %v8217
      %v8266 = vpack.c.b16 %v8218, %v8218
      %v8267 = vpack.c.b16 %v8219, %v8219
      %v8268 = vpack.c.b16 %v8220, %v8220
      %v8269 = vpack.c.b16 %v8221, %v8221
      %v8270 = vpack.c.b16 %v8222, %v8222
      %v8271 = vpack.c.b16 %v8223, %v8223
      %v8272 = vpack.c.b16 %v8224, %v8224
      %v8273 = vpack.c.b16 %v8225, %v8225
      %v8274 = vpack.c.b16 %v8226, %v8226
      %v8275 = vpack.c.b16 %v8227, %v8227
      %v8276 = vpack.c.b16 %v8228, %v8228
      %v8277 = vpack.c.b16 %v8229, %v8229
      %v8278 = vpack.c.b16 %v8230, %v8230
      %v8279 = vpack.c.b16 %v8231, %v8231
      %v8280 = vpack.c.b16 %v8232, %v8232
      %vm8281 = vsmask.f32 3328
      %vm8282 = vsmask.f32 7440
      %vm8283 = vmor %vm8281, %vm8282
      %v8285 = vshrl.u32 %v8233, 16
      %v8287 = vrot.slane %v8285, 4
      %v8288 = vshll.u32 %v8233, 16
      %v8290 = vrot.slane %v8288, 5
      %v8291 = vor.u32 %v8287, %v8290
      %v8292 = vrot.slane %v8291, 4
      %v8294 = vshll.u32 %v8234, 16
      %v8296 = vrot.slane %v8294, 5
      %v8297 = vsel %vm8283, %v8292, %v8296
      %v8298 = vshrl.u32 %v8234, 16
      %v8300 = vrot.slane %v8298, 4
      %v8301 = vor.u32 %v8300, %v8296
      %v8302 = vrot.slane %v8301, 4
      %v8304 = vshll.u32 %v8235, 16
      %v8306 = vrot.slane %v8304, 5
      %v8307 = vsel %vm8283, %v8302, %v8306
      %v8309 = vshrl.u32 %v8236, 16
      %v8311 = vrot.slane %v8309, 4
      %v8312 = vshll.u32 %v8236, 16
      %v8314 = vrot.slane %v8312, 5
      %v8315 = vor.u32 %v8311, %v8314
      %v8316 = vrot.slane %v8315, 4
      %v8318 = vshll.u32 %v8237, 16
      %v8320 = vrot.slane %v8318, 5
      %v8321 = vsel %vm8283, %v8316, %v8320
      %v8322 = vshrl.u32 %v8237, 16
      %v8324 = vrot.slane %v8322, 4
      %v8325 = vor.u32 %v8324, %v8320
      %v8326 = vrot.slane %v8325, 4
      %v8328 = vshll.u32 %v8238, 16
      %v8330 = vrot.slane %v8328, 5
      %v8331 = vsel %vm8283, %v8326, %v8330
      %v8333 = vshrl.u32 %v8239, 16
      %v8335 = vrot.slane %v8333, 4
      %v8336 = vshll.u32 %v8239, 16
      %v8338 = vrot.slane %v8336, 5
      %v8339 = vor.u32 %v8335, %v8338
      %v8340 = vrot.slane %v8339, 4
      %v8342 = vshll.u32 %v8240, 16
      %v8344 = vrot.slane %v8342, 5
      %v8345 = vsel %vm8283, %v8340, %v8344
      %v8346 = vshrl.u32 %v8240, 16
      %v8348 = vrot.slane %v8346, 4
      %v8349 = vor.u32 %v8348, %v8344
      %v8350 = vrot.slane %v8349, 4
      %v8352 = vshll.u32 %v8241, 16
      %v8354 = vrot.slane %v8352, 5
      %v8355 = vsel %vm8283, %v8350, %v8354
      %v8357 = vshrl.u32 %v8242, 16
      %v8359 = vrot.slane %v8357, 4
      %v8360 = vshll.u32 %v8242, 16
      %v8362 = vrot.slane %v8360, 5
      %v8363 = vor.u32 %v8359, %v8362
      %v8364 = vrot.slane %v8363, 4
      %v8366 = vshll.u32 %v8243, 16
      %v8368 = vrot.slane %v8366, 5
      %v8369 = vsel %vm8283, %v8364, %v8368
      %v8370 = vshrl.u32 %v8243, 16
      %v8372 = vrot.slane %v8370, 4
      %v8373 = vor.u32 %v8372, %v8368
      %v8374 = vrot.slane %v8373, 4
      %v8376 = vshll.u32 %v8244, 16
      %v8378 = vrot.slane %v8376, 5
      %v8379 = vsel %vm8283, %v8374, %v8378
      %v8381 = vshrl.u32 %v8245, 16
      %v8383 = vrot.slane %v8381, 4
      %v8384 = vshll.u32 %v8245, 16
      %v8386 = vrot.slane %v8384, 5
      %v8387 = vor.u32 %v8383, %v8386
      %v8388 = vrot.slane %v8387, 4
      %v8390 = vshll.u32 %v8246, 16
      %v8392 = vrot.slane %v8390, 5
      %v8393 = vsel %vm8283, %v8388, %v8392
      %v8394 = vshrl.u32 %v8246, 16
      %v8396 = vrot.slane %v8394, 4
      %v8397 = vor.u32 %v8396, %v8392
      %v8398 = vrot.slane %v8397, 4
      %v8400 = vshll.u32 %v8247, 16
      %v8402 = vrot.slane %v8400, 5
      %v8403 = vsel %vm8283, %v8398, %v8402
      %v8405 = vshrl.u32 %v8248, 16
      %v8407 = vrot.slane %v8405, 4
      %v8408 = vshll.u32 %v8248, 16
      %v8410 = vrot.slane %v8408, 5
      %v8411 = vor.u32 %v8407, %v8410
      %v8412 = vrot.slane %v8411, 4
      %v8414 = vshll.u32 %v8249, 16
      %v8416 = vrot.slane %v8414, 5
      %v8417 = vsel %vm8283, %v8412, %v8416
      %v8418 = vshrl.u32 %v8249, 16
      %v8420 = vrot.slane %v8418, 4
      %v8421 = vor.u32 %v8420, %v8416
      %v8422 = vrot.slane %v8421, 4
      %v8424 = vshll.u32 %v8250, 16
      %v8426 = vrot.slane %v8424, 5
      %v8427 = vsel %vm8283, %v8422, %v8426
      %v8429 = vshrl.u32 %v8251, 16
      %v8431 = vrot.slane %v8429, 4
      %v8432 = vshll.u32 %v8251, 16
      %v8434 = vrot.slane %v8432, 5
      %v8435 = vor.u32 %v8431, %v8434
      %v8436 = vrot.slane %v8435, 4
      %v8438 = vshll.u32 %v8252, 16
      %v8440 = vrot.slane %v8438, 5
      %v8441 = vsel %vm8283, %v8436, %v8440
      %v8442 = vshrl.u32 %v8252, 16
      %v8444 = vrot.slane %v8442, 4
      %v8445 = vor.u32 %v8444, %v8440
      %v8446 = vrot.slane %v8445, 4
      %v8448 = vshll.u32 %v8253, 16
      %v8450 = vrot.slane %v8448, 5
      %v8451 = vsel %vm8283, %v8446, %v8450
      %v8453 = vshrl.u32 %v8254, 16
      %v8455 = vrot.slane %v8453, 4
      %v8456 = vshll.u32 %v8254, 16
      %v8458 = vrot.slane %v8456, 5
      %v8459 = vor.u32 %v8455, %v8458
      %v8460 = vrot.slane %v8459, 4
      %v8462 = vshll.u32 %v8255, 16
      %v8464 = vrot.slane %v8462, 5
      %v8465 = vsel %vm8283, %v8460, %v8464
      %v8466 = vshrl.u32 %v8255, 16
      %v8468 = vrot.slane %v8466, 4
      %v8469 = vor.u32 %v8468, %v8464
      %v8470 = vrot.slane %v8469, 4
      %v8472 = vshll.u32 %v8256, 16
      %v8474 = vrot.slane %v8472, 5
      %v8475 = vsel %vm8283, %v8470, %v8474
      %v8477 = vshrl.u32 %v8257, 16
      %v8479 = vrot.slane %v8477, 4
      %v8480 = vshll.u32 %v8257, 16
      %v8482 = vrot.slane %v8480, 5
      %v8483 = vor.u32 %v8479, %v8482
      %v8484 = vrot.slane %v8483, 4
      %v8486 = vshll.u32 %v8258, 16
      %v8488 = vrot.slane %v8486, 5
      %v8489 = vsel %vm8283, %v8484, %v8488
      %v8490 = vshrl.u32 %v8258, 16
      %v8492 = vrot.slane %v8490, 4
      %v8493 = vor.u32 %v8492, %v8488
      %v8494 = vrot.slane %v8493, 4
      %v8496 = vshll.u32 %v8259, 16
      %v8498 = vrot.slane %v8496, 5
      %v8499 = vsel %vm8283, %v8494, %v8498
      %v8501 = vshrl.u32 %v8260, 16
      %v8503 = vrot.slane %v8501, 4
      %v8504 = vshll.u32 %v8260, 16
      %v8506 = vrot.slane %v8504, 5
      %v8507 = vor.u32 %v8503, %v8506
      %v8508 = vrot.slane %v8507, 4
      %v8510 = vshll.u32 %v8261, 16
      %v8512 = vrot.slane %v8510, 5
      %v8513 = vsel %vm8283, %v8508, %v8512
      %v8514 = vshrl.u32 %v8261, 16
      %v8516 = vrot.slane %v8514, 4
      %v8517 = vor.u32 %v8516, %v8512
      %v8518 = vrot.slane %v8517, 4
      %v8520 = vshll.u32 %v8262, 16
      %v8522 = vrot.slane %v8520, 5
      %v8523 = vsel %vm8283, %v8518, %v8522
      %v8525 = vshrl.u32 %v8263, 16
      %v8527 = vrot.slane %v8525, 4
      %v8528 = vshll.u32 %v8263, 16
      %v8530 = vrot.slane %v8528, 5
      %v8531 = vor.u32 %v8527, %v8530
      %v8532 = vrot.slane %v8531, 4
      %v8534 = vshll.u32 %v8264, 16
      %v8536 = vrot.slane %v8534, 5
      %v8537 = vsel %vm8283, %v8532, %v8536
      %v8538 = vshrl.u32 %v8264, 16
      %v8540 = vrot.slane %v8538, 4
      %v8541 = vor.u32 %v8540, %v8536
      %v8542 = vrot.slane %v8541, 4
      %v8544 = vshll.u32 %v8265, 16
      %v8546 = vrot.slane %v8544, 5
      %v8547 = vsel %vm8283, %v8542, %v8546
      %v8549 = vshrl.u32 %v8266, 16
      %v8551 = vrot.slane %v8549, 4
      %v8552 = vshll.u32 %v8266, 16
      %v8554 = vrot.slane %v8552, 5
      %v8555 = vor.u32 %v8551, %v8554
      %v8556 = vrot.slane %v8555, 4
      %v8558 = vshll.u32 %v8267, 16
      %v8560 = vrot.slane %v8558, 5
      %v8561 = vsel %vm8283, %v8556, %v8560
      %v8562 = vshrl.u32 %v8267, 16
      %v8564 = vrot.slane %v8562, 4
      %v8565 = vor.u32 %v8564, %v8560
      %v8566 = vrot.slane %v8565, 4
      %v8568 = vshll.u32 %v8268, 16
      %v8570 = vrot.slane %v8568, 5
      %v8571 = vsel %vm8283, %v8566, %v8570
      %v8573 = vshrl.u32 %v8269, 16
      %v8575 = vrot.slane %v8573, 4
      %v8576 = vshll.u32 %v8269, 16
      %v8578 = vrot.slane %v8576, 5
      %v8579 = vor.u32 %v8575, %v8578
      %v8580 = vrot.slane %v8579, 4
      %v8582 = vshll.u32 %v8270, 16
      %v8584 = vrot.slane %v8582, 5
      %v8585 = vsel %vm8283, %v8580, %v8584
      %v8586 = vshrl.u32 %v8270, 16
      %v8588 = vrot.slane %v8586, 4
      %v8589 = vor.u32 %v8588, %v8584
      %v8590 = vrot.slane %v8589, 4
      %v8592 = vshll.u32 %v8271, 16
      %v8594 = vrot.slane %v8592, 5
      %v8595 = vsel %vm8283, %v8590, %v8594
      %v8597 = vshrl.u32 %v8272, 16
      %v8599 = vrot.slane %v8597, 4
      %v8600 = vshll.u32 %v8272, 16
      %v8602 = vrot.slane %v8600, 5
      %v8603 = vor.u32 %v8599, %v8602
      %v8604 = vrot.slane %v8603, 4
      %v8606 = vshll.u32 %v8273, 16
      %v8608 = vrot.slane %v8606, 5
      %v8609 = vsel %vm8283, %v8604, %v8608
      %v8610 = vshrl.u32 %v8273, 16
      %v8612 = vrot.slane %v8610, 4
      %v8613 = vor.u32 %v8612, %v8608
      %v8614 = vrot.slane %v8613, 4
      %v8616 = vshll.u32 %v8274, 16
      %v8618 = vrot.slane %v8616, 5
      %v8619 = vsel %vm8283, %v8614, %v8618
      %v8621 = vshrl.u32 %v8275, 16
      %v8623 = vrot.slane %v8621, 4
      %v8624 = vshll.u32 %v8275, 16
      %v8626 = vrot.slane %v8624, 5
      %v8627 = vor.u32 %v8623, %v8626
      %v8628 = vrot.slane %v8627, 4
      %v8630 = vshll.u32 %v8276, 16
      %v8632 = vrot.slane %v8630, 5
      %v8633 = vsel %vm8283, %v8628, %v8632
      %v8634 = vshrl.u32 %v8276, 16
      %v8636 = vrot.slane %v8634, 4
      %v8637 = vor.u32 %v8636, %v8632
      %v8638 = vrot.slane %v8637, 4
      %v8640 = vshll.u32 %v8277, 16
      %v8642 = vrot.slane %v8640, 5
      %v8643 = vsel %vm8283, %v8638, %v8642
      %v8645 = vshrl.u32 %v8278, 16
      %v8647 = vrot.slane %v8645, 4
      %v8648 = vshll.u32 %v8278, 16
      %v8650 = vrot.slane %v8648, 5
      %v8651 = vor.u32 %v8647, %v8650
      %v8652 = vrot.slane %v8651, 4
      %v8654 = vshll.u32 %v8279, 16
      %v8656 = vrot.slane %v8654, 5
      %v8657 = vsel %vm8283, %v8652, %v8656
      %v8658 = vshrl.u32 %v8279, 16
      %v8660 = vrot.slane %v8658, 4
      %v8661 = vor.u32 %v8660, %v8656
      %v8662 = vrot.slane %v8661, 4
      %v8664 = vshll.u32 %v8280, 16
      %v8666 = vrot.slane %v8664, 5
      %v8667 = vsel %vm8283, %v8662, %v8666
      %8700 = vst [vmem:[%s143] sm:$0xf] %v8297
      %8701 = vst [vmem:[%s143 + $0x4] sm:$0xf] %v8307
      %8702 = vst [vmem:[%s143 + $0x8] sm:$0xf] %v8321
      %8703 = vst [vmem:[%s143 + $0xc] sm:$0xf] %v8331
      %8704 = vst [vmem:[%s143 + $0x10] sm:$0xf] %v8345
      %8705 = vst [vmem:[%s143 + $0x14] sm:$0xf] %v8355
      %8706 = vst [vmem:[%s143 + $0x18] sm:$0xf] %v8369
      %8707 = vst [vmem:[%s143 + $0x1c] sm:$0xf] %v8379
      %8708 = vst [vmem:[%s143 + $0x20] sm:$0xf] %v8393
      %8709 = vst [vmem:[%s143 + $0x24] sm:$0xf] %v8403
      %8710 = vst [vmem:[%s143 + $0x28] sm:$0xf] %v8417
      %8711 = vst [vmem:[%s143 + $0x2c] sm:$0xf] %v8427
      %8712 = vst [vmem:[%s143 + $0x30] sm:$0xf] %v8441
      %8713 = vst [vmem:[%s143 + $0x34] sm:$0xf] %v8451
      %8714 = vst [vmem:[%s143 + $0x38] sm:$0xf] %v8465
      %8715 = vst [vmem:[%s143 + $0x3c] sm:$0xf] %v8475
      %8716 = vst [vmem:[%s143 + $0x40] sm:$0xf] %v8489
      %8717 = vst [vmem:[%s143 + $0x44] sm:$0xf] %v8499
      %8718 = vst [vmem:[%s143 + $0x48] sm:$0xf] %v8513
      %8719 = vst [vmem:[%s143 + $0x4c] sm:$0xf] %v8523
      %8720 = vst [vmem:[%s143 + $0x50] sm:$0xf] %v8537
      %8721 = vst [vmem:[%s143 + $0x54] sm:$0xf] %v8547
      %8722 = vst [vmem:[%s143 + $0x58] sm:$0xf] %v8561
      %8723 = vst [vmem:[%s143 + $0x5c] sm:$0xf] %v8571
      %8724 = vst [vmem:[%s143 + $0x60] sm:$0xf] %v8585
      %8725 = vst [vmem:[%s143 + $0x64] sm:$0xf] %v8595
      %8726 = vst [vmem:[%s143 + $0x68] sm:$0xf] %v8609
      %8727 = vst [vmem:[%s143 + $0x6c] sm:$0xf] %v8619
      %8728 = vst [vmem:[%s143 + $0x70] sm:$0xf] %v8633
      %8729 = vst [vmem:[%s143 + $0x74] sm:$0xf] %v8643
      %8730 = vst [vmem:[%s143 + $0x78] sm:$0xf] %v8657
      %8731 = vst [vmem:[%s143 + $0x7c] sm:$0xf] %v8667
      %p8732 = scmp.lt.s32.totalorder %s13, 1
      %s8733 = scalar_select %p8732, %s13, 1
      %s8734 = smul.addr %s8733, 32
      %s8735 = smul.addr %s8734, 4
      %s8736 = scalar_lea.vmem %s2, %s8735
      // Predicated region
      $region29: #{skunit_forward.5} parent=27 // pred_check
        %p8737 = pneg %p78
      $region30: #{skunit_forward.5} parent=27 // pred_check_branch
        %8739 = sbr.rel (%p8737) target = $region32
      $region31: #{skunit_forward.5} parent=27 // pred_region
        _
      $region32: #{skunit_forward.5} parent=27 // pred_fallthru
        _
    $region28: #{skunit_forward.5} parent=5 // pred_fallthru
      _
    %p8740 = scmp.le.s32.totalorder 2, %s8
    // Predicated region
    $region33: #{skunit_forward.5} parent=5 // pred_check
      %p8741 = pneg %p8740
    $region34: #{skunit_forward.5} parent=5 // pred_check_branch
      %8743 = sbr.rel (%p8741) target = $region36
    $region35: #{skunit_forward.5} parent=5 // pred_region
      %s8744 = ssub.s32 %s8, 2
      // Predicated region
      $region37: #{skunit_forward.5} parent=35 // pred_check
        %p8745 = pneg %p84
      $region38: #{skunit_forward.5} parent=35 // pred_check_branch
        %8747 = sbr.rel (%p8745) target = $region40
      $region39: #{skunit_forward.5} parent=35 // pred_region
        %p8748 = scmp.lt.s32.totalorder %s14, 1
        %s8749 = scalar_select %p8748, %s14, 1
        %s8750 = smul.addr %s8749, 32
        %s8751 = smul.addr %s8750, 4
        %s8752 = scalar_lea.vmem %s2, %s8751
      $region40: #{skunit_forward.5} parent=35 // pred_fallthru
        _
    $region36: #{skunit_forward.5} parent=5 // pred_fallthru
      _
  $region6: #{skunit_forward.5} parent=0 // loop_footer
    %s12 = sadd.s32 1, %s8
  $region7: #{skunit_forward.5} parent=0 // loop_footer_branch
    %7 = sbr.rel target = $region3
  $region8: #{skunit_forward.5} parent=0 // loop_exit
    _

// kernel: skunit_forward.6
$region0: #{skunit_forward.6}
  #allocation0 [shape = 'u32[]', space=smem, size = 0x4, offset = 0x4, fixed_abs, tag = 'smem constant byte address 0x4 - core index']
  #allocation1 [shape = 'u32[144,128]{1,0:T(1,128)}', space=vmem, size = 0x12000, scoped, tag = 'internal scratch']
  %s0 = inlined_call_operand.vmem [shape: bf16[512,64], index: 0, kind: input, shape index: {}]
  %s1 = inlined_call_operand.vmem [shape: bf16[64,128], index: 1, kind: input, shape index: {}]
  %s2 = inlined_call_operand.vmem [shape: bf16[512,128], index: 2, kind: output, shape index: {}]
  %s3 = sld [smem:[#allocation0]]
  $region18: #{skunit_forward.6} parent=0
    _
  %s5 = ssub.s32 1, %s3
  %s6 = scalar_select 0, %s5, %s3
  // Predicated region
  $region2: #{skunit_forward.6} parent=0 // pred_check
    _
  $region3: #{skunit_forward.6} parent=0 // pred_check_branch
    %8 = sbr.rel (0) target = $region5
  $region4: #{skunit_forward.6} parent=0 // pred_region
    _
  $region5: #{skunit_forward.6} parent=0 // pred_fallthru
    _
  // Predicated region
  $region6: #{skunit_forward.6} parent=0 // pred_check
    _
  $region7: #{skunit_forward.6} parent=0 // pred_check_branch
    %10 = sbr.rel (0) target = $region9
  $region8: #{skunit_forward.6} parent=0 // pred_region
    _
  $region9: #{skunit_forward.6} parent=0 // pred_fallthru
    _
  %v12 = vld [vmem:[%s0] sm:$0xf]
  %v13 = vld [vmem:[%s0 + $0x4] sm:$0xf]
  %v14 = vld [vmem:[%s0 + $0x8] sm:$0xf]
  %v15 = vld [vmem:[%s0 + $0xc] sm:$0xf]
  %v16 = vld [vmem:[%s0 + $0x10] sm:$0xf]
  %v17 = vld [vmem:[%s0 + $0x14] sm:$0xf]
  %v18 = vld [vmem:[%s0 + $0x18] sm:$0xf]
  %v19 = vld [vmem:[%s0 + $0x1c] sm:$0xf]
  %v20 = vld [vmem:[%s0 + $0x20] sm:$0xf]
  %v21 = vld [vmem:[%s0 + $0x24] sm:$0xf]
  %v22 = vld [vmem:[%s0 + $0x28] sm:$0xf]
  %v23 = vld [vmem:[%s0 + $0x2c] sm:$0xf]
  %v24 = vld [vmem:[%s0 + $0x30] sm:$0xf]
  %v25 = vld [vmem:[%s0 + $0x34] sm:$0xf]
  %v26 = vld [vmem:[%s0 + $0x38] sm:$0xf]
  %v27 = vld [vmem:[%s0 + $0x3c] sm:$0xf]
  %v28 = vld [vmem:[%s0 + $0x40] sm:$0xf]
  %v29 = vld [vmem:[%s0 + $0x44] sm:$0xf]
  %v30 = vld [vmem:[%s0 + $0x48] sm:$0xf]
  %v31 = vld [vmem:[%s0 + $0x4c] sm:$0xf]
  %v32 = vld [vmem:[%s0 + $0x50] sm:$0xf]
  %v33 = vld [vmem:[%s0 + $0x54] sm:$0xf]
  %v34 = vld [vmem:[%s0 + $0x58] sm:$0xf]
  %v35 = vld [vmem:[%s0 + $0x5c] sm:$0xf]
  %v36 = vld [vmem:[%s0 + $0x60] sm:$0xf]
  %v37 = vld [vmem:[%s0 + $0x64] sm:$0xf]
  %v38 = vld [vmem:[%s0 + $0x68] sm:$0xf]
  %v39 = vld [vmem:[%s0 + $0x6c] sm:$0xf]
  %v40 = vld [vmem:[%s0 + $0x70] sm:$0xf]
  %v41 = vld [vmem:[%s0 + $0x74] sm:$0xf]
  %v42 = vld [vmem:[%s0 + $0x78] sm:$0xf]
  %v43 = vld [vmem:[%s0 + $0x7c] sm:$0xf]
  %v44 = vld [vmem:[%s0 + $0x80] sm:$0xf]
  %v45 = vld [vmem:[%s0 + $0x84] sm:$0xf]
  %v46 = vld [vmem:[%s0 + $0x88] sm:$0xf]
  %v47 = vld [vmem:[%s0 + $0x8c] sm:$0xf]
  %v48 = vld [vmem:[%s0 + $0x90] sm:$0xf]
  %v49 = vld [vmem:[%s0 + $0x94] sm:$0xf]
  %v50 = vld [vmem:[%s0 + $0x98] sm:$0xf]
  %v51 = vld [vmem:[%s0 + $0x9c] sm:$0xf]
  %v52 = vld [vmem:[%s0 + $0xa0] sm:$0xf]
  %v53 = vld [vmem:[%s0 + $0xa4] sm:$0xf]
  %v54 = vld [vmem:[%s0 + $0xa8] sm:$0xf]
  %v55 = vld [vmem:[%s0 + $0xac] sm:$0xf]
  %v56 = vld [vmem:[%s0 + $0xb0] sm:$0xf]
  %v57 = vld [vmem:[%s0 + $0xb4] sm:$0xf]
  %v58 = vld [vmem:[%s0 + $0xb8] sm:$0xf]
  %v59 = vld [vmem:[%s0 + $0xbc] sm:$0xf]
  %v60 = vld [vmem:[%s0 + $0xc0] sm:$0xf]
  %v61 = vld [vmem:[%s0 + $0xc4] sm:$0xf]
  %v62 = vld [vmem:[%s0 + $0xc8] sm:$0xf]
  %v63 = vld [vmem:[%s0 + $0xcc] sm:$0xf]
  %v64 = vld [vmem:[%s0 + $0xd0] sm:$0xf]
  %v65 = vld [vmem:[%s0 + $0xd4] sm:$0xf]
  %v66 = vld [vmem:[%s0 + $0xd8] sm:$0xf]
  %v67 = vld [vmem:[%s0 + $0xdc] sm:$0xf]
  %v68 = vld [vmem:[%s0 + $0xe0] sm:$0xf]
  %v69 = vld [vmem:[%s0 + $0xe4] sm:$0xf]
  %v70 = vld [vmem:[%s0 + $0xe8] sm:$0xf]
  %v71 = vld [vmem:[%s0 + $0xec] sm:$0xf]
  %v72 = vld [vmem:[%s0 + $0xf0] sm:$0xf]
  %v73 = vld [vmem:[%s0 + $0xf4] sm:$0xf]
  %v74 = vld [vmem:[%s0 + $0xf8] sm:$0xf]
  %v75 = vld [vmem:[%s0 + $0xfc] sm:$0xf]
  %v76 = vld [vmem:[%s1] sm:$0xf]
  %v77 = vld [vmem:[%s1 + $0x4] sm:$0xf]
  %v78 = vld [vmem:[%s1 + $0x8] sm:$0xf]
  %v79 = vld [vmem:[%s1 + $0xc] sm:$0xf]
  %v80 = vld [vmem:[%s1 + $0x10] sm:$0xf]
  %v81 = vld [vmem:[%s1 + $0x14] sm:$0xf]
  %v82 = vld [vmem:[%s1 + $0x18] sm:$0xf]
  %v83 = vld [vmem:[%s1 + $0x1c] sm:$0xf]
  %v148 = vunpack.c.l.b16 %v12
  %v149 = vunpack.c.l.b16 %v13
  %v150 = vunpack.c.l.b16 %v14
  %v151 = vunpack.c.l.b16 %v15
  %v152 = vunpack.c.l.b16 %v16
  %v153 = vunpack.c.l.b16 %v17
  %v154 = vunpack.c.l.b16 %v18
  %v155 = vunpack.c.l.b16 %v19
  %v156 = vunpack.c.l.b16 %v20
  %v157 = vunpack.c.l.b16 %v21
  %v158 = vunpack.c.l.b16 %v22
  %v159 = vunpack.c.l.b16 %v23
  %v160 = vunpack.c.l.b16 %v24
  %v161 = vunpack.c.l.b16 %v25
  %v162 = vunpack.c.l.b16 %v26
  %v163 = vunpack.c.l.b16 %v27
  %v164 = vunpack.c.l.b16 %v28
  %v165 = vunpack.c.l.b16 %v29
  %v166 = vunpack.c.l.b16 %v30
  %v167 = vunpack.c.l.b16 %v31
  %v168 = vunpack.c.l.b16 %v32
  %v169 = vunpack.c.l.b16 %v33
  %v170 = vunpack.c.l.b16 %v34
  %v171 = vunpack.c.l.b16 %v35
  %v172 = vunpack.c.l.b16 %v36
  %v173 = vunpack.c.l.b16 %v37
  %v174 = vunpack.c.l.b16 %v38
  %v175 = vunpack.c.l.b16 %v39
  %v176 = vunpack.c.l.b16 %v40
  %v177 = vunpack.c.l.b16 %v41
  %v178 = vunpack.c.l.b16 %v42
  %v179 = vunpack.c.l.b16 %v43
  %v180 = vunpack.c.l.b16 %v44
  %v181 = vunpack.c.l.b16 %v45
  %v182 = vunpack.c.l.b16 %v46
  %v183 = vunpack.c.l.b16 %v47
  %v184 = vunpack.c.l.b16 %v48
  %v185 = vunpack.c.l.b16 %v49
  %v186 = vunpack.c.l.b16 %v50
  %v187 = vunpack.c.l.b16 %v51
  %v188 = vunpack.c.l.b16 %v52
  %v189 = vunpack.c.l.b16 %v53
  %v190 = vunpack.c.l.b16 %v54
  %v191 = vunpack.c.l.b16 %v55
  %v192 = vunpack.c.l.b16 %v56
  %v193 = vunpack.c.l.b16 %v57
  %v194 = vunpack.c.l.b16 %v58
  %v195 = vunpack.c.l.b16 %v59
  %v196 = vunpack.c.l.b16 %v60
  %v197 = vunpack.c.l.b16 %v61
  %v198 = vunpack.c.l.b16 %v62
  %v199 = vunpack.c.l.b16 %v63
  %v200 = vunpack.c.l.b16 %v64
  %v201 = vunpack.c.l.b16 %v65
  %v202 = vunpack.c.l.b16 %v66
  %v203 = vunpack.c.l.b16 %v67
  %v204 = vunpack.c.l.b16 %v68
  %v205 = vunpack.c.l.b16 %v69
  %v206 = vunpack.c.l.b16 %v70
  %v207 = vunpack.c.l.b16 %v71
  %v208 = vunpack.c.l.b16 %v72
  %v209 = vunpack.c.l.b16 %v73
  %v210 = vunpack.c.l.b16 %v74
  %v211 = vunpack.c.l.b16 %v75
  %v212 = vpack.c.b16 %v149, %v148
  %v213 = vpack.c.b16 %v151, %v150
  %v214 = vpack.c.b16 %v153, %v152
  %v215 = vpack.c.b16 %v155, %v154
  %v216 = vpack.c.b16 %v157, %v156
  %v217 = vpack.c.b16 %v159, %v158
  %v218 = vpack.c.b16 %v161, %v160
  %v219 = vpack.c.b16 %v163, %v162
  %v220 = vpack.c.b16 %v165, %v164
  %v221 = vpack.c.b16 %v167, %v166
  %v222 = vpack.c.b16 %v169, %v168
  %v223 = vpack.c.b16 %v171, %v170
  %v224 = vpack.c.b16 %v173, %v172
  %v225 = vpack.c.b16 %v175, %v174
  %v226 = vpack.c.b16 %v177, %v176
  %v227 = vpack.c.b16 %v179, %v178
  %v228 = vpack.c.b16 %v181, %v180
  %v229 = vpack.c.b16 %v183, %v182
  %v230 = vpack.c.b16 %v185, %v184
  %v231 = vpack.c.b16 %v187, %v186
  %v232 = vpack.c.b16 %v189, %v188
  %v233 = vpack.c.b16 %v191, %v190
  %v234 = vpack.c.b16 %v193, %v192
  %v235 = vpack.c.b16 %v195, %v194
  %v236 = vpack.c.b16 %v197, %v196
  %v237 = vpack.c.b16 %v199, %v198
  %v238 = vpack.c.b16 %v201, %v200
  %v239 = vpack.c.b16 %v203, %v202
  %v240 = vpack.c.b16 %v205, %v204
  %v241 = vpack.c.b16 %v207, %v206
  %v242 = vpack.c.b16 %v209, %v208
  %v243 = vpack.c.b16 %v211, %v210
  %v252 = vunpack.c.l.b16 %v76
  %v253 = vunpack.c.l.b16 %v77
  %v254 = vunpack.c.l.b16 %v78
  %v255 = vunpack.c.l.b16 %v79
  %v256 = vunpack.c.l.b16 %v80
  %v257 = vunpack.c.l.b16 %v81
  %v258 = vunpack.c.l.b16 %v82
  %v259 = vunpack.c.l.b16 %v83
  %v260 = vpack.c.b16 %v253, %v252
  %v261 = vpack.c.b16 %v255, %v254
  %v262 = vpack.c.b16 %v257, %v256
  %v263 = vpack.c.b16 %v259, %v258
  %vm268 = vcmask 523264
  %v270 = vsel %vm268, %v212, 0
  %v273 = vsel %vm268, %v213, 0
  %v276 = vsel %vm268, %v214, 0
  %v279 = vsel %vm268, %v215, 0
  %v282 = vsel %vm268, %v216, 0
  %v285 = vsel %vm268, %v217, 0
  %v288 = vsel %vm268, %v218, 0
  %v291 = vsel %vm268, %v219, 0
  %v294 = vsel %vm268, %v220, 0
  %v297 = vsel %vm268, %v221, 0
  %v300 = vsel %vm268, %v222, 0
  %v303 = vsel %vm268, %v223, 0
  %v306 = vsel %vm268, %v224, 0
  %v309 = vsel %vm268, %v225, 0
  %v312 = vsel %vm268, %v226, 0
  %v315 = vsel %vm268, %v227, 0
  %v318 = vsel %vm268, %v228, 0
  %v321 = vsel %vm268, %v229, 0
  %v324 = vsel %vm268, %v230, 0
  %v327 = vsel %vm268, %v231, 0
  %v330 = vsel %vm268, %v232, 0
  %v333 = vsel %vm268, %v233, 0
  %v336 = vsel %vm268, %v234, 0
  %v339 = vsel %vm268, %v235, 0
  %v342 = vsel %vm268, %v236, 0
  %v345 = vsel %vm268, %v237, 0
  %v348 = vsel %vm268, %v238, 0
  %v351 = vsel %vm268, %v239, 0
  %v354 = vsel %vm268, %v240, 0
  %v357 = vsel %vm268, %v241, 0
  %v360 = vsel %vm268, %v242, 0
  %v363 = vsel %vm268, %v243, 0
  %365 = vmatprep.subr.bf16.mxu0 0
  %366 = vmatpush1.bf16.msra.mxu0 0
  %367 = vmatprep.subr.bf16.mxu0 0
  %368 = vmatpush1.bf16.msra.mxu0 0
  %369 = vmatprep.subr.bf16.mxu0 0
  %370 = vmatpush1.bf16.msra.mxu0 0
  %371 = vmatprep.subr.bf16.mxu0 0
  %372 = vmatpush1.bf16.msra.mxu0 0
  %373 = vmatprep.subr.bf16.mxu0 0
  %374 = vmatpush1.bf16.msra.mxu0 %v263
  %375 = vmatprep.subr.bf16.mxu0 0
  %376 = vmatpush1.bf16.msra.mxu0 %v262
  %377 = vmatprep.subr.bf16.mxu0 0
  %378 = vmatpush1.bf16.msra.mxu0 %v261
  %379 = vmatprep.subr.bf16.mxu0 0
  %380 = vmatpush1.bf16.msra.mxu0 %v260
  %381 = vmatprep.subr.bf16.mxu0 0
  %382 = vmatpush2.bf16.msra.mxu0 0
  %383 = vmatprep.subr.bf16.mxu0 0
  %384 = vmatpush2.bf16.msra.mxu0 0
  %385 = vmatprep.subr.bf16.mxu0 0
  %386 = vmatpush2.bf16.msra.mxu0 0
  %387 = vmatprep.subr.bf16.mxu0 0
  %388 = vmatpush2.bf16.msra.mxu0 0
  %389 = vmatprep.subr.bf16.mxu0 0
  %390 = vmatpush2.bf16.msra.mxu0 0
  %391 = vmatprep.subr.bf16.mxu0 0
  %392 = vmatpush2.bf16.msra.mxu0 0
  %393 = vmatprep.subr.bf16.mxu0 0
  %394 = vmatpush2.bf16.msra.mxu0 0
  %395 = vmatprep.subr.bf16.mxu0 0
  %396 = vmatpush2.bf16.msra.mxu0 0
  %397 = vmatprep.mubr.bf16.mxu0 0
  %398 = vmatmul.mubr.bf16.gmra.mxu0 %v270
  %v399 = vpop.f32.mrf.mxu0
  %v400 = vadd.f32 0.0, %v399
  %v401 = vpop.f32.mrf.mxu0
  %v402 = vpop.f32.mrf.mxu0
  %v403 = vadd.f32 0.0, %v402
  %v404 = vpop.f32.mrf.mxu0
  %405 = vmatprep.mubr.bf16.mxu0 0
  %406 = vmatmul.mubr.bf16.gmra.mxu0 %v273
  %v407 = vpop.f32.mrf.mxu0
  %v408 = vadd.f32 0.0, %v407
  %v409 = vpop.f32.mrf.mxu0
  %v410 = vpop.f32.mrf.mxu0
  %v411 = vadd.f32 0.0, %v410
  %v412 = vpop.f32.mrf.mxu0
  %413 = vmatprep.mubr.bf16.mxu0 0
  %414 = vmatmul.mubr.bf16.gmra.mxu0 %v276
  %v415 = vpop.f32.mrf.mxu0
  %v416 = vadd.f32 0.0, %v415
  %v417 = vpop.f32.mrf.mxu0
  %v418 = vpop.f32.mrf.mxu0
  %v419 = vadd.f32 0.0, %v418
  %v420 = vpop.f32.mrf.mxu0
  %421 = vmatprep.mubr.bf16.mxu0 0
  %422 = vmatmul.mubr.bf16.gmra.mxu0 %v279
  %v423 = vpop.f32.mrf.mxu0
  %v424 = vadd.f32 0.0, %v423
  %v425 = vpop.f32.mrf.mxu0
  %v426 = vpop.f32.mrf.mxu0
  %v427 = vadd.f32 0.0, %v426
  %v428 = vpop.f32.mrf.mxu0
  %429 = vmatprep.mubr.bf16.mxu0 0
  %430 = vmatmul.mubr.bf16.gmra.mxu0 %v282
  %v431 = vpop.f32.mrf.mxu0
  %v432 = vadd.f32 0.0, %v431
  %v433 = vpop.f32.mrf.mxu0
  %v434 = vpop.f32.mrf.mxu0
  %v435 = vadd.f32 0.0, %v434
  %v436 = vpop.f32.mrf.mxu0
  %437 = vmatprep.mubr.bf16.mxu0 0
  %438 = vmatmul.mubr.bf16.gmra.mxu0 %v285
  %v439 = vpop.f32.mrf.mxu0
  %v440 = vadd.f32 0.0, %v439
  %v441 = vpop.f32.mrf.mxu0
  %v442 = vpop.f32.mrf.mxu0
  %v443 = vadd.f32 0.0, %v442
  %v444 = vpop.f32.mrf.mxu0
  %445 = vmatprep.mubr.bf16.mxu0 0
  %446 = vmatmul.mubr.bf16.gmra.mxu0 %v288
  %v447 = vpop.f32.mrf.mxu0
  %v448 = vadd.f32 0.0, %v447
  %v449 = vpop.f32.mrf.mxu0
  %v450 = vpop.f32.mrf.mxu0
  %v451 = vadd.f32 0.0, %v450
  %v452 = vpop.f32.mrf.mxu0
  %453 = vmatprep.mubr.bf16.mxu0 0
  %454 = vmatmul.mubr.bf16.gmra.mxu0 %v291
  %v455 = vpop.f32.mrf.mxu0
  %v456 = vadd.f32 0.0, %v455
  %v457 = vpop.f32.mrf.mxu0
  %v458 = vpop.f32.mrf.mxu0
  %v459 = vadd.f32 0.0, %v458
  %v460 = vpop.f32.mrf.mxu0
  %461 = vmatprep.mubr.bf16.mxu0 0
  %462 = vmatmul.mubr.bf16.gmra.mxu0 %v294
  %v463 = vpop.f32.mrf.mxu0
  %v464 = vadd.f32 0.0, %v463
  %v465 = vpop.f32.mrf.mxu0
  %v466 = vpop.f32.mrf.mxu0
  %v467 = vadd.f32 0.0, %v466
  %v468 = vpop.f32.mrf.mxu0
  %469 = vmatprep.mubr.bf16.mxu0 0
  %470 = vmatmul.mubr.bf16.gmra.mxu0 %v297
  %v471 = vpop.f32.mrf.mxu0
  %v472 = vadd.f32 0.0, %v471
  %v473 = vpop.f32.mrf.mxu0
  %v474 = vpop.f32.mrf.mxu0
  %v475 = vadd.f32 0.0, %v474
  %v476 = vpop.f32.mrf.mxu0
  %477 = vmatprep.mubr.bf16.mxu0 0
  %478 = vmatmul.mubr.bf16.gmra.mxu0 %v300
  %v479 = vpop.f32.mrf.mxu0
  %v480 = vadd.f32 0.0, %v479
  %v481 = vpop.f32.mrf.mxu0
  %v482 = vpop.f32.mrf.mxu0
  %v483 = vadd.f32 0.0, %v482
  %v484 = vpop.f32.mrf.mxu0
  %485 = vmatprep.mubr.bf16.mxu0 0
  %486 = vmatmul.mubr.bf16.gmra.mxu0 %v303
  %v487 = vpop.f32.mrf.mxu0
  %v488 = vadd.f32 0.0, %v487
  %v489 = vpop.f32.mrf.mxu0
  %v490 = vpop.f32.mrf.mxu0
  %v491 = vadd.f32 0.0, %v490
  %v492 = vpop.f32.mrf.mxu0
  %493 = vmatprep.mubr.bf16.mxu0 0
  %494 = vmatmul.mubr.bf16.gmra.mxu0 %v306
  %v495 = vpop.f32.mrf.mxu0
  %v496 = vadd.f32 0.0, %v495
  %v497 = vpop.f32.mrf.mxu0
  %v498 = vpop.f32.mrf.mxu0
  %v499 = vadd.f32 0.0, %v498
  %v500 = vpop.f32.mrf.mxu0
  %501 = vmatprep.mubr.bf16.mxu0 0
  %502 = vmatmul.mubr.bf16.gmra.mxu0 %v309
  %v503 = vpop.f32.mrf.mxu0
  %v504 = vadd.f32 0.0, %v503
  %v505 = vpop.f32.mrf.mxu0
  %v506 = vpop.f32.mrf.mxu0
  %v507 = vadd.f32 0.0, %v506
  %v508 = vpop.f32.mrf.mxu0
  %509 = vmatprep.mubr.bf16.mxu0 0
  %510 = vmatmul.mubr.bf16.gmra.mxu0 %v312
  %v511 = vpop.f32.mrf.mxu0
  %v512 = vadd.f32 0.0, %v511
  %v513 = vpop.f32.mrf.mxu0
  %v514 = vpop.f32.mrf.mxu0
  %v515 = vadd.f32 0.0, %v514
  %v516 = vpop.f32.mrf.mxu0
  %517 = vmatprep.mubr.bf16.mxu0 0
  %518 = vmatmul.mubr.bf16.gmra.mxu0 %v315
  %v519 = vpop.f32.mrf.mxu0
  %v520 = vadd.f32 0.0, %v519
  %v521 = vpop.f32.mrf.mxu0
  %v522 = vpop.f32.mrf.mxu0
  %v523 = vadd.f32 0.0, %v522
  %v524 = vpop.f32.mrf.mxu0
  %525 = vmatprep.mubr.bf16.mxu0 0
  %526 = vmatmul.mubr.bf16.gmra.mxu0 %v318
  %v527 = vpop.f32.mrf.mxu0
  %v528 = vadd.f32 0.0, %v527
  %v529 = vpop.f32.mrf.mxu0
  %v530 = vpop.f32.mrf.mxu0
  %v531 = vadd.f32 0.0, %v530
  %v532 = vpop.f32.mrf.mxu0
  %533 = vmatprep.mubr.bf16.mxu0 0
  %534 = vmatmul.mubr.bf16.gmra.mxu0 %v321
  %v535 = vpop.f32.mrf.mxu0
  %v536 = vadd.f32 0.0, %v535
  %v537 = vpop.f32.mrf.mxu0
  %v538 = vpop.f32.mrf.mxu0
  %v539 = vadd.f32 0.0, %v538
  %v540 = vpop.f32.mrf.mxu0
  %541 = vmatprep.mubr.bf16.mxu0 0
  %542 = vmatmul.mubr.bf16.gmra.mxu0 %v324
  %v543 = vpop.f32.mrf.mxu0
  %v544 = vadd.f32 0.0, %v543
  %v545 = vpop.f32.mrf.mxu0
  %v546 = vpop.f32.mrf.mxu0
  %v547 = vadd.f32 0.0, %v546
  %v548 = vpop.f32.mrf.mxu0
  %549 = vmatprep.mubr.bf16.mxu0 0
  %550 = vmatmul.mubr.bf16.gmra.mxu0 %v327
  %v551 = vpop.f32.mrf.mxu0
  %v552 = vadd.f32 0.0, %v551
  %v553 = vpop.f32.mrf.mxu0
  %v554 = vpop.f32.mrf.mxu0
  %v555 = vadd.f32 0.0, %v554
  %v556 = vpop.f32.mrf.mxu0
  %557 = vmatprep.mubr.bf16.mxu0 0
  %558 = vmatmul.mubr.bf16.gmra.mxu0 %v330
  %v559 = vpop.f32.mrf.mxu0
  %v560 = vadd.f32 0.0, %v559
  %v561 = vpop.f32.mrf.mxu0
  %v562 = vpop.f32.mrf.mxu0
  %v563 = vadd.f32 0.0, %v562
  %v564 = vpop.f32.mrf.mxu0
  %565 = vmatprep.mubr.bf16.mxu0 0
  %566 = vmatmul.mubr.bf16.gmra.mxu0 %v333
  %v567 = vpop.f32.mrf.mxu0
  %v568 = vadd.f32 0.0, %v567
  %v569 = vpop.f32.mrf.mxu0
  %v570 = vpop.f32.mrf.mxu0
  %v571 = vadd.f32 0.0, %v570
  %v572 = vpop.f32.mrf.mxu0
  %573 = vmatprep.mubr.bf16.mxu0 0
  %574 = vmatmul.mubr.bf16.gmra.mxu0 %v336
  %v575 = vpop.f32.mrf.mxu0
  %v576 = vadd.f32 0.0, %v575
  %v577 = vpop.f32.mrf.mxu0
  %v578 = vpop.f32.mrf.mxu0
  %v579 = vadd.f32 0.0, %v578
  %v580 = vpop.f32.mrf.mxu0
  %581 = vmatprep.mubr.bf16.mxu0 0
  %582 = vmatmul.mubr.bf16.gmra.mxu0 %v339
  %v583 = vpop.f32.mrf.mxu0
  %v584 = vadd.f32 0.0, %v583
  %v585 = vpop.f32.mrf.mxu0
  %v586 = vpop.f32.mrf.mxu0
  %v587 = vadd.f32 0.0, %v586
  %v588 = vpop.f32.mrf.mxu0
  %589 = vmatprep.mubr.bf16.mxu0 0
  %590 = vmatmul.mubr.bf16.gmra.mxu0 %v342
  %v591 = vpop.f32.mrf.mxu0
  %v592 = vadd.f32 0.0, %v591
  %v593 = vpop.f32.mrf.mxu0
  %v594 = vpop.f32.mrf.mxu0
  %v595 = vadd.f32 0.0, %v594
  %v596 = vpop.f32.mrf.mxu0
  %597 = vmatprep.mubr.bf16.mxu0 0
  %598 = vmatmul.mubr.bf16.gmra.mxu0 %v345
  %v599 = vpop.f32.mrf.mxu0
  %v600 = vadd.f32 0.0, %v599
  %v601 = vpop.f32.mrf.mxu0
  %v602 = vpop.f32.mrf.mxu0
  %v603 = vadd.f32 0.0, %v602
  %v604 = vpop.f32.mrf.mxu0
  %605 = vmatprep.mubr.bf16.mxu0 0
  %606 = vmatmul.mubr.bf16.gmra.mxu0 %v348
  %v607 = vpop.f32.mrf.mxu0
  %v608 = vadd.f32 0.0, %v607
  %v609 = vpop.f32.mrf.mxu0
  %v610 = vpop.f32.mrf.mxu0
  %v611 = vadd.f32 0.0, %v610
  %v612 = vpop.f32.mrf.mxu0
  %613 = vmatprep.mubr.bf16.mxu0 0
  %614 = vmatmul.mubr.bf16.gmra.mxu0 %v351
  %v615 = vpop.f32.mrf.mxu0
  %v616 = vadd.f32 0.0, %v615
  %v617 = vpop.f32.mrf.mxu0
  %v618 = vpop.f32.mrf.mxu0
  %v619 = vadd.f32 0.0, %v618
  %v620 = vpop.f32.mrf.mxu0
  %621 = vmatprep.mubr.bf16.mxu0 0
  %622 = vmatmul.mubr.bf16.gmra.mxu0 %v354
  %v623 = vpop.f32.mrf.mxu0
  %v624 = vadd.f32 0.0, %v623
  %v625 = vpop.f32.mrf.mxu0
  %v626 = vpop.f32.mrf.mxu0
  %v627 = vadd.f32 0.0, %v626
  %v628 = vpop.f32.mrf.mxu0
  %629 = vmatprep.mubr.bf16.mxu0 0
  %630 = vmatmul.mubr.bf16.gmra.mxu0 %v357
  %v631 = vpop.f32.mrf.mxu0
  %v632 = vadd.f32 0.0, %v631
  %v633 = vpop.f32.mrf.mxu0
  %v634 = vpop.f32.mrf.mxu0
  %v635 = vadd.f32 0.0, %v634
  %v636 = vpop.f32.mrf.mxu0
  %637 = vmatprep.mubr.bf16.mxu0 0
  %638 = vmatmul.mubr.bf16.gmra.mxu0 %v360
  %v639 = vpop.f32.mrf.mxu0
  %v640 = vadd.f32 0.0, %v639
  %v641 = vpop.f32.mrf.mxu0
  %v642 = vpop.f32.mrf.mxu0
  %v643 = vadd.f32 0.0, %v642
  %v644 = vpop.f32.mrf.mxu0
  %645 = vmatprep.mubr.bf16.mxu0 0
  %646 = vmatmul.mubr.bf16.gmra.mxu0 %v363
  %v647 = vpop.f32.mrf.mxu0
  %v648 = vadd.f32 0.0, %v647
  %v649 = vpop.f32.mrf.mxu0
  %v650 = vpop.f32.mrf.mxu0
  %v651 = vadd.f32 0.0, %v650
  %v652 = vpop.f32.mrf.mxu0
  %653 = vdwg.mxu0
  %v654 = vmul.f32 %v400, 0.999995
  %v655 = vmul.f32 %v403, 0.999995
  %v656 = vmul.f32 %v408, 0.999995
  %v657 = vmul.f32 %v411, 0.999995
  %v658 = vmul.f32 %v416, 0.999995
  %v659 = vmul.f32 %v419, 0.999995
  %v660 = vmul.f32 %v424, 0.999995
  %v661 = vmul.f32 %v427, 0.999995
  %v662 = vmul.f32 %v432, 0.999995
  %v663 = vmul.f32 %v435, 0.999995
  %v664 = vmul.f32 %v440, 0.999995
  %v665 = vmul.f32 %v443, 0.999995
  %v666 = vmul.f32 %v448, 0.999995
  %v667 = vmul.f32 %v451, 0.999995
  %v668 = vmul.f32 %v456, 0.999995
  %v669 = vmul.f32 %v459, 0.999995
  %v670 = vmul.f32 %v464, 0.999995
  %v671 = vmul.f32 %v467, 0.999995
  %v672 = vmul.f32 %v472, 0.999995
  %v673 = vmul.f32 %v475, 0.999995
  %v674 = vmul.f32 %v480, 0.999995
  %v675 = vmul.f32 %v483, 0.999995
  %v676 = vmul.f32 %v488, 0.999995
  %v677 = vmul.f32 %v491, 0.999995
  %v678 = vmul.f32 %v496, 0.999995
  %v679 = vmul.f32 %v499, 0.999995
  %v680 = vmul.f32 %v504, 0.999995
  %v681 = vmul.f32 %v507, 0.999995
  %v682 = vmul.f32 %v512, 0.999995
  %v683 = vmul.f32 %v515, 0.999995
  %v684 = vmul.f32 %v520, 0.999995
  %v685 = vmul.f32 %v523, 0.999995
  %v686 = vmul.f32 %v528, 0.999995
  %v687 = vmul.f32 %v531, 0.999995
  %v688 = vmul.f32 %v536, 0.999995
  %v689 = vmul.f32 %v539, 0.999995
  %v690 = vmul.f32 %v544, 0.999995
  %v691 = vmul.f32 %v547, 0.999995
  %v692 = vmul.f32 %v552, 0.999995
  %v693 = vmul.f32 %v555, 0.999995
  %v694 = vmul.f32 %v560, 0.999995
  %v695 = vmul.f32 %v563, 0.999995
  %v696 = vmul.f32 %v568, 0.999995
  %v697 = vmul.f32 %v571, 0.999995
  %v698 = vmul.f32 %v576, 0.999995
  %v699 = vmul.f32 %v579, 0.999995
  %v700 = vmul.f32 %v584, 0.999995
  %v701 = vmul.f32 %v587, 0.999995
  %v702 = vmul.f32 %v592, 0.999995
  %v703 = vmul.f32 %v595, 0.999995
  %v704 = vmul.f32 %v600, 0.999995
  %v705 = vmul.f32 %v603, 0.999995
  %v706 = vmul.f32 %v608, 0.999995
  %v707 = vmul.f32 %v611, 0.999995
  %v708 = vmul.f32 %v616, 0.999995
  %v709 = vmul.f32 %v619, 0.999995
  %v710 = vmul.f32 %v624, 0.999995
  %v711 = vmul.f32 %v627, 0.999995
  %v712 = vmul.f32 %v632, 0.999995
  %v713 = vmul.f32 %v635, 0.999995
  %v714 = vmul.f32 %v640, 0.999995
  %v715 = vmul.f32 %v643, 0.999995
  %v716 = vmul.f32 %v648, 0.999995
  %v717 = vmul.f32 %v651, 0.999995
  %v718 = vpack.c.bf16 %v655, %v654
  %v719 = vpack.c.bf16 %v657, %v656
  %v720 = vpack.c.bf16 %v659, %v658
  %v721 = vpack.c.bf16 %v661, %v660
  %v722 = vpack.c.bf16 %v663, %v662
  %v723 = vpack.c.bf16 %v665, %v664
  %v724 = vpack.c.bf16 %v667, %v666
  %v725 = vpack.c.bf16 %v669, %v668
  %v726 = vpack.c.bf16 %v671, %v670
  %v727 = vpack.c.bf16 %v673, %v672
  %v728 = vpack.c.bf16 %v675, %v674
  %v729 = vpack.c.bf16 %v677, %v676
  %v730 = vpack.c.bf16 %v679, %v678
  %v731 = vpack.c.bf16 %v681, %v680
  %v732 = vpack.c.bf16 %v683, %v682
  %v733 = vpack.c.bf16 %v685, %v684
  %v734 = vpack.c.bf16 %v687, %v686
  %v735 = vpack.c.bf16 %v689, %v688
  %v736 = vpack.c.bf16 %v691, %v690
  %v737 = vpack.c.bf16 %v693, %v692
  %v738 = vpack.c.bf16 %v695, %v694
  %v739 = vpack.c.bf16 %v697, %v696
  %v740 = vpack.c.bf16 %v699, %v698
  %v741 = vpack.c.bf16 %v701, %v700
  %v742 = vpack.c.bf16 %v703, %v702
  %v743 = vpack.c.bf16 %v705, %v704
  %v744 = vpack.c.bf16 %v707, %v706
  %v745 = vpack.c.bf16 %v709, %v708
  %v746 = vpack.c.bf16 %v711, %v710
  %v747 = vpack.c.bf16 %v713, %v712
  %v748 = vpack.c.bf16 %v715, %v714
  %v749 = vpack.c.bf16 %v717, %v716
  %v782 = vunpack.c.l.b16 %v718
  %v783 = vunpack.c.h.b16 %v718
  %v784 = vunpack.c.l.b16 %v719
  %v785 = vunpack.c.h.b16 %v719
  %v786 = vunpack.c.l.b16 %v720
  %v787 = vunpack.c.h.b16 %v720
  %v788 = vunpack.c.l.b16 %v721
  %v789 = vunpack.c.h.b16 %v721
  %v790 = vunpack.c.l.b16 %v722
  %v791 = vunpack.c.h.b16 %v722
  %v792 = vunpack.c.l.b16 %v723
  %v793 = vunpack.c.h.b16 %v723
  %v794 = vunpack.c.l.b16 %v724
  %v795 = vunpack.c.h.b16 %v724
  %v796 = vunpack.c.l.b16 %v725
  %v797 = vunpack.c.h.b16 %v725
  %v798 = vunpack.c.l.b16 %v726
  %v799 = vunpack.c.h.b16 %v726
  %v800 = vunpack.c.l.b16 %v727
  %v801 = vunpack.c.h.b16 %v727
  %v802 = vunpack.c.l.b16 %v728
  %v803 = vunpack.c.h.b16 %v728
  %v804 = vunpack.c.l.b16 %v729
  %v805 = vunpack.c.h.b16 %v729
  %v806 = vunpack.c.l.b16 %v730
  %v807 = vunpack.c.h.b16 %v730
  %v808 = vunpack.c.l.b16 %v731
  %v809 = vunpack.c.h.b16 %v731
  %v810 = vunpack.c.l.b16 %v732
  %v811 = vunpack.c.h.b16 %v732
  %v812 = vunpack.c.l.b16 %v733
  %v813 = vunpack.c.h.b16 %v733
  %v814 = vunpack.c.l.b16 %v734
  %v815 = vunpack.c.h.b16 %v734
  %v816 = vunpack.c.l.b16 %v735
  %v817 = vunpack.c.h.b16 %v735
  %v818 = vunpack.c.l.b16 %v736
  %v819 = vunpack.c.h.b16 %v736
  %v820 = vunpack.c.l.b16 %v737
  %v821 = vunpack.c.h.b16 %v737
  %v822 = vunpack.c.l.b16 %v738
  %v823 = vunpack.c.h.b16 %v738
  %v824 = vunpack.c.l.b16 %v739
  %v825 = vunpack.c.h.b16 %v739
  %v826 = vunpack.c.l.b16 %v740
  %v827 = vunpack.c.h.b16 %v740
  %v828 = vunpack.c.l.b16 %v741
  %v829 = vunpack.c.h.b16 %v741
  %v830 = vunpack.c.l.b16 %v742
  %v831 = vunpack.c.h.b16 %v742
  %v832 = vunpack.c.l.b16 %v743
  %v833 = vunpack.c.h.b16 %v743
  %v834 = vunpack.c.l.b16 %v744
  %v835 = vunpack.c.h.b16 %v744
  %v836 = vunpack.c.l.b16 %v745
  %v837 = vunpack.c.h.b16 %v745
  %v838 = vunpack.c.l.b16 %v746
  %v839 = vunpack.c.h.b16 %v746
  %v840 = vunpack.c.l.b16 %v747
  %v841 = vunpack.c.h.b16 %v747
  %v842 = vunpack.c.l.b16 %v748
  %v843 = vunpack.c.h.b16 %v748
  %v844 = vunpack.c.l.b16 %v749
  %v845 = vunpack.c.h.b16 %v749
  %v846 = vpack.c.b16 %v782, %v782
  %v847 = vpack.c.b16 %v783, %v783
  %v848 = vpack.c.b16 %v784, %v784
  %v849 = vpack.c.b16 %v785, %v785
  %v850 = vpack.c.b16 %v786, %v786
  %v851 = vpack.c.b16 %v787, %v787
  %v852 = vpack.c.b16 %v788, %v788
  %v853 = vpack.c.b16 %v789, %v789
  %v854 = vpack.c.b16 %v790, %v790
  %v855 = vpack.c.b16 %v791, %v791
  %v856 = vpack.c.b16 %v792, %v792
  %v857 = vpack.c.b16 %v793, %v793
  %v858 = vpack.c.b16 %v794, %v794
  %v859 = vpack.c.b16 %v795, %v795
  %v860 = vpack.c.b16 %v796, %v796
  %v861 = vpack.c.b16 %v797, %v797
  %v862 = vpack.c.b16 %v798, %v798
  %v863 = vpack.c.b16 %v799, %v799
  %v864 = vpack.c.b16 %v800, %v800
  %v865 = vpack.c.b16 %v801, %v801
  %v866 = vpack.c.b16 %v802, %v802
  %v867 = vpack.c.b16 %v803, %v803
  %v868 = vpack.c.b16 %v804, %v804
  %v869 = vpack.c.b16 %v805, %v805
  %v870 = vpack.c.b16 %v806, %v806
  %v871 = vpack.c.b16 %v807, %v807
  %v872 = vpack.c.b16 %v808, %v808
  %v873 = vpack.c.b16 %v809, %v809
  %v874 = vpack.c.b16 %v810, %v810
  %v875 = vpack.c.b16 %v811, %v811
  %v876 = vpack.c.b16 %v812, %v812
  %v877 = vpack.c.b16 %v813, %v813
  %v878 = vpack.c.b16 %v814, %v814
  %v879 = vpack.c.b16 %v815, %v815
  %v880 = vpack.c.b16 %v816, %v816
  %v881 = vpack.c.b16 %v817, %v817
  %v882 = vpack.c.b16 %v818, %v818
  %v883 = vpack.c.b16 %v819, %v819
  %v884 = vpack.c.b16 %v820, %v820
  %v885 = vpack.c.b16 %v821, %v821
  %v886 = vpack.c.b16 %v822, %v822
  %v887 = vpack.c.b16 %v823, %v823
  %v888 = vpack.c.b16 %v824, %v824
  %v889 = vpack.c.b16 %v825, %v825
  %v890 = vpack.c.b16 %v826, %v826
  %v891 = vpack.c.b16 %v827, %v827
  %v892 = vpack.c.b16 %v828, %v828
  %v893 = vpack.c.b16 %v829, %v829
  %v894 = vpack.c.b16 %v830, %v830
  %v895 = vpack.c.b16 %v831, %v831
  %v896 = vpack.c.b16 %v832, %v832
  %v897 = vpack.c.b16 %v833, %v833
  %v898 = vpack.c.b16 %v834, %v834
  %v899 = vpack.c.b16 %v835, %v835
  %v900 = vpack.c.b16 %v836, %v836
  %v901 = vpack.c.b16 %v837, %v837
  %v902 = vpack.c.b16 %v838, %v838
  %v903 = vpack.c.b16 %v839, %v839
  %v904 = vpack.c.b16 %v840, %v840
  %v905 = vpack.c.b16 %v841, %v841
  %v906 = vpack.c.b16 %v842, %v842
  %v907 = vpack.c.b16 %v843, %v843
  %v908 = vpack.c.b16 %v844, %v844
  %v909 = vpack.c.b16 %v845, %v845
  %974 = vst [vmem:[%s2] sm:$0xf] %v846
  %975 = vst [vmem:[%s2 + $0x4] sm:$0xf] %v847
  %976 = vst [vmem:[%s2 + $0x8] sm:$0xf] %v848
  %977 = vst [vmem:[%s2 + $0xc] sm:$0xf] %v849
  %978 = vst [vmem:[%s2 + $0x10] sm:$0xf] %v850
  %979 = vst [vmem:[%s2 + $0x14] sm:$0xf] %v851
  %980 = vst [vmem:[%s2 + $0x18] sm:$0xf] %v852
  %981 = vst [vmem:[%s2 + $0x1c] sm:$0xf] %v853
  %982 = vst [vmem:[%s2 + $0x20] sm:$0xf] %v854
  %983 = vst [vmem:[%s2 + $0x24] sm:$0xf] %v855
  %984 = vst [vmem:[%s2 + $0x28] sm:$0xf] %v856
  %985 = vst [vmem:[%s2 + $0x2c] sm:$0xf] %v857
  %986 = vst [vmem:[%s2 + $0x30] sm:$0xf] %v858
  %987 = vst [vmem:[%s2 + $0x34] sm:$0xf] %v859
  %988 = vst [vmem:[%s2 + $0x38] sm:$0xf] %v860
  %989 = vst [vmem:[%s2 + $0x3c] sm:$0xf] %v861
  %990 = vst [vmem:[%s2 + $0x40] sm:$0xf] %v862
  %991 = vst [vmem:[%s2 + $0x44] sm:$0xf] %v863
  %992 = vst [vmem:[%s2 + $0x48] sm:$0xf] %v864
  %993 = vst [vmem:[%s2 + $0x4c] sm:$0xf] %v865
  %994 = vst [vmem:[%s2 + $0x50] sm:$0xf] %v866
  %995 = vst [vmem:[%s2 + $0x54] sm:$0xf] %v867
  %996 = vst [vmem:[%s2 + $0x58] sm:$0xf] %v868
  %997 = vst [vmem:[%s2 + $0x5c] sm:$0xf] %v869
  %998 = vst [vmem:[%s2 + $0x60] sm:$0xf] %v870
  %999 = vst [vmem:[%s2 + $0x64] sm:$0xf] %v871
  %1000 = vst [vmem:[%s2 + $0x68] sm:$0xf] %v872
  %1001 = vst [vmem:[%s2 + $0x6c] sm:$0xf] %v873
  %1002 = vst [vmem:[%s2 + $0x70] sm:$0xf] %v874
  %1003 = vst [vmem:[%s2 + $0x74] sm:$0xf] %v875
  %1004 = vst [vmem:[%s2 + $0x78] sm:$0xf] %v876
  %1005 = vst [vmem:[%s2 + $0x7c] sm:$0xf] %v877
  %1006 = vst [vmem:[%s2 + $0x80] sm:$0xf] %v878
  %1007 = vst [vmem:[%s2 + $0x84] sm:$0xf] %v879
  %1008 = vst [vmem:[%s2 + $0x88] sm:$0xf] %v880
  %1009 = vst [vmem:[%s2 + $0x8c] sm:$0xf] %v881
  %1010 = vst [vmem:[%s2 + $0x90] sm:$0xf] %v882
  %1011 = vst [vmem:[%s2 + $0x94] sm:$0xf] %v883
  %1012 = vst [vmem:[%s2 + $0x98] sm:$0xf] %v884
  %1013 = vst [vmem:[%s2 + $0x9c] sm:$0xf] %v885
  %1014 = vst [vmem:[%s2 + $0xa0] sm:$0xf] %v886
  %1015 = vst [vmem:[%s2 + $0xa4] sm:$0xf] %v887
  %1016 = vst [vmem:[%s2 + $0xa8] sm:$0xf] %v888
  %1017 = vst [vmem:[%s2 + $0xac] sm:$0xf] %v889
  %1018 = vst [vmem:[%s2 + $0xb0] sm:$0xf] %v890
  %1019 = vst [vmem:[%s2 + $0xb4] sm:$0xf] %v891
  %1020 = vst [vmem:[%s2 + $0xb8] sm:$0xf] %v892
  %1021 = vst [vmem:[%s2 + $0xbc] sm:$0xf] %v893
  %1022 = vst [vmem:[%s2 + $0xc0] sm:$0xf] %v894
  %1023 = vst [vmem:[%s2 + $0xc4] sm:$0xf] %v895
  %1024 = vst [vmem:[%s2 + $0xc8] sm:$0xf] %v896
  %1025 = vst [vmem:[%s2 + $0xcc] sm:$0xf] %v897
  %1026 = vst [vmem:[%s2 + $0xd0] sm:$0xf] %v898
  %1027 = vst [vmem:[%s2 + $0xd4] sm:$0xf] %v899
  %1028 = vst [vmem:[%s2 + $0xd8] sm:$0xf] %v900
  %1029 = vst [vmem:[%s2 + $0xdc] sm:$0xf] %v901
  %1030 = vst [vmem:[%s2 + $0xe0] sm:$0xf] %v902
  %1031 = vst [vmem:[%s2 + $0xe4] sm:$0xf] %v903
  %1032 = vst [vmem:[%s2 + $0xe8] sm:$0xf] %v904
  %1033 = vst [vmem:[%s2 + $0xec] sm:$0xf] %v905
  %1034 = vst [vmem:[%s2 + $0xf0] sm:$0xf] %v906
  %1035 = vst [vmem:[%s2 + $0xf4] sm:$0xf] %v907
  %1036 = vst [vmem:[%s2 + $0xf8] sm:$0xf] %v908
  %1037 = vst [vmem:[%s2 + $0xfc] sm:$0xf] %v909
  // Predicated region
  $region10: #{skunit_forward.6} parent=0 // pred_check
    _
  $region11: #{skunit_forward.6} parent=0 // pred_check_branch
    %1039 = sbr.rel (0) target = $region13
  $region12: #{skunit_forward.6} parent=0 // pred_region
    _
  $region13: #{skunit_forward.6} parent=0 // pred_fallthru
    _
  // Predicated region
  $region14: #{skunit_forward.6} parent=0 // pred_check
    _
  $region15: #{skunit_forward.6} parent=0 // pred_check_branch
    %1041 = sbr.rel (0) target = $region17
  $region16: #{skunit_forward.6} parent=0 // pred_region
    _
  $region17: #{skunit_forward.6} parent=0 // pred_fallthru
    _

// kernel: skunit_forward.7
$region0: #{skunit_forward.7}
  #allocation0 [shape = 'u32[]', space=smem, size = 0x4, offset = 0x4, fixed_abs, tag = 'smem constant byte address 0x4 - core index']
  #allocation1 [shape = 'u32[144,128]{1,0:T(1,128)}', space=vmem, size = 0x12000, scoped, tag = 'internal scratch']
  %s0 = inlined_call_operand.vmem [shape: bf16[512,64], index: 0, kind: input, shape index: {}]
  %s1 = inlined_call_operand.vmem [shape: bf16[64,128], index: 1, kind: input, shape index: {}]
  %s2 = inlined_call_operand.vmem [shape: bf16[512,128], index: 2, kind: input, shape index: {}]
  %s3 = inlined_call_operand.hbm [shape: f32[512,128], index: 3, kind: output, shape index: {}]
  %s4 = sld [smem:[#allocation0]]
  $region22: #{skunit_forward.7} parent=0
    _
  %s6 = ssub.s32 1, %s4
  %s7 = scalar_select 0, %s6, %s4
  $region1: #{skunit_forward.7} parent=0
    #allocation2 [shape = 'u8[262144]{0}', space=vmem, size = 0x40000, scoped, tag = 'output window, operand 0, single buffered']
    #allocation3 [shape = 's32[1]{0}', space=sflag, size = 0x4, scoped, tag = 'scoped memory for skunit_forward.7']
    %8 = vsyncpa [#allocation3], 0
    // Predicated region
    $region2: #{skunit_forward.7} parent=1 // pred_check
      _
    $region3: #{skunit_forward.7} parent=1 // pred_check_branch
      %10 = sbr.rel (0) target = $region5
    $region4: #{skunit_forward.7} parent=1 // pred_region
      _
    $region5: #{skunit_forward.7} parent=1 // pred_fallthru
      _
    // Predicated region
    $region6: #{skunit_forward.7} parent=1 // pred_check
      _
    $region7: #{skunit_forward.7} parent=1 // pred_check_branch
      %12 = sbr.rel (0) target = $region9
    $region8: #{skunit_forward.7} parent=1 // pred_region
      _
    $region9: #{skunit_forward.7} parent=1 // pred_fallthru
      _
    // Predicated region
    $region10: #{skunit_forward.7} parent=1 // pred_check
      _
    $region11: #{skunit_forward.7} parent=1 // pred_check_branch
      %14 = sbr.rel (0) target = $region13
    $region12: #{skunit_forward.7} parent=1 // pred_region
      _
    $region13: #{skunit_forward.7} parent=1 // pred_fallthru
      _
    %v16 = vld [vmem:[%s0] sm:$0xf]
    %v17 = vld [vmem:[%s0 + $0x4] sm:$0xf]
    %v18 = vld [vmem:[%s0 + $0x8] sm:$0xf]
    %v19 = vld [vmem:[%s0 + $0xc] sm:$0xf]
    %v20 = vld [vmem:[%s0 + $0x10] sm:$0xf]
    %v21 = vld [vmem:[%s0 + $0x14] sm:$0xf]
    %v22 = vld [vmem:[%s0 + $0x18] sm:$0xf]
    %v23 = vld [vmem:[%s0 + $0x1c] sm:$0xf]
    %v24 = vld [vmem:[%s0 + $0x20] sm:$0xf]
    %v25 = vld [vmem:[%s0 + $0x24] sm:$0xf]
    %v26 = vld [vmem:[%s0 + $0x28] sm:$0xf]
    %v27 = vld [vmem:[%s0 + $0x2c] sm:$0xf]
    %v28 = vld [vmem:[%s0 + $0x30] sm:$0xf]
    %v29 = vld [vmem:[%s0 + $0x34] sm:$0xf]
    %v30 = vld [vmem:[%s0 + $0x38] sm:$0xf]
    %v31 = vld [vmem:[%s0 + $0x3c] sm:$0xf]
    %v32 = vld [vmem:[%s0 + $0x40] sm:$0xf]
    %v33 = vld [vmem:[%s0 + $0x44] sm:$0xf]
    %v34 = vld [vmem:[%s0 + $0x48] sm:$0xf]
    %v35 = vld [vmem:[%s0 + $0x4c] sm:$0xf]
    %v36 = vld [vmem:[%s0 + $0x50] sm:$0xf]
    %v37 = vld [vmem:[%s0 + $0x54] sm:$0xf]
    %v38 = vld [vmem:[%s0 + $0x58] sm:$0xf]
    %v39 = vld [vmem:[%s0 + $0x5c] sm:$0xf]
    %v40 = vld [vmem:[%s0 + $0x60] sm:$0xf]
    %v41 = vld [vmem:[%s0 + $0x64] sm:$0xf]
    %v42 = vld [vmem:[%s0 + $0x68] sm:$0xf]
    %v43 = vld [vmem:[%s0 + $0x6c] sm:$0xf]
    %v44 = vld [vmem:[%s0 + $0x70] sm:$0xf]
    %v45 = vld [vmem:[%s0 + $0x74] sm:$0xf]
    %v46 = vld [vmem:[%s0 + $0x78] sm:$0xf]
    %v47 = vld [vmem:[%s0 + $0x7c] sm:$0xf]
    %v48 = vld [vmem:[%s0 + $0x80] sm:$0xf]
    %v49 = vld [vmem:[%s0 + $0x84] sm:$0xf]
    %v50 = vld [vmem:[%s0 + $0x88] sm:$0xf]
    %v51 = vld [vmem:[%s0 + $0x8c] sm:$0xf]
    %v52 = vld [vmem:[%s0 + $0x90] sm:$0xf]
    %v53 = vld [vmem:[%s0 + $0x94] sm:$0xf]
    %v54 = vld [vmem:[%s0 + $0x98] sm:$0xf]
    %v55 = vld [vmem:[%s0 + $0x9c] sm:$0xf]
    %v56 = vld [vmem:[%s0 + $0xa0] sm:$0xf]
    %v57 = vld [vmem:[%s0 + $0xa4] sm:$0xf]
    %v58 = vld [vmem:[%s0 + $0xa8] sm:$0xf]
    %v59 = vld [vmem:[%s0 + $0xac] sm:$0xf]
    %v60 = vld [vmem:[%s0 + $0xb0] sm:$0xf]
    %v61 = vld [vmem:[%s0 + $0xb4] sm:$0xf]
    %v62 = vld [vmem:[%s0 + $0xb8] sm:$0xf]
    %v63 = vld [vmem:[%s0 + $0xbc] sm:$0xf]
    %v64 = vld [vmem:[%s0 + $0xc0] sm:$0xf]
    %v65 = vld [vmem:[%s0 + $0xc4] sm:$0xf]
    %v66 = vld [vmem:[%s0 + $0xc8] sm:$0xf]
    %v67 = vld [vmem:[%s0 + $0xcc] sm:$0xf]
    %v68 = vld [vmem:[%s0 + $0xd0] sm:$0xf]
    %v69 = vld [vmem:[%s0 + $0xd4] sm:$0xf]
    %v70 = vld [vmem:[%s0 + $0xd8] sm:$0xf]
    %v71 = vld [vmem:[%s0 + $0xdc] sm:$0xf]
    %v72 = vld [vmem:[%s0 + $0xe0] sm:$0xf]
    %v73 = vld [vmem:[%s0 + $0xe4] sm:$0xf]
    %v74 = vld [vmem:[%s0 + $0xe8] sm:$0xf]
    %v75 = vld [vmem:[%s0 + $0xec] sm:$0xf]
    %v76 = vld [vmem:[%s0 + $0xf0] sm:$0xf]
    %v77 = vld [vmem:[%s0 + $0xf4] sm:$0xf]
    %v78 = vld [vmem:[%s0 + $0xf8] sm:$0xf]
    %v79 = vld [vmem:[%s0 + $0xfc] sm:$0xf]
    %v80 = vld [vmem:[%s1] sm:$0xf]
    %v81 = vld [vmem:[%s1 + $0x4] sm:$0xf]
    %v82 = vld [vmem:[%s1 + $0x8] sm:$0xf]
    %v83 = vld [vmem:[%s1 + $0xc] sm:$0xf]
    %v84 = vld [vmem:[%s1 + $0x10] sm:$0xf]
    %v85 = vld [vmem:[%s1 + $0x14] sm:$0xf]
    %v86 = vld [vmem:[%s1 + $0x18] sm:$0xf]
    %v87 = vld [vmem:[%s1 + $0x1c] sm:$0xf]
    %v152 = vunpack.c.l.b16 %v16
    %v153 = vunpack.c.l.b16 %v17
    %v154 = vunpack.c.l.b16 %v18
    %v155 = vunpack.c.l.b16 %v19
    %v156 = vunpack.c.l.b16 %v20
    %v157 = vunpack.c.l.b16 %v21
    %v158 = vunpack.c.l.b16 %v22
    %v159 = vunpack.c.l.b16 %v23
    %v160 = vunpack.c.l.b16 %v24
    %v161 = vunpack.c.l.b16 %v25
    %v162 = vunpack.c.l.b16 %v26
    %v163 = vunpack.c.l.b16 %v27
    %v164 = vunpack.c.l.b16 %v28
    %v165 = vunpack.c.l.b16 %v29
    %v166 = vunpack.c.l.b16 %v30
    %v167 = vunpack.c.l.b16 %v31
    %v168 = vunpack.c.l.b16 %v32
    %v169 = vunpack.c.l.b16 %v33
    %v170 = vunpack.c.l.b16 %v34
    %v171 = vunpack.c.l.b16 %v35
    %v172 = vunpack.c.l.b16 %v36
    %v173 = vunpack.c.l.b16 %v37
    %v174 = vunpack.c.l.b16 %v38
    %v175 = vunpack.c.l.b16 %v39
    %v176 = vunpack.c.l.b16 %v40
    %v177 = vunpack.c.l.b16 %v41
    %v178 = vunpack.c.l.b16 %v42
    %v179 = vunpack.c.l.b16 %v43
    %v180 = vunpack.c.l.b16 %v44
    %v181 = vunpack.c.l.b16 %v45
    %v182 = vunpack.c.l.b16 %v46
    %v183 = vunpack.c.l.b16 %v47
    %v184 = vunpack.c.l.b16 %v48
    %v185 = vunpack.c.l.b16 %v49
    %v186 = vunpack.c.l.b16 %v50
    %v187 = vunpack.c.l.b16 %v51
    %v188 = vunpack.c.l.b16 %v52
    %v189 = vunpack.c.l.b16 %v53
    %v190 = vunpack.c.l.b16 %v54
    %v191 = vunpack.c.l.b16 %v55
    %v192 = vunpack.c.l.b16 %v56
    %v193 = vunpack.c.l.b16 %v57
    %v194 = vunpack.c.l.b16 %v58
    %v195 = vunpack.c.l.b16 %v59
    %v196 = vunpack.c.l.b16 %v60
    %v197 = vunpack.c.l.b16 %v61
    %v198 = vunpack.c.l.b16 %v62
    %v199 = vunpack.c.l.b16 %v63
    %v200 = vunpack.c.l.b16 %v64
    %v201 = vunpack.c.l.b16 %v65
    %v202 = vunpack.c.l.b16 %v66
    %v203 = vunpack.c.l.b16 %v67
    %v204 = vunpack.c.l.b16 %v68
    %v205 = vunpack.c.l.b16 %v69
    %v206 = vunpack.c.l.b16 %v70
    %v207 = vunpack.c.l.b16 %v71
    %v208 = vunpack.c.l.b16 %v72
    %v209 = vunpack.c.l.b16 %v73
    %v210 = vunpack.c.l.b16 %v74
    %v211 = vunpack.c.l.b16 %v75
    %v212 = vunpack.c.l.b16 %v76
    %v213 = vunpack.c.l.b16 %v77
    %v214 = vunpack.c.l.b16 %v78
    %v215 = vunpack.c.l.b16 %v79
    %v216 = vpack.c.b16 %v153, %v152
    %v217 = vpack.c.b16 %v155, %v154
    %v218 = vpack.c.b16 %v157, %v156
    %v219 = vpack.c.b16 %v159, %v158
    %v220 = vpack.c.b16 %v161, %v160
    %v221 = vpack.c.b16 %v163, %v162
    %v222 = vpack.c.b16 %v165, %v164
    %v223 = vpack.c.b16 %v167, %v166
    %v224 = vpack.c.b16 %v169, %v168
    %v225 = vpack.c.b16 %v171, %v170
    %v226 = vpack.c.b16 %v173, %v172
    %v227 = vpack.c.b16 %v175, %v174
    %v228 = vpack.c.b16 %v177, %v176
    %v229 = vpack.c.b16 %v179, %v178
    %v230 = vpack.c.b16 %v181, %v180
    %v231 = vpack.c.b16 %v183, %v182
    %v232 = vpack.c.b16 %v185, %v184
    %v233 = vpack.c.b16 %v187, %v186
    %v234 = vpack.c.b16 %v189, %v188
    %v235 = vpack.c.b16 %v191, %v190
    %v236 = vpack.c.b16 %v193, %v192
    %v237 = vpack.c.b16 %v195, %v194
    %v238 = vpack.c.b16 %v197, %v196
    %v239 = vpack.c.b16 %v199, %v198
    %v240 = vpack.c.b16 %v201, %v200
    %v241 = vpack.c.b16 %v203, %v202
    %v242 = vpack.c.b16 %v205, %v204
    %v243 = vpack.c.b16 %v207, %v206
    %v244 = vpack.c.b16 %v209, %v208
    %v245 = vpack.c.b16 %v211, %v210
    %v246 = vpack.c.b16 %v213, %v212
    %v247 = vpack.c.b16 %v215, %v214
    %v256 = vunpack.c.l.b16 %v80
    %v257 = vunpack.c.l.b16 %v81
    %v258 = vunpack.c.l.b16 %v82
    %v259 = vunpack.c.l.b16 %v83
    %v260 = vunpack.c.l.b16 %v84
    %v261 = vunpack.c.l.b16 %v85
    %v262 = vunpack.c.l.b16 %v86
    %v263 = vunpack.c.l.b16 %v87
    %v264 = vpack.c.b16 %v257, %v256
    %v265 = vpack.c.b16 %v259, %v258
    %v266 = vpack.c.b16 %v261, %v260
    %v267 = vpack.c.b16 %v263, %v262
    %vm272 = vcmask 523264
    %v274 = vsel %vm272, %v216, 0
    %v277 = vsel %vm272, %v217, 0
    %v280 = vsel %vm272, %v218, 0
    %v283 = vsel %vm272, %v219, 0
    %v286 = vsel %vm272, %v220, 0
    %v289 = vsel %vm272, %v221, 0
    %v292 = vsel %vm272, %v222, 0
    %v295 = vsel %vm272, %v223, 0
    %v298 = vsel %vm272, %v224, 0
    %v301 = vsel %vm272, %v225, 0
    %v304 = vsel %vm272, %v226, 0
    %v307 = vsel %vm272, %v227, 0
    %v310 = vsel %vm272, %v228, 0
    %v313 = vsel %vm272, %v229, 0
    %v316 = vsel %vm272, %v230, 0
    %v319 = vsel %vm272, %v231, 0
    %v322 = vsel %vm272, %v232, 0
    %v325 = vsel %vm272, %v233, 0
    %v328 = vsel %vm272, %v234, 0
    %v331 = vsel %vm272, %v235, 0
    %v334 = vsel %vm272, %v236, 0
    %v337 = vsel %vm272, %v237, 0
    %v340 = vsel %vm272, %v238, 0
    %v343 = vsel %vm272, %v239, 0
    %v346 = vsel %vm272, %v240, 0
    %v349 = vsel %vm272, %v241, 0
    %v352 = vsel %vm272, %v242, 0
    %v355 = vsel %vm272, %v243, 0
    %v358 = vsel %vm272, %v244, 0
    %v361 = vsel %vm272, %v245, 0
    %v364 = vsel %vm272, %v246, 0
    %v367 = vsel %vm272, %v247, 0
    %369 = vmatprep.subr.bf16.mxu0 0
    %370 = vmatpush1.bf16.msra.mxu0 0
    %371 = vmatprep.subr.bf16.mxu0 0
    %372 = vmatpush1.bf16.msra.mxu0 0
    %373 = vmatprep.subr.bf16.mxu0 0
    %374 = vmatpush1.bf16.msra.mxu0 0
    %375 = vmatprep.subr.bf16.mxu0 0
    %376 = vmatpush1.bf16.msra.mxu0 0
    %377 = vmatprep.subr.bf16.mxu0 0
    %378 = vmatpush1.bf16.msra.mxu0 %v267
    %379 = vmatprep.subr.bf16.mxu0 0
    %380 = vmatpush1.bf16.msra.mxu0 %v266
    %381 = vmatprep.subr.bf16.mxu0 0
    %382 = vmatpush1.bf16.msra.mxu0 %v265
    %383 = vmatprep.subr.bf16.mxu0 0
    %384 = vmatpush1.bf16.msra.mxu0 %v264
    %385 = vmatprep.subr.bf16.mxu0 0
    %386 = vmatpush2.bf16.msra.mxu0 0
    %387 = vmatprep.subr.bf16.mxu0 0
    %388 = vmatpush2.bf16.msra.mxu0 0
    %389 = vmatprep.subr.bf16.mxu0 0
    %390 = vmatpush2.bf16.msra.mxu0 0
    %391 = vmatprep.subr.bf16.mxu0 0
    %392 = vmatpush2.bf16.msra.mxu0 0
    %393 = vmatprep.subr.bf16.mxu0 0
    %394 = vmatpush2.bf16.msra.mxu0 0
    %395 = vmatprep.subr.bf16.mxu0 0
    %396 = vmatpush2.bf16.msra.mxu0 0
    %397 = vmatprep.subr.bf16.mxu0 0
    %398 = vmatpush2.bf16.msra.mxu0 0
    %399 = vmatprep.subr.bf16.mxu0 0
    %400 = vmatpush2.bf16.msra.mxu0 0
    %401 = vmatprep.mubr.bf16.mxu0 0
    %402 = vmatmul.mubr.bf16.gmra.mxu0 %v274
    %v403 = vpop.f32.mrf.mxu0
    %v404 = vadd.f32 0.0, %v403
    %v405 = vpop.f32.mrf.mxu0
    %v406 = vpop.f32.mrf.mxu0
    %v407 = vadd.f32 0.0, %v406
    %v408 = vpop.f32.mrf.mxu0
    %409 = vmatprep.mubr.bf16.mxu0 0
    %410 = vmatmul.mubr.bf16.gmra.mxu0 %v277
    %v411 = vpop.f32.mrf.mxu0
    %v412 = vadd.f32 0.0, %v411
    %v413 = vpop.f32.mrf.mxu0
    %v414 = vpop.f32.mrf.mxu0
    %v415 = vadd.f32 0.0, %v414
    %v416 = vpop.f32.mrf.mxu0
    %417 = vmatprep.mubr.bf16.mxu0 0
    %418 = vmatmul.mubr.bf16.gmra.mxu0 %v280
    %v419 = vpop.f32.mrf.mxu0
    %v420 = vadd.f32 0.0, %v419
    %v421 = vpop.f32.mrf.mxu0
    %v422 = vpop.f32.mrf.mxu0
    %v423 = vadd.f32 0.0, %v422
    %v424 = vpop.f32.mrf.mxu0
    %425 = vmatprep.mubr.bf16.mxu0 0
    %426 = vmatmul.mubr.bf16.gmra.mxu0 %v283
    %v427 = vpop.f32.mrf.mxu0
    %v428 = vadd.f32 0.0, %v427
    %v429 = vpop.f32.mrf.mxu0
    %v430 = vpop.f32.mrf.mxu0
    %v431 = vadd.f32 0.0, %v430
    %v432 = vpop.f32.mrf.mxu0
    %433 = vmatprep.mubr.bf16.mxu0 0
    %434 = vmatmul.mubr.bf16.gmra.mxu0 %v286
    %v435 = vpop.f32.mrf.mxu0
    %v436 = vadd.f32 0.0, %v435
    %v437 = vpop.f32.mrf.mxu0
    %v438 = vpop.f32.mrf.mxu0
    %v439 = vadd.f32 0.0, %v438
    %v440 = vpop.f32.mrf.mxu0
    %441 = vmatprep.mubr.bf16.mxu0 0
    %442 = vmatmul.mubr.bf16.gmra.mxu0 %v289
    %v443 = vpop.f32.mrf.mxu0
    %v444 = vadd.f32 0.0, %v443
    %v445 = vpop.f32.mrf.mxu0
    %v446 = vpop.f32.mrf.mxu0
    %v447 = vadd.f32 0.0, %v446
    %v448 = vpop.f32.mrf.mxu0
    %449 = vmatprep.mubr.bf16.mxu0 0
    %450 = vmatmul.mubr.bf16.gmra.mxu0 %v292
    %v451 = vpop.f32.mrf.mxu0
    %v452 = vadd.f32 0.0, %v451
    %v453 = vpop.f32.mrf.mxu0
    %v454 = vpop.f32.mrf.mxu0
    %v455 = vadd.f32 0.0, %v454
    %v456 = vpop.f32.mrf.mxu0
    %457 = vmatprep.mubr.bf16.mxu0 0
    %458 = vmatmul.mubr.bf16.gmra.mxu0 %v295
    %v459 = vpop.f32.mrf.mxu0
    %v460 = vadd.f32 0.0, %v459
    %v461 = vpop.f32.mrf.mxu0
    %v462 = vpop.f32.mrf.mxu0
    %v463 = vadd.f32 0.0, %v462
    %v464 = vpop.f32.mrf.mxu0
    %465 = vmatprep.mubr.bf16.mxu0 0
    %466 = vmatmul.mubr.bf16.gmra.mxu0 %v298
    %v467 = vpop.f32.mrf.mxu0
    %v468 = vadd.f32 0.0, %v467
    %v469 = vpop.f32.mrf.mxu0
    %v470 = vpop.f32.mrf.mxu0
    %v471 = vadd.f32 0.0, %v470
    %v472 = vpop.f32.mrf.mxu0
    %473 = vmatprep.mubr.bf16.mxu0 0
    %474 = vmatmul.mubr.bf16.gmra.mxu0 %v301
    %v475 = vpop.f32.mrf.mxu0
    %v476 = vadd.f32 0.0, %v475
    %v477 = vpop.f32.mrf.mxu0
    %v478 = vpop.f32.mrf.mxu0
    %v479 = vadd.f32 0.0, %v478
    %v480 = vpop.f32.mrf.mxu0
    %481 = vmatprep.mubr.bf16.mxu0 0
    %482 = vmatmul.mubr.bf16.gmra.mxu0 %v304
    %v483 = vpop.f32.mrf.mxu0
    %v484 = vadd.f32 0.0, %v483
    %v485 = vpop.f32.mrf.mxu0
    %v486 = vpop.f32.mrf.mxu0
    %v487 = vadd.f32 0.0, %v486
    %v488 = vpop.f32.mrf.mxu0
    %489 = vmatprep.mubr.bf16.mxu0 0
    %490 = vmatmul.mubr.bf16.gmra.mxu0 %v307
    %v491 = vpop.f32.mrf.mxu0
    %v492 = vadd.f32 0.0, %v491
    %v493 = vpop.f32.mrf.mxu0
    %v494 = vpop.f32.mrf.mxu0
    %v495 = vadd.f32 0.0, %v494
    %v496 = vpop.f32.mrf.mxu0
    %497 = vmatprep.mubr.bf16.mxu0 0
    %498 = vmatmul.mubr.bf16.gmra.mxu0 %v310
    %v499 = vpop.f32.mrf.mxu0
    %v500 = vadd.f32 0.0, %v499
    %v501 = vpop.f32.mrf.mxu0
    %v502 = vpop.f32.mrf.mxu0
    %v503 = vadd.f32 0.0, %v502
    %v504 = vpop.f32.mrf.mxu0
    %505 = vmatprep.mubr.bf16.mxu0 0
    %506 = vmatmul.mubr.bf16.gmra.mxu0 %v313
    %v507 = vpop.f32.mrf.mxu0
    %v508 = vadd.f32 0.0, %v507
    %v509 = vpop.f32.mrf.mxu0
    %v510 = vpop.f32.mrf.mxu0
    %v511 = vadd.f32 0.0, %v510
    %v512 = vpop.f32.mrf.mxu0
    %513 = vmatprep.mubr.bf16.mxu0 0
    %514 = vmatmul.mubr.bf16.gmra.mxu0 %v316
    %v515 = vpop.f32.mrf.mxu0
    %v516 = vadd.f32 0.0, %v515
    %v517 = vpop.f32.mrf.mxu0
    %v518 = vpop.f32.mrf.mxu0
    %v519 = vadd.f32 0.0, %v518
    %v520 = vpop.f32.mrf.mxu0
    %521 = vmatprep.mubr.bf16.mxu0 0
    %522 = vmatmul.mubr.bf16.gmra.mxu0 %v319
    %v523 = vpop.f32.mrf.mxu0
    %v524 = vadd.f32 0.0, %v523
    %v525 = vpop.f32.mrf.mxu0
    %v526 = vpop.f32.mrf.mxu0
    %v527 = vadd.f32 0.0, %v526
    %v528 = vpop.f32.mrf.mxu0
    %529 = vmatprep.mubr.bf16.mxu0 0
    %530 = vmatmul.mubr.bf16.gmra.mxu0 %v322
    %v531 = vpop.f32.mrf.mxu0
    %v532 = vadd.f32 0.0, %v531
    %v533 = vpop.f32.mrf.mxu0
    %v534 = vpop.f32.mrf.mxu0
    %v535 = vadd.f32 0.0, %v534
    %v536 = vpop.f32.mrf.mxu0
    %537 = vmatprep.mubr.bf16.mxu0 0
    %538 = vmatmul.mubr.bf16.gmra.mxu0 %v325
    %v539 = vpop.f32.mrf.mxu0
    %v540 = vadd.f32 0.0, %v539
    %v541 = vpop.f32.mrf.mxu0
    %v542 = vpop.f32.mrf.mxu0
    %v543 = vadd.f32 0.0, %v542
    %v544 = vpop.f32.mrf.mxu0
    %545 = vmatprep.mubr.bf16.mxu0 0
    %546 = vmatmul.mubr.bf16.gmra.mxu0 %v328
    %v547 = vpop.f32.mrf.mxu0
    %v548 = vadd.f32 0.0, %v547
    %v549 = vpop.f32.mrf.mxu0
    %v550 = vpop.f32.mrf.mxu0
    %v551 = vadd.f32 0.0, %v550
    %v552 = vpop.f32.mrf.mxu0
    %553 = vmatprep.mubr.bf16.mxu0 0
    %554 = vmatmul.mubr.bf16.gmra.mxu0 %v331
    %v555 = vpop.f32.mrf.mxu0
    %v556 = vadd.f32 0.0, %v555
    %v557 = vpop.f32.mrf.mxu0
    %v558 = vpop.f32.mrf.mxu0
    %v559 = vadd.f32 0.0, %v558
    %v560 = vpop.f32.mrf.mxu0
    %561 = vmatprep.mubr.bf16.mxu0 0
    %562 = vmatmul.mubr.bf16.gmra.mxu0 %v334
    %v563 = vpop.f32.mrf.mxu0
    %v564 = vadd.f32 0.0, %v563
    %v565 = vpop.f32.mrf.mxu0
    %v566 = vpop.f32.mrf.mxu0
    %v567 = vadd.f32 0.0, %v566
    %v568 = vpop.f32.mrf.mxu0
    %569 = vmatprep.mubr.bf16.mxu0 0
    %570 = vmatmul.mubr.bf16.gmra.mxu0 %v337
    %v571 = vpop.f32.mrf.mxu0
    %v572 = vadd.f32 0.0, %v571
    %v573 = vpop.f32.mrf.mxu0
    %v574 = vpop.f32.mrf.mxu0
    %v575 = vadd.f32 0.0, %v574
    %v576 = vpop.f32.mrf.mxu0
    %577 = vmatprep.mubr.bf16.mxu0 0
    %578 = vmatmul.mubr.bf16.gmra.mxu0 %v340
    %v579 = vpop.f32.mrf.mxu0
    %v580 = vadd.f32 0.0, %v579
    %v581 = vpop.f32.mrf.mxu0
    %v582 = vpop.f32.mrf.mxu0
    %v583 = vadd.f32 0.0, %v582
    %v584 = vpop.f32.mrf.mxu0
    %585 = vmatprep.mubr.bf16.mxu0 0
    %586 = vmatmul.mubr.bf16.gmra.mxu0 %v343
    %v587 = vpop.f32.mrf.mxu0
    %v588 = vadd.f32 0.0, %v587
    %v589 = vpop.f32.mrf.mxu0
    %v590 = vpop.f32.mrf.mxu0
    %v591 = vadd.f32 0.0, %v590
    %v592 = vpop.f32.mrf.mxu0
    %593 = vmatprep.mubr.bf16.mxu0 0
    %594 = vmatmul.mubr.bf16.gmra.mxu0 %v346
    %v595 = vpop.f32.mrf.mxu0
    %v596 = vadd.f32 0.0, %v595
    %v597 = vpop.f32.mrf.mxu0
    %v598 = vpop.f32.mrf.mxu0
    %v599 = vadd.f32 0.0, %v598
    %v600 = vpop.f32.mrf.mxu0
    %601 = vmatprep.mubr.bf16.mxu0 0
    %602 = vmatmul.mubr.bf16.gmra.mxu0 %v349
    %v603 = vpop.f32.mrf.mxu0
    %v604 = vadd.f32 0.0, %v603
    %v605 = vpop.f32.mrf.mxu0
    %v606 = vpop.f32.mrf.mxu0
    %v607 = vadd.f32 0.0, %v606
    %v608 = vpop.f32.mrf.mxu0
    %609 = vmatprep.mubr.bf16.mxu0 0
    %610 = vmatmul.mubr.bf16.gmra.mxu0 %v352
    %v611 = vpop.f32.mrf.mxu0
    %v612 = vadd.f32 0.0, %v611
    %v613 = vpop.f32.mrf.mxu0
    %v614 = vpop.f32.mrf.mxu0
    %v615 = vadd.f32 0.0, %v614
    %v616 = vpop.f32.mrf.mxu0
    %617 = vmatprep.mubr.bf16.mxu0 0
    %618 = vmatmul.mubr.bf16.gmra.mxu0 %v355
    %v619 = vpop.f32.mrf.mxu0
    %v620 = vadd.f32 0.0, %v619
    %v621 = vpop.f32.mrf.mxu0
    %v622 = vpop.f32.mrf.mxu0
    %v623 = vadd.f32 0.0, %v622
    %v624 = vpop.f32.mrf.mxu0
    %625 = vmatprep.mubr.bf16.mxu0 0
    %626 = vmatmul.mubr.bf16.gmra.mxu0 %v358
    %v627 = vpop.f32.mrf.mxu0
    %v628 = vadd.f32 0.0, %v627
    %v629 = vpop.f32.mrf.mxu0
    %v630 = vpop.f32.mrf.mxu0
    %v631 = vadd.f32 0.0, %v630
    %v632 = vpop.f32.mrf.mxu0
    %633 = vmatprep.mubr.bf16.mxu0 0
    %634 = vmatmul.mubr.bf16.gmra.mxu0 %v361
    %v635 = vpop.f32.mrf.mxu0
    %v636 = vadd.f32 0.0, %v635
    %v637 = vpop.f32.mrf.mxu0
    %v638 = vpop.f32.mrf.mxu0
    %v639 = vadd.f32 0.0, %v638
    %v640 = vpop.f32.mrf.mxu0
    %641 = vmatprep.mubr.bf16.mxu0 0
    %642 = vmatmul.mubr.bf16.gmra.mxu0 %v364
    %v643 = vpop.f32.mrf.mxu0
    %v644 = vadd.f32 0.0, %v643
    %v645 = vpop.f32.mrf.mxu0
    %v646 = vpop.f32.mrf.mxu0
    %v647 = vadd.f32 0.0, %v646
    %v648 = vpop.f32.mrf.mxu0
    %649 = vmatprep.mubr.bf16.mxu0 0
    %650 = vmatmul.mubr.bf16.gmra.mxu0 %v367
    %v651 = vpop.f32.mrf.mxu0
    %v652 = vadd.f32 0.0, %v651
    %v653 = vpop.f32.mrf.mxu0
    %v654 = vpop.f32.mrf.mxu0
    %v655 = vadd.f32 0.0, %v654
    %v656 = vpop.f32.mrf.mxu0
    %657 = vdwg.mxu0
    %v658 = vmul.f32 %v404, 0.999995
    %v659 = vmul.f32 %v407, 0.999995
    %v660 = vmul.f32 %v412, 0.999995
    %v661 = vmul.f32 %v415, 0.999995
    %v662 = vmul.f32 %v420, 0.999995
    %v663 = vmul.f32 %v423, 0.999995
    %v664 = vmul.f32 %v428, 0.999995
    %v665 = vmul.f32 %v431, 0.999995
    %v666 = vmul.f32 %v436, 0.999995
    %v667 = vmul.f32 %v439, 0.999995
    %v668 = vmul.f32 %v444, 0.999995
    %v669 = vmul.f32 %v447, 0.999995
    %v670 = vmul.f32 %v452, 0.999995
    %v671 = vmul.f32 %v455, 0.999995
    %v672 = vmul.f32 %v460, 0.999995
    %v673 = vmul.f32 %v463, 0.999995
    %v674 = vmul.f32 %v468, 0.999995
    %v675 = vmul.f32 %v471, 0.999995
    %v676 = vmul.f32 %v476, 0.999995
    %v677 = vmul.f32 %v479, 0.999995
    %v678 = vmul.f32 %v484, 0.999995
    %v679 = vmul.f32 %v487, 0.999995
    %v680 = vmul.f32 %v492, 0.999995
    %v681 = vmul.f32 %v495, 0.999995
    %v682 = vmul.f32 %v500, 0.999995
    %v683 = vmul.f32 %v503, 0.999995
    %v684 = vmul.f32 %v508, 0.999995
    %v685 = vmul.f32 %v511, 0.999995
    %v686 = vmul.f32 %v516, 0.999995
    %v687 = vmul.f32 %v519, 0.999995
    %v688 = vmul.f32 %v524, 0.999995
    %v689 = vmul.f32 %v527, 0.999995
    %v690 = vmul.f32 %v532, 0.999995
    %v691 = vmul.f32 %v535, 0.999995
    %v692 = vmul.f32 %v540, 0.999995
    %v693 = vmul.f32 %v543, 0.999995
    %v694 = vmul.f32 %v548, 0.999995
    %v695 = vmul.f32 %v551, 0.999995
    %v696 = vmul.f32 %v556, 0.999995
    %v697 = vmul.f32 %v559, 0.999995
    %v698 = vmul.f32 %v564, 0.999995
    %v699 = vmul.f32 %v567, 0.999995
    %v700 = vmul.f32 %v572, 0.999995
    %v701 = vmul.f32 %v575, 0.999995
    %v702 = vmul.f32 %v580, 0.999995
    %v703 = vmul.f32 %v583, 0.999995
    %v704 = vmul.f32 %v588, 0.999995
    %v705 = vmul.f32 %v591, 0.999995
    %v706 = vmul.f32 %v596, 0.999995
    %v707 = vmul.f32 %v599, 0.999995
    %v708 = vmul.f32 %v604, 0.999995
    %v709 = vmul.f32 %v607, 0.999995
    %v710 = vmul.f32 %v612, 0.999995
    %v711 = vmul.f32 %v615, 0.999995
    %v712 = vmul.f32 %v620, 0.999995
    %v713 = vmul.f32 %v623, 0.999995
    %v714 = vmul.f32 %v628, 0.999995
    %v715 = vmul.f32 %v631, 0.999995
    %v716 = vmul.f32 %v636, 0.999995
    %v717 = vmul.f32 %v639, 0.999995
    %v718 = vmul.f32 %v644, 0.999995
    %v719 = vmul.f32 %v647, 0.999995
    %v720 = vmul.f32 %v652, 0.999995
    %v721 = vmul.f32 %v655, 0.999995
    %v722 = vld [vmem:[%s2] sm:$0xf]
    %v723 = vld [vmem:[%s2 + $0x4] sm:$0xf]
    %v724 = vld [vmem:[%s2 + $0x8] sm:$0xf]
    %v725 = vld [vmem:[%s2 + $0xc] sm:$0xf]
    %v726 = vld [vmem:[%s2 + $0x10] sm:$0xf]
    %v727 = vld [vmem:[%s2 + $0x14] sm:$0xf]
    %v728 = vld [vmem:[%s2 + $0x18] sm:$0xf]
    %v729 = vld [vmem:[%s2 + $0x1c] sm:$0xf]
    %v730 = vld [vmem:[%s2 + $0x20] sm:$0xf]
    %v731 = vld [vmem:[%s2 + $0x24] sm:$0xf]
    %v732 = vld [vmem:[%s2 + $0x28] sm:$0xf]
    %v733 = vld [vmem:[%s2 + $0x2c] sm:$0xf]
    %v734 = vld [vmem:[%s2 + $0x30] sm:$0xf]
    %v735 = vld [vmem:[%s2 + $0x34] sm:$0xf]
    %v736 = vld [vmem:[%s2 + $0x38] sm:$0xf]
    %v737 = vld [vmem:[%s2 + $0x3c] sm:$0xf]
    %v738 = vld [vmem:[%s2 + $0x40] sm:$0xf]
    %v739 = vld [vmem:[%s2 + $0x44] sm:$0xf]
    %v740 = vld [vmem:[%s2 + $0x48] sm:$0xf]
    %v741 = vld [vmem:[%s2 + $0x4c] sm:$0xf]
    %v742 = vld [vmem:[%s2 + $0x50] sm:$0xf]
    %v743 = vld [vmem:[%s2 + $0x54] sm:$0xf]
    %v744 = vld [vmem:[%s2 + $0x58] sm:$0xf]
    %v745 = vld [vmem:[%s2 + $0x5c] sm:$0xf]
    %v746 = vld [vmem:[%s2 + $0x60] sm:$0xf]
    %v747 = vld [vmem:[%s2 + $0x64] sm:$0xf]
    %v748 = vld [vmem:[%s2 + $0x68] sm:$0xf]
    %v749 = vld [vmem:[%s2 + $0x6c] sm:$0xf]
    %v750 = vld [vmem:[%s2 + $0x70] sm:$0xf]
    %v751 = vld [vmem:[%s2 + $0x74] sm:$0xf]
    %v752 = vld [vmem:[%s2 + $0x78] sm:$0xf]
    %v753 = vld [vmem:[%s2 + $0x7c] sm:$0xf]
    %v754 = vld [vmem:[%s2 + $0x80] sm:$0xf]
    %v755 = vld [vmem:[%s2 + $0x84] sm:$0xf]
    %v756 = vld [vmem:[%s2 + $0x88] sm:$0xf]
    %v757 = vld [vmem:[%s2 + $0x8c] sm:$0xf]
    %v758 = vld [vmem:[%s2 + $0x90] sm:$0xf]
    %v759 = vld [vmem:[%s2 + $0x94] sm:$0xf]
    %v760 = vld [vmem:[%s2 + $0x98] sm:$0xf]
    %v761 = vld [vmem:[%s2 + $0x9c] sm:$0xf]
    %v762 = vld [vmem:[%s2 + $0xa0] sm:$0xf]
    %v763 = vld [vmem:[%s2 + $0xa4] sm:$0xf]
    %v764 = vld [vmem:[%s2 + $0xa8] sm:$0xf]
    %v765 = vld [vmem:[%s2 + $0xac] sm:$0xf]
    %v766 = vld [vmem:[%s2 + $0xb0] sm:$0xf]
    %v767 = vld [vmem:[%s2 + $0xb4] sm:$0xf]
    %v768 = vld [vmem:[%s2 + $0xb8] sm:$0xf]
    %v769 = vld [vmem:[%s2 + $0xbc] sm:$0xf]
    %v770 = vld [vmem:[%s2 + $0xc0] sm:$0xf]
    %v771 = vld [vmem:[%s2 + $0xc4] sm:$0xf]
    %v772 = vld [vmem:[%s2 + $0xc8] sm:$0xf]
    %v773 = vld [vmem:[%s2 + $0xcc] sm:$0xf]
    %v774 = vld [vmem:[%s2 + $0xd0] sm:$0xf]
    %v775 = vld [vmem:[%s2 + $0xd4] sm:$0xf]
    %v776 = vld [vmem:[%s2 + $0xd8] sm:$0xf]
    %v777 = vld [vmem:[%s2 + $0xdc] sm:$0xf]
    %v778 = vld [vmem:[%s2 + $0xe0] sm:$0xf]
    %v779 = vld [vmem:[%s2 + $0xe4] sm:$0xf]
    %v780 = vld [vmem:[%s2 + $0xe8] sm:$0xf]
    %v781 = vld [vmem:[%s2 + $0xec] sm:$0xf]
    %v782 = vld [vmem:[%s2 + $0xf0] sm:$0xf]
    %v783 = vld [vmem:[%s2 + $0xf4] sm:$0xf]
    %v784 = vld [vmem:[%s2 + $0xf8] sm:$0xf]
    %v785 = vld [vmem:[%s2 + $0xfc] sm:$0xf]
    %v786 = vunpack.c.l.bf16 %v722
    %v787 = vunpack.c.l.bf16 %v723
    %v788 = vunpack.c.l.bf16 %v724
    %v789 = vunpack.c.l.bf16 %v725
    %v790 = vunpack.c.l.bf16 %v726
    %v791 = vunpack.c.l.bf16 %v727
    %v792 = vunpack.c.l.bf16 %v728
    %v793 = vunpack.c.l.bf16 %v729
    %v794 = vunpack.c.l.bf16 %v730
    %v795 = vunpack.c.l.bf16 %v731
    %v796 = vunpack.c.l.bf16 %v732
    %v797 = vunpack.c.l.bf16 %v733
    %v798 = vunpack.c.l.bf16 %v734
    %v799 = vunpack.c.l.bf16 %v735
    %v800 = vunpack.c.l.bf16 %v736
    %v801 = vunpack.c.l.bf16 %v737
    %v802 = vunpack.c.l.bf16 %v738
    %v803 = vunpack.c.l.bf16 %v739
    %v804 = vunpack.c.l.bf16 %v740
    %v805 = vunpack.c.l.bf16 %v741
    %v806 = vunpack.c.l.bf16 %v742
    %v807 = vunpack.c.l.bf16 %v743
    %v808 = vunpack.c.l.bf16 %v744
    %v809 = vunpack.c.l.bf16 %v745
    %v810 = vunpack.c.l.bf16 %v746
    %v811 = vunpack.c.l.bf16 %v747
    %v812 = vunpack.c.l.bf16 %v748
    %v813 = vunpack.c.l.bf16 %v749
    %v814 = vunpack.c.l.bf16 %v750
    %v815 = vunpack.c.l.bf16 %v751
    %v816 = vunpack.c.l.bf16 %v752
    %v817 = vunpack.c.l.bf16 %v753
    %v818 = vunpack.c.l.bf16 %v754
    %v819 = vunpack.c.l.bf16 %v755
    %v820 = vunpack.c.l.bf16 %v756
    %v821 = vunpack.c.l.bf16 %v757
    %v822 = vunpack.c.l.bf16 %v758
    %v823 = vunpack.c.l.bf16 %v759
    %v824 = vunpack.c.l.bf16 %v760
    %v825 = vunpack.c.l.bf16 %v761
    %v826 = vunpack.c.l.bf16 %v762
    %v827 = vunpack.c.l.bf16 %v763
    %v828 = vunpack.c.l.bf16 %v764
    %v829 = vunpack.c.l.bf16 %v765
    %v830 = vunpack.c.l.bf16 %v766
    %v831 = vunpack.c.l.bf16 %v767
    %v832 = vunpack.c.l.bf16 %v768
    %v833 = vunpack.c.l.bf16 %v769
    %v834 = vunpack.c.l.bf16 %v770
    %v835 = vunpack.c.l.bf16 %v771
    %v836 = vunpack.c.l.bf16 %v772
    %v837 = vunpack.c.l.bf16 %v773
    %v838 = vunpack.c.l.bf16 %v774
    %v839 = vunpack.c.l.bf16 %v775
    %v840 = vunpack.c.l.bf16 %v776
    %v841 = vunpack.c.l.bf16 %v777
    %v842 = vunpack.c.l.bf16 %v778
    %v843 = vunpack.c.l.bf16 %v779
    %v844 = vunpack.c.l.bf16 %v780
    %v845 = vunpack.c.l.bf16 %v781
    %v846 = vunpack.c.l.bf16 %v782
    %v847 = vunpack.c.l.bf16 %v783
    %v848 = vunpack.c.l.bf16 %v784
    %v849 = vunpack.c.l.bf16 %v785
    %v850 = vadd.f32 %v658, %v786
    %v851 = vadd.f32 %v659, %v787
    %v852 = vadd.f32 %v660, %v788
    %v853 = vadd.f32 %v661, %v789
    %v854 = vadd.f32 %v662, %v790
    %v855 = vadd.f32 %v663, %v791
    %v856 = vadd.f32 %v664, %v792
    %v857 = vadd.f32 %v665, %v793
    %v858 = vadd.f32 %v666, %v794
    %v859 = vadd.f32 %v667, %v795
    %v860 = vadd.f32 %v668, %v796
    %v861 = vadd.f32 %v669, %v797
    %v862 = vadd.f32 %v670, %v798
    %v863 = vadd.f32 %v671, %v799
    %v864 = vadd.f32 %v672, %v800
    %v865 = vadd.f32 %v673, %v801
    %v866 = vadd.f32 %v674, %v802
    %v867 = vadd.f32 %v675, %v803
    %v868 = vadd.f32 %v676, %v804
    %v869 = vadd.f32 %v677, %v805
    %v870 = vadd.f32 %v678, %v806
    %v871 = vadd.f32 %v679, %v807
    %v872 = vadd.f32 %v680, %v808
    %v873 = vadd.f32 %v681, %v809
    %v874 = vadd.f32 %v682, %v810
    %v875 = vadd.f32 %v683, %v811
    %v876 = vadd.f32 %v684, %v812
    %v877 = vadd.f32 %v685, %v813
    %v878 = vadd.f32 %v686, %v814
    %v879 = vadd.f32 %v687, %v815
    %v880 = vadd.f32 %v688, %v816
    %v881 = vadd.f32 %v689, %v817
    %v882 = vadd.f32 %v690, %v818
    %v883 = vadd.f32 %v691, %v819
    %v884 = vadd.f32 %v692, %v820
    %v885 = vadd.f32 %v693, %v821
    %v886 = vadd.f32 %v694, %v822
    %v887 = vadd.f32 %v695, %v823
    %v888 = vadd.f32 %v696, %v824
    %v889 = vadd.f32 %v697, %v825
    %v890 = vadd.f32 %v698, %v826
    %v891 = vadd.f32 %v699, %v827
    %v892 = vadd.f32 %v700, %v828
    %v893 = vadd.f32 %v701, %v829
    %v894 = vadd.f32 %v702, %v830
    %v895 = vadd.f32 %v703, %v831
    %v896 = vadd.f32 %v704, %v832
    %v897 = vadd.f32 %v705, %v833
    %v898 = vadd.f32 %v706, %v834
    %v899 = vadd.f32 %v707, %v835
    %v900 = vadd.f32 %v708, %v836
    %v901 = vadd.f32 %v709, %v837
    %v902 = vadd.f32 %v710, %v838
    %v903 = vadd.f32 %v711, %v839
    %v904 = vadd.f32 %v712, %v840
    %v905 = vadd.f32 %v713, %v841
    %v906 = vadd.f32 %v714, %v842
    %v907 = vadd.f32 %v715, %v843
    %v908 = vadd.f32 %v716, %v844
    %v909 = vadd.f32 %v717, %v845
    %v910 = vadd.f32 %v718, %v846
    %v911 = vadd.f32 %v719, %v847
    %v912 = vadd.f32 %v720, %v848
    %v913 = vadd.f32 %v721, %v849
    %v914 = vmax.f32 %v850, 0.0
    %v915 = vmax.f32 %v851, 0.0
    %v916 = vmax.f32 %v852, 0.0
    %v917 = vmax.f32 %v853, 0.0
    %v918 = vmax.f32 %v854, 0.0
    %v919 = vmax.f32 %v855, 0.0
    %v920 = vmax.f32 %v856, 0.0
    %v921 = vmax.f32 %v857, 0.0
    %v922 = vmax.f32 %v858, 0.0
    %v923 = vmax.f32 %v859, 0.0
    %v924 = vmax.f32 %v860, 0.0
    %v925 = vmax.f32 %v861, 0.0
    %v926 = vmax.f32 %v862, 0.0
    %v927 = vmax.f32 %v863, 0.0
    %v928 = vmax.f32 %v864, 0.0
    %v929 = vmax.f32 %v865, 0.0
    %v930 = vmax.f32 %v866, 0.0
    %v931 = vmax.f32 %v867, 0.0
    %v932 = vmax.f32 %v868, 0.0
    %v933 = vmax.f32 %v869, 0.0
    %v934 = vmax.f32 %v870, 0.0
    %v935 = vmax.f32 %v871, 0.0
    %v936 = vmax.f32 %v872, 0.0
    %v937 = vmax.f32 %v873, 0.0
    %v938 = vmax.f32 %v874, 0.0
    %v939 = vmax.f32 %v875, 0.0
    %v940 = vmax.f32 %v876, 0.0
    %v941 = vmax.f32 %v877, 0.0
    %v942 = vmax.f32 %v878, 0.0
    %v943 = vmax.f32 %v879, 0.0
    %v944 = vmax.f32 %v880, 0.0
    %v945 = vmax.f32 %v881, 0.0
    %v946 = vmax.f32 %v882, 0.0
    %v947 = vmax.f32 %v883, 0.0
    %v948 = vmax.f32 %v884, 0.0
    %v949 = vmax.f32 %v885, 0.0
    %v950 = vmax.f32 %v886, 0.0
    %v951 = vmax.f32 %v887, 0.0
    %v952 = vmax.f32 %v888, 0.0
    %v953 = vmax.f32 %v889, 0.0
    %v954 = vmax.f32 %v890, 0.0
    %v955 = vmax.f32 %v891, 0.0
    %v956 = vmax.f32 %v892, 0.0
    %v957 = vmax.f32 %v893, 0.0
    %v958 = vmax.f32 %v894, 0.0
    %v959 = vmax.f32 %v895, 0.0
    %v960 = vmax.f32 %v896, 0.0
    %v961 = vmax.f32 %v897, 0.0
    %v962 = vmax.f32 %v898, 0.0
    %v963 = vmax.f32 %v899, 0.0
    %v964 = vmax.f32 %v900, 0.0
    %v965 = vmax.f32 %v901, 0.0
    %v966 = vmax.f32 %v902, 0.0
    %v967 = vmax.f32 %v903, 0.0
    %v968 = vmax.f32 %v904, 0.0
    %v969 = vmax.f32 %v905, 0.0
    %v970 = vmax.f32 %v906, 0.0
    %v971 = vmax.f32 %v907, 0.0
    %v972 = vmax.f32 %v908, 0.0
    %v973 = vmax.f32 %v909, 0.0
    %v974 = vmax.f32 %v910, 0.0
    %v975 = vmax.f32 %v911, 0.0
    %v976 = vmax.f32 %v912, 0.0
    %v977 = vmax.f32 %v913, 0.0
    %978 = vst [vmem:[#allocation2] sm:$0xff] %v914
    %979 = vst [vmem:[#allocation2 + $0x8] sm:$0xff] %v915
    %980 = vst [vmem:[#allocation2 + $0x10] sm:$0xff] %v916
    %981 = vst [vmem:[#allocation2 + $0x18] sm:$0xff] %v917
    %982 = vst [vmem:[#allocation2 + $0x20] sm:$0xff] %v918
    %983 = vst [vmem:[#allocation2 + $0x28] sm:$0xff] %v919
    %984 = vst [vmem:[#allocation2 + $0x30] sm:$0xff] %v920
    %985 = vst [vmem:[#allocation2 + $0x38] sm:$0xff] %v921
    %986 = vst [vmem:[#allocation2 + $0x40] sm:$0xff] %v922
    %987 = vst [vmem:[#allocation2 + $0x48] sm:$0xff] %v923
    %988 = vst [vmem:[#allocation2 + $0x50] sm:$0xff] %v924
    %989 = vst [vmem:[#allocation2 + $0x58] sm:$0xff] %v925
    %990 = vst [vmem:[#allocation2 + $0x60] sm:$0xff] %v926
    %991 = vst [vmem:[#allocation2 + $0x68] sm:$0xff] %v927
    %992 = vst [vmem:[#allocation2 + $0x70] sm:$0xff] %v928
    %993 = vst [vmem:[#allocation2 + $0x78] sm:$0xff] %v929
    %994 = vst [vmem:[#allocation2 + $0x80] sm:$0xff] %v930
    %995 = vst [vmem:[#allocation2 + $0x88] sm:$0xff] %v931
    %996 = vst [vmem:[#allocation2 + $0x90] sm:$0xff] %v932
    %997 = vst [vmem:[#allocation2 + $0x98] sm:$0xff] %v933
    %998 = vst [vmem:[#allocation2 + $0xa0] sm:$0xff] %v934
    %999 = vst [vmem:[#allocation2 + $0xa8] sm:$0xff] %v935
    %1000 = vst [vmem:[#allocation2 + $0xb0] sm:$0xff] %v936
    %1001 = vst [vmem:[#allocation2 + $0xb8] sm:$0xff] %v937
    %1002 = vst [vmem:[#allocation2 + $0xc0] sm:$0xff] %v938
    %1003 = vst [vmem:[#allocation2 + $0xc8] sm:$0xff] %v939
    %1004 = vst [vmem:[#allocation2 + $0xd0] sm:$0xff] %v940
    %1005 = vst [vmem:[#allocation2 + $0xd8] sm:$0xff] %v941
    %1006 = vst [vmem:[#allocation2 + $0xe0] sm:$0xff] %v942
    %1007 = vst [vmem:[#allocation2 + $0xe8] sm:$0xff] %v943
    %1008 = vst [vmem:[#allocation2 + $0xf0] sm:$0xff] %v944
    %1009 = vst [vmem:[#allocation2 + $0xf8] sm:$0xff] %v945
    %1010 = vst [vmem:[#allocation2 + $0x100] sm:$0xff] %v946
    %1011 = vst [vmem:[#allocation2 + $0x108] sm:$0xff] %v947
    %1012 = vst [vmem:[#allocation2 + $0x110] sm:$0xff] %v948
    %1013 = vst [vmem:[#allocation2 + $0x118] sm:$0xff] %v949
    %1014 = vst [vmem:[#allocation2 + $0x120] sm:$0xff] %v950
    %1015 = vst [vmem:[#allocation2 + $0x128] sm:$0xff] %v951
    %1016 = vst [vmem:[#allocation2 + $0x130] sm:$0xff] %v952
    %1017 = vst [vmem:[#allocation2 + $0x138] sm:$0xff] %v953
    %1018 = vst [vmem:[#allocation2 + $0x140] sm:$0xff] %v954
    %1019 = vst [vmem:[#allocation2 + $0x148] sm:$0xff] %v955
    %1020 = vst [vmem:[#allocation2 + $0x150] sm:$0xff] %v956
    %1021 = vst [vmem:[#allocation2 + $0x158] sm:$0xff] %v957
    %1022 = vst [vmem:[#allocation2 + $0x160] sm:$0xff] %v958
    %1023 = vst [vmem:[#allocation2 + $0x168] sm:$0xff] %v959
    %1024 = vst [vmem:[#allocation2 + $0x170] sm:$0xff] %v960
    %1025 = vst [vmem:[#allocation2 + $0x178] sm:$0xff] %v961
    %1026 = vst [vmem:[#allocation2 + $0x180] sm:$0xff] %v962
    %1027 = vst [vmem:[#allocation2 + $0x188] sm:$0xff] %v963
    %1028 = vst [vmem:[#allocation2 + $0x190] sm:$0xff] %v964
    %1029 = vst [vmem:[#allocation2 + $0x198] sm:$0xff] %v965
    %1030 = vst [vmem:[#allocation2 + $0x1a0] sm:$0xff] %v966
    %1031 = vst [vmem:[#allocation2 + $0x1a8] sm:$0xff] %v967
    %1032 = vst [vmem:[#allocation2 + $0x1b0] sm:$0xff] %v968
    %1033 = vst [vmem:[#allocation2 + $0x1b8] sm:$0xff] %v969
    %1034 = vst [vmem:[#allocation2 + $0x1c0] sm:$0xff] %v970
    %1035 = vst [vmem:[#allocation2 + $0x1c8] sm:$0xff] %v971
    %1036 = vst [vmem:[#allocation2 + $0x1d0] sm:$0xff] %v972
    %1037 = vst [vmem:[#allocation2 + $0x1d8] sm:$0xff] %v973
    %1038 = vst [vmem:[#allocation2 + $0x1e0] sm:$0xff] %v974
    %1039 = vst [vmem:[#allocation2 + $0x1e8] sm:$0xff] %v975
    %1040 = vst [vmem:[#allocation2 + $0x1f0] sm:$0xff] %v976
    %1041 = vst [vmem:[#allocation2 + $0x1f8] sm:$0xff] %v977
    // Predicated region
    $region14: #{skunit_forward.7} parent=1 // pred_check
      _
    $region15: #{skunit_forward.7} parent=1 // pred_check_branch
      %1043 = sbr.rel (0) target = $region17
    $region16: #{skunit_forward.7} parent=1 // pred_region
      %s1045 = ssub.s32 8192, 8192
      %1046 = vsyncadd [#allocation3], %s1045
      %s1047 = sshll.u32 [#allocation2], 4
      %s1048 = int_to_ptr.vmem [resolvable:$true] %s1047
      %1053 = dma.vmem_to_hbm [thread:$0]  %s1048, 8192, %s3, [#allocation3], 128, 128, 8
    $region17: #{skunit_forward.7} parent=1 // pred_fallthru
      _
    // Predicated region
    $region18: #{skunit_forward.7} parent=1 // pred_check
      _
    $region19: #{skunit_forward.7} parent=1 // pred_check_branch
      %1055 = sbr.rel (0) target = $region21
    $region20: #{skunit_forward.7} parent=1 // pred_region
      %1056 = dma.done [#allocation3], 8192
    $region21: #{skunit_forward.7} parent=1 // pred_fallthru
      _
    %1057 = vsyncpa [#allocation3], 1

</llo_original>
